<compile_context>
chip_gen: v5e
topology: v5e:2x2
jax: 0.10.0
libtpu: 0.0.40
codegen_flags: <defaults>
</compile_context>

<pallas_src>
import math
from functools import partial

import jax
import jax.numpy as jnp
from jax import lax
from jax.experimental import pallas as pl
from jax.experimental.pallas import tpu as pltpu

EPS = 1e-5
LANE = 128


def _round_up(x, m):
    return ((x + m - 1) // m) * m


def _cost(flops, arrays):
    nbytes = sum(math.prod(s) * jnp.dtype(d).itemsize for s, d in arrays)
    return pl.CostEstimate(flops=int(flops), transcendentals=0,
                           bytes_accessed=int(nbytes))


@partial(jax.jit, static_argnames=("stride",))
def residual_block_forward(x_nchw, params, stride=1):
    """x_nchw: (N, Cin, H, W) float32 -> (N, Cout, Ho, Wo) float32."""
    N, Cin, H, W = x_nchw.shape
    Cout = params["w1"].shape[0]
    has_proj = (stride != 1) or (Cin != Cout)
    Ho = (H - 1) // stride + 1
    Wo = (W - 1) // stride + 1
    Hp, Wp = H + 2, W + 2
    M2 = Ho * Wo
    Cip = _round_up(Cin, LANE)
    Cop = _round_up(Cout, LANE)

    f32, bf16 = jnp.float32, jnp.bfloat16

    # ---- layout plumbing (XLA glue, outside the kernels): NCHW -> NHWC,
    #      channel pad to lane width, spatial zero-pad, bf16 casts. ----
    x = jnp.transpose(x_nchw, (0, 2, 3, 1)).astype(f32)              # (N,H,W,Cin)
    x_cp = jnp.pad(x, ((0, 0), (0, 0), (0, 0), (0, Cip - Cin)))      # (N,H,W,Cip)
    xpad = jnp.pad(x_cp, ((0, 0), (1, 1), (1, 1), (0, 0))).astype(bf16)
    xs = x_cp[:, ::stride, ::stride, :]                              # pre-strided shortcut input

    def prep_w3x3(w, ci, cip):
        # (Cout, ci, 3, 3) -> (3, 3*cip, Cop) bf16, kw folded into K (K = kw*cip + c)
        wt = jnp.transpose(w, (2, 3, 1, 0))                          # (kh, kw, ci, Cout)
        wt = jnp.pad(wt, ((0, 0), (0, 0), (0, cip - ci), (0, Cop - Cout)))
        return wt.reshape(3, 3 * cip, Cop).astype(bf16)

    w1 = prep_w3x3(params["w1"], Cin, Cip)
    w2 = prep_w3x3(params["w2"], Cout, Cop)

    def pad_c(v):
        return jnp.pad(v.astype(f32), (0, Cop - Cout))

    g1, b1 = pad_c(params["g1"]), pad_c(params["b1"])
    g2, b2 = pad_c(params["g2"]), pad_c(params["b2"])

    cparams = pltpu.CompilerParams(dimension_semantics=("parallel",),
                                   vmem_limit_bytes=32 * 1024 * 1024)

    act_spec = pl.BlockSpec((1, Ho, Wo, Cop), lambda n: (n, 0, 0, 0))
    xs_spec = pl.BlockSpec((1, Ho, Wo, Cip), lambda n: (n, 0, 0, 0))
    st_spec = pl.BlockSpec((1, 2, Cop), lambda n: (n, 0, 0))
    par_spec = pl.BlockSpec((1, Cop), lambda n: (0, 0))
    wsc_spec = pl.BlockSpec((Cip, Cop), lambda n: (0, 0))

    # ------------- pass A: conv1 (3x3, stride) + BN1 partial stats
    #               (+ 1x1 shortcut conv, stats only) -------------
    def kernel_a(*refs):
        if has_proj:
            xpad_ref, xs_ref, w1_ref, wsc_ref, a1_ref, st1_ref, stsc_ref = refs
        else:
            xpad_ref, w1_ref, a1_ref, st1_ref = refs

        acc = jnp.zeros((M2, Cop), f32)
        if stride == 1:
            for kh in range(3):
                patch = jnp.concatenate(
                    [xpad_ref[0, kh:kh + Ho, kw:kw + Wo, :] for kw in range(3)],
                    axis=-1).reshape(M2, 3 * Cip)
                acc = acc + jnp.dot(patch, w1_ref[kh],
                                    preferred_element_type=f32)
        else:
            # TODO(synk): stride>1 still uses an in-kernel strided slice; use a
            # space-to-depth layout in the wrapper for production stride-2 blocks.
            xp = xpad_ref[0]
            for kh in range(3):
                for kw in range(3):
                    patch = lax.slice(
                        xp, (kh, kw, 0),
                        (kh + stride * (Ho - 1) + 1,
                         kw + stride * (Wo - 1) + 1, Cip),
                        (stride, stride, 1)).reshape(M2, Cip)
                    acc = acc + jnp.dot(
                        patch, w1_ref[kh, kw * Cip:(kw + 1) * Cip, :],
                        preferred_element_type=f32)

        # stats from the f32 accumulator, activation stored as bf16
        a1_ref[0] = acc.reshape(Ho, Wo, Cop).astype(bf16)
        st1_ref[0, 0:1, :] = jnp.sum(acc, axis=0, keepdims=True)
        st1_ref[0, 1:2, :] = jnp.sum(acc * acc, axis=0, keepdims=True)
        if has_proj:
            asc = jnp.dot(xs_ref[0].reshape(M2, Cip), wsc_ref[...],
                          preferred_element_type=f32)
            stsc_ref[0, 0:1, :] = jnp.sum(asc, axis=0, keepdims=True)
            stsc_ref[0, 1:2, :] = jnp.sum(asc * asc, axis=0, keepdims=True)

    a_inputs = [xpad]
    a_in_specs = [pl.BlockSpec((1, Hp, Wp, Cip), lambda n: (n, 0, 0, 0))]
    xs_bf = None
    wsc = None
    if has_proj:
        xs_bf = xs.astype(bf16)
        a_inputs.append(xs_bf)
        a_in_specs.append(xs_spec)
    a_inputs.append(w1)
    a_in_specs.append(pl.BlockSpec((3, 3 * Cip, Cop), lambda n: (0, 0, 0)))
    if has_proj:
        wsc = jnp.transpose(params["wsc"], (2, 3, 1, 0)).reshape(Cin, Cout)
        wsc = jnp.pad(wsc, ((0, Cip - Cin), (0, Cop - Cout))).astype(bf16)
        a_inputs.append(wsc)
        a_in_specs.append(wsc_spec)

    a_out_shape = [jax.ShapeDtypeStruct((N, Ho, Wo, Cop), bf16),
                   jax.ShapeDtypeStruct((N, 2, Cop), f32)]
    a_out_specs = [act_spec, st_spec]
    if has_proj:
        a_out_shape.append(jax.ShapeDtypeStruct((N, 2, Cop), f32))
        a_out_specs.append(st_spec)

    flops_a = 2 * N * M2 * Cip * Cop * (9 + (1 if has_proj else 0))
    bytes_a = [((N, Hp, Wp, Cip), bf16), ((3, 3 * Cip, Cop), bf16),
               ((N, Ho, Wo, Cop), bf16), ((N, 2, Cop), f32)]
    if has_proj:
        bytes_a += [((N, Ho, Wo, Cip), bf16), ((Cip, Cop), bf16),
                    ((N, 2, Cop), f32)]

    a_res = pl.pallas_call(
        kernel_a,
        out_shape=tuple(a_out_shape),
        grid_spec=pltpu.PrefetchScalarGridSpec(
            num_scalar_prefetch=0, grid=(N,),
            in_specs=a_in_specs, out_specs=a_out_specs),
        compiler_params=cparams,
        cost_estimate=_cost(flops_a, bytes_a),
    )(*a_inputs)
    if has_proj:
        a1, st1, stsc = a_res
    else:
        a1, st1 = a_res
        stsc = None

    # ---- reduce per-image partials to exact global BatchNorm affine params ----
    cnt = jnp.float32(N * M2)

    def bn_affine(st, g, b):
        s = jnp.sum(st[:, 0, :], axis=0)
        ss = jnp.sum(st[:, 1, :], axis=0)
        mean = s / cnt
        # NOTE: E[x^2]-E[x]^2 in f32 is fine at these sizes; switch to a
        # two-pass / Welford reduction for very large N*Ho*Wo.
        var = jnp.maximum(ss / cnt - mean * mean, 0.0)
        scale = g * lax.rsqrt(var + EPS)
        shift = b - mean * scale
        return scale.reshape(1, Cop), shift.reshape(1, Cop)

    s1, t1 = bn_affine(st1, g1, b1)

    # ------------- pass B: BN1 affine + ReLU + conv2 (3x3, stride 1) + partial stats -------------
    def kernel_b(a1_ref, s1_ref, t1_ref, w2_ref, a2_ref, st2_ref, y1p_ref):
        y1 = jnp.maximum(a1_ref[0].astype(f32) * s1_ref[...] + t1_ref[...], 0.0)
        # bf16 halo scratch, interior at W offset 2 so every store is aligned to
        # the packed bf16 word; only the 1-px border is (re)zeroed each step.
        zrow = jnp.zeros((1, Wo + 4, Cop), bf16)
        zcol = jnp.zeros((Ho, 2, Cop), bf16)
        y1p_ref[0:1, :, :] = zrow
        y1p_ref[Ho + 1:Ho + 2, :, :] = zrow
        y1p_ref[1:Ho + 1, 0:2, :] = zcol
        y1p_ref[1:Ho + 1, Wo + 2:Wo + 4, :] = zcol
        y1p_ref[1:Ho + 1, 2:Wo + 2, :] = y1.astype(bf16)

        acc = jnp.zeros((M2, Cop), f32)
        for kh in range(3):
            patch = jnp.concatenate(
                [y1p_ref[kh:kh + Ho, kw + 1:kw + 1 + Wo, :] for kw in range(3)],
                axis=-1).reshape(M2, 3 * Cop)
            acc = acc + jnp.dot(patch, w2_ref[kh], preferred_element_type=f32)

        a2_ref[0] = acc.reshape(Ho, Wo, Cop).astype(bf16)
        st2_ref[0, 0:1, :] = jnp.sum(acc, axis=0, keepdims=True)
        st2_ref[0, 1:2, :] = jnp.sum(acc * acc, axis=0, keepdims=True)

    flops_b = 2 * N * M2 * Cop * Cop * 9
    bytes_b = [((N, Ho, Wo, Cop), bf16), ((3, 3 * Cop, Cop), bf16),
               ((N, Ho, Wo, Cop), bf16), ((N, 2, Cop), f32)]
    a2, st2 = pl.pallas_call(
        kernel_b,
        out_shape=(jax.ShapeDtypeStruct((N, Ho, Wo, Cop), bf16),
                   jax.ShapeDtypeStruct((N, 2, Cop), f32)),
        grid_spec=pltpu.PrefetchScalarGridSpec(
            num_scalar_prefetch=0, grid=(N,),
            in_specs=[act_spec, par_spec, par_spec,
                      pl.BlockSpec((3, 3 * Cop, Cop), lambda n: (0, 0, 0))],
            out_specs=[act_spec, st_spec],
            scratch_shapes=[pltpu.VMEM((Ho + 2, Wo + 4, Cop), bf16)]),
        compiler_params=cparams,
        cost_estimate=_cost(flops_b, bytes_b),
    )(a1, s1, t1, w2)

    s2, t2 = bn_affine(st2, g2, b2)

    # ------------- pass C: BN2 affine + shortcut (recomputed 1x1+BN or identity) + add + ReLU -------------
    def kernel_c(*refs):
        if has_proj:
            a2_ref, xs_ref, wsc_ref, s2_ref, t2_ref, ssc_ref, tsc_ref, out_ref = refs
            asc = jnp.dot(xs_ref[0].reshape(M2, Cip), wsc_ref[...],
                          preferred_element_type=f32)
            sc = (asc * ssc_ref[...] + tsc_ref[...]).reshape(Ho, Wo, Cop)
        else:
            a2_ref, xid_ref, s2_ref, t2_ref, out_ref = refs
            sc = xid_ref[0]
        left = a2_ref[0].astype(f32) * s2_ref[...] + t2_ref[...]
        out_ref[0] = jnp.maximum(left + sc, 0.0)

    if has_proj:
        gsc, bsc = pad_c(params["gsc"]), pad_c(params["bsc"])
        ssc, tsc = bn_affine(stsc, gsc, bsc)
        c_inputs = [a2, xs_bf, wsc, s2, t2, ssc, tsc]
        c_specs = [act_spec, xs_spec, wsc_spec,
                   par_spec, par_spec, par_spec, par_spec]
        flops_c = 2 * N * M2 * Cip * Cop + 6 * N * M2 * Cop
        bytes_c = [((N, Ho, Wo, Cop), bf16), ((N, Ho, Wo, Cip), bf16),
                   ((Cip, Cop), bf16), ((N, Ho, Wo, Cop), f32)]
    else:
        c_inputs = [a2, xs, s2, t2]              # identity shortcut: exact f32 x
        c_specs = [act_spec, xs_spec, par_spec, par_spec]
        flops_c = 5 * N * M2 * Cop
        bytes_c = [((N, Ho, Wo, Cop), bf16), ((N, Ho, Wo, Cip), f32),
                   ((N, Ho, Wo, Cop), f32)]

    out_nhwc = pl.pallas_call(
        kernel_c,
        out_shape=jax.ShapeDtypeStruct((N, Ho, Wo, Cop), f32),
        grid_spec=pltpu.PrefetchScalarGridSpec(
            num_scalar_prefetch=0, grid=(N,),
            in_specs=c_specs, out_specs=act_spec),
        compiler_params=cparams,
        cost_estimate=_cost(flops_c, bytes_c),
    )(*c_inputs)

    out = out_nhwc[:, :, :, :Cout]              # drop lane padding (XLA glue)
    return jnp.transpose(out, (0, 3, 1, 2))     # back to NCHW


def reference_forward(x, params, stride=1, conv_dtype=jnp.float32):
    """Pure-JAX NCHW reference (PyTorch module math, training-mode BN).

    conv_dtype=float32  : exact f32 semantics (PyTorch).
    conv_dtype=bfloat16 : conv operands cast to bf16 with f32 accumulation,
                          approximating the kernel's MXU numerics (the kernel
                          additionally stores inter-pass activations in bf16).
    """
    def conv(a, w, s, pad):
        return lax.conv_general_dilated(
            a.astype(conv_dtype), w.astype(conv_dtype), (s, s),
            [(pad, pad), (pad, pad)],
            dimension_numbers=("NCHW", "OIHW", "NCHW"),
            preferred_element_type=jnp.float32,
            precision=lax.Precision.HIGHEST)

    def bn(a, g, b):
        mean = jnp.mean(a, axis=(0, 2, 3), keepdims=True)
        var = jnp.mean((a - mean) ** 2, axis=(0, 2, 3), keepdims=True)
        return ((a - mean) * lax.rsqrt(var + EPS) * g.reshape(1, -1, 1, 1)
                + b.reshape(1, -1, 1, 1))

    Cin = x.shape[1]
    Cout = params["w1"].shape[0]
    out = jax.nn.relu(bn(conv(x, params["w1"], stride, 1), params["g1"], params["b1"]))
    out = bn(conv(out, params["w2"], 1, 1), params["g2"], params["b2"])
    if stride != 1 or Cin != Cout:
        sc = bn(conv(x, params["wsc"], stride, 0), params["gsc"], params["bsc"])
    else:
        sc = x.astype(jnp.float32)
    return jax.nn.relu(out + sc)


def _make_params(key, Cin, Cout, has_proj):
    ks = jax.random.split(key, 9)
    p = {
        "w1": 0.2 * jax.random.normal(ks[0], (Cout, Cin, 3, 3), jnp.float32),
        "g1": 1.0 + 0.1 * jax.random.normal(ks[1], (Cout,), jnp.float32),
        "b1": 0.1 * jax.random.normal(ks[2], (Cout,), jnp.float32),
        "w2": 0.2 * jax.random.normal(ks[3], (Cout, Cout, 3, 3), jnp.float32),
        "g2": 1.0 + 0.1 * jax.random.normal(ks[4], (Cout,), jnp.float32),
        "b2": 0.1 * jax.random.normal(ks[5], (Cout,), jnp.float32),
    }
    if has_proj:
        p["wsc"] = 0.2 * jax.random.normal(ks[6], (Cout, Cin, 1, 1), jnp.float32)
        p["gsc"] = 1.0 + 0.1 * jax.random.normal(ks[7], (Cout,), jnp.float32)
        p["bsc"] = 0.1 * jax.random.normal(ks[8], (Cout,), jnp.float32)
    return p


if __name__ == "__main__":
    key = jax.random.PRNGKey(0)
    kx0, kx1, kp0, kp1 = jax.random.split(key, 4)

    # (N, Cin, Cout, H, W, stride): projection-shortcut and identity-shortcut configs.
    configs = [(2, 4, 8, 16, 16, 1), (2, 8, 8, 16, 16, 1)]
    ok = True
    msgs = []
    for (N, Cin, Cout, H, W, stride), kx, kp in zip(configs, (kx0, kx1), (kp0, kp1)):
        has_proj = (stride != 1) or (Cin != Cout)
        x = jax.random.normal(kx, (N, Cin, H, W), jnp.float32)
        params = _make_params(kp, Cin, Cout, has_proj)

        out = jax.block_until_ready(residual_block_forward(x, params, stride=stride))
        ref_matched = reference_forward(x, params, stride, conv_dtype=jnp.bfloat16)
        ref_f32 = reference_forward(x, params, stride, conv_dtype=jnp.float32)

        Ho, Wo = (H - 1) // stride + 1, (W - 1) // stride + 1
        shape_ok = out.shape == (N, Cout, Ho, Wo)
        err_m = float(jnp.max(jnp.abs(out - ref_matched)))
        err_f = float(jnp.max(jnp.abs(out - ref_f32)))
        # bf16 inter-pass activation storage adds a small extra rounding vs the
        # bf16-conv reference, hence the 5e-2 tolerance (real bugs are O(1)).
        this_ok = shape_ok and (err_m < 5e-2) and (err_f < 1e-1)
        ok = ok and this_ok
        if not this_ok:
            msgs.append(f"cfg=({N},{Cin},{Cout},{H},{W},s{stride}) shape_ok={shape_ok} "
                        f"err_matched={err_m:.3e} err_f32={err_f:.3e}")

    if ok:
        print("KERNEL_OK")
    else:
        print("MISMATCH " + " | ".join(msgs))
</pallas_src>

<mosaic_0001>
module attributes {stable_mosaic.version = 11 : i64} {
  func.func @kernel_a(%arg0: i32, %arg1: memref<1x18x18x128xbf16, #tpu.memory_space<vmem>>, %arg2: memref<1x16x16x128xbf16, #tpu.memory_space<vmem>>, %arg3: memref<3x384x128xbf16, #tpu.memory_space<vmem>>, %arg4: memref<128x128xbf16, #tpu.memory_space<vmem>>, %arg5: memref<1x16x16x128xbf16, #tpu.memory_space<vmem>>, %arg6: memref<1x2x128xf32, #tpu.memory_space<vmem>>, %arg7: memref<1x2x128xf32, #tpu.memory_space<vmem>>) attributes {dimension_semantics = [#tpu.dimension_semantics<parallel>], iteration_bounds = array<i64: 2>, scalar_prefetch = 0 : i64, scratch_operands = 0 : i64, tpu.core_type = #tpu.core_type<tc>, window_params = [{transform_indices = @transform_0, window_bounds = array<i64: 1, 18, 18, 128>}, {transform_indices = @transform_1, window_bounds = array<i64: 1, 16, 16, 128>}, {pipeline_mode = #tpu.pipeline_mode<synchronous>, transform_indices = @transform_2, window_bounds = array<i64: 3, 384, 128>}, {pipeline_mode = #tpu.pipeline_mode<synchronous>, transform_indices = @transform_3, window_bounds = array<i64: 128, 128>}, {transform_indices = @transform_4, window_bounds = array<i64: 1, 16, 16, 128>}, {transform_indices = @transform_5, window_bounds = array<i64: 1, 2, 128>}, {transform_indices = @transform_6, window_bounds = array<i64: 1, 2, 128>}]} {
    %cst = arith.constant 0.000000e+00 : f32
    %0 = vector.broadcast %cst : f32 to vector<256x128xf32>
    %c0 = arith.constant 0 : index
    %c0_0 = arith.constant 0 : index
    %c0_1 = arith.constant 0 : index
    %c0_2 = arith.constant 0 : index
    %1 = vector.load %arg1[%c0, %c0_0, %c0_1, %c0_2] : memref<1x18x18x128xbf16, #tpu.memory_space<vmem>>, vector<1x16x16x128xbf16>
    %2 = vector.shape_cast %1 : vector<1x16x16x128xbf16> to vector<16x16x128xbf16>
    %c0_3 = arith.constant 0 : index
    %c0_4 = arith.constant 0 : index
    %c1 = arith.constant 1 : index
    %c0_5 = arith.constant 0 : index
    %3 = vector.load %arg1[%c0_3, %c0_4, %c1, %c0_5] : memref<1x18x18x128xbf16, #tpu.memory_space<vmem>>, vector<1x16x16x128xbf16>
    %4 = vector.shape_cast %3 : vector<1x16x16x128xbf16> to vector<16x16x128xbf16>
    %c0_6 = arith.constant 0 : index
    %c0_7 = arith.constant 0 : index
    %c2 = arith.constant 2 : index
    %c0_8 = arith.constant 0 : index
    %5 = vector.load %arg1[%c0_6, %c0_7, %c2, %c0_8] : memref<1x18x18x128xbf16, #tpu.memory_space<vmem>>, vector<1x16x16x128xbf16>
    %6 = vector.shape_cast %5 : vector<1x16x16x128xbf16> to vector<16x16x128xbf16>
    %7 = tpu.concatenate %2, %4, %6 in 2 : vector<16x16x128xbf16>, vector<16x16x128xbf16>, vector<16x16x128xbf16> -> vector<16x16x384xbf16>
    %8 = vector.shape_cast %7 : vector<16x16x384xbf16> to vector<256x384xbf16>
    %c0_9 = arith.constant 0 : index
    %c0_10 = arith.constant 0 : index
    %c0_11 = arith.constant 0 : index
    %9 = vector.load %arg3[%c0_9, %c0_10, %c0_11] : memref<3x384x128xbf16, #tpu.memory_space<vmem>>, vector<1x384x128xbf16>
    %10 = vector.shape_cast %9 : vector<1x384x128xbf16> to vector<384x128xbf16>
    %cst_12 = arith.constant dense<0.000000e+00> : vector<256x128xf32>
    %11 = tpu.matmul %8, %10, %cst_12 {dimension_numbers = #tpu.dot_dimension_numbers<[1], [0], [0], [1], [0, 0, 1, 1], [], []>} : vector<256x384xbf16>, vector<384x128xbf16>, vector<256x128xf32> -> vector<256x128xf32>
    %12 = arith.addf %0, %11 : vector<256x128xf32>
    %c0_13 = arith.constant 0 : index
    %c1_14 = arith.constant 1 : index
    %c0_15 = arith.constant 0 : index
    %c0_16 = arith.constant 0 : index
    %13 = vector.load %arg1[%c0_13, %c1_14, %c0_15, %c0_16] : memref<1x18x18x128xbf16, #tpu.memory_space<vmem>>, vector<1x16x16x128xbf16>
    %14 = vector.shape_cast %13 : vector<1x16x16x128xbf16> to vector<16x16x128xbf16>
    %c0_17 = arith.constant 0 : index
    %c1_18 = arith.constant 1 : index
    %c1_19 = arith.constant 1 : index
    %c0_20 = arith.constant 0 : index
    %15 = vector.load %arg1[%c0_17, %c1_18, %c1_19, %c0_20] : memref<1x18x18x128xbf16, #tpu.memory_space<vmem>>, vector<1x16x16x128xbf16>
    %16 = vector.shape_cast %15 : vector<1x16x16x128xbf16> to vector<16x16x128xbf16>
    %c0_21 = arith.constant 0 : index
    %c1_22 = arith.constant 1 : index
    %c2_23 = arith.constant 2 : index
    %c0_24 = arith.constant 0 : index
    %17 = vector.load %arg1[%c0_21, %c1_22, %c2_23, %c0_24] : memref<1x18x18x128xbf16, #tpu.memory_space<vmem>>, vector<1x16x16x128xbf16>
    %18 = vector.shape_cast %17 : vector<1x16x16x128xbf16> to vector<16x16x128xbf16>
    %19 = tpu.concatenate %14, %16, %18 in 2 : vector<16x16x128xbf16>, vector<16x16x128xbf16>, vector<16x16x128xbf16> -> vector<16x16x384xbf16>
    %20 = vector.shape_cast %19 : vector<16x16x384xbf16> to vector<256x384xbf16>
    %c1_25 = arith.constant 1 : index
    %c0_26 = arith.constant 0 : index
    %c0_27 = arith.constant 0 : index
    %21 = vector.load %arg3[%c1_25, %c0_26, %c0_27] : memref<3x384x128xbf16, #tpu.memory_space<vmem>>, vector<1x384x128xbf16>
    %22 = vector.shape_cast %21 : vector<1x384x128xbf16> to vector<384x128xbf16>
    %cst_28 = arith.constant dense<0.000000e+00> : vector<256x128xf32>
    %23 = tpu.matmul %20, %22, %cst_28 {dimension_numbers = #tpu.dot_dimension_numbers<[1], [0], [0], [1], [0, 0, 1, 1], [], []>} : vector<256x384xbf16>, vector<384x128xbf16>, vector<256x128xf32> -> vector<256x128xf32>
    %24 = arith.addf %12, %23 : vector<256x128xf32>
    %c0_29 = arith.constant 0 : index
    %c2_30 = arith.constant 2 : index
    %c0_31 = arith.constant 0 : index
    %c0_32 = arith.constant 0 : index
    %25 = vector.load %arg1[%c0_29, %c2_30, %c0_31, %c0_32] : memref<1x18x18x128xbf16, #tpu.memory_space<vmem>>, vector<1x16x16x128xbf16>
    %26 = vector.shape_cast %25 : vector<1x16x16x128xbf16> to vector<16x16x128xbf16>
    %c0_33 = arith.constant 0 : index
    %c2_34 = arith.constant 2 : index
    %c1_35 = arith.constant 1 : index
    %c0_36 = arith.constant 0 : index
    %27 = vector.load %arg1[%c0_33, %c2_34, %c1_35, %c0_36] : memref<1x18x18x128xbf16, #tpu.memory_space<vmem>>, vector<1x16x16x128xbf16>
    %28 = vector.shape_cast %27 : vector<1x16x16x128xbf16> to vector<16x16x128xbf16>
    %c0_37 = arith.constant 0 : index
    %c2_38 = arith.constant 2 : index
    %c2_39 = arith.constant 2 : index
    %c0_40 = arith.constant 0 : index
    %29 = vector.load %arg1[%c0_37, %c2_38, %c2_39, %c0_40] : memref<1x18x18x128xbf16, #tpu.memory_space<vmem>>, vector<1x16x16x128xbf16>
    %30 = vector.shape_cast %29 : vector<1x16x16x128xbf16> to vector<16x16x128xbf16>
    %31 = tpu.concatenate %26, %28, %30 in 2 : vector<16x16x128xbf16>, vector<16x16x128xbf16>, vector<16x16x128xbf16> -> vector<16x16x384xbf16>
    %32 = vector.shape_cast %31 : vector<16x16x384xbf16> to vector<256x384xbf16>
    %c2_41 = arith.constant 2 : index
    %c0_42 = arith.constant 0 : index
    %c0_43 = arith.constant 0 : index
    %33 = vector.load %arg3[%c2_41, %c0_42, %c0_43] : memref<3x384x128xbf16, #tpu.memory_space<vmem>>, vector<1x384x128xbf16>
    %34 = vector.shape_cast %33 : vector<1x384x128xbf16> to vector<384x128xbf16>
    %cst_44 = arith.constant dense<0.000000e+00> : vector<256x128xf32>
    %35 = tpu.matmul %32, %34, %cst_44 {dimension_numbers = #tpu.dot_dimension_numbers<[1], [0], [0], [1], [0, 0, 1, 1], [], []>} : vector<256x384xbf16>, vector<384x128xbf16>, vector<256x128xf32> -> vector<256x128xf32>
    %36 = arith.addf %24, %35 : vector<256x128xf32>
    %37 = vector.shape_cast %36 : vector<256x128xf32> to vector<16x16x128xf32>
    %38 = arith.truncf %37 : vector<16x16x128xf32> to vector<16x16x128xbf16>
    %c0_45 = arith.constant 0 : index
    %c0_46 = arith.constant 0 : index
    %c0_47 = arith.constant 0 : index
    %c0_48 = arith.constant 0 : index
    %39 = vector.load %arg5[%c0_45, %c0_46, %c0_47, %c0_48] : memref<1x16x16x128xbf16, #tpu.memory_space<vmem>>, vector<1x16x16x128xbf16>
    %40 = vector.shape_cast %39 : vector<1x16x16x128xbf16> to vector<16x16x128xbf16>
    %41 = vector.shape_cast %38 : vector<16x16x128xbf16> to vector<1x16x16x128xbf16>
    tpu.vector_store %arg5[%c0_45, %c0_46, %c0_47, %c0_48], %41 {strides = array<i32>} : memref<1x16x16x128xbf16, #tpu.memory_space<vmem>>, vector<1x16x16x128xbf16>,
    %cst_49 = arith.constant dense<0.000000e+00> : vector<128xf32>
    %42 = vector.multi_reduction <add>, %36, %cst_49 [0] : vector<256x128xf32> to vector<128xf32>
    %43 = vector.shape_cast %42 : vector<128xf32> to vector<1x128xf32>
    %c0_50 = arith.constant 0 : index
    %c0_51 = arith.constant 0 : index
    %c0_52 = arith.constant 0 : index
    %44 = vector.load %arg6[%c0_50, %c0_51, %c0_52] : memref<1x2x128xf32, #tpu.memory_space<vmem>>, vector<1x1x128xf32>
    %45 = vector.shape_cast %44 : vector<1x1x128xf32> to vector<1x128xf32>
    %46 = vector.shape_cast %43 : vector<1x128xf32> to vector<1x1x128xf32>
    tpu.vector_store %arg6[%c0_50, %c0_51, %c0_52], %46 {strides = array<i32>} : memref<1x2x128xf32, #tpu.memory_space<vmem>>, vector<1x1x128xf32>,
    %47 = arith.mulf %36, %36 : vector<256x128xf32>
    %cst_53 = arith.constant dense<0.000000e+00> : vector<128xf32>
    %48 = vector.multi_reduction <add>, %47, %cst_53 [0] : vector<256x128xf32> to vector<128xf32>
    %49 = vector.shape_cast %48 : vector<128xf32> to vector<1x128xf32>
    %c0_54 = arith.constant 0 : index
    %c1_55 = arith.constant 1 : index
    %c0_56 = arith.constant 0 : index
    %50 = vector.load %arg6[%c0_54, %c1_55, %c0_56] : memref<1x2x128xf32, #tpu.memory_space<vmem>>, vector<1x1x128xf32>
    %51 = vector.shape_cast %50 : vector<1x1x128xf32> to vector<1x128xf32>
    %52 = vector.shape_cast %49 : vector<1x128xf32> to vector<1x1x128xf32>
    tpu.vector_store %arg6[%c0_54, %c1_55, %c0_56], %52 {strides = array<i32>} : memref<1x2x128xf32, #tpu.memory_space<vmem>>, vector<1x1x128xf32>,
    %c0_57 = arith.constant 0 : index
    %c0_58 = arith.constant 0 : index
    %c0_59 = arith.constant 0 : index
    %c0_60 = arith.constant 0 : index
    %53 = vector.load %arg2[%c0_57, %c0_58, %c0_59, %c0_60] : memref<1x16x16x128xbf16, #tpu.memory_space<vmem>>, vector<1x16x16x128xbf16>
    %54 = vector.shape_cast %53 : vector<1x16x16x128xbf16> to vector<16x16x128xbf16>
    %55 = vector.shape_cast %54 : vector<16x16x128xbf16> to vector<256x128xbf16>
    %c0_61 = arith.constant 0 : index
    %c0_62 = arith.constant 0 : index
    %56 = vector.load %arg4[%c0_61, %c0_62] : memref<128x128xbf16, #tpu.memory_space<vmem>>, vector<128x128xbf16>
    %cst_63 = arith.constant dense<0.000000e+00> : vector<256x128xf32>
    %57 = tpu.matmul %55, %56, %cst_63 {dimension_numbers = #tpu.dot_dimension_numbers<[1], [0], [0], [1], [0, 0, 1, 1], [], []>} : vector<256x128xbf16>, vector<128x128xbf16>, vector<256x128xf32> -> vector<256x128xf32>
    %cst_64 = arith.constant dense<0.000000e+00> : vector<128xf32>
    %58 = vector.multi_reduction <add>, %57, %cst_64 [0] : vector<256x128xf32> to vector<128xf32>
    %59 = vector.shape_cast %58 : vector<128xf32> to vector<1x128xf32>
    %c0_65 = arith.constant 0 : index
    %c0_66 = arith.constant 0 : index
    %c0_67 = arith.constant 0 : index
    %60 = vector.load %arg7[%c0_65, %c0_66, %c0_67] : memref<1x2x128xf32, #tpu.memory_space<vmem>>, vector<1x1x128xf32>
    %61 = vector.shape_cast %60 : vector<1x1x128xf32> to vector<1x128xf32>
    %62 = vector.shape_cast %59 : vector<1x128xf32> to vector<1x1x128xf32>
    tpu.vector_store %arg7[%c0_65, %c0_66, %c0_67], %62 {strides = array<i32>} : memref<1x2x128xf32, #tpu.memory_space<vmem>>, vector<1x1x128xf32>,
    %63 = arith.mulf %57, %57 : vector<256x128xf32>
    %cst_68 = arith.constant dense<0.000000e+00> : vector<128xf32>
    %64 = vector.multi_reduction <add>, %63, %cst_68 [0] : vector<256x128xf32> to vector<128xf32>
    %65 = vector.shape_cast %64 : vector<128xf32> to vector<1x128xf32>
    %c0_69 = arith.constant 0 : index
    %c1_70 = arith.constant 1 : index
    %c0_71 = arith.constant 0 : index
    %66 = vector.load %arg7[%c0_69, %c1_70, %c0_71] : memref<1x2x128xf32, #tpu.memory_space<vmem>>, vector<1x1x128xf32>
    %67 = vector.shape_cast %66 : vector<1x1x128xf32> to vector<1x128xf32>
    %68 = vector.shape_cast %65 : vector<1x128xf32> to vector<1x1x128xf32>
    tpu.vector_store %arg7[%c0_69, %c1_70, %c0_71], %68 {strides = array<i32>} : memref<1x2x128xf32, #tpu.memory_space<vmem>>, vector<1x1x128xf32>,
    return
  }
  func.func @transform_0(%arg0: i32) -> (i32, i32, i32, i32) {
    %c0_i32 = arith.constant 0 : i32
    %c0_i32_0 = arith.constant 0 : i32
    %c0_i32_1 = arith.constant 0 : i32
    %c0_i32_2 = arith.constant 0 : i32
    return %arg0, %c0_i32, %c0_i32_0, %c0_i32_1 : i32, i32, i32, i32
  }
  func.func @transform_1(%arg0: i32) -> (i32, i32, i32, i32) {
    %c0_i32 = arith.constant 0 : i32
    %c0_i32_0 = arith.constant 0 : i32
    %c0_i32_1 = arith.constant 0 : i32
    %c0_i32_2 = arith.constant 0 : i32
    return %arg0, %c0_i32, %c0_i32_0, %c0_i32_1 : i32, i32, i32, i32
  }
  func.func @transform_2(%arg0: i32) -> (i32, i32, i32) {
    %c0_i32 = arith.constant 0 : i32
    %c0_i32_0 = arith.constant 0 : i32
    %c0_i32_1 = arith.constant 0 : i32
    %c0_i32_2 = arith.constant 0 : i32
    return %c0_i32, %c0_i32_0, %c0_i32_1 : i32, i32, i32
  }
  func.func @transform_3(%arg0: i32) -> (i32, i32) {
    %c0_i32 = arith.constant 0 : i32
    %c0_i32_0 = arith.constant 0 : i32
    %c0_i32_1 = arith.constant 0 : i32
    return %c0_i32, %c0_i32_0 : i32, i32
  }
  func.func @transform_4(%arg0: i32) -> (i32, i32, i32, i32) {
    %c0_i32 = arith.constant 0 : i32
    %c0_i32_0 = arith.constant 0 : i32
    %c0_i32_1 = arith.constant 0 : i32
    %c0_i32_2 = arith.constant 0 : i32
    return %arg0, %c0_i32, %c0_i32_0, %c0_i32_1 : i32, i32, i32, i32
  }
  func.func @transform_5(%arg0: i32) -> (i32, i32, i32) {
    %c0_i32 = arith.constant 0 : i32
    %c0_i32_0 = arith.constant 0 : i32
    %c0_i32_1 = arith.constant 0 : i32
    return %arg0, %c0_i32, %c0_i32_0 : i32, i32, i32
  }
  func.func @transform_6(%arg0: i32) -> (i32, i32, i32) {
    %c0_i32 = arith.constant 0 : i32
    %c0_i32_0 = arith.constant 0 : i32
    %c0_i32_1 = arith.constant 0 : i32
    return %arg0, %c0_i32, %c0_i32_0 : i32, i32, i32
  }
}

module attributes {stable_mosaic.version = 11 : i64} {
  func.func @kernel_c(%arg0: i32, %arg1: memref<1x16x16x128xbf16, #tpu.memory_space<vmem>>, %arg2: memref<1x16x16x128xbf16, #tpu.memory_space<vmem>>, %arg3: memref<128x128xbf16, #tpu.memory_space<vmem>>, %arg4: memref<1x128xf32, #tpu.memory_space<vmem>>, %arg5: memref<1x128xf32, #tpu.memory_space<vmem>>, %arg6: memref<1x128xf32, #tpu.memory_space<vmem>>, %arg7: memref<1x128xf32, #tpu.memory_space<vmem>>, %arg8: memref<1x16x16x128xf32, #tpu.memory_space<vmem>>) attributes {dimension_semantics = [#tpu.dimension_semantics<parallel>], iteration_bounds = array<i64: 2>, scalar_prefetch = 0 : i64, scratch_operands = 0 : i64, tpu.core_type = #tpu.core_type<tc>, window_params = [{transform_indices = @transform_0, window_bounds = array<i64: 1, 16, 16, 128>}, {transform_indices = @transform_1, window_bounds = array<i64: 1, 16, 16, 128>}, {pipeline_mode = #tpu.pipeline_mode<synchronous>, transform_indices = @transform_2, window_bounds = array<i64: 128, 128>}, {pipeline_mode = #tpu.pipeline_mode<synchronous>, transform_indices = @transform_3, window_bounds = array<i64: 1, 128>}, {pipeline_mode = #tpu.pipeline_mode<synchronous>, transform_indices = @transform_4, window_bounds = array<i64: 1, 128>}, {pipeline_mode = #tpu.pipeline_mode<synchronous>, transform_indices = @transform_5, window_bounds = array<i64: 1, 128>}, {pipeline_mode = #tpu.pipeline_mode<synchronous>, transform_indices = @transform_6, window_bounds = array<i64: 1, 128>}, {transform_indices = @transform_7, window_bounds = array<i64: 1, 16, 16, 128>}]} {
    %c0 = arith.constant 0 : index
    %c0_0 = arith.constant 0 : index
    %c0_1 = arith.constant 0 : index
    %c0_2 = arith.constant 0 : index
    %0 = vector.load %arg2[%c0, %c0_0, %c0_1, %c0_2] : memref<1x16x16x128xbf16, #tpu.memory_space<vmem>>, vector<1x16x16x128xbf16>
    %1 = vector.shape_cast %0 : vector<1x16x16x128xbf16> to vector<16x16x128xbf16>
    %2 = vector.shape_cast %1 : vector<16x16x128xbf16> to vector<256x128xbf16>
    %c0_3 = arith.constant 0 : index
    %c0_4 = arith.constant 0 : index
    %3 = vector.load %arg3[%c0_3, %c0_4] : memref<128x128xbf16, #tpu.memory_space<vmem>>, vector<128x128xbf16>
    %cst = arith.constant dense<0.000000e+00> : vector<256x128xf32>
    %4 = tpu.matmul %2, %3, %cst {dimension_numbers = #tpu.dot_dimension_numbers<[1], [0], [0], [1], [0, 0, 1, 1], [], []>} : vector<256x128xbf16>, vector<128x128xbf16>, vector<256x128xf32> -> vector<256x128xf32>
    %c0_5 = arith.constant 0 : index
    %c0_6 = arith.constant 0 : index
    %5 = vector.load %arg6[%c0_5, %c0_6] : memref<1x128xf32, #tpu.memory_space<vmem>>, vector<1x128xf32>
    %6 = vector.broadcast %5 : vector<1x128xf32> to vector<256x128xf32>
    %7 = arith.mulf %4, %6 : vector<256x128xf32>
    %c0_7 = arith.constant 0 : index
    %c0_8 = arith.constant 0 : index
    %8 = vector.load %arg7[%c0_7, %c0_8] : memref<1x128xf32, #tpu.memory_space<vmem>>, vector<1x128xf32>
    %9 = vector.broadcast %8 : vector<1x128xf32> to vector<256x128xf32>
    %10 = arith.addf %7, %9 : vector<256x128xf32>
    %11 = vector.shape_cast %10 : vector<256x128xf32> to vector<16x16x128xf32>
    %c0_9 = arith.constant 0 : index
    %c0_10 = arith.constant 0 : index
    %c0_11 = arith.constant 0 : index
    %c0_12 = arith.constant 0 : index
    %12 = vector.load %arg1[%c0_9, %c0_10, %c0_11, %c0_12] : memref<1x16x16x128xbf16, #tpu.memory_space<vmem>>, vector<1x16x16x128xbf16>
    %13 = vector.shape_cast %12 : vector<1x16x16x128xbf16> to vector<16x16x128xbf16>
    %14 = arith.extf %13 : vector<16x16x128xbf16> to vector<16x16x128xf32>
    %c0_13 = arith.constant 0 : index
    %c0_14 = arith.constant 0 : index
    %15 = vector.load %arg4[%c0_13, %c0_14] : memref<1x128xf32, #tpu.memory_space<vmem>>, vector<1x128xf32>
    %16 = vector.shape_cast %15 : vector<1x128xf32> to vector<1x1x128xf32>
    %17 = vector.broadcast %16 : vector<1x1x128xf32> to vector<16x16x128xf32>
    %18 = arith.mulf %14, %17 : vector<16x16x128xf32>
    %c0_15 = arith.constant 0 : index
    %c0_16 = arith.constant 0 : index
    %19 = vector.load %arg5[%c0_15, %c0_16] : memref<1x128xf32, #tpu.memory_space<vmem>>, vector<1x128xf32>
    %20 = vector.shape_cast %19 : vector<1x128xf32> to vector<1x1x128xf32>
    %21 = vector.broadcast %20 : vector<1x1x128xf32> to vector<16x16x128xf32>
    %22 = arith.addf %18, %21 : vector<16x16x128xf32>
    %23 = arith.addf %22, %11 : vector<16x16x128xf32>
    %cst_17 = arith.constant 0.000000e+00 : f32
    %24 = vector.broadcast %cst_17 : f32 to vector<16x16x128xf32>
    %25 = arith.maximumf %23, %24 : vector<16x16x128xf32>
    %c0_18 = arith.constant 0 : index
    %c0_19 = arith.constant 0 : index
    %c0_20 = arith.constant 0 : index
    %c0_21 = arith.constant 0 : index
    %26 = vector.load %arg8[%c0_18, %c0_19, %c0_20, %c0_21] : memref<1x16x16x128xf32, #tpu.memory_space<vmem>>, vector<1x16x16x128xf32>
    %27 = vector.shape_cast %26 : vector<1x16x16x128xf32> to vector<16x16x128xf32>
    %28 = vector.shape_cast %25 : vector<16x16x128xf32> to vector<1x16x16x128xf32>
    tpu.vector_store %arg8[%c0_18, %c0_19, %c0_20, %c0_21], %28 {strides = array<i32>} : memref<1x16x16x128xf32, #tpu.memory_space<vmem>>, vector<1x16x16x128xf32>,
    return
  }
  func.func @transform_0(%arg0: i32) -> (i32, i32, i32, i32) {
    %c0_i32 = arith.constant 0 : i32
    %c0_i32_0 = arith.constant 0 : i32
    %c0_i32_1 = arith.constant 0 : i32
    %c0_i32_2 = arith.constant 0 : i32
    return %arg0, %c0_i32, %c0_i32_0, %c0_i32_1 : i32, i32, i32, i32
  }
  func.func @transform_1(%arg0: i32) -> (i32, i32, i32, i32) {
    %c0_i32 = arith.constant 0 : i32
    %c0_i32_0 = arith.constant 0 : i32
    %c0_i32_1 = arith.constant 0 : i32
    %c0_i32_2 = arith.constant 0 : i32
    return %arg0, %c0_i32, %c0_i32_0, %c0_i32_1 : i32, i32, i32, i32
  }
  func.func @transform_2(%arg0: i32) -> (i32, i32) {
    %c0_i32 = arith.constant 0 : i32
    %c0_i32_0 = arith.constant 0 : i32
    %c0_i32_1 = arith.constant 0 : i32
    return %c0_i32, %c0_i32_0 : i32, i32
  }
  func.func @transform_3(%arg0: i32) -> (i32, i32) {
    %c0_i32 = arith.constant 0 : i32
    %c0_i32_0 = arith.constant 0 : i32
    %c0_i32_1 = arith.constant 0 : i32
    return %c0_i32, %c0_i32_0 : i32, i32
  }
  func.func @transform_4(%arg0: i32) -> (i32, i32) {
    %c0_i32 = arith.constant 0 : i32
    %c0_i32_0 = arith.constant 0 : i32
    %c0_i32_1 = arith.constant 0 : i32
    return %c0_i32, %c0_i32_0 : i32, i32
  }
  func.func @transform_5(%arg0: i32) -> (i32, i32) {
    %c0_i32 = arith.constant 0 : i32
    %c0_i32_0 = arith.constant 0 : i32
    %c0_i32_1 = arith.constant 0 : i32
    return %c0_i32, %c0_i32_0 : i32, i32
  }
  func.func @transform_6(%arg0: i32) -> (i32, i32) {
    %c0_i32 = arith.constant 0 : i32
    %c0_i32_0 = arith.constant 0 : i32
    %c0_i32_1 = arith.constant 0 : i32
    return %c0_i32, %c0_i32_0 : i32, i32
  }
  func.func @transform_7(%arg0: i32) -> (i32, i32, i32, i32) {
    %c0_i32 = arith.constant 0 : i32
    %c0_i32_0 = arith.constant 0 : i32
    %c0_i32_1 = arith.constant 0 : i32
    %c0_i32_2 = arith.constant 0 : i32
    return %arg0, %c0_i32, %c0_i32_0, %c0_i32_1 : i32, i32, i32, i32
  }
}

module attributes {stable_mosaic.version = 11 : i64} {
  func.func @kernel_b(%arg0: i32, %arg1: memref<1x16x16x128xbf16, #tpu.memory_space<vmem>>, %arg2: memref<1x128xf32, #tpu.memory_space<vmem>>, %arg3: memref<1x128xf32, #tpu.memory_space<vmem>>, %arg4: memref<3x384x128xbf16, #tpu.memory_space<vmem>>, %arg5: memref<1x16x16x128xbf16, #tpu.memory_space<vmem>>, %arg6: memref<1x2x128xf32, #tpu.memory_space<vmem>>, %arg7: memref<18x20x128xbf16, #tpu.memory_space<vmem>>) attributes {dimension_semantics = [#tpu.dimension_semantics<parallel>], iteration_bounds = array<i64: 2>, scalar_prefetch = 0 : i64, scratch_operands = 1 : i64, tpu.core_type = #tpu.core_type<tc>, window_params = [{transform_indices = @transform_0, window_bounds = array<i64: 1, 16, 16, 128>}, {pipeline_mode = #tpu.pipeline_mode<synchronous>, transform_indices = @transform_1, window_bounds = array<i64: 1, 128>}, {pipeline_mode = #tpu.pipeline_mode<synchronous>, transform_indices = @transform_2, window_bounds = array<i64: 1, 128>}, {pipeline_mode = #tpu.pipeline_mode<synchronous>, transform_indices = @transform_3, window_bounds = array<i64: 3, 384, 128>}, {transform_indices = @transform_4, window_bounds = array<i64: 1, 16, 16, 128>}, {transform_indices = @transform_5, window_bounds = array<i64: 1, 2, 128>}]} {
    %c0 = arith.constant 0 : index
    %c0_0 = arith.constant 0 : index
    %c0_1 = arith.constant 0 : index
    %c0_2 = arith.constant 0 : index
    %0 = vector.load %arg1[%c0, %c0_0, %c0_1, %c0_2] : memref<1x16x16x128xbf16, #tpu.memory_space<vmem>>, vector<1x16x16x128xbf16>
    %1 = vector.shape_cast %0 : vector<1x16x16x128xbf16> to vector<16x16x128xbf16>
    %2 = arith.extf %1 : vector<16x16x128xbf16> to vector<16x16x128xf32>
    %c0_3 = arith.constant 0 : index
    %c0_4 = arith.constant 0 : index
    %3 = vector.load %arg2[%c0_3, %c0_4] : memref<1x128xf32, #tpu.memory_space<vmem>>, vector<1x128xf32>
    %4 = vector.shape_cast %3 : vector<1x128xf32> to vector<1x1x128xf32>
    %5 = vector.broadcast %4 : vector<1x1x128xf32> to vector<16x16x128xf32>
    %6 = arith.mulf %2, %5 : vector<16x16x128xf32>
    %c0_5 = arith.constant 0 : index
    %c0_6 = arith.constant 0 : index
    %7 = vector.load %arg3[%c0_5, %c0_6] : memref<1x128xf32, #tpu.memory_space<vmem>>, vector<1x128xf32>
    %8 = vector.shape_cast %7 : vector<1x128xf32> to vector<1x1x128xf32>
    %9 = vector.broadcast %8 : vector<1x1x128xf32> to vector<16x16x128xf32>
    %10 = arith.addf %6, %9 : vector<16x16x128xf32>
    %cst = arith.constant 0.000000e+00 : f32
    %11 = vector.broadcast %cst : f32 to vector<16x16x128xf32>
    %12 = arith.maximumf %10, %11 : vector<16x16x128xf32>
    %cst_7 = arith.constant 0.000000e+00 : bf16
    %13 = vector.broadcast %cst_7 : bf16 to vector<1x20x128xbf16>
    %cst_8 = arith.constant 0.000000e+00 : bf16
    %14 = vector.broadcast %cst_8 : bf16 to vector<16x2x128xbf16>
    %c0_9 = arith.constant 0 : index
    %c0_10 = arith.constant 0 : index
    %c0_11 = arith.constant 0 : index
    %15 = vector.load %arg7[%c0_9, %c0_10, %c0_11] : memref<18x20x128xbf16, #tpu.memory_space<vmem>>, vector<1x20x128xbf16>
    tpu.vector_store %arg7[%c0_9, %c0_10, %c0_11], %13 {strides = array<i32>} : memref<18x20x128xbf16, #tpu.memory_space<vmem>>, vector<1x20x128xbf16>,
    %c17 = arith.constant 17 : index
    %c0_12 = arith.constant 0 : index
    %c0_13 = arith.constant 0 : index
    %16 = vector.load %arg7[%c17, %c0_12, %c0_13] : memref<18x20x128xbf16, #tpu.memory_space<vmem>>, vector<1x20x128xbf16>
    tpu.vector_store %arg7[%c17, %c0_12, %c0_13], %13 {strides = array<i32>} : memref<18x20x128xbf16, #tpu.memory_space<vmem>>, vector<1x20x128xbf16>,
    %c1 = arith.constant 1 : index
    %c0_14 = arith.constant 0 : index
    %c0_15 = arith.constant 0 : index
    %17 = vector.load %arg7[%c1, %c0_14, %c0_15] : memref<18x20x128xbf16, #tpu.memory_space<vmem>>, vector<16x2x128xbf16>
    tpu.vector_store %arg7[%c1, %c0_14, %c0_15], %14 {strides = array<i32>} : memref<18x20x128xbf16, #tpu.memory_space<vmem>>, vector<16x2x128xbf16>,
    %c1_16 = arith.constant 1 : index
    %c18 = arith.constant 18 : index
    %c0_17 = arith.constant 0 : index
    %18 = vector.load %arg7[%c1_16, %c18, %c0_17] : memref<18x20x128xbf16, #tpu.memory_space<vmem>>, vector<16x2x128xbf16>
    tpu.vector_store %arg7[%c1_16, %c18, %c0_17], %14 {strides = array<i32>} : memref<18x20x128xbf16, #tpu.memory_space<vmem>>, vector<16x2x128xbf16>,
    %19 = arith.truncf %12 : vector<16x16x128xf32> to vector<16x16x128xbf16>
    %c1_18 = arith.constant 1 : index
    %c2 = arith.constant 2 : index
    %c0_19 = arith.constant 0 : index
    %20 = vector.load %arg7[%c1_18, %c2, %c0_19] : memref<18x20x128xbf16, #tpu.memory_space<vmem>>, vector<16x16x128xbf16>
    tpu.vector_store %arg7[%c1_18, %c2, %c0_19], %19 {strides = array<i32>} : memref<18x20x128xbf16, #tpu.memory_space<vmem>>, vector<16x16x128xbf16>,
    %cst_20 = arith.constant 0.000000e+00 : f32
    %21 = vector.broadcast %cst_20 : f32 to vector<256x128xf32>
    %c0_21 = arith.constant 0 : index
    %c1_22 = arith.constant 1 : index
    %c0_23 = arith.constant 0 : index
    %22 = vector.load %arg7[%c0_21, %c1_22, %c0_23] : memref<18x20x128xbf16, #tpu.memory_space<vmem>>, vector<16x16x128xbf16>
    %c0_24 = arith.constant 0 : index
    %c2_25 = arith.constant 2 : index
    %c0_26 = arith.constant 0 : index
    %23 = vector.load %arg7[%c0_24, %c2_25, %c0_26] : memref<18x20x128xbf16, #tpu.memory_space<vmem>>, vector<16x16x128xbf16>
    %c0_27 = arith.constant 0 : index
    %c3 = arith.constant 3 : index
    %c0_28 = arith.constant 0 : index
    %24 = vector.load %arg7[%c0_27, %c3, %c0_28] : memref<18x20x128xbf16, #tpu.memory_space<vmem>>, vector<16x16x128xbf16>
    %25 = tpu.concatenate %22, %23, %24 in 2 : vector<16x16x128xbf16>, vector<16x16x128xbf16>, vector<16x16x128xbf16> -> vector<16x16x384xbf16>
    %26 = vector.shape_cast %25 : vector<16x16x384xbf16> to vector<256x384xbf16>
    %c0_29 = arith.constant 0 : index
    %c0_30 = arith.constant 0 : index
    %c0_31 = arith.constant 0 : index
    %27 = vector.load %arg4[%c0_29, %c0_30, %c0_31] : memref<3x384x128xbf16, #tpu.memory_space<vmem>>, vector<1x384x128xbf16>
    %28 = vector.shape_cast %27 : vector<1x384x128xbf16> to vector<384x128xbf16>
    %cst_32 = arith.constant dense<0.000000e+00> : vector<256x128xf32>
    %29 = tpu.matmul %26, %28, %cst_32 {dimension_numbers = #tpu.dot_dimension_numbers<[1], [0], [0], [1], [0, 0, 1, 1], [], []>} : vector<256x384xbf16>, vector<384x128xbf16>, vector<256x128xf32> -> vector<256x128xf32>
    %30 = arith.addf %21, %29 : vector<256x128xf32>
    %c1_33 = arith.constant 1 : index
    %c1_34 = arith.constant 1 : index
    %c0_35 = arith.constant 0 : index
    %31 = vector.load %arg7[%c1_33, %c1_34, %c0_35] : memref<18x20x128xbf16, #tpu.memory_space<vmem>>, vector<16x16x128xbf16>
    %c1_36 = arith.constant 1 : index
    %c2_37 = arith.constant 2 : index
    %c0_38 = arith.constant 0 : index
    %32 = vector.load %arg7[%c1_36, %c2_37, %c0_38] : memref<18x20x128xbf16, #tpu.memory_space<vmem>>, vector<16x16x128xbf16>
    %c1_39 = arith.constant 1 : index
    %c3_40 = arith.constant 3 : index
    %c0_41 = arith.constant 0 : index
    %33 = vector.load %arg7[%c1_39, %c3_40, %c0_41] : memref<18x20x128xbf16, #tpu.memory_space<vmem>>, vector<16x16x128xbf16>
    %34 = tpu.concatenate %31, %32, %33 in 2 : vector<16x16x128xbf16>, vector<16x16x128xbf16>, vector<16x16x128xbf16> -> vector<16x16x384xbf16>
    %35 = vector.shape_cast %34 : vector<16x16x384xbf16> to vector<256x384xbf16>
    %c1_42 = arith.constant 1 : index
    %c0_43 = arith.constant 0 : index
    %c0_44 = arith.constant 0 : index
    %36 = vector.load %arg4[%c1_42, %c0_43, %c0_44] : memref<3x384x128xbf16, #tpu.memory_space<vmem>>, vector<1x384x128xbf16>
    %37 = vector.shape_cast %36 : vector<1x384x128xbf16> to vector<384x128xbf16>
    %cst_45 = arith.constant dense<0.000000e+00> : vector<256x128xf32>
    %38 = tpu.matmul %35, %37, %cst_45 {dimension_numbers = #tpu.dot_dimension_numbers<[1], [0], [0], [1], [0, 0, 1, 1], [], []>} : vector<256x384xbf16>, vector<384x128xbf16>, vector<256x128xf32> -> vector<256x128xf32>
    %39 = arith.addf %30, %38 : vector<256x128xf32>
    %c2_46 = arith.constant 2 : index
    %c1_47 = arith.constant 1 : index
    %c0_48 = arith.constant 0 : index
    %40 = vector.load %arg7[%c2_46, %c1_47, %c0_48] : memref<18x20x128xbf16, #tpu.memory_space<vmem>>, vector<16x16x128xbf16>
    %c2_49 = arith.constant 2 : index
    %c2_50 = arith.constant 2 : index
    %c0_51 = arith.constant 0 : index
    %41 = vector.load %arg7[%c2_49, %c2_50, %c0_51] : memref<18x20x128xbf16, #tpu.memory_space<vmem>>, vector<16x16x128xbf16>
    %c2_52 = arith.constant 2 : index
    %c3_53 = arith.constant 3 : index
    %c0_54 = arith.constant 0 : index
    %42 = vector.load %arg7[%c2_52, %c3_53, %c0_54] : memref<18x20x128xbf16, #tpu.memory_space<vmem>>, vector<16x16x128xbf16>
    %43 = tpu.concatenate %40, %41, %42 in 2 : vector<16x16x128xbf16>, vector<16x16x128xbf16>, vector<16x16x128xbf16> -> vector<16x16x384xbf16>
    %44 = vector.shape_cast %43 : vector<16x16x384xbf16> to vector<256x384xbf16>
    %c2_55 = arith.constant 2 : index
    %c0_56 = arith.constant 0 : index
    %c0_57 = arith.constant 0 : index
    %45 = vector.load %arg4[%c2_55, %c0_56, %c0_57] : memref<3x384x128xbf16, #tpu.memory_space<vmem>>, vector<1x384x128xbf16>
    %46 = vector.shape_cast %45 : vector<1x384x128xbf16> to vector<384x128xbf16>
    %cst_58 = arith.constant dense<0.000000e+00> : vector<256x128xf32>
    %47 = tpu.matmul %44, %46, %cst_58 {dimension_numbers = #tpu.dot_dimension_numbers<[1], [0], [0], [1], [0, 0, 1, 1], [], []>} : vector<256x384xbf16>, vector<384x128xbf16>, vector<256x128xf32> -> vector<256x128xf32>
    %48 = arith.addf %39, %47 : vector<256x128xf32>
    %49 = vector.shape_cast %48 : vector<256x128xf32> to vector<16x16x128xf32>
    %50 = arith.truncf %49 : vector<16x16x128xf32> to vector<16x16x128xbf16>
    %c0_59 = arith.constant 0 : index
    %c0_60 = arith.constant 0 : index
    %c0_61 = arith.constant 0 : index
    %c0_62 = arith.constant 0 : index
    %51 = vector.load %arg5[%c0_59, %c0_60, %c0_61, %c0_62] : memref<1x16x16x128xbf16, #tpu.memory_space<vmem>>, vector<1x16x16x128xbf16>
    %52 = vector.shape_cast %51 : vector<1x16x16x128xbf16> to vector<16x16x128xbf16>
    %53 = vector.shape_cast %50 : vector<16x16x128xbf16> to vector<1x16x16x128xbf16>
    tpu.vector_store %arg5[%c0_59, %c0_60, %c0_61, %c0_62], %53 {strides = array<i32>} : memref<1x16x16x128xbf16, #tpu.memory_space<vmem>>, vector<1x16x16x128xbf16>,
    %cst_63 = arith.constant dense<0.000000e+00> : vector<128xf32>
    %54 = vector.multi_reduction <add>, %48, %cst_63 [0] : vector<256x128xf32> to vector<128xf32>
    %55 = vector.shape_cast %54 : vector<128xf32> to vector<1x128xf32>
    %c0_64 = arith.constant 0 : index
    %c0_65 = arith.constant 0 : index
    %c0_66 = arith.constant 0 : index
    %56 = vector.load %arg6[%c0_64, %c0_65, %c0_66] : memref<1x2x128xf32, #tpu.memory_space<vmem>>, vector<1x1x128xf32>
    %57 = vector.shape_cast %56 : vector<1x1x128xf32> to vector<1x128xf32>
    %58 = vector.shape_cast %55 : vector<1x128xf32> to vector<1x1x128xf32>
    tpu.vector_store %arg6[%c0_64, %c0_65, %c0_66], %58 {strides = array<i32>} : memref<1x2x128xf32, #tpu.memory_space<vmem>>, vector<1x1x128xf32>,
    %59 = arith.mulf %48, %48 : vector<256x128xf32>
    %cst_67 = arith.constant dense<0.000000e+00> : vector<128xf32>
    %60 = vector.multi_reduction <add>, %59, %cst_67 [0] : vector<256x128xf32> to vector<128xf32>
    %61 = vector.shape_cast %60 : vector<128xf32> to vector<1x128xf32>
    %c0_68 = arith.constant 0 : index
    %c1_69 = arith.constant 1 : index
    %c0_70 = arith.constant 0 : index
    %62 = vector.load %arg6[%c0_68, %c1_69, %c0_70] : memref<1x2x128xf32, #tpu.memory_space<vmem>>, vector<1x1x128xf32>
    %63 = vector.shape_cast %62 : vector<1x1x128xf32> to vector<1x128xf32>
    %64 = vector.shape_cast %61 : vector<1x128xf32> to vector<1x1x128xf32>
    tpu.vector_store %arg6[%c0_68, %c1_69, %c0_70], %64 {strides = array<i32>} : memref<1x2x128xf32, #tpu.memory_space<vmem>>, vector<1x1x128xf32>,
    return
  }
  func.func @transform_0(%arg0: i32) -> (i32, i32, i32, i32) {
    %c0_i32 = arith.constant 0 : i32
    %c0_i32_0 = arith.constant 0 : i32
    %c0_i32_1 = arith.constant 0 : i32
    %c0_i32_2 = arith.constant 0 : i32
    return %arg0, %c0_i32, %c0_i32_0, %c0_i32_1 : i32, i32, i32, i32
  }
  func.func @transform_1(%arg0: i32) -> (i32, i32) {
    %c0_i32 = arith.constant 0 : i32
    %c0_i32_0 = arith.constant 0 : i32
    %c0_i32_1 = arith.constant 0 : i32
    return %c0_i32, %c0_i32_0 : i32, i32
  }
  func.func @transform_2(%arg0: i32) -> (i32, i32) {
    %c0_i32 = arith.constant 0 : i32
    %c0_i32_0 = arith.constant 0 : i32
    %c0_i32_1 = arith.constant 0 : i32
    return %c0_i32, %c0_i32_0 : i32, i32
  }
  func.func @transform_3(%arg0: i32) -> (i32, i32, i32) {
    %c0_i32 = arith.constant 0 : i32
    %c0_i32_0 = arith.constant 0 : i32
    %c0_i32_1 = arith.constant 0 : i32
    %c0_i32_2 = arith.constant 0 : i32
    return %c0_i32, %c0_i32_0, %c0_i32_1 : i32, i32, i32
  }
  func.func @transform_4(%arg0: i32) -> (i32, i32, i32, i32) {
    %c0_i32 = arith.constant 0 : i32
    %c0_i32_0 = arith.constant 0 : i32
    %c0_i32_1 = arith.constant 0 : i32
    %c0_i32_2 = arith.constant 0 : i32
    return %arg0, %c0_i32, %c0_i32_0, %c0_i32_1 : i32, i32, i32, i32
  }
  func.func @transform_5(%arg0: i32) -> (i32, i32, i32) {
    %c0_i32 = arith.constant 0 : i32
    %c0_i32_0 = arith.constant 0 : i32
    %c0_i32_1 = arith.constant 0 : i32
    return %arg0, %c0_i32, %c0_i32_0 : i32, i32, i32
  }
}

</mosaic_0001>

<llo_original>
// kernel: residual_block_forward.5
$region0: #{residual_block_forward.5}
  #allocation0 [shape = 'u32[]', space=smem, size = 0x4, offset = 0x4, fixed_abs, tag = 'smem constant byte address 0x4 - core index']
  #allocation1 [shape = 'u32[72,128]{1,0:T(1,128)}', space=vmem, size = 0x9000, scoped, tag = 'internal scratch']
  %s0 = inlined_call_operand.vmem [shape: bf16[2,16,16,128], index: 0, kind: input, shape index: {}]
  %s1 = inlined_call_operand.vmem [shape: bf16[2,16,16,128], index: 1, kind: input, shape index: {}]
  %s2 = inlined_call_operand.vmem [shape: bf16[128,128], index: 2, kind: input, shape index: {}]
  %s3 = inlined_call_operand.vmem [shape: f32[1,128], index: 3, kind: input, shape index: {}]
  %s4 = inlined_call_operand.vmem [shape: f32[1,128], index: 4, kind: input, shape index: {}]
  %s5 = inlined_call_operand.vmem [shape: f32[1,128], index: 5, kind: input, shape index: {}]
  %s6 = inlined_call_operand.vmem [shape: f32[1,128], index: 6, kind: input, shape index: {}]
  %s7 = inlined_call_operand.vmem [shape: f32[2,16,16,128], index: 7, kind: output, shape index: {}]
  %s8 = sld [smem:[#allocation0]]
  $region61: #{residual_block_forward.5} parent=0
    _
  %s10 = ssub.s32 1, %s8
  %s11 = scalar_select 0, %s10, %s8
  loop: start=0, step=1, limit=4
  $region2: #{residual_block_forward.5} parent=0 // loop_pre_header
    _
  $region3: #{residual_block_forward.5} parent=0 // loop_header
    %s13 = sphi 0, %s17
    %p14 = scmp.ge.s32.totalorder %s13, 4
    %s23 = sphi 0, %s25
    %s26 = sphi 0, %s23
    %s27 = sphi 0, %s26
    %s43 = sphi 0, %s27
    %s49 = sphi 0, %s51
    %s52 = sphi 0, %s49
    %s53 = sphi 0, %s52
    %s69 = sphi 0, %s53
    %s73 = sphi 0, %s73
    %s75 = sphi 0, %s73
    %s76 = sphi 0, %s75
    %s90 = sphi 0, %s76
    %s94 = sphi 0, %s94
    %s96 = sphi 0, %s94
    %s97 = sphi 0, %s96
    %s111 = sphi 0, %s97
    %s115 = sphi 0, %s115
    %s117 = sphi 0, %s115
    %s118 = sphi 0, %s117
    %s132 = sphi 0, %s118
    %s136 = sphi 0, %s136
    %s138 = sphi 0, %s136
    %s139 = sphi 0, %s138
    %s153 = sphi 0, %s139
    %s157 = sphi 0, %s157
    %s159 = sphi 0, %s157
    %s160 = sphi 0, %s159
    %s174 = sphi 0, %s160
    %s180 = sphi 0, %s182
    %s183 = sphi 0, %s180
    %s184 = sphi 0, %s183
    %s200 = sphi 0, %s184
  $region4: #{residual_block_forward.5} parent=0 // loop_header_branch
    %16 = sbr.rel (%p14) target = $region8
  $region5: #{residual_block_forward.5} parent=0 // loop_body
    %s18 = ssub.s32 %s13, 1
    %s19 = ssub.s32 %s13, 2
    %s20 = sadd.s32 %s13, 1
    %s21 = ssub.s32 %s13, %s20
    %p22 = scmp.eq.s32.totalorder %s21, 0
    %s24 = sadd.s32 %s23, 1
    %s25 = scalar_select %p22, %s23, %s24
    %p28 = pneg %p22
    %p29 = scmp.eq.s32.totalorder %s13, 1
    %p30 = por %p28, %p29
    %p31 = scmp.ne.s32.totalorder %s23, %s26
    %p32 = scmp.eq.s32.totalorder %s13, 0
    %p33 = por %p31, %p32
    %p34 = scmp.ne.s32.totalorder %s23, %s26
    %p35 = scmp.eq.s32.totalorder %s18, 1
    %p36 = por %p34, %p35
    %p37 = scmp.ne.s32.totalorder %s26, %s27
    %p38 = scmp.eq.s32.totalorder %s18, 0
    %p39 = por %p37, %p38
    %p40 = scmp.ne.s32.totalorder %s26, %s27
    %p41 = scmp.eq.s32.totalorder %s19, 1
    %p42 = por %p40, %p41
    %p44 = scmp.ne.s32.totalorder %s27, %s43
    %p45 = scmp.eq.s32.totalorder %s19, 0
    %p46 = por %p44, %p45
    %s47 = ssub.s32 %s13, %s20
    %p48 = scmp.eq.s32.totalorder %s47, 0
    %s50 = sadd.s32 %s49, 1
    %s51 = scalar_select %p48, %s49, %s50
    %p54 = pneg %p48
    %p55 = scmp.eq.s32.totalorder %s13, 1
    %p56 = por %p54, %p55
    %p57 = scmp.ne.s32.totalorder %s49, %s52
    %p58 = scmp.eq.s32.totalorder %s13, 0
    %p59 = por %p57, %p58
    %p60 = scmp.ne.s32.totalorder %s49, %s52
    %p61 = scmp.eq.s32.totalorder %s18, 1
    %p62 = por %p60, %p61
    %p63 = scmp.ne.s32.totalorder %s52, %s53
    %p64 = scmp.eq.s32.totalorder %s18, 0
    %p65 = por %p63, %p64
    %p66 = scmp.ne.s32.totalorder %s52, %s53
    %p67 = scmp.eq.s32.totalorder %s19, 1
    %p68 = por %p66, %p67
    %p70 = scmp.ne.s32.totalorder %s53, %s69
    %p71 = scmp.eq.s32.totalorder %s19, 0
    %p72 = por %p70, %p71
    %s74 = sadd.s32 %s73, 1
    %p77 = scmp.eq.s32.totalorder %s13, 1
    %p78 = scmp.ne.s32.totalorder %s73, %s75
    %p79 = scmp.eq.s32.totalorder %s13, 0
    %p80 = por %p78, %p79
    %p81 = scmp.ne.s32.totalorder %s73, %s75
    %p82 = scmp.eq.s32.totalorder %s18, 1
    %p83 = por %p81, %p82
    %p84 = scmp.ne.s32.totalorder %s75, %s76
    %p85 = scmp.eq.s32.totalorder %s18, 0
    %p86 = por %p84, %p85
    %p87 = scmp.ne.s32.totalorder %s75, %s76
    %p88 = scmp.eq.s32.totalorder %s19, 1
    %p89 = por %p87, %p88
    %p91 = scmp.ne.s32.totalorder %s76, %s90
    %p92 = scmp.eq.s32.totalorder %s19, 0
    %p93 = por %p91, %p92
    %s95 = sadd.s32 %s94, 1
    %p98 = scmp.eq.s32.totalorder %s13, 1
    %p99 = scmp.ne.s32.totalorder %s94, %s96
    %p100 = scmp.eq.s32.totalorder %s13, 0
    %p101 = por %p99, %p100
    %p102 = scmp.ne.s32.totalorder %s94, %s96
    %p103 = scmp.eq.s32.totalorder %s18, 1
    %p104 = por %p102, %p103
    %p105 = scmp.ne.s32.totalorder %s96, %s97
    %p106 = scmp.eq.s32.totalorder %s18, 0
    %p107 = por %p105, %p106
    %p108 = scmp.ne.s32.totalorder %s96, %s97
    %p109 = scmp.eq.s32.totalorder %s19, 1
    %p110 = por %p108, %p109
    %p112 = scmp.ne.s32.totalorder %s97, %s111
    %p113 = scmp.eq.s32.totalorder %s19, 0
    %p114 = por %p112, %p113
    %s116 = sadd.s32 %s115, 1
    %p119 = scmp.eq.s32.totalorder %s13, 1
    %p120 = scmp.ne.s32.totalorder %s115, %s117
    %p121 = scmp.eq.s32.totalorder %s13, 0
    %p122 = por %p120, %p121
    %p123 = scmp.ne.s32.totalorder %s115, %s117
    %p124 = scmp.eq.s32.totalorder %s18, 1
    %p125 = por %p123, %p124
    %p126 = scmp.ne.s32.totalorder %s117, %s118
    %p127 = scmp.eq.s32.totalorder %s18, 0
    %p128 = por %p126, %p127
    %p129 = scmp.ne.s32.totalorder %s117, %s118
    %p130 = scmp.eq.s32.totalorder %s19, 1
    %p131 = por %p129, %p130
    %p133 = scmp.ne.s32.totalorder %s118, %s132
    %p134 = scmp.eq.s32.totalorder %s19, 0
    %p135 = por %p133, %p134
    %s137 = sadd.s32 %s136, 1
    %p140 = scmp.eq.s32.totalorder %s13, 1
    %p141 = scmp.ne.s32.totalorder %s136, %s138
    %p142 = scmp.eq.s32.totalorder %s13, 0
    %p143 = por %p141, %p142
    %p144 = scmp.ne.s32.totalorder %s136, %s138
    %p145 = scmp.eq.s32.totalorder %s18, 1
    %p146 = por %p144, %p145
    %p147 = scmp.ne.s32.totalorder %s138, %s139
    %p148 = scmp.eq.s32.totalorder %s18, 0
    %p149 = por %p147, %p148
    %p150 = scmp.ne.s32.totalorder %s138, %s139
    %p151 = scmp.eq.s32.totalorder %s19, 1
    %p152 = por %p150, %p151
    %p154 = scmp.ne.s32.totalorder %s139, %s153
    %p155 = scmp.eq.s32.totalorder %s19, 0
    %p156 = por %p154, %p155
    %s158 = sadd.s32 %s157, 1
    %p161 = scmp.eq.s32.totalorder %s13, 1
    %p162 = scmp.ne.s32.totalorder %s157, %s159
    %p163 = scmp.eq.s32.totalorder %s13, 0
    %p164 = por %p162, %p163
    %p165 = scmp.ne.s32.totalorder %s157, %s159
    %p166 = scmp.eq.s32.totalorder %s18, 1
    %p167 = por %p165, %p166
    %p168 = scmp.ne.s32.totalorder %s159, %s160
    %p169 = scmp.eq.s32.totalorder %s18, 0
    %p170 = por %p168, %p169
    %p171 = scmp.ne.s32.totalorder %s159, %s160
    %p172 = scmp.eq.s32.totalorder %s19, 1
    %p173 = por %p171, %p172
    %p175 = scmp.ne.s32.totalorder %s160, %s174
    %p176 = scmp.eq.s32.totalorder %s19, 0
    %p177 = por %p175, %p176
    %s178 = ssub.s32 %s13, %s20
    %p179 = scmp.eq.s32.totalorder %s178, 0
    %s181 = sadd.s32 %s180, 1
    %s182 = scalar_select %p179, %s180, %s181
    %p185 = pneg %p179
    %p186 = scmp.eq.s32.totalorder %s13, 1
    %p187 = por %p185, %p186
    %p188 = scmp.ne.s32.totalorder %s180, %s183
    %p189 = scmp.eq.s32.totalorder %s13, 0
    %p190 = por %p188, %p189
    %p191 = scmp.ne.s32.totalorder %s180, %s183
    %p192 = scmp.eq.s32.totalorder %s18, 1
    %p193 = por %p191, %p192
    %p194 = scmp.ne.s32.totalorder %s183, %s184
    %p195 = scmp.eq.s32.totalorder %s18, 0
    %p196 = por %p194, %p195
    %p197 = scmp.ne.s32.totalorder %s183, %s184
    %p198 = scmp.eq.s32.totalorder %s19, 1
    %p199 = por %p197, %p198
    %p201 = scmp.ne.s32.totalorder %s184, %s200
    %p202 = scmp.eq.s32.totalorder %s19, 0
    %p203 = por %p201, %p202
    %p204 = scmp.le.s32.totalorder 1, %s13
    %p205 = scmp.lt.s32.totalorder %s13, 3
    %p206 = pnand %p204, %p205
    %p207 = pneg %p206
    // Predicated region
    $region9: #{residual_block_forward.5} parent=5 // pred_check
      _
    $region10: #{residual_block_forward.5} parent=5 // pred_check_branch
      %209 = sbr.rel (%p206) target = $region12
    $region11: #{residual_block_forward.5} parent=5 // pred_region
      %s210 = ssub.s32 %s13, 1
      // Predicated region
      $region13: #{residual_block_forward.5} parent=11 // pred_check
        %p211 = pneg %p86
      $region14: #{residual_block_forward.5} parent=11 // pred_check_branch
        %213 = sbr.rel (%p211) target = $region16
      $region15: #{residual_block_forward.5} parent=11 // pred_region
        _
      $region16: #{residual_block_forward.5} parent=11 // pred_fallthru
        _
      // Predicated region
      $region17: #{residual_block_forward.5} parent=11 // pred_check
        %p214 = pneg %p107
      $region18: #{residual_block_forward.5} parent=11 // pred_check_branch
        %216 = sbr.rel (%p214) target = $region20
      $region19: #{residual_block_forward.5} parent=11 // pred_region
        _
      $region20: #{residual_block_forward.5} parent=11 // pred_fallthru
        _
      // Predicated region
      $region21: #{residual_block_forward.5} parent=11 // pred_check
        %p217 = pneg %p128
      $region22: #{residual_block_forward.5} parent=11 // pred_check_branch
        %219 = sbr.rel (%p217) target = $region24
      $region23: #{residual_block_forward.5} parent=11 // pred_region
        _
      $region24: #{residual_block_forward.5} parent=11 // pred_fallthru
        _
      // Predicated region
      $region25: #{residual_block_forward.5} parent=11 // pred_check
        %p220 = pneg %p149
      $region26: #{residual_block_forward.5} parent=11 // pred_check_branch
        %222 = sbr.rel (%p220) target = $region28
      $region27: #{residual_block_forward.5} parent=11 // pred_region
        _
      $region28: #{residual_block_forward.5} parent=11 // pred_fallthru
        _
      // Predicated region
      $region29: #{residual_block_forward.5} parent=11 // pred_check
        %p223 = pneg %p170
      $region30: #{residual_block_forward.5} parent=11 // pred_check_branch
        %225 = sbr.rel (%p223) target = $region32
      $region31: #{residual_block_forward.5} parent=11 // pred_region
        _
      $region32: #{residual_block_forward.5} parent=11 // pred_fallthru
        _
    $region12: #{residual_block_forward.5} parent=5 // pred_fallthru
      _
    %p226 = scmp.lt.s32.totalorder %s13, 2
    // Predicated region
    $region33: #{residual_block_forward.5} parent=5 // pred_check
      %p227 = pneg %p226
    $region34: #{residual_block_forward.5} parent=5 // pred_check_branch
      %229 = sbr.rel (%p227) target = $region36
    $region35: #{residual_block_forward.5} parent=5 // pred_region
      // Predicated region
      $region37: #{residual_block_forward.5} parent=35 // pred_check
        %p230 = pneg %p33
      $region38: #{residual_block_forward.5} parent=35 // pred_check_branch
        %232 = sbr.rel (%p230) target = $region40
      $region39: #{residual_block_forward.5} parent=35 // pred_region
        %p233 = scmp.lt.s32.totalorder %s13, 1
        %s234 = scalar_select %p233, %s13, 1
        %s235 = smul.addr %s234, 32
        %s236 = smul.addr %s235, 4
        %s237 = scalar_lea.vmem %s0, %s236
      $region40: #{residual_block_forward.5} parent=35 // pred_fallthru
        _
      // Predicated region
      $region41: #{residual_block_forward.5} parent=35 // pred_check
        %p238 = pneg %p59
      $region42: #{residual_block_forward.5} parent=35 // pred_check_branch
        %240 = sbr.rel (%p238) target = $region44
      $region43: #{residual_block_forward.5} parent=35 // pred_region
        %p241 = scmp.lt.s32.totalorder %s13, 1
        %s242 = scalar_select %p241, %s13, 1
        %s243 = smul.addr %s242, 32
        %s244 = smul.addr %s243, 4
        %s245 = scalar_lea.vmem %s1, %s244
      $region44: #{residual_block_forward.5} parent=35 // pred_fallthru
        _
    $region36: #{residual_block_forward.5} parent=5 // pred_fallthru
      _
    %p246 = scmp.le.s32.totalorder 1, %s13
    %p247 = scmp.lt.s32.totalorder %s13, 3
    %p248 = pnand %p246, %p247
    %p249 = pneg %p248
    // Predicated region
    $region45: #{residual_block_forward.5} parent=5 // pred_check
      _
    $region46: #{residual_block_forward.5} parent=5 // pred_check_branch
      %251 = sbr.rel (%p248) target = $region48
    $region47: #{residual_block_forward.5} parent=5 // pred_region
      %s252 = ssub.s32 %s13, 1
      %p253 = scmp.lt.s32.totalorder %s18, 1
      %s254 = scalar_select %p253, %s18, 1
      %s255 = smul.addr %s254, 32
      %s256 = smul.addr %s255, 4
      %s257 = scalar_lea.vmem %s0, %s256
      %p258 = pneg %p39
      %p259 = pneg %p36
      %p260 = scmp.lt.s32.totalorder %s18, 1
      %s261 = scalar_select %p260, %s18, 1
      %s262 = smul.addr %s261, 32
      %s263 = smul.addr %s262, 4
      %s264 = scalar_lea.vmem %s1, %s263
      %p265 = pneg %p65
      %p266 = pneg %p62
      %p267 = pneg %p86
      %p268 = pneg %p83
      %p269 = pneg %p107
      %p270 = pneg %p104
      %p271 = pneg %p128
      %p272 = pneg %p125
      %p273 = pneg %p149
      %p274 = pneg %p146
      %p275 = pneg %p170
      %p276 = pneg %p167
      %p277 = pneg %p196
      %p278 = pneg %p193
      %p279 = scmp.lt.s32.totalorder %s18, 1
      %s280 = scalar_select %p279, %s18, 1
      %s281 = smul.addr %s280, 32
      %s282 = smul.addr %s281, 8
      %s283 = scalar_lea.vmem %s7, %s282
      %p284 = scmp.lt.s32.totalorder %s18, 1
      %s285 = scalar_select %p284, %s18, 1
      %s286 = smul.addr %s285, 32
      %s287 = smul.addr %s286, 4
      %s288 = scalar_lea.vmem %s0, %s287
      %p289 = scmp.lt.s32.totalorder %s18, 1
      %s290 = scalar_select %p289, %s18, 1
      %s291 = smul.addr %s290, 32
      %s292 = smul.addr %s291, 4
      %s293 = scalar_lea.vmem %s1, %s292
      %p294 = scmp.lt.s32.totalorder %s18, 1
      %s295 = scalar_select %p294, %s18, 1
      %s296 = smul.addr %s295, 32
      %s297 = smul.addr %s296, 8
      %s298 = scalar_lea.vmem %s7, %s297
      %v299 = vld [vmem:[%s293] sm:$0xf]
      %v300 = vld [vmem:[%s293 + $0x4] sm:$0xf]
      %v301 = vld [vmem:[%s293 + $0x8] sm:$0xf]
      %v302 = vld [vmem:[%s293 + $0xc] sm:$0xf]
      %v303 = vld [vmem:[%s293 + $0x10] sm:$0xf]
      %v304 = vld [vmem:[%s293 + $0x14] sm:$0xf]
      %v305 = vld [vmem:[%s293 + $0x18] sm:$0xf]
      %v306 = vld [vmem:[%s293 + $0x1c] sm:$0xf]
      %v307 = vld [vmem:[%s293 + $0x20] sm:$0xf]
      %v308 = vld [vmem:[%s293 + $0x24] sm:$0xf]
      %v309 = vld [vmem:[%s293 + $0x28] sm:$0xf]
      %v310 = vld [vmem:[%s293 + $0x2c] sm:$0xf]
      %v311 = vld [vmem:[%s293 + $0x30] sm:$0xf]
      %v312 = vld [vmem:[%s293 + $0x34] sm:$0xf]
      %v313 = vld [vmem:[%s293 + $0x38] sm:$0xf]
      %v314 = vld [vmem:[%s293 + $0x3c] sm:$0xf]
      %v315 = vld [vmem:[%s293 + $0x40] sm:$0xf]
      %v316 = vld [vmem:[%s293 + $0x44] sm:$0xf]
      %v317 = vld [vmem:[%s293 + $0x48] sm:$0xf]
      %v318 = vld [vmem:[%s293 + $0x4c] sm:$0xf]
      %v319 = vld [vmem:[%s293 + $0x50] sm:$0xf]
      %v320 = vld [vmem:[%s293 + $0x54] sm:$0xf]
      %v321 = vld [vmem:[%s293 + $0x58] sm:$0xf]
      %v322 = vld [vmem:[%s293 + $0x5c] sm:$0xf]
      %v323 = vld [vmem:[%s293 + $0x60] sm:$0xf]
      %v324 = vld [vmem:[%s293 + $0x64] sm:$0xf]
      %v325 = vld [vmem:[%s293 + $0x68] sm:$0xf]
      %v326 = vld [vmem:[%s293 + $0x6c] sm:$0xf]
      %v327 = vld [vmem:[%s293 + $0x70] sm:$0xf]
      %v328 = vld [vmem:[%s293 + $0x74] sm:$0xf]
      %v329 = vld [vmem:[%s293 + $0x78] sm:$0xf]
      %v330 = vld [vmem:[%s293 + $0x7c] sm:$0xf]
      %v331 = vld [vmem:[%s2] sm:$0xf]
      %v332 = vld [vmem:[%s2 + $0x4] sm:$0xf]
      %v333 = vld [vmem:[%s2 + $0x8] sm:$0xf]
      %v334 = vld [vmem:[%s2 + $0xc] sm:$0xf]
      %v335 = vld [vmem:[%s2 + $0x10] sm:$0xf]
      %v336 = vld [vmem:[%s2 + $0x14] sm:$0xf]
      %v337 = vld [vmem:[%s2 + $0x18] sm:$0xf]
      %v338 = vld [vmem:[%s2 + $0x1c] sm:$0xf]
      %v339 = vld [vmem:[%s2 + $0x20] sm:$0xf]
      %v340 = vld [vmem:[%s2 + $0x24] sm:$0xf]
      %v341 = vld [vmem:[%s2 + $0x28] sm:$0xf]
      %v342 = vld [vmem:[%s2 + $0x2c] sm:$0xf]
      %v343 = vld [vmem:[%s2 + $0x30] sm:$0xf]
      %v344 = vld [vmem:[%s2 + $0x34] sm:$0xf]
      %v345 = vld [vmem:[%s2 + $0x38] sm:$0xf]
      %v346 = vld [vmem:[%s2 + $0x3c] sm:$0xf]
      %v379 = vunpack.c.l.b16 %v299
      %v380 = vunpack.c.l.b16 %v300
      %v381 = vunpack.c.l.b16 %v301
      %v382 = vunpack.c.l.b16 %v302
      %v383 = vunpack.c.l.b16 %v303
      %v384 = vunpack.c.l.b16 %v304
      %v385 = vunpack.c.l.b16 %v305
      %v386 = vunpack.c.l.b16 %v306
      %v387 = vunpack.c.l.b16 %v307
      %v388 = vunpack.c.l.b16 %v308
      %v389 = vunpack.c.l.b16 %v309
      %v390 = vunpack.c.l.b16 %v310
      %v391 = vunpack.c.l.b16 %v311
      %v392 = vunpack.c.l.b16 %v312
      %v393 = vunpack.c.l.b16 %v313
      %v394 = vunpack.c.l.b16 %v314
      %v395 = vunpack.c.l.b16 %v315
      %v396 = vunpack.c.l.b16 %v316
      %v397 = vunpack.c.l.b16 %v317
      %v398 = vunpack.c.l.b16 %v318
      %v399 = vunpack.c.l.b16 %v319
      %v400 = vunpack.c.l.b16 %v320
      %v401 = vunpack.c.l.b16 %v321
      %v402 = vunpack.c.l.b16 %v322
      %v403 = vunpack.c.l.b16 %v323
      %v404 = vunpack.c.l.b16 %v324
      %v405 = vunpack.c.l.b16 %v325
      %v406 = vunpack.c.l.b16 %v326
      %v407 = vunpack.c.l.b16 %v327
      %v408 = vunpack.c.l.b16 %v328
      %v409 = vunpack.c.l.b16 %v329
      %v410 = vunpack.c.l.b16 %v330
      %v411 = vpack.c.b16 %v380, %v379
      %v412 = vpack.c.b16 %v382, %v381
      %v413 = vpack.c.b16 %v384, %v383
      %v414 = vpack.c.b16 %v386, %v385
      %v415 = vpack.c.b16 %v388, %v387
      %v416 = vpack.c.b16 %v390, %v389
      %v417 = vpack.c.b16 %v392, %v391
      %v418 = vpack.c.b16 %v394, %v393
      %v419 = vpack.c.b16 %v396, %v395
      %v420 = vpack.c.b16 %v398, %v397
      %v421 = vpack.c.b16 %v400, %v399
      %v422 = vpack.c.b16 %v402, %v401
      %v423 = vpack.c.b16 %v404, %v403
      %v424 = vpack.c.b16 %v406, %v405
      %v425 = vpack.c.b16 %v408, %v407
      %v426 = vpack.c.b16 %v410, %v409
      %v459 = vunpack.c.l.b16 %v331
      %v460 = vunpack.c.l.b16 %v332
      %v461 = vunpack.c.l.b16 %v333
      %v462 = vunpack.c.l.b16 %v334
      %v463 = vunpack.c.l.b16 %v335
      %v464 = vunpack.c.l.b16 %v336
      %v465 = vunpack.c.l.b16 %v337
      %v466 = vunpack.c.l.b16 %v338
      %v467 = vunpack.c.l.b16 %v339
      %v468 = vunpack.c.l.b16 %v340
      %v469 = vunpack.c.l.b16 %v341
      %v470 = vunpack.c.l.b16 %v342
      %v471 = vunpack.c.l.b16 %v343
      %v472 = vunpack.c.l.b16 %v344
      %v473 = vunpack.c.l.b16 %v345
      %v474 = vunpack.c.l.b16 %v346
      %v475 = vpack.c.b16 %v460, %v459
      %v476 = vpack.c.b16 %v462, %v461
      %v477 = vpack.c.b16 %v464, %v463
      %v478 = vpack.c.b16 %v466, %v465
      %v479 = vpack.c.b16 %v468, %v467
      %v480 = vpack.c.b16 %v470, %v469
      %v481 = vpack.c.b16 %v472, %v471
      %v482 = vpack.c.b16 %v474, %v473
      %491 = vmatpush.bf16.msra.mxu0 %v482
      %492 = vmatpush.bf16.msra.mxu0 %v481
      %493 = vmatpush.bf16.msra.mxu0 %v480
      %494 = vmatpush.bf16.msra.mxu0 %v479
      %495 = vmatpush.bf16.msra.mxu0 %v478
      %496 = vmatpush.bf16.msra.mxu0 %v477
      %497 = vmatpush.bf16.msra.mxu0 %v476
      %498 = vmatpush.bf16.msra.mxu0 %v475
      %499 = vmatmul.bf16.gmra.mxu0 %v411
      %v500 = vpop.f32.mrf.mxu0
      %v501 = vadd.f32 0.0, %v500
      %v502 = vpop.f32.mrf.mxu0
      %v503 = vadd.f32 0.0, %v502
      %504 = vmatmul.bf16.gmra.mxu0 %v412
      %v505 = vpop.f32.mrf.mxu0
      %v506 = vadd.f32 0.0, %v505
      %v507 = vpop.f32.mrf.mxu0
      %v508 = vadd.f32 0.0, %v507
      %509 = vmatmul.bf16.gmra.mxu0 %v413
      %v510 = vpop.f32.mrf.mxu0
      %v511 = vadd.f32 0.0, %v510
      %v512 = vpop.f32.mrf.mxu0
      %v513 = vadd.f32 0.0, %v512
      %514 = vmatmul.bf16.gmra.mxu0 %v414
      %v515 = vpop.f32.mrf.mxu0
      %v516 = vadd.f32 0.0, %v515
      %v517 = vpop.f32.mrf.mxu0
      %v518 = vadd.f32 0.0, %v517
      %519 = vmatmul.bf16.gmra.mxu0 %v415
      %v520 = vpop.f32.mrf.mxu0
      %v521 = vadd.f32 0.0, %v520
      %v522 = vpop.f32.mrf.mxu0
      %v523 = vadd.f32 0.0, %v522
      %524 = vmatmul.bf16.gmra.mxu0 %v416
      %v525 = vpop.f32.mrf.mxu0
      %v526 = vadd.f32 0.0, %v525
      %v527 = vpop.f32.mrf.mxu0
      %v528 = vadd.f32 0.0, %v527
      %529 = vmatmul.bf16.gmra.mxu0 %v417
      %v530 = vpop.f32.mrf.mxu0
      %v531 = vadd.f32 0.0, %v530
      %v532 = vpop.f32.mrf.mxu0
      %v533 = vadd.f32 0.0, %v532
      %534 = vmatmul.bf16.gmra.mxu0 %v418
      %v535 = vpop.f32.mrf.mxu0
      %v536 = vadd.f32 0.0, %v535
      %v537 = vpop.f32.mrf.mxu0
      %v538 = vadd.f32 0.0, %v537
      %539 = vmatmul.bf16.gmra.mxu0 %v419
      %v540 = vpop.f32.mrf.mxu0
      %v541 = vadd.f32 0.0, %v540
      %v542 = vpop.f32.mrf.mxu0
      %v543 = vadd.f32 0.0, %v542
      %544 = vmatmul.bf16.gmra.mxu0 %v420
      %v545 = vpop.f32.mrf.mxu0
      %v546 = vadd.f32 0.0, %v545
      %v547 = vpop.f32.mrf.mxu0
      %v548 = vadd.f32 0.0, %v547
      %549 = vmatmul.bf16.gmra.mxu0 %v421
      %v550 = vpop.f32.mrf.mxu0
      %v551 = vadd.f32 0.0, %v550
      %v552 = vpop.f32.mrf.mxu0
      %v553 = vadd.f32 0.0, %v552
      %554 = vmatmul.bf16.gmra.mxu0 %v422
      %v555 = vpop.f32.mrf.mxu0
      %v556 = vadd.f32 0.0, %v555
      %v557 = vpop.f32.mrf.mxu0
      %v558 = vadd.f32 0.0, %v557
      %559 = vmatmul.bf16.gmra.mxu0 %v423
      %v560 = vpop.f32.mrf.mxu0
      %v561 = vadd.f32 0.0, %v560
      %v562 = vpop.f32.mrf.mxu0
      %v563 = vadd.f32 0.0, %v562
      %564 = vmatmul.bf16.gmra.mxu0 %v424
      %v565 = vpop.f32.mrf.mxu0
      %v566 = vadd.f32 0.0, %v565
      %v567 = vpop.f32.mrf.mxu0
      %v568 = vadd.f32 0.0, %v567
      %569 = vmatmul.bf16.gmra.mxu0 %v425
      %v570 = vpop.f32.mrf.mxu0
      %v571 = vadd.f32 0.0, %v570
      %v572 = vpop.f32.mrf.mxu0
      %v573 = vadd.f32 0.0, %v572
      %574 = vmatmul.bf16.gmra.mxu0 %v426
      %v575 = vpop.f32.mrf.mxu0
      %v576 = vadd.f32 0.0, %v575
      %v577 = vpop.f32.mrf.mxu0
      %v578 = vadd.f32 0.0, %v577
      %579 = vdwg.mxu0
      %v580 = vld [vmem:[%s5] sm:$0x1]
      %v582 = vperm.slane %v580, 0
      %v584 = vmul.f32 %v501, %v582
      %v585 = vmul.f32 %v503, %v582
      %v586 = vmul.f32 %v506, %v582
      %v587 = vmul.f32 %v508, %v582
      %v588 = vmul.f32 %v511, %v582
      %v589 = vmul.f32 %v513, %v582
      %v590 = vmul.f32 %v516, %v582
      %v591 = vmul.f32 %v518, %v582
      %v592 = vmul.f32 %v521, %v582
      %v593 = vmul.f32 %v523, %v582
      %v594 = vmul.f32 %v526, %v582
      %v595 = vmul.f32 %v528, %v582
      %v596 = vmul.f32 %v531, %v582
      %v597 = vmul.f32 %v533, %v582
      %v598 = vmul.f32 %v536, %v582
      %v599 = vmul.f32 %v538, %v582
      %v600 = vmul.f32 %v541, %v582
      %v601 = vmul.f32 %v543, %v582
      %v602 = vmul.f32 %v546, %v582
      %v603 = vmul.f32 %v548, %v582
      %v604 = vmul.f32 %v551, %v582
      %v605 = vmul.f32 %v553, %v582
      %v606 = vmul.f32 %v556, %v582
      %v607 = vmul.f32 %v558, %v582
      %v608 = vmul.f32 %v561, %v582
      %v609 = vmul.f32 %v563, %v582
      %v610 = vmul.f32 %v566, %v582
      %v611 = vmul.f32 %v568, %v582
      %v612 = vmul.f32 %v571, %v582
      %v613 = vmul.f32 %v573, %v582
      %v614 = vmul.f32 %v576, %v582
      %v615 = vmul.f32 %v578, %v582
      %v616 = vld [vmem:[%s6] sm:$0x1]
      %v618 = vperm.slane %v616, 0
      %v620 = vadd.f32 %v584, %v618
      %v621 = vadd.f32 %v585, %v618
      %v622 = vadd.f32 %v586, %v618
      %v623 = vadd.f32 %v587, %v618
      %v624 = vadd.f32 %v588, %v618
      %v625 = vadd.f32 %v589, %v618
      %v626 = vadd.f32 %v590, %v618
      %v627 = vadd.f32 %v591, %v618
      %v628 = vadd.f32 %v592, %v618
      %v629 = vadd.f32 %v593, %v618
      %v630 = vadd.f32 %v594, %v618
      %v631 = vadd.f32 %v595, %v618
      %v632 = vadd.f32 %v596, %v618
      %v633 = vadd.f32 %v597, %v618
      %v634 = vadd.f32 %v598, %v618
      %v635 = vadd.f32 %v599, %v618
      %v636 = vadd.f32 %v600, %v618
      %v637 = vadd.f32 %v601, %v618
      %v638 = vadd.f32 %v602, %v618
      %v639 = vadd.f32 %v603, %v618
      %v640 = vadd.f32 %v604, %v618
      %v641 = vadd.f32 %v605, %v618
      %v642 = vadd.f32 %v606, %v618
      %v643 = vadd.f32 %v607, %v618
      %v644 = vadd.f32 %v608, %v618
      %v645 = vadd.f32 %v609, %v618
      %v646 = vadd.f32 %v610, %v618
      %v647 = vadd.f32 %v611, %v618
      %v648 = vadd.f32 %v612, %v618
      %v649 = vadd.f32 %v613, %v618
      %v650 = vadd.f32 %v614, %v618
      %v651 = vadd.f32 %v615, %v618
      %v652 = vld [vmem:[%s288] sm:$0xf]
      %v653 = vld [vmem:[%s288 + $0x4] sm:$0xf]
      %v654 = vld [vmem:[%s288 + $0x8] sm:$0xf]
      %v655 = vld [vmem:[%s288 + $0xc] sm:$0xf]
      %v656 = vld [vmem:[%s288 + $0x10] sm:$0xf]
      %v657 = vld [vmem:[%s288 + $0x14] sm:$0xf]
      %v658 = vld [vmem:[%s288 + $0x18] sm:$0xf]
      %v659 = vld [vmem:[%s288 + $0x1c] sm:$0xf]
      %v660 = vld [vmem:[%s288 + $0x20] sm:$0xf]
      %v661 = vld [vmem:[%s288 + $0x24] sm:$0xf]
      %v662 = vld [vmem:[%s288 + $0x28] sm:$0xf]
      %v663 = vld [vmem:[%s288 + $0x2c] sm:$0xf]
      %v664 = vld [vmem:[%s288 + $0x30] sm:$0xf]
      %v665 = vld [vmem:[%s288 + $0x34] sm:$0xf]
      %v666 = vld [vmem:[%s288 + $0x38] sm:$0xf]
      %v667 = vld [vmem:[%s288 + $0x3c] sm:$0xf]
      %v668 = vld [vmem:[%s288 + $0x40] sm:$0xf]
      %v669 = vld [vmem:[%s288 + $0x44] sm:$0xf]
      %v670 = vld [vmem:[%s288 + $0x48] sm:$0xf]
      %v671 = vld [vmem:[%s288 + $0x4c] sm:$0xf]
      %v672 = vld [vmem:[%s288 + $0x50] sm:$0xf]
      %v673 = vld [vmem:[%s288 + $0x54] sm:$0xf]
      %v674 = vld [vmem:[%s288 + $0x58] sm:$0xf]
      %v675 = vld [vmem:[%s288 + $0x5c] sm:$0xf]
      %v676 = vld [vmem:[%s288 + $0x60] sm:$0xf]
      %v677 = vld [vmem:[%s288 + $0x64] sm:$0xf]
      %v678 = vld [vmem:[%s288 + $0x68] sm:$0xf]
      %v679 = vld [vmem:[%s288 + $0x6c] sm:$0xf]
      %v680 = vld [vmem:[%s288 + $0x70] sm:$0xf]
      %v681 = vld [vmem:[%s288 + $0x74] sm:$0xf]
      %v682 = vld [vmem:[%s288 + $0x78] sm:$0xf]
      %v683 = vld [vmem:[%s288 + $0x7c] sm:$0xf]
      %v684 = vunpack.c.l.bf16 %v652
      %v685 = vunpack.c.l.bf16 %v653
      %v686 = vunpack.c.l.bf16 %v654
      %v687 = vunpack.c.l.bf16 %v655
      %v688 = vunpack.c.l.bf16 %v656
      %v689 = vunpack.c.l.bf16 %v657
      %v690 = vunpack.c.l.bf16 %v658
      %v691 = vunpack.c.l.bf16 %v659
      %v692 = vunpack.c.l.bf16 %v660
      %v693 = vunpack.c.l.bf16 %v661
      %v694 = vunpack.c.l.bf16 %v662
      %v695 = vunpack.c.l.bf16 %v663
      %v696 = vunpack.c.l.bf16 %v664
      %v697 = vunpack.c.l.bf16 %v665
      %v698 = vunpack.c.l.bf16 %v666
      %v699 = vunpack.c.l.bf16 %v667
      %v700 = vunpack.c.l.bf16 %v668
      %v701 = vunpack.c.l.bf16 %v669
      %v702 = vunpack.c.l.bf16 %v670
      %v703 = vunpack.c.l.bf16 %v671
      %v704 = vunpack.c.l.bf16 %v672
      %v705 = vunpack.c.l.bf16 %v673
      %v706 = vunpack.c.l.bf16 %v674
      %v707 = vunpack.c.l.bf16 %v675
      %v708 = vunpack.c.l.bf16 %v676
      %v709 = vunpack.c.l.bf16 %v677
      %v710 = vunpack.c.l.bf16 %v678
      %v711 = vunpack.c.l.bf16 %v679
      %v712 = vunpack.c.l.bf16 %v680
      %v713 = vunpack.c.l.bf16 %v681
      %v714 = vunpack.c.l.bf16 %v682
      %v715 = vunpack.c.l.bf16 %v683
      %v716 = vld [vmem:[%s3] sm:$0x1]
      %v718 = vperm.slane %v716, 0
      %v720 = vmul.f32 %v684, %v718
      %v721 = vmul.f32 %v685, %v718
      %v722 = vmul.f32 %v686, %v718
      %v723 = vmul.f32 %v687, %v718
      %v724 = vmul.f32 %v688, %v718
      %v725 = vmul.f32 %v689, %v718
      %v726 = vmul.f32 %v690, %v718
      %v727 = vmul.f32 %v691, %v718
      %v728 = vmul.f32 %v692, %v718
      %v729 = vmul.f32 %v693, %v718
      %v730 = vmul.f32 %v694, %v718
      %v731 = vmul.f32 %v695, %v718
      %v732 = vmul.f32 %v696, %v718
      %v733 = vmul.f32 %v697, %v718
      %v734 = vmul.f32 %v698, %v718
      %v735 = vmul.f32 %v699, %v718
      %v736 = vmul.f32 %v700, %v718
      %v737 = vmul.f32 %v701, %v718
      %v738 = vmul.f32 %v702, %v718
      %v739 = vmul.f32 %v703, %v718
      %v740 = vmul.f32 %v704, %v718
      %v741 = vmul.f32 %v705, %v718
      %v742 = vmul.f32 %v706, %v718
      %v743 = vmul.f32 %v707, %v718
      %v744 = vmul.f32 %v708, %v718
      %v745 = vmul.f32 %v709, %v718
      %v746 = vmul.f32 %v710, %v718
      %v747 = vmul.f32 %v711, %v718
      %v748 = vmul.f32 %v712, %v718
      %v749 = vmul.f32 %v713, %v718
      %v750 = vmul.f32 %v714, %v718
      %v751 = vmul.f32 %v715, %v718
      %v752 = vld [vmem:[%s4] sm:$0x1]
      %v754 = vperm.slane %v752, 0
      %v756 = vadd.f32 %v720, %v754
      %v757 = vadd.f32 %v721, %v754
      %v758 = vadd.f32 %v722, %v754
      %v759 = vadd.f32 %v723, %v754
      %v760 = vadd.f32 %v724, %v754
      %v761 = vadd.f32 %v725, %v754
      %v762 = vadd.f32 %v726, %v754
      %v763 = vadd.f32 %v727, %v754
      %v764 = vadd.f32 %v728, %v754
      %v765 = vadd.f32 %v729, %v754
      %v766 = vadd.f32 %v730, %v754
      %v767 = vadd.f32 %v731, %v754
      %v768 = vadd.f32 %v732, %v754
      %v769 = vadd.f32 %v733, %v754
      %v770 = vadd.f32 %v734, %v754
      %v771 = vadd.f32 %v735, %v754
      %v772 = vadd.f32 %v736, %v754
      %v773 = vadd.f32 %v737, %v754
      %v774 = vadd.f32 %v738, %v754
      %v775 = vadd.f32 %v739, %v754
      %v776 = vadd.f32 %v740, %v754
      %v777 = vadd.f32 %v741, %v754
      %v778 = vadd.f32 %v742, %v754
      %v779 = vadd.f32 %v743, %v754
      %v780 = vadd.f32 %v744, %v754
      %v781 = vadd.f32 %v745, %v754
      %v782 = vadd.f32 %v746, %v754
      %v783 = vadd.f32 %v747, %v754
      %v784 = vadd.f32 %v748, %v754
      %v785 = vadd.f32 %v749, %v754
      %v786 = vadd.f32 %v750, %v754
      %v787 = vadd.f32 %v751, %v754
      %v788 = vadd.f32 %v756, %v620
      %v789 = vadd.f32 %v757, %v621
      %v790 = vadd.f32 %v758, %v622
      %v791 = vadd.f32 %v759, %v623
      %v792 = vadd.f32 %v760, %v624
      %v793 = vadd.f32 %v761, %v625
      %v794 = vadd.f32 %v762, %v626
      %v795 = vadd.f32 %v763, %v627
      %v796 = vadd.f32 %v764, %v628
      %v797 = vadd.f32 %v765, %v629
      %v798 = vadd.f32 %v766, %v630
      %v799 = vadd.f32 %v767, %v631
      %v800 = vadd.f32 %v768, %v632
      %v801 = vadd.f32 %v769, %v633
      %v802 = vadd.f32 %v770, %v634
      %v803 = vadd.f32 %v771, %v635
      %v804 = vadd.f32 %v772, %v636
      %v805 = vadd.f32 %v773, %v637
      %v806 = vadd.f32 %v774, %v638
      %v807 = vadd.f32 %v775, %v639
      %v808 = vadd.f32 %v776, %v640
      %v809 = vadd.f32 %v777, %v641
      %v810 = vadd.f32 %v778, %v642
      %v811 = vadd.f32 %v779, %v643
      %v812 = vadd.f32 %v780, %v644
      %v813 = vadd.f32 %v781, %v645
      %v814 = vadd.f32 %v782, %v646
      %v815 = vadd.f32 %v783, %v647
      %v816 = vadd.f32 %v784, %v648
      %v817 = vadd.f32 %v785, %v649
      %v818 = vadd.f32 %v786, %v650
      %v819 = vadd.f32 %v787, %v651
      %v820 = vmax.f32 %v788, 0.0
      %v821 = vmax.f32 %v789, 0.0
      %v822 = vmax.f32 %v790, 0.0
      %v823 = vmax.f32 %v791, 0.0
      %v824 = vmax.f32 %v792, 0.0
      %v825 = vmax.f32 %v793, 0.0
      %v826 = vmax.f32 %v794, 0.0
      %v827 = vmax.f32 %v795, 0.0
      %v828 = vmax.f32 %v796, 0.0
      %v829 = vmax.f32 %v797, 0.0
      %v830 = vmax.f32 %v798, 0.0
      %v831 = vmax.f32 %v799, 0.0
      %v832 = vmax.f32 %v800, 0.0
      %v833 = vmax.f32 %v801, 0.0
      %v834 = vmax.f32 %v802, 0.0
      %v835 = vmax.f32 %v803, 0.0
      %v836 = vmax.f32 %v804, 0.0
      %v837 = vmax.f32 %v805, 0.0
      %v838 = vmax.f32 %v806, 0.0
      %v839 = vmax.f32 %v807, 0.0
      %v840 = vmax.f32 %v808, 0.0
      %v841 = vmax.f32 %v809, 0.0
      %v842 = vmax.f32 %v810, 0.0
      %v843 = vmax.f32 %v811, 0.0
      %v844 = vmax.f32 %v812, 0.0
      %v845 = vmax.f32 %v813, 0.0
      %v846 = vmax.f32 %v814, 0.0
      %v847 = vmax.f32 %v815, 0.0
      %v848 = vmax.f32 %v816, 0.0
      %v849 = vmax.f32 %v817, 0.0
      %v850 = vmax.f32 %v818, 0.0
      %v851 = vmax.f32 %v819, 0.0
      %852 = vst [vmem:[%s298] sm:$0xff] %v820
      %853 = vst [vmem:[%s298 + $0x8] sm:$0xff] %v821
      %854 = vst [vmem:[%s298 + $0x10] sm:$0xff] %v822
      %855 = vst [vmem:[%s298 + $0x18] sm:$0xff] %v823
      %856 = vst [vmem:[%s298 + $0x20] sm:$0xff] %v824
      %857 = vst [vmem:[%s298 + $0x28] sm:$0xff] %v825
      %858 = vst [vmem:[%s298 + $0x30] sm:$0xff] %v826
      %859 = vst [vmem:[%s298 + $0x38] sm:$0xff] %v827
      %860 = vst [vmem:[%s298 + $0x40] sm:$0xff] %v828
      %861 = vst [vmem:[%s298 + $0x48] sm:$0xff] %v829
      %862 = vst [vmem:[%s298 + $0x50] sm:$0xff] %v830
      %863 = vst [vmem:[%s298 + $0x58] sm:$0xff] %v831
      %864 = vst [vmem:[%s298 + $0x60] sm:$0xff] %v832
      %865 = vst [vmem:[%s298 + $0x68] sm:$0xff] %v833
      %866 = vst [vmem:[%s298 + $0x70] sm:$0xff] %v834
      %867 = vst [vmem:[%s298 + $0x78] sm:$0xff] %v835
      %868 = vst [vmem:[%s298 + $0x80] sm:$0xff] %v836
      %869 = vst [vmem:[%s298 + $0x88] sm:$0xff] %v837
      %870 = vst [vmem:[%s298 + $0x90] sm:$0xff] %v838
      %871 = vst [vmem:[%s298 + $0x98] sm:$0xff] %v839
      %872 = vst [vmem:[%s298 + $0xa0] sm:$0xff] %v840
      %873 = vst [vmem:[%s298 + $0xa8] sm:$0xff] %v841
      %874 = vst [vmem:[%s298 + $0xb0] sm:$0xff] %v842
      %875 = vst [vmem:[%s298 + $0xb8] sm:$0xff] %v843
      %876 = vst [vmem:[%s298 + $0xc0] sm:$0xff] %v844
      %877 = vst [vmem:[%s298 + $0xc8] sm:$0xff] %v845
      %878 = vst [vmem:[%s298 + $0xd0] sm:$0xff] %v846
      %879 = vst [vmem:[%s298 + $0xd8] sm:$0xff] %v847
      %880 = vst [vmem:[%s298 + $0xe0] sm:$0xff] %v848
      %881 = vst [vmem:[%s298 + $0xe8] sm:$0xff] %v849
      %882 = vst [vmem:[%s298 + $0xf0] sm:$0xff] %v850
      %883 = vst [vmem:[%s298 + $0xf8] sm:$0xff] %v851
      %p884 = scmp.lt.s32.totalorder %s18, 1
      %s885 = scalar_select %p884, %s18, 1
      %s886 = smul.addr %s885, 32
      %s887 = smul.addr %s886, 8
      %s888 = scalar_lea.vmem %s7, %s887
      // Predicated region
      $region49: #{residual_block_forward.5} parent=47 // pred_check
        %p889 = pneg %p193
      $region50: #{residual_block_forward.5} parent=47 // pred_check_branch
        %891 = sbr.rel (%p889) target = $region52
      $region51: #{residual_block_forward.5} parent=47 // pred_region
        _
      $region52: #{residual_block_forward.5} parent=47 // pred_fallthru
        _
    $region48: #{residual_block_forward.5} parent=5 // pred_fallthru
      _
    %p892 = scmp.le.s32.totalorder 2, %s13
    // Predicated region
    $region53: #{residual_block_forward.5} parent=5 // pred_check
      %p893 = pneg %p892
    $region54: #{residual_block_forward.5} parent=5 // pred_check_branch
      %895 = sbr.rel (%p893) target = $region56
    $region55: #{residual_block_forward.5} parent=5 // pred_region
      %s896 = ssub.s32 %s13, 2
      // Predicated region
      $region57: #{residual_block_forward.5} parent=55 // pred_check
        %p897 = pneg %p199
      $region58: #{residual_block_forward.5} parent=55 // pred_check_branch
        %899 = sbr.rel (%p897) target = $region60
      $region59: #{residual_block_forward.5} parent=55 // pred_region
        %p900 = scmp.lt.s32.totalorder %s19, 1
        %s901 = scalar_select %p900, %s19, 1
        %s902 = smul.addr %s901, 32
        %s903 = smul.addr %s902, 8
        %s904 = scalar_lea.vmem %s7, %s903
      $region60: #{residual_block_forward.5} parent=55 // pred_fallthru
        _
    $region56: #{residual_block_forward.5} parent=5 // pred_fallthru
      _
  $region6: #{residual_block_forward.5} parent=0 // loop_footer
    %s17 = sadd.s32 1, %s13
  $region7: #{residual_block_forward.5} parent=0 // loop_footer_branch
    %12 = sbr.rel target = $region3
  $region8: #{residual_block_forward.5} parent=0 // loop_exit
    _

// kernel: residual_block_forward.3
$region0: #{residual_block_forward.3}
  #allocation0 [shape = 'u32[]', space=smem, size = 0x4, offset = 0x4, fixed_abs, tag = 'smem constant byte address 0x4 - core index']
  #allocation1 [shape = 'u32[72,128]{1,0:T(1,128)}', space=vmem, size = 0x9000, scoped, tag = 'internal scratch']
  %s0 = inlined_call_operand.vmem [shape: bf16[2,18,18,128], index: 0, kind: input, shape index: {}]
  %s1 = inlined_call_operand.vmem [shape: bf16[2,16,16,128], index: 1, kind: input, shape index: {}]
  %s2 = inlined_call_operand.vmem [shape: bf16[3,384,128], index: 2, kind: input, shape index: {}]
  %s3 = inlined_call_operand.vmem [shape: bf16[128,128], index: 3, kind: input, shape index: {}]
  %s4 = inlined_call_operand.vmem [shape: bf16[2,16,16,128], index: 4, kind: output, shape index: {0}]
  %s5 = inlined_call_operand.vmem [shape: f32[2,2,128], index: 5, kind: output, shape index: {1}]
  %s6 = inlined_call_operand.vmem [shape: f32[2,2,128], index: 6, kind: output, shape index: {2}]
  %7 = xla_tuple %s4, %s5, %s6
  %s8 = sld [smem:[#allocation0]]
  $region65: #{residual_block_forward.3} parent=0
    _
  %s10 = ssub.s32 1, %s8
  %s11 = scalar_select 0, %s10, %s8
  loop: start=0, step=1, limit=4
  $region2: #{residual_block_forward.3} parent=0 // loop_pre_header
    _
  $region3: #{residual_block_forward.3} parent=0 // loop_header
    %s13 = sphi 0, %s17
    %p14 = scmp.ge.s32.totalorder %s13, 4
    %s23 = sphi 0, %s25
    %s26 = sphi 0, %s23
    %s27 = sphi 0, %s26
    %s43 = sphi 0, %s27
    %s49 = sphi 0, %s51
    %s52 = sphi 0, %s49
    %s53 = sphi 0, %s52
    %s69 = sphi 0, %s53
    %s73 = sphi 0, %s73
    %s75 = sphi 0, %s73
    %s76 = sphi 0, %s75
    %s90 = sphi 0, %s76
    %s94 = sphi 0, %s94
    %s96 = sphi 0, %s94
    %s97 = sphi 0, %s96
    %s111 = sphi 0, %s97
    %s117 = sphi 0, %s119
    %s120 = sphi 0, %s117
    %s121 = sphi 0, %s120
    %s137 = sphi 0, %s121
    %s143 = sphi 0, %s145
    %s146 = sphi 0, %s143
    %s147 = sphi 0, %s146
    %s163 = sphi 0, %s147
    %s169 = sphi 0, %s171
    %s172 = sphi 0, %s169
    %s173 = sphi 0, %s172
    %s189 = sphi 0, %s173
  $region4: #{residual_block_forward.3} parent=0 // loop_header_branch
    %16 = sbr.rel (%p14) target = $region8
  $region5: #{residual_block_forward.3} parent=0 // loop_body
    %s18 = ssub.s32 %s13, 1
    %s19 = ssub.s32 %s13, 2
    %s20 = sadd.s32 %s13, 1
    %s21 = ssub.s32 %s13, %s20
    %p22 = scmp.eq.s32.totalorder %s21, 0
    %s24 = sadd.s32 %s23, 1
    %s25 = scalar_select %p22, %s23, %s24
    %p28 = pneg %p22
    %p29 = scmp.eq.s32.totalorder %s13, 1
    %p30 = por %p28, %p29
    %p31 = scmp.ne.s32.totalorder %s23, %s26
    %p32 = scmp.eq.s32.totalorder %s13, 0
    %p33 = por %p31, %p32
    %p34 = scmp.ne.s32.totalorder %s23, %s26
    %p35 = scmp.eq.s32.totalorder %s18, 1
    %p36 = por %p34, %p35
    %p37 = scmp.ne.s32.totalorder %s26, %s27
    %p38 = scmp.eq.s32.totalorder %s18, 0
    %p39 = por %p37, %p38
    %p40 = scmp.ne.s32.totalorder %s26, %s27
    %p41 = scmp.eq.s32.totalorder %s19, 1
    %p42 = por %p40, %p41
    %p44 = scmp.ne.s32.totalorder %s27, %s43
    %p45 = scmp.eq.s32.totalorder %s19, 0
    %p46 = por %p44, %p45
    %s47 = ssub.s32 %s13, %s20
    %p48 = scmp.eq.s32.totalorder %s47, 0
    %s50 = sadd.s32 %s49, 1
    %s51 = scalar_select %p48, %s49, %s50
    %p54 = pneg %p48
    %p55 = scmp.eq.s32.totalorder %s13, 1
    %p56 = por %p54, %p55
    %p57 = scmp.ne.s32.totalorder %s49, %s52
    %p58 = scmp.eq.s32.totalorder %s13, 0
    %p59 = por %p57, %p58
    %p60 = scmp.ne.s32.totalorder %s49, %s52
    %p61 = scmp.eq.s32.totalorder %s18, 1
    %p62 = por %p60, %p61
    %p63 = scmp.ne.s32.totalorder %s52, %s53
    %p64 = scmp.eq.s32.totalorder %s18, 0
    %p65 = por %p63, %p64
    %p66 = scmp.ne.s32.totalorder %s52, %s53
    %p67 = scmp.eq.s32.totalorder %s19, 1
    %p68 = por %p66, %p67
    %p70 = scmp.ne.s32.totalorder %s53, %s69
    %p71 = scmp.eq.s32.totalorder %s19, 0
    %p72 = por %p70, %p71
    %s74 = sadd.s32 %s73, 1
    %p77 = scmp.eq.s32.totalorder %s13, 1
    %p78 = scmp.ne.s32.totalorder %s73, %s75
    %p79 = scmp.eq.s32.totalorder %s13, 0
    %p80 = por %p78, %p79
    %p81 = scmp.ne.s32.totalorder %s73, %s75
    %p82 = scmp.eq.s32.totalorder %s18, 1
    %p83 = por %p81, %p82
    %p84 = scmp.ne.s32.totalorder %s75, %s76
    %p85 = scmp.eq.s32.totalorder %s18, 0
    %p86 = por %p84, %p85
    %p87 = scmp.ne.s32.totalorder %s75, %s76
    %p88 = scmp.eq.s32.totalorder %s19, 1
    %p89 = por %p87, %p88
    %p91 = scmp.ne.s32.totalorder %s76, %s90
    %p92 = scmp.eq.s32.totalorder %s19, 0
    %p93 = por %p91, %p92
    %s95 = sadd.s32 %s94, 1
    %p98 = scmp.eq.s32.totalorder %s13, 1
    %p99 = scmp.ne.s32.totalorder %s94, %s96
    %p100 = scmp.eq.s32.totalorder %s13, 0
    %p101 = por %p99, %p100
    %p102 = scmp.ne.s32.totalorder %s94, %s96
    %p103 = scmp.eq.s32.totalorder %s18, 1
    %p104 = por %p102, %p103
    %p105 = scmp.ne.s32.totalorder %s96, %s97
    %p106 = scmp.eq.s32.totalorder %s18, 0
    %p107 = por %p105, %p106
    %p108 = scmp.ne.s32.totalorder %s96, %s97
    %p109 = scmp.eq.s32.totalorder %s19, 1
    %p110 = por %p108, %p109
    %p112 = scmp.ne.s32.totalorder %s97, %s111
    %p113 = scmp.eq.s32.totalorder %s19, 0
    %p114 = por %p112, %p113
    %s115 = ssub.s32 %s13, %s20
    %p116 = scmp.eq.s32.totalorder %s115, 0
    %s118 = sadd.s32 %s117, 1
    %s119 = scalar_select %p116, %s117, %s118
    %p122 = pneg %p116
    %p123 = scmp.eq.s32.totalorder %s13, 1
    %p124 = por %p122, %p123
    %p125 = scmp.ne.s32.totalorder %s117, %s120
    %p126 = scmp.eq.s32.totalorder %s13, 0
    %p127 = por %p125, %p126
    %p128 = scmp.ne.s32.totalorder %s117, %s120
    %p129 = scmp.eq.s32.totalorder %s18, 1
    %p130 = por %p128, %p129
    %p131 = scmp.ne.s32.totalorder %s120, %s121
    %p132 = scmp.eq.s32.totalorder %s18, 0
    %p133 = por %p131, %p132
    %p134 = scmp.ne.s32.totalorder %s120, %s121
    %p135 = scmp.eq.s32.totalorder %s19, 1
    %p136 = por %p134, %p135
    %p138 = scmp.ne.s32.totalorder %s121, %s137
    %p139 = scmp.eq.s32.totalorder %s19, 0
    %p140 = por %p138, %p139
    %s141 = ssub.s32 %s13, %s20
    %p142 = scmp.eq.s32.totalorder %s141, 0
    %s144 = sadd.s32 %s143, 1
    %s145 = scalar_select %p142, %s143, %s144
    %p148 = pneg %p142
    %p149 = scmp.eq.s32.totalorder %s13, 1
    %p150 = por %p148, %p149
    %p151 = scmp.ne.s32.totalorder %s143, %s146
    %p152 = scmp.eq.s32.totalorder %s13, 0
    %p153 = por %p151, %p152
    %p154 = scmp.ne.s32.totalorder %s143, %s146
    %p155 = scmp.eq.s32.totalorder %s18, 1
    %p156 = por %p154, %p155
    %p157 = scmp.ne.s32.totalorder %s146, %s147
    %p158 = scmp.eq.s32.totalorder %s18, 0
    %p159 = por %p157, %p158
    %p160 = scmp.ne.s32.totalorder %s146, %s147
    %p161 = scmp.eq.s32.totalorder %s19, 1
    %p162 = por %p160, %p161
    %p164 = scmp.ne.s32.totalorder %s147, %s163
    %p165 = scmp.eq.s32.totalorder %s19, 0
    %p166 = por %p164, %p165
    %s167 = ssub.s32 %s13, %s20
    %p168 = scmp.eq.s32.totalorder %s167, 0
    %s170 = sadd.s32 %s169, 1
    %s171 = scalar_select %p168, %s169, %s170
    %p174 = pneg %p168
    %p175 = scmp.eq.s32.totalorder %s13, 1
    %p176 = por %p174, %p175
    %p177 = scmp.ne.s32.totalorder %s169, %s172
    %p178 = scmp.eq.s32.totalorder %s13, 0
    %p179 = por %p177, %p178
    %p180 = scmp.ne.s32.totalorder %s169, %s172
    %p181 = scmp.eq.s32.totalorder %s18, 1
    %p182 = por %p180, %p181
    %p183 = scmp.ne.s32.totalorder %s172, %s173
    %p184 = scmp.eq.s32.totalorder %s18, 0
    %p185 = por %p183, %p184
    %p186 = scmp.ne.s32.totalorder %s172, %s173
    %p187 = scmp.eq.s32.totalorder %s19, 1
    %p188 = por %p186, %p187
    %p190 = scmp.ne.s32.totalorder %s173, %s189
    %p191 = scmp.eq.s32.totalorder %s19, 0
    %p192 = por %p190, %p191
    %p193 = scmp.le.s32.totalorder 1, %s13
    %p194 = scmp.lt.s32.totalorder %s13, 3
    %p195 = pnand %p193, %p194
    %p196 = pneg %p195
    // Predicated region
    $region9: #{residual_block_forward.3} parent=5 // pred_check
      _
    $region10: #{residual_block_forward.3} parent=5 // pred_check_branch
      %198 = sbr.rel (%p195) target = $region12
    $region11: #{residual_block_forward.3} parent=5 // pred_region
      %s199 = ssub.s32 %s13, 1
      // Predicated region
      $region13: #{residual_block_forward.3} parent=11 // pred_check
        %p200 = pneg %p86
      $region14: #{residual_block_forward.3} parent=11 // pred_check_branch
        %202 = sbr.rel (%p200) target = $region16
      $region15: #{residual_block_forward.3} parent=11 // pred_region
        _
      $region16: #{residual_block_forward.3} parent=11 // pred_fallthru
        _
      // Predicated region
      $region17: #{residual_block_forward.3} parent=11 // pred_check
        %p203 = pneg %p107
      $region18: #{residual_block_forward.3} parent=11 // pred_check_branch
        %205 = sbr.rel (%p203) target = $region20
      $region19: #{residual_block_forward.3} parent=11 // pred_region
        _
      $region20: #{residual_block_forward.3} parent=11 // pred_fallthru
        _
    $region12: #{residual_block_forward.3} parent=5 // pred_fallthru
      _
    %p206 = scmp.lt.s32.totalorder %s13, 2
    // Predicated region
    $region21: #{residual_block_forward.3} parent=5 // pred_check
      %p207 = pneg %p206
    $region22: #{residual_block_forward.3} parent=5 // pred_check_branch
      %209 = sbr.rel (%p207) target = $region24
    $region23: #{residual_block_forward.3} parent=5 // pred_region
      // Predicated region
      $region25: #{residual_block_forward.3} parent=23 // pred_check
        %p210 = pneg %p33
      $region26: #{residual_block_forward.3} parent=23 // pred_check_branch
        %212 = sbr.rel (%p210) target = $region28
      $region27: #{residual_block_forward.3} parent=23 // pred_region
        %p213 = scmp.lt.s32.totalorder %s13, 1
        %s214 = scalar_select %p213, %s13, 1
        %s215 = smul.addr %s214, 54
        %s216 = smul.addr %s215, 4
        %s217 = scalar_lea.vmem %s0, %s216
      $region28: #{residual_block_forward.3} parent=23 // pred_fallthru
        _
      // Predicated region
      $region29: #{residual_block_forward.3} parent=23 // pred_check
        %p218 = pneg %p59
      $region30: #{residual_block_forward.3} parent=23 // pred_check_branch
        %220 = sbr.rel (%p218) target = $region32
      $region31: #{residual_block_forward.3} parent=23 // pred_region
        %p221 = scmp.lt.s32.totalorder %s13, 1
        %s222 = scalar_select %p221, %s13, 1
        %s223 = smul.addr %s222, 32
        %s224 = smul.addr %s223, 4
        %s225 = scalar_lea.vmem %s1, %s224
      $region32: #{residual_block_forward.3} parent=23 // pred_fallthru
        _
    $region24: #{residual_block_forward.3} parent=5 // pred_fallthru
      _
    %p226 = scmp.le.s32.totalorder 1, %s13
    %p227 = scmp.lt.s32.totalorder %s13, 3
    %p228 = pnand %p226, %p227
    %p229 = pneg %p228
    // Predicated region
    $region33: #{residual_block_forward.3} parent=5 // pred_check
      _
    $region34: #{residual_block_forward.3} parent=5 // pred_check_branch
      %231 = sbr.rel (%p228) target = $region36
    $region35: #{residual_block_forward.3} parent=5 // pred_region
      %s232 = ssub.s32 %s13, 1
      %p233 = scmp.lt.s32.totalorder %s18, 1
      %s234 = scalar_select %p233, %s18, 1
      %s235 = smul.addr %s234, 54
      %s236 = smul.addr %s235, 4
      %s237 = scalar_lea.vmem %s0, %s236
      %p238 = pneg %p39
      %p239 = pneg %p36
      %p240 = scmp.lt.s32.totalorder %s18, 1
      %s241 = scalar_select %p240, %s18, 1
      %s242 = smul.addr %s241, 32
      %s243 = smul.addr %s242, 4
      %s244 = scalar_lea.vmem %s1, %s243
      %p245 = pneg %p65
      %p246 = pneg %p62
      %p247 = pneg %p86
      %p248 = pneg %p83
      %p249 = pneg %p107
      %p250 = pneg %p104
      %p251 = pneg %p133
      %p252 = pneg %p130
      %p253 = scmp.lt.s32.totalorder %s18, 1
      %s254 = scalar_select %p253, %s18, 1
      %s255 = smul.addr %s254, 32
      %s256 = smul.addr %s255, 4
      %s257 = scalar_lea.vmem %s4, %s256
      %p258 = pneg %p159
      %p259 = pneg %p156
      %p260 = scmp.lt.s32.totalorder %s18, 1
      %s261 = scalar_select %p260, %s18, 1
      %s262 = smul.addr %s261, 2
      %s263 = scalar_lea.vmem %s5, %s262
      %p264 = pneg %p185
      %p265 = pneg %p182
      %p266 = scmp.lt.s32.totalorder %s18, 1
      %s267 = scalar_select %p266, %s18, 1
      %s268 = smul.addr %s267, 2
      %s269 = scalar_lea.vmem %s6, %s268
      %p270 = scmp.lt.s32.totalorder %s18, 1
      %s271 = scalar_select %p270, %s18, 1
      %s272 = smul.addr %s271, 54
      %s273 = smul.addr %s272, 4
      %s274 = scalar_lea.vmem %s0, %s273
      %p275 = scmp.lt.s32.totalorder %s18, 1
      %s276 = scalar_select %p275, %s18, 1
      %s277 = smul.addr %s276, 32
      %s278 = smul.addr %s277, 4
      %s279 = scalar_lea.vmem %s1, %s278
      %p280 = scmp.lt.s32.totalorder %s18, 1
      %s281 = scalar_select %p280, %s18, 1
      %s282 = smul.addr %s281, 32
      %s283 = smul.addr %s282, 4
      %s284 = scalar_lea.vmem %s4, %s283
      %p285 = scmp.lt.s32.totalorder %s18, 1
      %s286 = scalar_select %p285, %s18, 1
      %s287 = smul.addr %s286, 2
      %s288 = scalar_lea.vmem %s5, %s287
      %p289 = scmp.lt.s32.totalorder %s18, 1
      %s290 = scalar_select %p289, %s18, 1
      %s291 = smul.addr %s290, 2
      %s292 = scalar_lea.vmem %s6, %s291
      %v293 = vld [vmem:[%s274] sm:$0xf]
      %v294 = vld [vmem:[%s274 + $0x4] sm:$0xf]
      %v295 = vld [vmem:[%s274 + $0xc] sm:$0xf]
      %v296 = vld [vmem:[%s274 + $0x10] sm:$0xf]
      %v297 = vld [vmem:[%s274 + $0x18] sm:$0xf]
      %v298 = vld [vmem:[%s274 + $0x1c] sm:$0xf]
      %v299 = vld [vmem:[%s274 + $0x24] sm:$0xf]
      %v300 = vld [vmem:[%s274 + $0x28] sm:$0xf]
      %v301 = vld [vmem:[%s274 + $0x30] sm:$0xf]
      %v302 = vld [vmem:[%s274 + $0x34] sm:$0xf]
      %v303 = vld [vmem:[%s274 + $0x3c] sm:$0xf]
      %v304 = vld [vmem:[%s274 + $0x40] sm:$0xf]
      %v305 = vld [vmem:[%s274 + $0x48] sm:$0xf]
      %v306 = vld [vmem:[%s274 + $0x4c] sm:$0xf]
      %v307 = vld [vmem:[%s274 + $0x54] sm:$0xf]
      %v308 = vld [vmem:[%s274 + $0x58] sm:$0xf]
      %v309 = vld [vmem:[%s274 + $0x60] sm:$0xf]
      %v310 = vld [vmem:[%s274 + $0x64] sm:$0xf]
      %v311 = vld [vmem:[%s274 + $0x6c] sm:$0xf]
      %v312 = vld [vmem:[%s274 + $0x70] sm:$0xf]
      %v313 = vld [vmem:[%s274 + $0x78] sm:$0xf]
      %v314 = vld [vmem:[%s274 + $0x7c] sm:$0xf]
      %v315 = vld [vmem:[%s274 + $0x84] sm:$0xf]
      %v316 = vld [vmem:[%s274 + $0x88] sm:$0xf]
      %v317 = vld [vmem:[%s274 + $0x90] sm:$0xf]
      %v318 = vld [vmem:[%s274 + $0x94] sm:$0xf]
      %v319 = vld [vmem:[%s274 + $0x9c] sm:$0xf]
      %v320 = vld [vmem:[%s274 + $0xa0] sm:$0xf]
      %v321 = vld [vmem:[%s274 + $0xa8] sm:$0xf]
      %v322 = vld [vmem:[%s274 + $0xac] sm:$0xf]
      %v323 = vld [vmem:[%s274 + $0xb4] sm:$0xf]
      %v324 = vld [vmem:[%s274 + $0xb8] sm:$0xf]
      %v325 = vld [vmem:[%s274 + $0x8] sm:$0x1]
      %v326 = vld [vmem:[%s274 + $0x14] sm:$0x1]
      %v327 = vld [vmem:[%s274 + $0x20] sm:$0x1]
      %v328 = vld [vmem:[%s274 + $0x2c] sm:$0x1]
      %v329 = vld [vmem:[%s274 + $0x38] sm:$0x1]
      %v330 = vld [vmem:[%s274 + $0x44] sm:$0x1]
      %v331 = vld [vmem:[%s274 + $0x50] sm:$0x1]
      %v332 = vld [vmem:[%s274 + $0x5c] sm:$0x1]
      %v333 = vld [vmem:[%s274 + $0x68] sm:$0x1]
      %v334 = vld [vmem:[%s274 + $0x74] sm:$0x1]
      %v335 = vld [vmem:[%s274 + $0x80] sm:$0x1]
      %v336 = vld [vmem:[%s274 + $0x8c] sm:$0x1]
      %v337 = vld [vmem:[%s274 + $0x98] sm:$0x1]
      %v338 = vld [vmem:[%s274 + $0xa4] sm:$0x1]
      %v339 = vld [vmem:[%s274 + $0xb0] sm:$0x1]
      %v340 = vld [vmem:[%s274 + $0xbc] sm:$0x1]
      %v341 = vld [vmem:[%s274] sm:$0xe]
      %v342 = vld [vmem:[%s274 + $0xc] sm:$0xe]
      %v343 = vld [vmem:[%s274 + $0x18] sm:$0xe]
      %v344 = vld [vmem:[%s274 + $0x24] sm:$0xe]
      %v345 = vld [vmem:[%s274 + $0x30] sm:$0xe]
      %v346 = vld [vmem:[%s274 + $0x3c] sm:$0xe]
      %v347 = vld [vmem:[%s274 + $0x48] sm:$0xe]
      %v348 = vld [vmem:[%s274 + $0x54] sm:$0xe]
      %v349 = vld [vmem:[%s274 + $0x60] sm:$0xe]
      %v350 = vld [vmem:[%s274 + $0x6c] sm:$0xe]
      %v351 = vld [vmem:[%s274 + $0x78] sm:$0xe]
      %v352 = vld [vmem:[%s274 + $0x84] sm:$0xe]
      %v353 = vld [vmem:[%s274 + $0x90] sm:$0xe]
      %v354 = vld [vmem:[%s274 + $0x9c] sm:$0xe]
      %v355 = vld [vmem:[%s274 + $0xa8] sm:$0xe]
      %v356 = vld [vmem:[%s274 + $0xb4] sm:$0xe]
      %v389 = vunpack.c.l.b16 %v293
      %v390 = vunpack.c.l.b16 %v294
      %v391 = vunpack.c.l.b16 %v295
      %v392 = vunpack.c.l.b16 %v296
      %v393 = vunpack.c.l.b16 %v297
      %v394 = vunpack.c.l.b16 %v298
      %v395 = vunpack.c.l.b16 %v299
      %v396 = vunpack.c.l.b16 %v300
      %v397 = vunpack.c.l.b16 %v301
      %v398 = vunpack.c.l.b16 %v302
      %v399 = vunpack.c.l.b16 %v303
      %v400 = vunpack.c.l.b16 %v304
      %v401 = vunpack.c.l.b16 %v305
      %v402 = vunpack.c.l.b16 %v306
      %v403 = vunpack.c.l.b16 %v307
      %v404 = vunpack.c.l.b16 %v308
      %v405 = vunpack.c.l.b16 %v309
      %v406 = vunpack.c.l.b16 %v310
      %v407 = vunpack.c.l.b16 %v311
      %v408 = vunpack.c.l.b16 %v312
      %v409 = vunpack.c.l.b16 %v313
      %v410 = vunpack.c.l.b16 %v314
      %v411 = vunpack.c.l.b16 %v315
      %v412 = vunpack.c.l.b16 %v316
      %v413 = vunpack.c.l.b16 %v317
      %v414 = vunpack.c.l.b16 %v318
      %v415 = vunpack.c.l.b16 %v319
      %v416 = vunpack.c.l.b16 %v320
      %v417 = vunpack.c.l.b16 %v321
      %v418 = vunpack.c.l.b16 %v322
      %v419 = vunpack.c.l.b16 %v323
      %v420 = vunpack.c.l.b16 %v324
      %v421 = vpack.c.b16 %v390, %v389
      %v422 = vpack.c.b16 %v392, %v391
      %v423 = vpack.c.b16 %v394, %v393
      %v424 = vpack.c.b16 %v396, %v395
      %v425 = vpack.c.b16 %v398, %v397
      %v426 = vpack.c.b16 %v400, %v399
      %v427 = vpack.c.b16 %v402, %v401
      %v428 = vpack.c.b16 %v404, %v403
      %v429 = vpack.c.b16 %v406, %v405
      %v430 = vpack.c.b16 %v408, %v407
      %v431 = vpack.c.b16 %v410, %v409
      %v432 = vpack.c.b16 %v412, %v411
      %v433 = vpack.c.b16 %v414, %v413
      %v434 = vpack.c.b16 %v416, %v415
      %v435 = vpack.c.b16 %v418, %v417
      %v436 = vpack.c.b16 %v420, %v419
      %v469 = vunpack.c.l.b16 %v325
      %v470 = vunpack.c.l.b16 %v326
      %v471 = vunpack.c.l.b16 %v327
      %v472 = vunpack.c.l.b16 %v328
      %v473 = vunpack.c.l.b16 %v329
      %v474 = vunpack.c.l.b16 %v330
      %v475 = vunpack.c.l.b16 %v331
      %v476 = vunpack.c.l.b16 %v332
      %v477 = vunpack.c.l.b16 %v333
      %v478 = vunpack.c.l.b16 %v334
      %v479 = vunpack.c.l.b16 %v335
      %v480 = vunpack.c.l.b16 %v336
      %v481 = vunpack.c.l.b16 %v337
      %v482 = vunpack.c.l.b16 %v338
      %v483 = vunpack.c.l.b16 %v339
      %v484 = vunpack.c.l.b16 %v340
      %v485 = vpack.c.b16 %v469, %v469
      %v486 = vpack.c.b16 %v470, %v470
      %v487 = vpack.c.b16 %v471, %v471
      %v488 = vpack.c.b16 %v472, %v472
      %v489 = vpack.c.b16 %v473, %v473
      %v490 = vpack.c.b16 %v474, %v474
      %v491 = vpack.c.b16 %v475, %v475
      %v492 = vpack.c.b16 %v476, %v476
      %v493 = vpack.c.b16 %v477, %v477
      %v494 = vpack.c.b16 %v478, %v478
      %v495 = vpack.c.b16 %v479, %v479
      %v496 = vpack.c.b16 %v480, %v480
      %v497 = vpack.c.b16 %v481, %v481
      %v498 = vpack.c.b16 %v482, %v482
      %v499 = vpack.c.b16 %v483, %v483
      %v500 = vpack.c.b16 %v484, %v484
      %vm501 = vsmask.f32 7424
      %v503 = vshrl.u32 %v421, 16
      %v505 = vshll.u32 %v421, 16
      %v507 = vrot.slane %v505, 1
      %v508 = vor.u32 %v503, %v507
      %v510 = vshll.u32 %v485, 16
      %v512 = vrot.slane %v510, 1
      %v513 = vsel %vm501, %v508, %v512
      %v515 = vshrl.u32 %v422, 16
      %v517 = vshll.u32 %v422, 16
      %v519 = vrot.slane %v517, 1
      %v520 = vor.u32 %v515, %v519
      %v522 = vshll.u32 %v486, 16
      %v524 = vrot.slane %v522, 1
      %v525 = vsel %vm501, %v520, %v524
      %v527 = vshrl.u32 %v423, 16
      %v529 = vshll.u32 %v423, 16
      %v531 = vrot.slane %v529, 1
      %v532 = vor.u32 %v527, %v531
      %v534 = vshll.u32 %v487, 16
      %v536 = vrot.slane %v534, 1
      %v537 = vsel %vm501, %v532, %v536
      %v539 = vshrl.u32 %v424, 16
      %v541 = vshll.u32 %v424, 16
      %v543 = vrot.slane %v541, 1
      %v544 = vor.u32 %v539, %v543
      %v546 = vshll.u32 %v488, 16
      %v548 = vrot.slane %v546, 1
      %v549 = vsel %vm501, %v544, %v548
      %v551 = vshrl.u32 %v425, 16
      %v553 = vshll.u32 %v425, 16
      %v555 = vrot.slane %v553, 1
      %v556 = vor.u32 %v551, %v555
      %v558 = vshll.u32 %v489, 16
      %v560 = vrot.slane %v558, 1
      %v561 = vsel %vm501, %v556, %v560
      %v563 = vshrl.u32 %v426, 16
      %v565 = vshll.u32 %v426, 16
      %v567 = vrot.slane %v565, 1
      %v568 = vor.u32 %v563, %v567
      %v570 = vshll.u32 %v490, 16
      %v572 = vrot.slane %v570, 1
      %v573 = vsel %vm501, %v568, %v572
      %v575 = vshrl.u32 %v427, 16
      %v577 = vshll.u32 %v427, 16
      %v579 = vrot.slane %v577, 1
      %v580 = vor.u32 %v575, %v579
      %v582 = vshll.u32 %v491, 16
      %v584 = vrot.slane %v582, 1
      %v585 = vsel %vm501, %v580, %v584
      %v587 = vshrl.u32 %v428, 16
      %v589 = vshll.u32 %v428, 16
      %v591 = vrot.slane %v589, 1
      %v592 = vor.u32 %v587, %v591
      %v594 = vshll.u32 %v492, 16
      %v596 = vrot.slane %v594, 1
      %v597 = vsel %vm501, %v592, %v596
      %v599 = vshrl.u32 %v429, 16
      %v601 = vshll.u32 %v429, 16
      %v603 = vrot.slane %v601, 1
      %v604 = vor.u32 %v599, %v603
      %v606 = vshll.u32 %v493, 16
      %v608 = vrot.slane %v606, 1
      %v609 = vsel %vm501, %v604, %v608
      %v611 = vshrl.u32 %v430, 16
      %v613 = vshll.u32 %v430, 16
      %v615 = vrot.slane %v613, 1
      %v616 = vor.u32 %v611, %v615
      %v618 = vshll.u32 %v494, 16
      %v620 = vrot.slane %v618, 1
      %v621 = vsel %vm501, %v616, %v620
      %v623 = vshrl.u32 %v431, 16
      %v625 = vshll.u32 %v431, 16
      %v627 = vrot.slane %v625, 1
      %v628 = vor.u32 %v623, %v627
      %v630 = vshll.u32 %v495, 16
      %v632 = vrot.slane %v630, 1
      %v633 = vsel %vm501, %v628, %v632
      %v635 = vshrl.u32 %v432, 16
      %v637 = vshll.u32 %v432, 16
      %v639 = vrot.slane %v637, 1
      %v640 = vor.u32 %v635, %v639
      %v642 = vshll.u32 %v496, 16
      %v644 = vrot.slane %v642, 1
      %v645 = vsel %vm501, %v640, %v644
      %v647 = vshrl.u32 %v433, 16
      %v649 = vshll.u32 %v433, 16
      %v651 = vrot.slane %v649, 1
      %v652 = vor.u32 %v647, %v651
      %v654 = vshll.u32 %v497, 16
      %v656 = vrot.slane %v654, 1
      %v657 = vsel %vm501, %v652, %v656
      %v659 = vshrl.u32 %v434, 16
      %v661 = vshll.u32 %v434, 16
      %v663 = vrot.slane %v661, 1
      %v664 = vor.u32 %v659, %v663
      %v666 = vshll.u32 %v498, 16
      %v668 = vrot.slane %v666, 1
      %v669 = vsel %vm501, %v664, %v668
      %v671 = vshrl.u32 %v435, 16
      %v673 = vshll.u32 %v435, 16
      %v675 = vrot.slane %v673, 1
      %v676 = vor.u32 %v671, %v675
      %v678 = vshll.u32 %v499, 16
      %v680 = vrot.slane %v678, 1
      %v681 = vsel %vm501, %v676, %v680
      %v683 = vshrl.u32 %v436, 16
      %v685 = vshll.u32 %v436, 16
      %v687 = vrot.slane %v685, 1
      %v688 = vor.u32 %v683, %v687
      %v690 = vshll.u32 %v500, 16
      %v692 = vrot.slane %v690, 1
      %v693 = vsel %vm501, %v688, %v692
      %v726 = vunpack.c.l.b16 %v341
      %v727 = vunpack.c.l.b16 %v342
      %v728 = vunpack.c.l.b16 %v343
      %v729 = vunpack.c.l.b16 %v344
      %v730 = vunpack.c.l.b16 %v345
      %v731 = vunpack.c.l.b16 %v346
      %v732 = vunpack.c.l.b16 %v347
      %v733 = vunpack.c.l.b16 %v348
      %v734 = vunpack.c.l.b16 %v349
      %v735 = vunpack.c.l.b16 %v350
      %v736 = vunpack.c.l.b16 %v351
      %v737 = vunpack.c.l.b16 %v352
      %v738 = vunpack.c.l.b16 %v353
      %v739 = vunpack.c.l.b16 %v354
      %v740 = vunpack.c.l.b16 %v355
      %v741 = vunpack.c.l.b16 %v356
      %v742 = vpack.c.b16 %v390, %v726
      %v743 = vpack.c.b16 %v392, %v727
      %v744 = vpack.c.b16 %v394, %v728
      %v745 = vpack.c.b16 %v396, %v729
      %v746 = vpack.c.b16 %v398, %v730
      %v747 = vpack.c.b16 %v400, %v731
      %v748 = vpack.c.b16 %v402, %v732
      %v749 = vpack.c.b16 %v404, %v733
      %v750 = vpack.c.b16 %v406, %v734
      %v751 = vpack.c.b16 %v408, %v735
      %v752 = vpack.c.b16 %v410, %v736
      %v753 = vpack.c.b16 %v412, %v737
      %v754 = vpack.c.b16 %v414, %v738
      %v755 = vpack.c.b16 %v416, %v739
      %v756 = vpack.c.b16 %v418, %v740
      %v757 = vpack.c.b16 %v420, %v741
      %vm758 = vcmask 1046528
      %v759 = vrot.slane %v742, 1
      %v760 = vrot.slane %v485, 1
      %v761 = vsel %vm758, %v759, %v760
      %v762 = vrot.slane %v743, 1
      %v763 = vrot.slane %v486, 1
      %v764 = vsel %vm758, %v762, %v763
      %v765 = vrot.slane %v744, 1
      %v766 = vrot.slane %v487, 1
      %v767 = vsel %vm758, %v765, %v766
      %v768 = vrot.slane %v745, 1
      %v769 = vrot.slane %v488, 1
      %v770 = vsel %vm758, %v768, %v769
      %v771 = vrot.slane %v746, 1
      %v772 = vrot.slane %v489, 1
      %v773 = vsel %vm758, %v771, %v772
      %v774 = vrot.slane %v747, 1
      %v775 = vrot.slane %v490, 1
      %v776 = vsel %vm758, %v774, %v775
      %v777 = vrot.slane %v748, 1
      %v778 = vrot.slane %v491, 1
      %v779 = vsel %vm758, %v777, %v778
      %v780 = vrot.slane %v749, 1
      %v781 = vrot.slane %v492, 1
      %v782 = vsel %vm758, %v780, %v781
      %v783 = vrot.slane %v750, 1
      %v784 = vrot.slane %v493, 1
      %v785 = vsel %vm758, %v783, %v784
      %v786 = vrot.slane %v751, 1
      %v787 = vrot.slane %v494, 1
      %v788 = vsel %vm758, %v786, %v787
      %v789 = vrot.slane %v752, 1
      %v790 = vrot.slane %v495, 1
      %v791 = vsel %vm758, %v789, %v790
      %v792 = vrot.slane %v753, 1
      %v793 = vrot.slane %v496, 1
      %v794 = vsel %vm758, %v792, %v793
      %v795 = vrot.slane %v754, 1
      %v796 = vrot.slane %v497, 1
      %v797 = vsel %vm758, %v795, %v796
      %v798 = vrot.slane %v755, 1
      %v799 = vrot.slane %v498, 1
      %v800 = vsel %vm758, %v798, %v799
      %v801 = vrot.slane %v756, 1
      %v802 = vrot.slane %v499, 1
      %v803 = vsel %vm758, %v801, %v802
      %v804 = vrot.slane %v757, 1
      %v805 = vrot.slane %v500, 1
      %v806 = vsel %vm758, %v804, %v805
      %v823 = vld [vmem:[%s2] sm:$0xf]
      %v824 = vld [vmem:[%s2 + $0x4] sm:$0xf]
      %v825 = vld [vmem:[%s2 + $0x8] sm:$0xf]
      %v826 = vld [vmem:[%s2 + $0xc] sm:$0xf]
      %v827 = vld [vmem:[%s2 + $0x10] sm:$0xf]
      %v828 = vld [vmem:[%s2 + $0x14] sm:$0xf]
      %v829 = vld [vmem:[%s2 + $0x18] sm:$0xf]
      %v830 = vld [vmem:[%s2 + $0x1c] sm:$0xf]
      %v831 = vld [vmem:[%s2 + $0x20] sm:$0xf]
      %v832 = vld [vmem:[%s2 + $0x24] sm:$0xf]
      %v833 = vld [vmem:[%s2 + $0x28] sm:$0xf]
      %v834 = vld [vmem:[%s2 + $0x2c] sm:$0xf]
      %v835 = vld [vmem:[%s2 + $0x30] sm:$0xf]
      %v836 = vld [vmem:[%s2 + $0x34] sm:$0xf]
      %v837 = vld [vmem:[%s2 + $0x38] sm:$0xf]
      %v838 = vld [vmem:[%s2 + $0x3c] sm:$0xf]
      %v839 = vld [vmem:[%s2 + $0x40] sm:$0xf]
      %v840 = vld [vmem:[%s2 + $0x44] sm:$0xf]
      %v841 = vld [vmem:[%s2 + $0x48] sm:$0xf]
      %v842 = vld [vmem:[%s2 + $0x4c] sm:$0xf]
      %v843 = vld [vmem:[%s2 + $0x50] sm:$0xf]
      %v844 = vld [vmem:[%s2 + $0x54] sm:$0xf]
      %v845 = vld [vmem:[%s2 + $0x58] sm:$0xf]
      %v846 = vld [vmem:[%s2 + $0x5c] sm:$0xf]
      %v847 = vld [vmem:[%s2 + $0x60] sm:$0xf]
      %v848 = vld [vmem:[%s2 + $0x64] sm:$0xf]
      %v849 = vld [vmem:[%s2 + $0x68] sm:$0xf]
      %v850 = vld [vmem:[%s2 + $0x6c] sm:$0xf]
      %v851 = vld [vmem:[%s2 + $0x70] sm:$0xf]
      %v852 = vld [vmem:[%s2 + $0x74] sm:$0xf]
      %v853 = vld [vmem:[%s2 + $0x78] sm:$0xf]
      %v854 = vld [vmem:[%s2 + $0x7c] sm:$0xf]
      %v855 = vld [vmem:[%s2 + $0x80] sm:$0xf]
      %v856 = vld [vmem:[%s2 + $0x84] sm:$0xf]
      %v857 = vld [vmem:[%s2 + $0x88] sm:$0xf]
      %v858 = vld [vmem:[%s2 + $0x8c] sm:$0xf]
      %v859 = vld [vmem:[%s2 + $0x90] sm:$0xf]
      %v860 = vld [vmem:[%s2 + $0x94] sm:$0xf]
      %v861 = vld [vmem:[%s2 + $0x98] sm:$0xf]
      %v862 = vld [vmem:[%s2 + $0x9c] sm:$0xf]
      %v863 = vld [vmem:[%s2 + $0xa0] sm:$0xf]
      %v864 = vld [vmem:[%s2 + $0xa4] sm:$0xf]
      %v865 = vld [vmem:[%s2 + $0xa8] sm:$0xf]
      %v866 = vld [vmem:[%s2 + $0xac] sm:$0xf]
      %v867 = vld [vmem:[%s2 + $0xb0] sm:$0xf]
      %v868 = vld [vmem:[%s2 + $0xb4] sm:$0xf]
      %v869 = vld [vmem:[%s2 + $0xb8] sm:$0xf]
      %v870 = vld [vmem:[%s2 + $0xbc] sm:$0xf]
      %s871 = scalar_lea.vmem %s274, 12
      %v872 = vld [vmem:[%s871] sm:$0xf]
      %v873 = vld [vmem:[%s871 + $0x4] sm:$0xf]
      %v874 = vld [vmem:[%s871 + $0xc] sm:$0xf]
      %v875 = vld [vmem:[%s871 + $0x10] sm:$0xf]
      %v876 = vld [vmem:[%s871 + $0x18] sm:$0xf]
      %v877 = vld [vmem:[%s871 + $0x1c] sm:$0xf]
      %v878 = vld [vmem:[%s871 + $0x24] sm:$0xf]
      %v879 = vld [vmem:[%s871 + $0x28] sm:$0xf]
      %v880 = vld [vmem:[%s871 + $0x30] sm:$0xf]
      %v881 = vld [vmem:[%s871 + $0x34] sm:$0xf]
      %v882 = vld [vmem:[%s871 + $0x3c] sm:$0xf]
      %v883 = vld [vmem:[%s871 + $0x40] sm:$0xf]
      %v884 = vld [vmem:[%s871 + $0x48] sm:$0xf]
      %v885 = vld [vmem:[%s871 + $0x4c] sm:$0xf]
      %v886 = vld [vmem:[%s871 + $0x54] sm:$0xf]
      %v887 = vld [vmem:[%s871 + $0x58] sm:$0xf]
      %v888 = vld [vmem:[%s871 + $0x60] sm:$0xf]
      %v889 = vld [vmem:[%s871 + $0x64] sm:$0xf]
      %v890 = vld [vmem:[%s871 + $0x6c] sm:$0xf]
      %v891 = vld [vmem:[%s871 + $0x70] sm:$0xf]
      %v892 = vld [vmem:[%s871 + $0x78] sm:$0xf]
      %v893 = vld [vmem:[%s871 + $0x7c] sm:$0xf]
      %v894 = vld [vmem:[%s871 + $0x84] sm:$0xf]
      %v895 = vld [vmem:[%s871 + $0x88] sm:$0xf]
      %v896 = vld [vmem:[%s871 + $0x90] sm:$0xf]
      %v897 = vld [vmem:[%s871 + $0x94] sm:$0xf]
      %v898 = vld [vmem:[%s871 + $0x9c] sm:$0xf]
      %v899 = vld [vmem:[%s871 + $0xa0] sm:$0xf]
      %v900 = vld [vmem:[%s871 + $0xa8] sm:$0xf]
      %v901 = vld [vmem:[%s871 + $0xac] sm:$0xf]
      %v902 = vld [vmem:[%s871 + $0xb4] sm:$0xf]
      %v903 = vld [vmem:[%s871 + $0xb8] sm:$0xf]
      %v904 = vld [vmem:[%s871 + $0x8] sm:$0x1]
      %v905 = vld [vmem:[%s871 + $0x14] sm:$0x1]
      %v906 = vld [vmem:[%s871 + $0x20] sm:$0x1]
      %v907 = vld [vmem:[%s871 + $0x2c] sm:$0x1]
      %v908 = vld [vmem:[%s871 + $0x38] sm:$0x1]
      %v909 = vld [vmem:[%s871 + $0x44] sm:$0x1]
      %v910 = vld [vmem:[%s871 + $0x50] sm:$0x1]
      %v911 = vld [vmem:[%s871 + $0x5c] sm:$0x1]
      %v912 = vld [vmem:[%s871 + $0x68] sm:$0x1]
      %v913 = vld [vmem:[%s871 + $0x74] sm:$0x1]
      %v914 = vld [vmem:[%s871 + $0x80] sm:$0x1]
      %v915 = vld [vmem:[%s871 + $0x8c] sm:$0x1]
      %v916 = vld [vmem:[%s871 + $0x98] sm:$0x1]
      %v917 = vld [vmem:[%s871 + $0xa4] sm:$0x1]
      %v918 = vld [vmem:[%s871 + $0xb0] sm:$0x1]
      %v919 = vld [vmem:[%s871 + $0xbc] sm:$0x1]
      %v920 = vld [vmem:[%s871] sm:$0xe]
      %v921 = vld [vmem:[%s871 + $0xc] sm:$0xe]
      %v922 = vld [vmem:[%s871 + $0x18] sm:$0xe]
      %v923 = vld [vmem:[%s871 + $0x24] sm:$0xe]
      %v924 = vld [vmem:[%s871 + $0x30] sm:$0xe]
      %v925 = vld [vmem:[%s871 + $0x3c] sm:$0xe]
      %v926 = vld [vmem:[%s871 + $0x48] sm:$0xe]
      %v927 = vld [vmem:[%s871 + $0x54] sm:$0xe]
      %v928 = vld [vmem:[%s871 + $0x60] sm:$0xe]
      %v929 = vld [vmem:[%s871 + $0x6c] sm:$0xe]
      %v930 = vld [vmem:[%s871 + $0x78] sm:$0xe]
      %v931 = vld [vmem:[%s871 + $0x84] sm:$0xe]
      %v932 = vld [vmem:[%s871 + $0x90] sm:$0xe]
      %v933 = vld [vmem:[%s871 + $0x9c] sm:$0xe]
      %v934 = vld [vmem:[%s871 + $0xa8] sm:$0xe]
      %v935 = vld [vmem:[%s871 + $0xb4] sm:$0xe]
      %v968 = vunpack.c.l.b16 %v872
      %v969 = vunpack.c.l.b16 %v873
      %v970 = vunpack.c.l.b16 %v874
      %v971 = vunpack.c.l.b16 %v875
      %v972 = vunpack.c.l.b16 %v876
      %v973 = vunpack.c.l.b16 %v877
      %v974 = vunpack.c.l.b16 %v878
      %v975 = vunpack.c.l.b16 %v879
      %v976 = vunpack.c.l.b16 %v880
      %v977 = vunpack.c.l.b16 %v881
      %v978 = vunpack.c.l.b16 %v882
      %v979 = vunpack.c.l.b16 %v883
      %v980 = vunpack.c.l.b16 %v884
      %v981 = vunpack.c.l.b16 %v885
      %v982 = vunpack.c.l.b16 %v886
      %v983 = vunpack.c.l.b16 %v887
      %v984 = vunpack.c.l.b16 %v888
      %v985 = vunpack.c.l.b16 %v889
      %v986 = vunpack.c.l.b16 %v890
      %v987 = vunpack.c.l.b16 %v891
      %v988 = vunpack.c.l.b16 %v892
      %v989 = vunpack.c.l.b16 %v893
      %v990 = vunpack.c.l.b16 %v894
      %v991 = vunpack.c.l.b16 %v895
      %v992 = vunpack.c.l.b16 %v896
      %v993 = vunpack.c.l.b16 %v897
      %v994 = vunpack.c.l.b16 %v898
      %v995 = vunpack.c.l.b16 %v899
      %v996 = vunpack.c.l.b16 %v900
      %v997 = vunpack.c.l.b16 %v901
      %v998 = vunpack.c.l.b16 %v902
      %v999 = vunpack.c.l.b16 %v903
      %v1000 = vpack.c.b16 %v969, %v968
      %v1001 = vpack.c.b16 %v971, %v970
      %v1002 = vpack.c.b16 %v973, %v972
      %v1003 = vpack.c.b16 %v975, %v974
      %v1004 = vpack.c.b16 %v977, %v976
      %v1005 = vpack.c.b16 %v979, %v978
      %v1006 = vpack.c.b16 %v981, %v980
      %v1007 = vpack.c.b16 %v983, %v982
      %v1008 = vpack.c.b16 %v985, %v984
      %v1009 = vpack.c.b16 %v987, %v986
      %v1010 = vpack.c.b16 %v989, %v988
      %v1011 = vpack.c.b16 %v991, %v990
      %v1012 = vpack.c.b16 %v993, %v992
      %v1013 = vpack.c.b16 %v995, %v994
      %v1014 = vpack.c.b16 %v997, %v996
      %v1015 = vpack.c.b16 %v999, %v998
      %v1048 = vunpack.c.l.b16 %v904
      %v1049 = vunpack.c.l.b16 %v905
      %v1050 = vunpack.c.l.b16 %v906
      %v1051 = vunpack.c.l.b16 %v907
      %v1052 = vunpack.c.l.b16 %v908
      %v1053 = vunpack.c.l.b16 %v909
      %v1054 = vunpack.c.l.b16 %v910
      %v1055 = vunpack.c.l.b16 %v911
      %v1056 = vunpack.c.l.b16 %v912
      %v1057 = vunpack.c.l.b16 %v913
      %v1058 = vunpack.c.l.b16 %v914
      %v1059 = vunpack.c.l.b16 %v915
      %v1060 = vunpack.c.l.b16 %v916
      %v1061 = vunpack.c.l.b16 %v917
      %v1062 = vunpack.c.l.b16 %v918
      %v1063 = vunpack.c.l.b16 %v919
      %v1064 = vpack.c.b16 %v1048, %v1048
      %v1065 = vpack.c.b16 %v1049, %v1049
      %v1066 = vpack.c.b16 %v1050, %v1050
      %v1067 = vpack.c.b16 %v1051, %v1051
      %v1068 = vpack.c.b16 %v1052, %v1052
      %v1069 = vpack.c.b16 %v1053, %v1053
      %v1070 = vpack.c.b16 %v1054, %v1054
      %v1071 = vpack.c.b16 %v1055, %v1055
      %v1072 = vpack.c.b16 %v1056, %v1056
      %v1073 = vpack.c.b16 %v1057, %v1057
      %v1074 = vpack.c.b16 %v1058, %v1058
      %v1075 = vpack.c.b16 %v1059, %v1059
      %v1076 = vpack.c.b16 %v1060, %v1060
      %v1077 = vpack.c.b16 %v1061, %v1061
      %v1078 = vpack.c.b16 %v1062, %v1062
      %v1079 = vpack.c.b16 %v1063, %v1063
      %v1081 = vshrl.u32 %v1000, 16
      %v1083 = vshll.u32 %v1000, 16
      %v1085 = vrot.slane %v1083, 1
      %v1086 = vor.u32 %v1081, %v1085
      %v1088 = vshll.u32 %v1064, 16
      %v1090 = vrot.slane %v1088, 1
      %v1091 = vsel %vm501, %v1086, %v1090
      %v1093 = vshrl.u32 %v1001, 16
      %v1095 = vshll.u32 %v1001, 16
      %v1097 = vrot.slane %v1095, 1
      %v1098 = vor.u32 %v1093, %v1097
      %v1100 = vshll.u32 %v1065, 16
      %v1102 = vrot.slane %v1100, 1
      %v1103 = vsel %vm501, %v1098, %v1102
      %v1105 = vshrl.u32 %v1002, 16
      %v1107 = vshll.u32 %v1002, 16
      %v1109 = vrot.slane %v1107, 1
      %v1110 = vor.u32 %v1105, %v1109
      %v1112 = vshll.u32 %v1066, 16
      %v1114 = vrot.slane %v1112, 1
      %v1115 = vsel %vm501, %v1110, %v1114
      %v1117 = vshrl.u32 %v1003, 16
      %v1119 = vshll.u32 %v1003, 16
      %v1121 = vrot.slane %v1119, 1
      %v1122 = vor.u32 %v1117, %v1121
      %v1124 = vshll.u32 %v1067, 16
      %v1126 = vrot.slane %v1124, 1
      %v1127 = vsel %vm501, %v1122, %v1126
      %v1129 = vshrl.u32 %v1004, 16
      %v1131 = vshll.u32 %v1004, 16
      %v1133 = vrot.slane %v1131, 1
      %v1134 = vor.u32 %v1129, %v1133
      %v1136 = vshll.u32 %v1068, 16
      %v1138 = vrot.slane %v1136, 1
      %v1139 = vsel %vm501, %v1134, %v1138
      %v1141 = vshrl.u32 %v1005, 16
      %v1143 = vshll.u32 %v1005, 16
      %v1145 = vrot.slane %v1143, 1
      %v1146 = vor.u32 %v1141, %v1145
      %v1148 = vshll.u32 %v1069, 16
      %v1150 = vrot.slane %v1148, 1
      %v1151 = vsel %vm501, %v1146, %v1150
      %v1153 = vshrl.u32 %v1006, 16
      %v1155 = vshll.u32 %v1006, 16
      %v1157 = vrot.slane %v1155, 1
      %v1158 = vor.u32 %v1153, %v1157
      %v1160 = vshll.u32 %v1070, 16
      %v1162 = vrot.slane %v1160, 1
      %v1163 = vsel %vm501, %v1158, %v1162
      %v1165 = vshrl.u32 %v1007, 16
      %v1167 = vshll.u32 %v1007, 16
      %v1169 = vrot.slane %v1167, 1
      %v1170 = vor.u32 %v1165, %v1169
      %v1172 = vshll.u32 %v1071, 16
      %v1174 = vrot.slane %v1172, 1
      %v1175 = vsel %vm501, %v1170, %v1174
      %v1177 = vshrl.u32 %v1008, 16
      %v1179 = vshll.u32 %v1008, 16
      %v1181 = vrot.slane %v1179, 1
      %v1182 = vor.u32 %v1177, %v1181
      %v1184 = vshll.u32 %v1072, 16
      %v1186 = vrot.slane %v1184, 1
      %v1187 = vsel %vm501, %v1182, %v1186
      %v1189 = vshrl.u32 %v1009, 16
      %v1191 = vshll.u32 %v1009, 16
      %v1193 = vrot.slane %v1191, 1
      %v1194 = vor.u32 %v1189, %v1193
      %v1196 = vshll.u32 %v1073, 16
      %v1198 = vrot.slane %v1196, 1
      %v1199 = vsel %vm501, %v1194, %v1198
      %v1201 = vshrl.u32 %v1010, 16
      %v1203 = vshll.u32 %v1010, 16
      %v1205 = vrot.slane %v1203, 1
      %v1206 = vor.u32 %v1201, %v1205
      %v1208 = vshll.u32 %v1074, 16
      %v1210 = vrot.slane %v1208, 1
      %v1211 = vsel %vm501, %v1206, %v1210
      %v1213 = vshrl.u32 %v1011, 16
      %v1215 = vshll.u32 %v1011, 16
      %v1217 = vrot.slane %v1215, 1
      %v1218 = vor.u32 %v1213, %v1217
      %v1220 = vshll.u32 %v1075, 16
      %v1222 = vrot.slane %v1220, 1
      %v1223 = vsel %vm501, %v1218, %v1222
      %v1225 = vshrl.u32 %v1012, 16
      %v1227 = vshll.u32 %v1012, 16
      %v1229 = vrot.slane %v1227, 1
      %v1230 = vor.u32 %v1225, %v1229
      %v1232 = vshll.u32 %v1076, 16
      %v1234 = vrot.slane %v1232, 1
      %v1235 = vsel %vm501, %v1230, %v1234
      %v1237 = vshrl.u32 %v1013, 16
      %v1239 = vshll.u32 %v1013, 16
      %v1241 = vrot.slane %v1239, 1
      %v1242 = vor.u32 %v1237, %v1241
      %v1244 = vshll.u32 %v1077, 16
      %v1246 = vrot.slane %v1244, 1
      %v1247 = vsel %vm501, %v1242, %v1246
      %v1249 = vshrl.u32 %v1014, 16
      %v1251 = vshll.u32 %v1014, 16
      %v1253 = vrot.slane %v1251, 1
      %v1254 = vor.u32 %v1249, %v1253
      %v1256 = vshll.u32 %v1078, 16
      %v1258 = vrot.slane %v1256, 1
      %v1259 = vsel %vm501, %v1254, %v1258
      %v1261 = vshrl.u32 %v1015, 16
      %v1263 = vshll.u32 %v1015, 16
      %v1265 = vrot.slane %v1263, 1
      %v1266 = vor.u32 %v1261, %v1265
      %v1268 = vshll.u32 %v1079, 16
      %v1270 = vrot.slane %v1268, 1
      %v1271 = vsel %vm501, %v1266, %v1270
      %v1304 = vunpack.c.l.b16 %v920
      %v1305 = vunpack.c.l.b16 %v921
      %v1306 = vunpack.c.l.b16 %v922
      %v1307 = vunpack.c.l.b16 %v923
      %v1308 = vunpack.c.l.b16 %v924
      %v1309 = vunpack.c.l.b16 %v925
      %v1310 = vunpack.c.l.b16 %v926
      %v1311 = vunpack.c.l.b16 %v927
      %v1312 = vunpack.c.l.b16 %v928
      %v1313 = vunpack.c.l.b16 %v929
      %v1314 = vunpack.c.l.b16 %v930
      %v1315 = vunpack.c.l.b16 %v931
      %v1316 = vunpack.c.l.b16 %v932
      %v1317 = vunpack.c.l.b16 %v933
      %v1318 = vunpack.c.l.b16 %v934
      %v1319 = vunpack.c.l.b16 %v935
      %v1320 = vpack.c.b16 %v969, %v1304
      %v1321 = vpack.c.b16 %v971, %v1305
      %v1322 = vpack.c.b16 %v973, %v1306
      %v1323 = vpack.c.b16 %v975, %v1307
      %v1324 = vpack.c.b16 %v977, %v1308
      %v1325 = vpack.c.b16 %v979, %v1309
      %v1326 = vpack.c.b16 %v981, %v1310
      %v1327 = vpack.c.b16 %v983, %v1311
      %v1328 = vpack.c.b16 %v985, %v1312
      %v1329 = vpack.c.b16 %v987, %v1313
      %v1330 = vpack.c.b16 %v989, %v1314
      %v1331 = vpack.c.b16 %v991, %v1315
      %v1332 = vpack.c.b16 %v993, %v1316
      %v1333 = vpack.c.b16 %v995, %v1317
      %v1334 = vpack.c.b16 %v997, %v1318
      %v1335 = vpack.c.b16 %v999, %v1319
      %v1336 = vrot.slane %v1320, 1
      %v1337 = vrot.slane %v1064, 1
      %v1338 = vsel %vm758, %v1336, %v1337
      %v1339 = vrot.slane %v1321, 1
      %v1340 = vrot.slane %v1065, 1
      %v1341 = vsel %vm758, %v1339, %v1340
      %v1342 = vrot.slane %v1322, 1
      %v1343 = vrot.slane %v1066, 1
      %v1344 = vsel %vm758, %v1342, %v1343
      %v1345 = vrot.slane %v1323, 1
      %v1346 = vrot.slane %v1067, 1
      %v1347 = vsel %vm758, %v1345, %v1346
      %v1348 = vrot.slane %v1324, 1
      %v1349 = vrot.slane %v1068, 1
      %v1350 = vsel %vm758, %v1348, %v1349
      %v1351 = vrot.slane %v1325, 1
      %v1352 = vrot.slane %v1069, 1
      %v1353 = vsel %vm758, %v1351, %v1352
      %v1354 = vrot.slane %v1326, 1
      %v1355 = vrot.slane %v1070, 1
      %v1356 = vsel %vm758, %v1354, %v1355
      %v1357 = vrot.slane %v1327, 1
      %v1358 = vrot.slane %v1071, 1
      %v1359 = vsel %vm758, %v1357, %v1358
      %v1360 = vrot.slane %v1328, 1
      %v1361 = vrot.slane %v1072, 1
      %v1362 = vsel %vm758, %v1360, %v1361
      %v1363 = vrot.slane %v1329, 1
      %v1364 = vrot.slane %v1073, 1
      %v1365 = vsel %vm758, %v1363, %v1364
      %v1366 = vrot.slane %v1330, 1
      %v1367 = vrot.slane %v1074, 1
      %v1368 = vsel %vm758, %v1366, %v1367
      %v1369 = vrot.slane %v1331, 1
      %v1370 = vrot.slane %v1075, 1
      %v1371 = vsel %vm758, %v1369, %v1370
      %v1372 = vrot.slane %v1332, 1
      %v1373 = vrot.slane %v1076, 1
      %v1374 = vsel %vm758, %v1372, %v1373
      %v1375 = vrot.slane %v1333, 1
      %v1376 = vrot.slane %v1077, 1
      %v1377 = vsel %vm758, %v1375, %v1376
      %v1378 = vrot.slane %v1334, 1
      %v1379 = vrot.slane %v1078, 1
      %v1380 = vsel %vm758, %v1378, %v1379
      %v1381 = vrot.slane %v1335, 1
      %v1382 = vrot.slane %v1079, 1
      %v1383 = vsel %vm758, %v1381, %v1382
      %s1400 = scalar_lea.vmem %s2, 192
      %v1401 = vld [vmem:[%s1400] sm:$0xf]
      %v1402 = vld [vmem:[%s1400 + $0x4] sm:$0xf]
      %v1403 = vld [vmem:[%s1400 + $0x8] sm:$0xf]
      %v1404 = vld [vmem:[%s1400 + $0xc] sm:$0xf]
      %v1405 = vld [vmem:[%s1400 + $0x10] sm:$0xf]
      %v1406 = vld [vmem:[%s1400 + $0x14] sm:$0xf]
      %v1407 = vld [vmem:[%s1400 + $0x18] sm:$0xf]
      %v1408 = vld [vmem:[%s1400 + $0x1c] sm:$0xf]
      %v1409 = vld [vmem:[%s1400 + $0x20] sm:$0xf]
      %v1410 = vld [vmem:[%s1400 + $0x24] sm:$0xf]
      %v1411 = vld [vmem:[%s1400 + $0x28] sm:$0xf]
      %v1412 = vld [vmem:[%s1400 + $0x2c] sm:$0xf]
      %v1413 = vld [vmem:[%s1400 + $0x30] sm:$0xf]
      %v1414 = vld [vmem:[%s1400 + $0x34] sm:$0xf]
      %v1415 = vld [vmem:[%s1400 + $0x38] sm:$0xf]
      %v1416 = vld [vmem:[%s1400 + $0x3c] sm:$0xf]
      %v1417 = vld [vmem:[%s1400 + $0x40] sm:$0xf]
      %v1418 = vld [vmem:[%s1400 + $0x44] sm:$0xf]
      %v1419 = vld [vmem:[%s1400 + $0x48] sm:$0xf]
      %v1420 = vld [vmem:[%s1400 + $0x4c] sm:$0xf]
      %v1421 = vld [vmem:[%s1400 + $0x50] sm:$0xf]
      %v1422 = vld [vmem:[%s1400 + $0x54] sm:$0xf]
      %v1423 = vld [vmem:[%s1400 + $0x58] sm:$0xf]
      %v1424 = vld [vmem:[%s1400 + $0x5c] sm:$0xf]
      %v1425 = vld [vmem:[%s1400 + $0x60] sm:$0xf]
      %v1426 = vld [vmem:[%s1400 + $0x64] sm:$0xf]
      %v1427 = vld [vmem:[%s1400 + $0x68] sm:$0xf]
      %v1428 = vld [vmem:[%s1400 + $0x6c] sm:$0xf]
      %v1429 = vld [vmem:[%s1400 + $0x70] sm:$0xf]
      %v1430 = vld [vmem:[%s1400 + $0x74] sm:$0xf]
      %v1431 = vld [vmem:[%s1400 + $0x78] sm:$0xf]
      %v1432 = vld [vmem:[%s1400 + $0x7c] sm:$0xf]
      %v1433 = vld [vmem:[%s1400 + $0x80] sm:$0xf]
      %v1434 = vld [vmem:[%s1400 + $0x84] sm:$0xf]
      %v1435 = vld [vmem:[%s1400 + $0x88] sm:$0xf]
      %v1436 = vld [vmem:[%s1400 + $0x8c] sm:$0xf]
      %v1437 = vld [vmem:[%s1400 + $0x90] sm:$0xf]
      %v1438 = vld [vmem:[%s1400 + $0x94] sm:$0xf]
      %v1439 = vld [vmem:[%s1400 + $0x98] sm:$0xf]
      %v1440 = vld [vmem:[%s1400 + $0x9c] sm:$0xf]
      %v1441 = vld [vmem:[%s1400 + $0xa0] sm:$0xf]
      %v1442 = vld [vmem:[%s1400 + $0xa4] sm:$0xf]
      %v1443 = vld [vmem:[%s1400 + $0xa8] sm:$0xf]
      %v1444 = vld [vmem:[%s1400 + $0xac] sm:$0xf]
      %v1445 = vld [vmem:[%s1400 + $0xb0] sm:$0xf]
      %v1446 = vld [vmem:[%s1400 + $0xb4] sm:$0xf]
      %v1447 = vld [vmem:[%s1400 + $0xb8] sm:$0xf]
      %v1448 = vld [vmem:[%s1400 + $0xbc] sm:$0xf]
      %v1497 = vunpack.c.l.b16 %v1401
      %v1498 = vunpack.c.l.b16 %v1402
      %v1499 = vunpack.c.l.b16 %v1403
      %v1500 = vunpack.c.l.b16 %v1404
      %v1501 = vunpack.c.l.b16 %v1405
      %v1502 = vunpack.c.l.b16 %v1406
      %v1503 = vunpack.c.l.b16 %v1407
      %v1504 = vunpack.c.l.b16 %v1408
      %v1505 = vunpack.c.l.b16 %v1409
      %v1506 = vunpack.c.l.b16 %v1410
      %v1507 = vunpack.c.l.b16 %v1411
      %v1508 = vunpack.c.l.b16 %v1412
      %v1509 = vunpack.c.l.b16 %v1413
      %v1510 = vunpack.c.l.b16 %v1414
      %v1511 = vunpack.c.l.b16 %v1415
      %v1512 = vunpack.c.l.b16 %v1416
      %v1513 = vunpack.c.l.b16 %v1417
      %v1514 = vunpack.c.l.b16 %v1418
      %v1515 = vunpack.c.l.b16 %v1419
      %v1516 = vunpack.c.l.b16 %v1420
      %v1517 = vunpack.c.l.b16 %v1421
      %v1518 = vunpack.c.l.b16 %v1422
      %v1519 = vunpack.c.l.b16 %v1423
      %v1520 = vunpack.c.l.b16 %v1424
      %v1521 = vunpack.c.l.b16 %v1425
      %v1522 = vunpack.c.l.b16 %v1426
      %v1523 = vunpack.c.l.b16 %v1427
      %v1524 = vunpack.c.l.b16 %v1428
      %v1525 = vunpack.c.l.b16 %v1429
      %v1526 = vunpack.c.l.b16 %v1430
      %v1527 = vunpack.c.l.b16 %v1431
      %v1528 = vunpack.c.l.b16 %v1432
      %v1529 = vunpack.c.l.b16 %v1433
      %v1530 = vunpack.c.l.b16 %v1434
      %v1531 = vunpack.c.l.b16 %v1435
      %v1532 = vunpack.c.l.b16 %v1436
      %v1533 = vunpack.c.l.b16 %v1437
      %v1534 = vunpack.c.l.b16 %v1438
      %v1535 = vunpack.c.l.b16 %v1439
      %v1536 = vunpack.c.l.b16 %v1440
      %v1537 = vunpack.c.l.b16 %v1441
      %v1538 = vunpack.c.l.b16 %v1442
      %v1539 = vunpack.c.l.b16 %v1443
      %v1540 = vunpack.c.l.b16 %v1444
      %v1541 = vunpack.c.l.b16 %v1445
      %v1542 = vunpack.c.l.b16 %v1446
      %v1543 = vunpack.c.l.b16 %v1447
      %v1544 = vunpack.c.l.b16 %v1448
      %v1545 = vpack.c.b16 %v1498, %v1497
      %v1546 = vpack.c.b16 %v1500, %v1499
      %v1547 = vpack.c.b16 %v1502, %v1501
      %v1548 = vpack.c.b16 %v1504, %v1503
      %v1549 = vpack.c.b16 %v1506, %v1505
      %v1550 = vpack.c.b16 %v1508, %v1507
      %v1551 = vpack.c.b16 %v1510, %v1509
      %v1552 = vpack.c.b16 %v1512, %v1511
      %v1553 = vpack.c.b16 %v1514, %v1513
      %v1554 = vpack.c.b16 %v1516, %v1515
      %v1555 = vpack.c.b16 %v1518, %v1517
      %v1556 = vpack.c.b16 %v1520, %v1519
      %v1557 = vpack.c.b16 %v1522, %v1521
      %v1558 = vpack.c.b16 %v1524, %v1523
      %v1559 = vpack.c.b16 %v1526, %v1525
      %v1560 = vpack.c.b16 %v1528, %v1527
      %v1561 = vpack.c.b16 %v1530, %v1529
      %v1562 = vpack.c.b16 %v1532, %v1531
      %v1563 = vpack.c.b16 %v1534, %v1533
      %v1564 = vpack.c.b16 %v1536, %v1535
      %v1565 = vpack.c.b16 %v1538, %v1537
      %v1566 = vpack.c.b16 %v1540, %v1539
      %v1567 = vpack.c.b16 %v1542, %v1541
      %v1568 = vpack.c.b16 %v1544, %v1543
      %1593 = vmatpush.bf16.msra.mxu0 %v1552
      %1594 = vmatpush.bf16.msra.mxu0 %v1551
      %1595 = vmatpush.bf16.msra.mxu0 %v1550
      %1596 = vmatpush.bf16.msra.mxu0 %v1549
      %1597 = vmatpush.bf16.msra.mxu0 %v1548
      %1598 = vmatpush.bf16.msra.mxu0 %v1547
      %1599 = vmatpush.bf16.msra.mxu0 %v1546
      %1600 = vmatpush.bf16.msra.mxu0 %v1545
      %1601 = vmatmul.bf16.gmra.mxu0 %v1000
      %v1602 = vpop.f32.mrf.mxu0
      %v1603 = vadd.f32 0.0, %v1602
      %v1604 = vpop.f32.mrf.mxu0
      %v1605 = vadd.f32 0.0, %v1604
      %1606 = vmatmul.bf16.gmra.mxu0 %v1001
      %v1607 = vpop.f32.mrf.mxu0
      %v1608 = vadd.f32 0.0, %v1607
      %v1609 = vpop.f32.mrf.mxu0
      %v1610 = vadd.f32 0.0, %v1609
      %1611 = vmatmul.bf16.gmra.mxu0 %v1002
      %v1612 = vpop.f32.mrf.mxu0
      %v1613 = vadd.f32 0.0, %v1612
      %v1614 = vpop.f32.mrf.mxu0
      %v1615 = vadd.f32 0.0, %v1614
      %1616 = vmatmul.bf16.gmra.mxu0 %v1003
      %v1617 = vpop.f32.mrf.mxu0
      %v1618 = vadd.f32 0.0, %v1617
      %v1619 = vpop.f32.mrf.mxu0
      %v1620 = vadd.f32 0.0, %v1619
      %1621 = vmatmul.bf16.gmra.mxu0 %v1004
      %v1622 = vpop.f32.mrf.mxu0
      %v1623 = vadd.f32 0.0, %v1622
      %v1624 = vpop.f32.mrf.mxu0
      %v1625 = vadd.f32 0.0, %v1624
      %1626 = vmatmul.bf16.gmra.mxu0 %v1005
      %v1627 = vpop.f32.mrf.mxu0
      %v1628 = vadd.f32 0.0, %v1627
      %v1629 = vpop.f32.mrf.mxu0
      %v1630 = vadd.f32 0.0, %v1629
      %1631 = vmatmul.bf16.gmra.mxu0 %v1006
      %v1632 = vpop.f32.mrf.mxu0
      %v1633 = vadd.f32 0.0, %v1632
      %v1634 = vpop.f32.mrf.mxu0
      %v1635 = vadd.f32 0.0, %v1634
      %1636 = vmatmul.bf16.gmra.mxu0 %v1007
      %v1637 = vpop.f32.mrf.mxu0
      %v1638 = vadd.f32 0.0, %v1637
      %v1639 = vpop.f32.mrf.mxu0
      %v1640 = vadd.f32 0.0, %v1639
      %1641 = vmatmul.bf16.gmra.mxu0 %v1008
      %v1642 = vpop.f32.mrf.mxu0
      %v1643 = vadd.f32 0.0, %v1642
      %v1644 = vpop.f32.mrf.mxu0
      %v1645 = vadd.f32 0.0, %v1644
      %1646 = vmatmul.bf16.gmra.mxu0 %v1009
      %v1647 = vpop.f32.mrf.mxu0
      %v1648 = vadd.f32 0.0, %v1647
      %v1649 = vpop.f32.mrf.mxu0
      %v1650 = vadd.f32 0.0, %v1649
      %1651 = vmatmul.bf16.gmra.mxu0 %v1010
      %v1652 = vpop.f32.mrf.mxu0
      %v1653 = vadd.f32 0.0, %v1652
      %v1654 = vpop.f32.mrf.mxu0
      %v1655 = vadd.f32 0.0, %v1654
      %1656 = vmatmul.bf16.gmra.mxu0 %v1011
      %v1657 = vpop.f32.mrf.mxu0
      %v1658 = vadd.f32 0.0, %v1657
      %v1659 = vpop.f32.mrf.mxu0
      %v1660 = vadd.f32 0.0, %v1659
      %1661 = vmatmul.bf16.gmra.mxu0 %v1012
      %v1662 = vpop.f32.mrf.mxu0
      %v1663 = vadd.f32 0.0, %v1662
      %v1664 = vpop.f32.mrf.mxu0
      %v1665 = vadd.f32 0.0, %v1664
      %1666 = vmatmul.bf16.gmra.mxu0 %v1013
      %v1667 = vpop.f32.mrf.mxu0
      %v1668 = vadd.f32 0.0, %v1667
      %v1669 = vpop.f32.mrf.mxu0
      %v1670 = vadd.f32 0.0, %v1669
      %1671 = vmatmul.bf16.gmra.mxu0 %v1014
      %v1672 = vpop.f32.mrf.mxu0
      %v1673 = vadd.f32 0.0, %v1672
      %v1674 = vpop.f32.mrf.mxu0
      %v1675 = vadd.f32 0.0, %v1674
      %1676 = vmatmul.bf16.gmra.mxu0 %v1015
      %v1677 = vpop.f32.mrf.mxu0
      %v1678 = vadd.f32 0.0, %v1677
      %v1679 = vpop.f32.mrf.mxu0
      %v1680 = vadd.f32 0.0, %v1679
      %1681 = vdwg.mxu0
      %1682 = vmatpush.bf16.msra.mxu0 %v1560
      %1683 = vmatpush.bf16.msra.mxu0 %v1559
      %1684 = vmatpush.bf16.msra.mxu0 %v1558
      %1685 = vmatpush.bf16.msra.mxu0 %v1557
      %1686 = vmatpush.bf16.msra.mxu0 %v1556
      %1687 = vmatpush.bf16.msra.mxu0 %v1555
      %1688 = vmatpush.bf16.msra.mxu0 %v1554
      %1689 = vmatpush.bf16.msra.mxu0 %v1553
      %1690 = vmatmul.bf16.gmra.mxu0 %v1091
      %v1691 = vpop.f32.mrf.mxu0
      %v1692 = vadd.f32 %v1603, %v1691
      %v1693 = vpop.f32.mrf.mxu0
      %v1694 = vadd.f32 %v1605, %v1693
      %1695 = vmatmul.bf16.gmra.mxu0 %v1103
      %v1696 = vpop.f32.mrf.mxu0
      %v1697 = vadd.f32 %v1608, %v1696
      %v1698 = vpop.f32.mrf.mxu0
      %v1699 = vadd.f32 %v1610, %v1698
      %1700 = vmatmul.bf16.gmra.mxu0 %v1115
      %v1701 = vpop.f32.mrf.mxu0
      %v1702 = vadd.f32 %v1613, %v1701
      %v1703 = vpop.f32.mrf.mxu0
      %v1704 = vadd.f32 %v1615, %v1703
      %1705 = vmatmul.bf16.gmra.mxu0 %v1127
      %v1706 = vpop.f32.mrf.mxu0
      %v1707 = vadd.f32 %v1618, %v1706
      %v1708 = vpop.f32.mrf.mxu0
      %v1709 = vadd.f32 %v1620, %v1708
      %1710 = vmatmul.bf16.gmra.mxu0 %v1139
      %v1711 = vpop.f32.mrf.mxu0
      %v1712 = vadd.f32 %v1623, %v1711
      %v1713 = vpop.f32.mrf.mxu0
      %v1714 = vadd.f32 %v1625, %v1713
      %1715 = vmatmul.bf16.gmra.mxu0 %v1151
      %v1716 = vpop.f32.mrf.mxu0
      %v1717 = vadd.f32 %v1628, %v1716
      %v1718 = vpop.f32.mrf.mxu0
      %v1719 = vadd.f32 %v1630, %v1718
      %1720 = vmatmul.bf16.gmra.mxu0 %v1163
      %v1721 = vpop.f32.mrf.mxu0
      %v1722 = vadd.f32 %v1633, %v1721
      %v1723 = vpop.f32.mrf.mxu0
      %v1724 = vadd.f32 %v1635, %v1723
      %1725 = vmatmul.bf16.gmra.mxu0 %v1175
      %v1726 = vpop.f32.mrf.mxu0
      %v1727 = vadd.f32 %v1638, %v1726
      %v1728 = vpop.f32.mrf.mxu0
      %v1729 = vadd.f32 %v1640, %v1728
      %1730 = vmatmul.bf16.gmra.mxu0 %v1187
      %v1731 = vpop.f32.mrf.mxu0
      %v1732 = vadd.f32 %v1643, %v1731
      %v1733 = vpop.f32.mrf.mxu0
      %v1734 = vadd.f32 %v1645, %v1733
      %1735 = vmatmul.bf16.gmra.mxu0 %v1199
      %v1736 = vpop.f32.mrf.mxu0
      %v1737 = vadd.f32 %v1648, %v1736
      %v1738 = vpop.f32.mrf.mxu0
      %v1739 = vadd.f32 %v1650, %v1738
      %1740 = vmatmul.bf16.gmra.mxu0 %v1211
      %v1741 = vpop.f32.mrf.mxu0
      %v1742 = vadd.f32 %v1653, %v1741
      %v1743 = vpop.f32.mrf.mxu0
      %v1744 = vadd.f32 %v1655, %v1743
      %1745 = vmatmul.bf16.gmra.mxu0 %v1223
      %v1746 = vpop.f32.mrf.mxu0
      %v1747 = vadd.f32 %v1658, %v1746
      %v1748 = vpop.f32.mrf.mxu0
      %v1749 = vadd.f32 %v1660, %v1748
      %1750 = vmatmul.bf16.gmra.mxu0 %v1235
      %v1751 = vpop.f32.mrf.mxu0
      %v1752 = vadd.f32 %v1663, %v1751
      %v1753 = vpop.f32.mrf.mxu0
      %v1754 = vadd.f32 %v1665, %v1753
      %1755 = vmatmul.bf16.gmra.mxu0 %v1247
      %v1756 = vpop.f32.mrf.mxu0
      %v1757 = vadd.f32 %v1668, %v1756
      %v1758 = vpop.f32.mrf.mxu0
      %v1759 = vadd.f32 %v1670, %v1758
      %1760 = vmatmul.bf16.gmra.mxu0 %v1259
      %v1761 = vpop.f32.mrf.mxu0
      %v1762 = vadd.f32 %v1673, %v1761
      %v1763 = vpop.f32.mrf.mxu0
      %v1764 = vadd.f32 %v1675, %v1763
      %1765 = vmatmul.bf16.gmra.mxu0 %v1271
      %v1766 = vpop.f32.mrf.mxu0
      %v1767 = vadd.f32 %v1678, %v1766
      %v1768 = vpop.f32.mrf.mxu0
      %v1769 = vadd.f32 %v1680, %v1768
      %1770 = vdwg.mxu0
      %1771 = vmatpush.bf16.msra.mxu0 %v1568
      %1772 = vmatpush.bf16.msra.mxu0 %v1567
      %1773 = vmatpush.bf16.msra.mxu0 %v1566
      %1774 = vmatpush.bf16.msra.mxu0 %v1565
      %1775 = vmatpush.bf16.msra.mxu0 %v1564
      %1776 = vmatpush.bf16.msra.mxu0 %v1563
      %1777 = vmatpush.bf16.msra.mxu0 %v1562
      %1778 = vmatpush.bf16.msra.mxu0 %v1561
      %1779 = vmatmul.bf16.gmra.mxu0 %v1338
      %v1780 = vpop.f32.mrf.mxu0
      %v1781 = vadd.f32 %v1692, %v1780
      %v1782 = vpop.f32.mrf.mxu0
      %v1783 = vadd.f32 %v1694, %v1782
      %1784 = vmatmul.bf16.gmra.mxu0 %v1341
      %v1785 = vpop.f32.mrf.mxu0
      %v1786 = vadd.f32 %v1697, %v1785
      %v1787 = vpop.f32.mrf.mxu0
      %v1788 = vadd.f32 %v1699, %v1787
      %1789 = vmatmul.bf16.gmra.mxu0 %v1344
      %v1790 = vpop.f32.mrf.mxu0
      %v1791 = vadd.f32 %v1702, %v1790
      %v1792 = vpop.f32.mrf.mxu0
      %v1793 = vadd.f32 %v1704, %v1792
      %1794 = vmatmul.bf16.gmra.mxu0 %v1347
      %v1795 = vpop.f32.mrf.mxu0
      %v1796 = vadd.f32 %v1707, %v1795
      %v1797 = vpop.f32.mrf.mxu0
      %v1798 = vadd.f32 %v1709, %v1797
      %1799 = vmatmul.bf16.gmra.mxu0 %v1350
      %v1800 = vpop.f32.mrf.mxu0
      %v1801 = vadd.f32 %v1712, %v1800
      %v1802 = vpop.f32.mrf.mxu0
      %v1803 = vadd.f32 %v1714, %v1802
      %1804 = vmatmul.bf16.gmra.mxu0 %v1353
      %v1805 = vpop.f32.mrf.mxu0
      %v1806 = vadd.f32 %v1717, %v1805
      %v1807 = vpop.f32.mrf.mxu0
      %v1808 = vadd.f32 %v1719, %v1807
      %1809 = vmatmul.bf16.gmra.mxu0 %v1356
      %v1810 = vpop.f32.mrf.mxu0
      %v1811 = vadd.f32 %v1722, %v1810
      %v1812 = vpop.f32.mrf.mxu0
      %v1813 = vadd.f32 %v1724, %v1812
      %1814 = vmatmul.bf16.gmra.mxu0 %v1359
      %v1815 = vpop.f32.mrf.mxu0
      %v1816 = vadd.f32 %v1727, %v1815
      %v1817 = vpop.f32.mrf.mxu0
      %v1818 = vadd.f32 %v1729, %v1817
      %1819 = vmatmul.bf16.gmra.mxu0 %v1362
      %v1820 = vpop.f32.mrf.mxu0
      %v1821 = vadd.f32 %v1732, %v1820
      %v1822 = vpop.f32.mrf.mxu0
      %v1823 = vadd.f32 %v1734, %v1822
      %1824 = vmatmul.bf16.gmra.mxu0 %v1365
      %v1825 = vpop.f32.mrf.mxu0
      %v1826 = vadd.f32 %v1737, %v1825
      %v1827 = vpop.f32.mrf.mxu0
      %v1828 = vadd.f32 %v1739, %v1827
      %1829 = vmatmul.bf16.gmra.mxu0 %v1368
      %v1830 = vpop.f32.mrf.mxu0
      %v1831 = vadd.f32 %v1742, %v1830
      %v1832 = vpop.f32.mrf.mxu0
      %v1833 = vadd.f32 %v1744, %v1832
      %1834 = vmatmul.bf16.gmra.mxu0 %v1371
      %v1835 = vpop.f32.mrf.mxu0
      %v1836 = vadd.f32 %v1747, %v1835
      %v1837 = vpop.f32.mrf.mxu0
      %v1838 = vadd.f32 %v1749, %v1837
      %1839 = vmatmul.bf16.gmra.mxu0 %v1374
      %v1840 = vpop.f32.mrf.mxu0
      %v1841 = vadd.f32 %v1752, %v1840
      %v1842 = vpop.f32.mrf.mxu0
      %v1843 = vadd.f32 %v1754, %v1842
      %1844 = vmatmul.bf16.gmra.mxu0 %v1377
      %v1845 = vpop.f32.mrf.mxu0
      %v1846 = vadd.f32 %v1757, %v1845
      %v1847 = vpop.f32.mrf.mxu0
      %v1848 = vadd.f32 %v1759, %v1847
      %1849 = vmatmul.bf16.gmra.mxu0 %v1380
      %v1850 = vpop.f32.mrf.mxu0
      %v1851 = vadd.f32 %v1762, %v1850
      %v1852 = vpop.f32.mrf.mxu0
      %v1853 = vadd.f32 %v1764, %v1852
      %1854 = vmatmul.bf16.gmra.mxu0 %v1383
      %v1855 = vpop.f32.mrf.mxu0
      %v1856 = vadd.f32 %v1767, %v1855
      %v1857 = vpop.f32.mrf.mxu0
      %v1858 = vadd.f32 %v1769, %v1857
      %1859 = vdwg.mxu0
      %v1908 = vunpack.c.l.b16 %v823
      %v1909 = vunpack.c.l.b16 %v824
      %v1910 = vunpack.c.l.b16 %v825
      %v1911 = vunpack.c.l.b16 %v826
      %v1912 = vunpack.c.l.b16 %v827
      %v1913 = vunpack.c.l.b16 %v828
      %v1914 = vunpack.c.l.b16 %v829
      %v1915 = vunpack.c.l.b16 %v830
      %v1916 = vunpack.c.l.b16 %v831
      %v1917 = vunpack.c.l.b16 %v832
      %v1918 = vunpack.c.l.b16 %v833
      %v1919 = vunpack.c.l.b16 %v834
      %v1920 = vunpack.c.l.b16 %v835
      %v1921 = vunpack.c.l.b16 %v836
      %v1922 = vunpack.c.l.b16 %v837
      %v1923 = vunpack.c.l.b16 %v838
      %v1924 = vunpack.c.l.b16 %v839
      %v1925 = vunpack.c.l.b16 %v840
      %v1926 = vunpack.c.l.b16 %v841
      %v1927 = vunpack.c.l.b16 %v842
      %v1928 = vunpack.c.l.b16 %v843
      %v1929 = vunpack.c.l.b16 %v844
      %v1930 = vunpack.c.l.b16 %v845
      %v1931 = vunpack.c.l.b16 %v846
      %v1932 = vunpack.c.l.b16 %v847
      %v1933 = vunpack.c.l.b16 %v848
      %v1934 = vunpack.c.l.b16 %v849
      %v1935 = vunpack.c.l.b16 %v850
      %v1936 = vunpack.c.l.b16 %v851
      %v1937 = vunpack.c.l.b16 %v852
      %v1938 = vunpack.c.l.b16 %v853
      %v1939 = vunpack.c.l.b16 %v854
      %v1940 = vunpack.c.l.b16 %v855
      %v1941 = vunpack.c.l.b16 %v856
      %v1942 = vunpack.c.l.b16 %v857
      %v1943 = vunpack.c.l.b16 %v858
      %v1944 = vunpack.c.l.b16 %v859
      %v1945 = vunpack.c.l.b16 %v860
      %v1946 = vunpack.c.l.b16 %v861
      %v1947 = vunpack.c.l.b16 %v862
      %v1948 = vunpack.c.l.b16 %v863
      %v1949 = vunpack.c.l.b16 %v864
      %v1950 = vunpack.c.l.b16 %v865
      %v1951 = vunpack.c.l.b16 %v866
      %v1952 = vunpack.c.l.b16 %v867
      %v1953 = vunpack.c.l.b16 %v868
      %v1954 = vunpack.c.l.b16 %v869
      %v1955 = vunpack.c.l.b16 %v870
      %v1956 = vpack.c.b16 %v1909, %v1908
      %v1957 = vpack.c.b16 %v1911, %v1910
      %v1958 = vpack.c.b16 %v1913, %v1912
      %v1959 = vpack.c.b16 %v1915, %v1914
      %v1960 = vpack.c.b16 %v1917, %v1916
      %v1961 = vpack.c.b16 %v1919, %v1918
      %v1962 = vpack.c.b16 %v1921, %v1920
      %v1963 = vpack.c.b16 %v1923, %v1922
      %v1964 = vpack.c.b16 %v1925, %v1924
      %v1965 = vpack.c.b16 %v1927, %v1926
      %v1966 = vpack.c.b16 %v1929, %v1928
      %v1967 = vpack.c.b16 %v1931, %v1930
      %v1968 = vpack.c.b16 %v1933, %v1932
      %v1969 = vpack.c.b16 %v1935, %v1934
      %v1970 = vpack.c.b16 %v1937, %v1936
      %v1971 = vpack.c.b16 %v1939, %v1938
      %v1972 = vpack.c.b16 %v1941, %v1940
      %v1973 = vpack.c.b16 %v1943, %v1942
      %v1974 = vpack.c.b16 %v1945, %v1944
      %v1975 = vpack.c.b16 %v1947, %v1946
      %v1976 = vpack.c.b16 %v1949, %v1948
      %v1977 = vpack.c.b16 %v1951, %v1950
      %v1978 = vpack.c.b16 %v1953, %v1952
      %v1979 = vpack.c.b16 %v1955, %v1954
      %2004 = vmatpush.bf16.msra.mxu0 %v1963
      %2005 = vmatpush.bf16.msra.mxu0 %v1962
      %2006 = vmatpush.bf16.msra.mxu0 %v1961
      %2007 = vmatpush.bf16.msra.mxu0 %v1960
      %2008 = vmatpush.bf16.msra.mxu0 %v1959
      %2009 = vmatpush.bf16.msra.mxu0 %v1958
      %2010 = vmatpush.bf16.msra.mxu0 %v1957
      %2011 = vmatpush.bf16.msra.mxu0 %v1956
      %2012 = vmatmul.bf16.gmra.mxu0 %v421
      %v2013 = vpop.f32.mrf.mxu0
      %v2014 = vadd.f32 %v1781, %v2013
      %v2015 = vpop.f32.mrf.mxu0
      %v2016 = vadd.f32 %v1783, %v2015
      %2017 = vmatmul.bf16.gmra.mxu0 %v422
      %v2018 = vpop.f32.mrf.mxu0
      %v2019 = vadd.f32 %v1786, %v2018
      %v2020 = vpop.f32.mrf.mxu0
      %v2021 = vadd.f32 %v1788, %v2020
      %2022 = vmatmul.bf16.gmra.mxu0 %v423
      %v2023 = vpop.f32.mrf.mxu0
      %v2024 = vadd.f32 %v1791, %v2023
      %v2025 = vpop.f32.mrf.mxu0
      %v2026 = vadd.f32 %v1793, %v2025
      %2027 = vmatmul.bf16.gmra.mxu0 %v424
      %v2028 = vpop.f32.mrf.mxu0
      %v2029 = vadd.f32 %v1796, %v2028
      %v2030 = vpop.f32.mrf.mxu0
      %v2031 = vadd.f32 %v1798, %v2030
      %2032 = vmatmul.bf16.gmra.mxu0 %v425
      %v2033 = vpop.f32.mrf.mxu0
      %v2034 = vadd.f32 %v1801, %v2033
      %v2035 = vpop.f32.mrf.mxu0
      %v2036 = vadd.f32 %v1803, %v2035
      %2037 = vmatmul.bf16.gmra.mxu0 %v426
      %v2038 = vpop.f32.mrf.mxu0
      %v2039 = vadd.f32 %v1806, %v2038
      %v2040 = vpop.f32.mrf.mxu0
      %v2041 = vadd.f32 %v1808, %v2040
      %2042 = vmatmul.bf16.gmra.mxu0 %v427
      %v2043 = vpop.f32.mrf.mxu0
      %v2044 = vadd.f32 %v1811, %v2043
      %v2045 = vpop.f32.mrf.mxu0
      %v2046 = vadd.f32 %v1813, %v2045
      %2047 = vmatmul.bf16.gmra.mxu0 %v428
      %v2048 = vpop.f32.mrf.mxu0
      %v2049 = vadd.f32 %v1816, %v2048
      %v2050 = vpop.f32.mrf.mxu0
      %v2051 = vadd.f32 %v1818, %v2050
      %2052 = vmatmul.bf16.gmra.mxu0 %v429
      %v2053 = vpop.f32.mrf.mxu0
      %v2054 = vadd.f32 %v1821, %v2053
      %v2055 = vpop.f32.mrf.mxu0
      %v2056 = vadd.f32 %v1823, %v2055
      %2057 = vmatmul.bf16.gmra.mxu0 %v430
      %v2058 = vpop.f32.mrf.mxu0
      %v2059 = vadd.f32 %v1826, %v2058
      %v2060 = vpop.f32.mrf.mxu0
      %v2061 = vadd.f32 %v1828, %v2060
      %2062 = vmatmul.bf16.gmra.mxu0 %v431
      %v2063 = vpop.f32.mrf.mxu0
      %v2064 = vadd.f32 %v1831, %v2063
      %v2065 = vpop.f32.mrf.mxu0
      %v2066 = vadd.f32 %v1833, %v2065
      %2067 = vmatmul.bf16.gmra.mxu0 %v432
      %v2068 = vpop.f32.mrf.mxu0
      %v2069 = vadd.f32 %v1836, %v2068
      %v2070 = vpop.f32.mrf.mxu0
      %v2071 = vadd.f32 %v1838, %v2070
      %2072 = vmatmul.bf16.gmra.mxu0 %v433
      %v2073 = vpop.f32.mrf.mxu0
      %v2074 = vadd.f32 %v1841, %v2073
      %v2075 = vpop.f32.mrf.mxu0
      %v2076 = vadd.f32 %v1843, %v2075
      %2077 = vmatmul.bf16.gmra.mxu0 %v434
      %v2078 = vpop.f32.mrf.mxu0
      %v2079 = vadd.f32 %v1846, %v2078
      %v2080 = vpop.f32.mrf.mxu0
      %v2081 = vadd.f32 %v1848, %v2080
      %2082 = vmatmul.bf16.gmra.mxu0 %v435
      %v2083 = vpop.f32.mrf.mxu0
      %v2084 = vadd.f32 %v1851, %v2083
      %v2085 = vpop.f32.mrf.mxu0
      %v2086 = vadd.f32 %v1853, %v2085
      %2087 = vmatmul.bf16.gmra.mxu0 %v436
      %v2088 = vpop.f32.mrf.mxu0
      %v2089 = vadd.f32 %v1856, %v2088
      %v2090 = vpop.f32.mrf.mxu0
      %v2091 = vadd.f32 %v1858, %v2090
      %2092 = vdwg.mxu0
      %2093 = vmatpush.bf16.msra.mxu0 %v1971
      %2094 = vmatpush.bf16.msra.mxu0 %v1970
      %2095 = vmatpush.bf16.msra.mxu0 %v1969
      %2096 = vmatpush.bf16.msra.mxu0 %v1968
      %2097 = vmatpush.bf16.msra.mxu0 %v1967
      %2098 = vmatpush.bf16.msra.mxu0 %v1966
      %2099 = vmatpush.bf16.msra.mxu0 %v1965
      %2100 = vmatpush.bf16.msra.mxu0 %v1964
      %2101 = vmatmul.bf16.gmra.mxu0 %v513
      %v2102 = vpop.f32.mrf.mxu0
      %v2103 = vadd.f32 %v2014, %v2102
      %v2104 = vpop.f32.mrf.mxu0
      %v2105 = vadd.f32 %v2016, %v2104
      %2106 = vmatmul.bf16.gmra.mxu0 %v525
      %v2107 = vpop.f32.mrf.mxu0
      %v2108 = vadd.f32 %v2019, %v2107
      %v2109 = vpop.f32.mrf.mxu0
      %v2110 = vadd.f32 %v2021, %v2109
      %2111 = vmatmul.bf16.gmra.mxu0 %v537
      %v2112 = vpop.f32.mrf.mxu0
      %v2113 = vadd.f32 %v2024, %v2112
      %v2114 = vpop.f32.mrf.mxu0
      %v2115 = vadd.f32 %v2026, %v2114
      %2116 = vmatmul.bf16.gmra.mxu0 %v549
      %v2117 = vpop.f32.mrf.mxu0
      %v2118 = vadd.f32 %v2029, %v2117
      %v2119 = vpop.f32.mrf.mxu0
      %v2120 = vadd.f32 %v2031, %v2119
      %2121 = vmatmul.bf16.gmra.mxu0 %v561
      %v2122 = vpop.f32.mrf.mxu0
      %v2123 = vadd.f32 %v2034, %v2122
      %v2124 = vpop.f32.mrf.mxu0
      %v2125 = vadd.f32 %v2036, %v2124
      %2126 = vmatmul.bf16.gmra.mxu0 %v573
      %v2127 = vpop.f32.mrf.mxu0
      %v2128 = vadd.f32 %v2039, %v2127
      %v2129 = vpop.f32.mrf.mxu0
      %v2130 = vadd.f32 %v2041, %v2129
      %2131 = vmatmul.bf16.gmra.mxu0 %v585
      %v2132 = vpop.f32.mrf.mxu0
      %v2133 = vadd.f32 %v2044, %v2132
      %v2134 = vpop.f32.mrf.mxu0
      %v2135 = vadd.f32 %v2046, %v2134
      %2136 = vmatmul.bf16.gmra.mxu0 %v597
      %v2137 = vpop.f32.mrf.mxu0
      %v2138 = vadd.f32 %v2049, %v2137
      %v2139 = vpop.f32.mrf.mxu0
      %v2140 = vadd.f32 %v2051, %v2139
      %2141 = vmatmul.bf16.gmra.mxu0 %v609
      %v2142 = vpop.f32.mrf.mxu0
      %v2143 = vadd.f32 %v2054, %v2142
      %v2144 = vpop.f32.mrf.mxu0
      %v2145 = vadd.f32 %v2056, %v2144
      %2146 = vmatmul.bf16.gmra.mxu0 %v621
      %v2147 = vpop.f32.mrf.mxu0
      %v2148 = vadd.f32 %v2059, %v2147
      %v2149 = vpop.f32.mrf.mxu0
      %v2150 = vadd.f32 %v2061, %v2149
      %2151 = vmatmul.bf16.gmra.mxu0 %v633
      %v2152 = vpop.f32.mrf.mxu0
      %v2153 = vadd.f32 %v2064, %v2152
      %v2154 = vpop.f32.mrf.mxu0
      %v2155 = vadd.f32 %v2066, %v2154
      %2156 = vmatmul.bf16.gmra.mxu0 %v645
      %v2157 = vpop.f32.mrf.mxu0
      %v2158 = vadd.f32 %v2069, %v2157
      %v2159 = vpop.f32.mrf.mxu0
      %v2160 = vadd.f32 %v2071, %v2159
      %2161 = vmatmul.bf16.gmra.mxu0 %v657
      %v2162 = vpop.f32.mrf.mxu0
      %v2163 = vadd.f32 %v2074, %v2162
      %v2164 = vpop.f32.mrf.mxu0
      %v2165 = vadd.f32 %v2076, %v2164
      %2166 = vmatmul.bf16.gmra.mxu0 %v669
      %v2167 = vpop.f32.mrf.mxu0
      %v2168 = vadd.f32 %v2079, %v2167
      %v2169 = vpop.f32.mrf.mxu0
      %v2170 = vadd.f32 %v2081, %v2169
      %2171 = vmatmul.bf16.gmra.mxu0 %v681
      %v2172 = vpop.f32.mrf.mxu0
      %v2173 = vadd.f32 %v2084, %v2172
      %v2174 = vpop.f32.mrf.mxu0
      %v2175 = vadd.f32 %v2086, %v2174
      %2176 = vmatmul.bf16.gmra.mxu0 %v693
      %v2177 = vpop.f32.mrf.mxu0
      %v2178 = vadd.f32 %v2089, %v2177
      %v2179 = vpop.f32.mrf.mxu0
      %v2180 = vadd.f32 %v2091, %v2179
      %2181 = vdwg.mxu0
      %2182 = vmatpush.bf16.msra.mxu0 %v1979
      %2183 = vmatpush.bf16.msra.mxu0 %v1978
      %2184 = vmatpush.bf16.msra.mxu0 %v1977
      %2185 = vmatpush.bf16.msra.mxu0 %v1976
      %2186 = vmatpush.bf16.msra.mxu0 %v1975
      %2187 = vmatpush.bf16.msra.mxu0 %v1974
      %2188 = vmatpush.bf16.msra.mxu0 %v1973
      %2189 = vmatpush.bf16.msra.mxu0 %v1972
      %2190 = vmatmul.bf16.gmra.mxu0 %v761
      %v2191 = vpop.f32.mrf.mxu0
      %v2192 = vadd.f32 %v2103, %v2191
      %v2193 = vpop.f32.mrf.mxu0
      %v2194 = vadd.f32 %v2105, %v2193
      %2195 = vmatmul.bf16.gmra.mxu0 %v764
      %v2196 = vpop.f32.mrf.mxu0
      %v2197 = vadd.f32 %v2108, %v2196
      %v2198 = vpop.f32.mrf.mxu0
      %v2199 = vadd.f32 %v2110, %v2198
      %2200 = vmatmul.bf16.gmra.mxu0 %v767
      %v2201 = vpop.f32.mrf.mxu0
      %v2202 = vadd.f32 %v2113, %v2201
      %v2203 = vpop.f32.mrf.mxu0
      %v2204 = vadd.f32 %v2115, %v2203
      %2205 = vmatmul.bf16.gmra.mxu0 %v770
      %v2206 = vpop.f32.mrf.mxu0
      %v2207 = vadd.f32 %v2118, %v2206
      %v2208 = vpop.f32.mrf.mxu0
      %v2209 = vadd.f32 %v2120, %v2208
      %2210 = vmatmul.bf16.gmra.mxu0 %v773
      %v2211 = vpop.f32.mrf.mxu0
      %v2212 = vadd.f32 %v2123, %v2211
      %v2213 = vpop.f32.mrf.mxu0
      %v2214 = vadd.f32 %v2125, %v2213
      %2215 = vmatmul.bf16.gmra.mxu0 %v776
      %v2216 = vpop.f32.mrf.mxu0
      %v2217 = vadd.f32 %v2128, %v2216
      %v2218 = vpop.f32.mrf.mxu0
      %v2219 = vadd.f32 %v2130, %v2218
      %2220 = vmatmul.bf16.gmra.mxu0 %v779
      %v2221 = vpop.f32.mrf.mxu0
      %v2222 = vadd.f32 %v2133, %v2221
      %v2223 = vpop.f32.mrf.mxu0
      %v2224 = vadd.f32 %v2135, %v2223
      %2225 = vmatmul.bf16.gmra.mxu0 %v782
      %v2226 = vpop.f32.mrf.mxu0
      %v2227 = vadd.f32 %v2138, %v2226
      %v2228 = vpop.f32.mrf.mxu0
      %v2229 = vadd.f32 %v2140, %v2228
      %2230 = vmatmul.bf16.gmra.mxu0 %v785
      %v2231 = vpop.f32.mrf.mxu0
      %v2232 = vadd.f32 %v2143, %v2231
      %v2233 = vpop.f32.mrf.mxu0
      %v2234 = vadd.f32 %v2145, %v2233
      %2235 = vmatmul.bf16.gmra.mxu0 %v788
      %v2236 = vpop.f32.mrf.mxu0
      %v2237 = vadd.f32 %v2148, %v2236
      %v2238 = vpop.f32.mrf.mxu0
      %v2239 = vadd.f32 %v2150, %v2238
      %2240 = vmatmul.bf16.gmra.mxu0 %v791
      %v2241 = vpop.f32.mrf.mxu0
      %v2242 = vadd.f32 %v2153, %v2241
      %v2243 = vpop.f32.mrf.mxu0
      %v2244 = vadd.f32 %v2155, %v2243
      %2245 = vmatmul.bf16.gmra.mxu0 %v794
      %v2246 = vpop.f32.mrf.mxu0
      %v2247 = vadd.f32 %v2158, %v2246
      %v2248 = vpop.f32.mrf.mxu0
      %v2249 = vadd.f32 %v2160, %v2248
      %2250 = vmatmul.bf16.gmra.mxu0 %v797
      %v2251 = vpop.f32.mrf.mxu0
      %v2252 = vadd.f32 %v2163, %v2251
      %v2253 = vpop.f32.mrf.mxu0
      %v2254 = vadd.f32 %v2165, %v2253
      %2255 = vmatmul.bf16.gmra.mxu0 %v800
      %v2256 = vpop.f32.mrf.mxu0
      %v2257 = vadd.f32 %v2168, %v2256
      %v2258 = vpop.f32.mrf.mxu0
      %v2259 = vadd.f32 %v2170, %v2258
      %2260 = vmatmul.bf16.gmra.mxu0 %v803
      %v2261 = vpop.f32.mrf.mxu0
      %v2262 = vadd.f32 %v2173, %v2261
      %v2263 = vpop.f32.mrf.mxu0
      %v2264 = vadd.f32 %v2175, %v2263
      %2265 = vmatmul.bf16.gmra.mxu0 %v806
      %v2266 = vpop.f32.mrf.mxu0
      %v2267 = vadd.f32 %v2178, %v2266
      %v2268 = vpop.f32.mrf.mxu0
      %v2269 = vadd.f32 %v2180, %v2268
      %2270 = vdwg.mxu0
      %s2271 = scalar_lea.vmem %s274, 24
      %v2272 = vld [vmem:[%s2271] sm:$0xf]
      %v2273 = vld [vmem:[%s2271 + $0x4] sm:$0xf]
      %v2274 = vld [vmem:[%s2271 + $0xc] sm:$0xf]
      %v2275 = vld [vmem:[%s2271 + $0x10] sm:$0xf]
      %v2276 = vld [vmem:[%s2271 + $0x18] sm:$0xf]
      %v2277 = vld [vmem:[%s2271 + $0x1c] sm:$0xf]
      %v2278 = vld [vmem:[%s2271 + $0x24] sm:$0xf]
      %v2279 = vld [vmem:[%s2271 + $0x28] sm:$0xf]
      %v2280 = vld [vmem:[%s2271 + $0x30] sm:$0xf]
      %v2281 = vld [vmem:[%s2271 + $0x34] sm:$0xf]
      %v2282 = vld [vmem:[%s2271 + $0x3c] sm:$0xf]
      %v2283 = vld [vmem:[%s2271 + $0x40] sm:$0xf]
      %v2284 = vld [vmem:[%s2271 + $0x48] sm:$0xf]
      %v2285 = vld [vmem:[%s2271 + $0x4c] sm:$0xf]
      %v2286 = vld [vmem:[%s2271 + $0x54] sm:$0xf]
      %v2287 = vld [vmem:[%s2271 + $0x58] sm:$0xf]
      %v2288 = vld [vmem:[%s2271 + $0x60] sm:$0xf]
      %v2289 = vld [vmem:[%s2271 + $0x64] sm:$0xf]
      %v2290 = vld [vmem:[%s2271 + $0x6c] sm:$0xf]
      %v2291 = vld [vmem:[%s2271 + $0x70] sm:$0xf]
      %v2292 = vld [vmem:[%s2271 + $0x78] sm:$0xf]
      %v2293 = vld [vmem:[%s2271 + $0x7c] sm:$0xf]
      %v2294 = vld [vmem:[%s2271 + $0x84] sm:$0xf]
      %v2295 = vld [vmem:[%s2271 + $0x88] sm:$0xf]
      %v2296 = vld [vmem:[%s2271 + $0x90] sm:$0xf]
      %v2297 = vld [vmem:[%s2271 + $0x94] sm:$0xf]
      %v2298 = vld [vmem:[%s2271 + $0x9c] sm:$0xf]
      %v2299 = vld [vmem:[%s2271 + $0xa0] sm:$0xf]
      %v2300 = vld [vmem:[%s2271 + $0xa8] sm:$0xf]
      %v2301 = vld [vmem:[%s2271 + $0xac] sm:$0xf]
      %v2302 = vld [vmem:[%s2271 + $0xb4] sm:$0xf]
      %v2303 = vld [vmem:[%s2271 + $0xb8] sm:$0xf]
      %v2304 = vld [vmem:[%s2271 + $0x8] sm:$0x1]
      %v2305 = vld [vmem:[%s2271 + $0x14] sm:$0x1]
      %v2306 = vld [vmem:[%s2271 + $0x20] sm:$0x1]
      %v2307 = vld [vmem:[%s2271 + $0x2c] sm:$0x1]
      %v2308 = vld [vmem:[%s2271 + $0x38] sm:$0x1]
      %v2309 = vld [vmem:[%s2271 + $0x44] sm:$0x1]
      %v2310 = vld [vmem:[%s2271 + $0x50] sm:$0x1]
      %v2311 = vld [vmem:[%s2271 + $0x5c] sm:$0x1]
      %v2312 = vld [vmem:[%s2271 + $0x68] sm:$0x1]
      %v2313 = vld [vmem:[%s2271 + $0x74] sm:$0x1]
      %v2314 = vld [vmem:[%s2271 + $0x80] sm:$0x1]
      %v2315 = vld [vmem:[%s2271 + $0x8c] sm:$0x1]
      %v2316 = vld [vmem:[%s2271 + $0x98] sm:$0x1]
      %v2317 = vld [vmem:[%s2271 + $0xa4] sm:$0x1]
      %v2318 = vld [vmem:[%s2271 + $0xb0] sm:$0x1]
      %v2319 = vld [vmem:[%s2271 + $0xbc] sm:$0x1]
      %v2320 = vld [vmem:[%s2271] sm:$0xe]
      %v2321 = vld [vmem:[%s2271 + $0xc] sm:$0xe]
      %v2322 = vld [vmem:[%s2271 + $0x18] sm:$0xe]
      %v2323 = vld [vmem:[%s2271 + $0x24] sm:$0xe]
      %v2324 = vld [vmem:[%s2271 + $0x30] sm:$0xe]
      %v2325 = vld [vmem:[%s2271 + $0x3c] sm:$0xe]
      %v2326 = vld [vmem:[%s2271 + $0x48] sm:$0xe]
      %v2327 = vld [vmem:[%s2271 + $0x54] sm:$0xe]
      %v2328 = vld [vmem:[%s2271 + $0x60] sm:$0xe]
      %v2329 = vld [vmem:[%s2271 + $0x6c] sm:$0xe]
      %v2330 = vld [vmem:[%s2271 + $0x78] sm:$0xe]
      %v2331 = vld [vmem:[%s2271 + $0x84] sm:$0xe]
      %v2332 = vld [vmem:[%s2271 + $0x90] sm:$0xe]
      %v2333 = vld [vmem:[%s2271 + $0x9c] sm:$0xe]
      %v2334 = vld [vmem:[%s2271 + $0xa8] sm:$0xe]
      %v2335 = vld [vmem:[%s2271 + $0xb4] sm:$0xe]
      %v2368 = vunpack.c.l.b16 %v2272
      %v2369 = vunpack.c.l.b16 %v2273
      %v2370 = vunpack.c.l.b16 %v2274
      %v2371 = vunpack.c.l.b16 %v2275
      %v2372 = vunpack.c.l.b16 %v2276
      %v2373 = vunpack.c.l.b16 %v2277
      %v2374 = vunpack.c.l.b16 %v2278
      %v2375 = vunpack.c.l.b16 %v2279
      %v2376 = vunpack.c.l.b16 %v2280
      %v2377 = vunpack.c.l.b16 %v2281
      %v2378 = vunpack.c.l.b16 %v2282
      %v2379 = vunpack.c.l.b16 %v2283
      %v2380 = vunpack.c.l.b16 %v2284
      %v2381 = vunpack.c.l.b16 %v2285
      %v2382 = vunpack.c.l.b16 %v2286
      %v2383 = vunpack.c.l.b16 %v2287
      %v2384 = vunpack.c.l.b16 %v2288
      %v2385 = vunpack.c.l.b16 %v2289
      %v2386 = vunpack.c.l.b16 %v2290
      %v2387 = vunpack.c.l.b16 %v2291
      %v2388 = vunpack.c.l.b16 %v2292
      %v2389 = vunpack.c.l.b16 %v2293
      %v2390 = vunpack.c.l.b16 %v2294
      %v2391 = vunpack.c.l.b16 %v2295
      %v2392 = vunpack.c.l.b16 %v2296
      %v2393 = vunpack.c.l.b16 %v2297
      %v2394 = vunpack.c.l.b16 %v2298
      %v2395 = vunpack.c.l.b16 %v2299
      %v2396 = vunpack.c.l.b16 %v2300
      %v2397 = vunpack.c.l.b16 %v2301
      %v2398 = vunpack.c.l.b16 %v2302
      %v2399 = vunpack.c.l.b16 %v2303
      %v2400 = vpack.c.b16 %v2369, %v2368
      %v2401 = vpack.c.b16 %v2371, %v2370
      %v2402 = vpack.c.b16 %v2373, %v2372
      %v2403 = vpack.c.b16 %v2375, %v2374
      %v2404 = vpack.c.b16 %v2377, %v2376
      %v2405 = vpack.c.b16 %v2379, %v2378
      %v2406 = vpack.c.b16 %v2381, %v2380
      %v2407 = vpack.c.b16 %v2383, %v2382
      %v2408 = vpack.c.b16 %v2385, %v2384
      %v2409 = vpack.c.b16 %v2387, %v2386
      %v2410 = vpack.c.b16 %v2389, %v2388
      %v2411 = vpack.c.b16 %v2391, %v2390
      %v2412 = vpack.c.b16 %v2393, %v2392
      %v2413 = vpack.c.b16 %v2395, %v2394
      %v2414 = vpack.c.b16 %v2397, %v2396
      %v2415 = vpack.c.b16 %v2399, %v2398
      %v2448 = vunpack.c.l.b16 %v2304
      %v2449 = vunpack.c.l.b16 %v2305
      %v2450 = vunpack.c.l.b16 %v2306
      %v2451 = vunpack.c.l.b16 %v2307
      %v2452 = vunpack.c.l.b16 %v2308
      %v2453 = vunpack.c.l.b16 %v2309
      %v2454 = vunpack.c.l.b16 %v2310
      %v2455 = vunpack.c.l.b16 %v2311
      %v2456 = vunpack.c.l.b16 %v2312
      %v2457 = vunpack.c.l.b16 %v2313
      %v2458 = vunpack.c.l.b16 %v2314
      %v2459 = vunpack.c.l.b16 %v2315
      %v2460 = vunpack.c.l.b16 %v2316
      %v2461 = vunpack.c.l.b16 %v2317
      %v2462 = vunpack.c.l.b16 %v2318
      %v2463 = vunpack.c.l.b16 %v2319
      %v2464 = vpack.c.b16 %v2448, %v2448
      %v2465 = vpack.c.b16 %v2449, %v2449
      %v2466 = vpack.c.b16 %v2450, %v2450
      %v2467 = vpack.c.b16 %v2451, %v2451
      %v2468 = vpack.c.b16 %v2452, %v2452
      %v2469 = vpack.c.b16 %v2453, %v2453
      %v2470 = vpack.c.b16 %v2454, %v2454
      %v2471 = vpack.c.b16 %v2455, %v2455
      %v2472 = vpack.c.b16 %v2456, %v2456
      %v2473 = vpack.c.b16 %v2457, %v2457
      %v2474 = vpack.c.b16 %v2458, %v2458
      %v2475 = vpack.c.b16 %v2459, %v2459
      %v2476 = vpack.c.b16 %v2460, %v2460
      %v2477 = vpack.c.b16 %v2461, %v2461
      %v2478 = vpack.c.b16 %v2462, %v2462
      %v2479 = vpack.c.b16 %v2463, %v2463
      %v2481 = vshrl.u32 %v2400, 16
      %v2483 = vshll.u32 %v2400, 16
      %v2485 = vrot.slane %v2483, 1
      %v2486 = vor.u32 %v2481, %v2485
      %v2488 = vshll.u32 %v2464, 16
      %v2490 = vrot.slane %v2488, 1
      %v2491 = vsel %vm501, %v2486, %v2490
      %v2493 = vshrl.u32 %v2401, 16
      %v2495 = vshll.u32 %v2401, 16
      %v2497 = vrot.slane %v2495, 1
      %v2498 = vor.u32 %v2493, %v2497
      %v2500 = vshll.u32 %v2465, 16
      %v2502 = vrot.slane %v2500, 1
      %v2503 = vsel %vm501, %v2498, %v2502
      %v2505 = vshrl.u32 %v2402, 16
      %v2507 = vshll.u32 %v2402, 16
      %v2509 = vrot.slane %v2507, 1
      %v2510 = vor.u32 %v2505, %v2509
      %v2512 = vshll.u32 %v2466, 16
      %v2514 = vrot.slane %v2512, 1
      %v2515 = vsel %vm501, %v2510, %v2514
      %v2517 = vshrl.u32 %v2403, 16
      %v2519 = vshll.u32 %v2403, 16
      %v2521 = vrot.slane %v2519, 1
      %v2522 = vor.u32 %v2517, %v2521
      %v2524 = vshll.u32 %v2467, 16
      %v2526 = vrot.slane %v2524, 1
      %v2527 = vsel %vm501, %v2522, %v2526
      %v2529 = vshrl.u32 %v2404, 16
      %v2531 = vshll.u32 %v2404, 16
      %v2533 = vrot.slane %v2531, 1
      %v2534 = vor.u32 %v2529, %v2533
      %v2536 = vshll.u32 %v2468, 16
      %v2538 = vrot.slane %v2536, 1
      %v2539 = vsel %vm501, %v2534, %v2538
      %v2541 = vshrl.u32 %v2405, 16
      %v2543 = vshll.u32 %v2405, 16
      %v2545 = vrot.slane %v2543, 1
      %v2546 = vor.u32 %v2541, %v2545
      %v2548 = vshll.u32 %v2469, 16
      %v2550 = vrot.slane %v2548, 1
      %v2551 = vsel %vm501, %v2546, %v2550
      %v2553 = vshrl.u32 %v2406, 16
      %v2555 = vshll.u32 %v2406, 16
      %v2557 = vrot.slane %v2555, 1
      %v2558 = vor.u32 %v2553, %v2557
      %v2560 = vshll.u32 %v2470, 16
      %v2562 = vrot.slane %v2560, 1
      %v2563 = vsel %vm501, %v2558, %v2562
      %v2565 = vshrl.u32 %v2407, 16
      %v2567 = vshll.u32 %v2407, 16
      %v2569 = vrot.slane %v2567, 1
      %v2570 = vor.u32 %v2565, %v2569
      %v2572 = vshll.u32 %v2471, 16
      %v2574 = vrot.slane %v2572, 1
      %v2575 = vsel %vm501, %v2570, %v2574
      %v2577 = vshrl.u32 %v2408, 16
      %v2579 = vshll.u32 %v2408, 16
      %v2581 = vrot.slane %v2579, 1
      %v2582 = vor.u32 %v2577, %v2581
      %v2584 = vshll.u32 %v2472, 16
      %v2586 = vrot.slane %v2584, 1
      %v2587 = vsel %vm501, %v2582, %v2586
      %v2589 = vshrl.u32 %v2409, 16
      %v2591 = vshll.u32 %v2409, 16
      %v2593 = vrot.slane %v2591, 1
      %v2594 = vor.u32 %v2589, %v2593
      %v2596 = vshll.u32 %v2473, 16
      %v2598 = vrot.slane %v2596, 1
      %v2599 = vsel %vm501, %v2594, %v2598
      %v2601 = vshrl.u32 %v2410, 16
      %v2603 = vshll.u32 %v2410, 16
      %v2605 = vrot.slane %v2603, 1
      %v2606 = vor.u32 %v2601, %v2605
      %v2608 = vshll.u32 %v2474, 16
      %v2610 = vrot.slane %v2608, 1
      %v2611 = vsel %vm501, %v2606, %v2610
      %v2613 = vshrl.u32 %v2411, 16
      %v2615 = vshll.u32 %v2411, 16
      %v2617 = vrot.slane %v2615, 1
      %v2618 = vor.u32 %v2613, %v2617
      %v2620 = vshll.u32 %v2475, 16
      %v2622 = vrot.slane %v2620, 1
      %v2623 = vsel %vm501, %v2618, %v2622
      %v2625 = vshrl.u32 %v2412, 16
      %v2627 = vshll.u32 %v2412, 16
      %v2629 = vrot.slane %v2627, 1
      %v2630 = vor.u32 %v2625, %v2629
      %v2632 = vshll.u32 %v2476, 16
      %v2634 = vrot.slane %v2632, 1
      %v2635 = vsel %vm501, %v2630, %v2634
      %v2637 = vshrl.u32 %v2413, 16
      %v2639 = vshll.u32 %v2413, 16
      %v2641 = vrot.slane %v2639, 1
      %v2642 = vor.u32 %v2637, %v2641
      %v2644 = vshll.u32 %v2477, 16
      %v2646 = vrot.slane %v2644, 1
      %v2647 = vsel %vm501, %v2642, %v2646
      %v2649 = vshrl.u32 %v2414, 16
      %v2651 = vshll.u32 %v2414, 16
      %v2653 = vrot.slane %v2651, 1
      %v2654 = vor.u32 %v2649, %v2653
      %v2656 = vshll.u32 %v2478, 16
      %v2658 = vrot.slane %v2656, 1
      %v2659 = vsel %vm501, %v2654, %v2658
      %v2661 = vshrl.u32 %v2415, 16
      %v2663 = vshll.u32 %v2415, 16
      %v2665 = vrot.slane %v2663, 1
      %v2666 = vor.u32 %v2661, %v2665
      %v2668 = vshll.u32 %v2479, 16
      %v2670 = vrot.slane %v2668, 1
      %v2671 = vsel %vm501, %v2666, %v2670
      %v2704 = vunpack.c.l.b16 %v2320
      %v2705 = vunpack.c.l.b16 %v2321
      %v2706 = vunpack.c.l.b16 %v2322
      %v2707 = vunpack.c.l.b16 %v2323
      %v2708 = vunpack.c.l.b16 %v2324
      %v2709 = vunpack.c.l.b16 %v2325
      %v2710 = vunpack.c.l.b16 %v2326
      %v2711 = vunpack.c.l.b16 %v2327
      %v2712 = vunpack.c.l.b16 %v2328
      %v2713 = vunpack.c.l.b16 %v2329
      %v2714 = vunpack.c.l.b16 %v2330
      %v2715 = vunpack.c.l.b16 %v2331
      %v2716 = vunpack.c.l.b16 %v2332
      %v2717 = vunpack.c.l.b16 %v2333
      %v2718 = vunpack.c.l.b16 %v2334
      %v2719 = vunpack.c.l.b16 %v2335
      %v2720 = vpack.c.b16 %v2369, %v2704
      %v2721 = vpack.c.b16 %v2371, %v2705
      %v2722 = vpack.c.b16 %v2373, %v2706
      %v2723 = vpack.c.b16 %v2375, %v2707
      %v2724 = vpack.c.b16 %v2377, %v2708
      %v2725 = vpack.c.b16 %v2379, %v2709
      %v2726 = vpack.c.b16 %v2381, %v2710
      %v2727 = vpack.c.b16 %v2383, %v2711
      %v2728 = vpack.c.b16 %v2385, %v2712
      %v2729 = vpack.c.b16 %v2387, %v2713
      %v2730 = vpack.c.b16 %v2389, %v2714
      %v2731 = vpack.c.b16 %v2391, %v2715
      %v2732 = vpack.c.b16 %v2393, %v2716
      %v2733 = vpack.c.b16 %v2395, %v2717
      %v2734 = vpack.c.b16 %v2397, %v2718
      %v2735 = vpack.c.b16 %v2399, %v2719
      %v2736 = vrot.slane %v2720, 1
      %v2737 = vrot.slane %v2464, 1
      %v2738 = vsel %vm758, %v2736, %v2737
      %v2739 = vrot.slane %v2721, 1
      %v2740 = vrot.slane %v2465, 1
      %v2741 = vsel %vm758, %v2739, %v2740
      %v2742 = vrot.slane %v2722, 1
      %v2743 = vrot.slane %v2466, 1
      %v2744 = vsel %vm758, %v2742, %v2743
      %v2745 = vrot.slane %v2723, 1
      %v2746 = vrot.slane %v2467, 1
      %v2747 = vsel %vm758, %v2745, %v2746
      %v2748 = vrot.slane %v2724, 1
      %v2749 = vrot.slane %v2468, 1
      %v2750 = vsel %vm758, %v2748, %v2749
      %v2751 = vrot.slane %v2725, 1
      %v2752 = vrot.slane %v2469, 1
      %v2753 = vsel %vm758, %v2751, %v2752
      %v2754 = vrot.slane %v2726, 1
      %v2755 = vrot.slane %v2470, 1
      %v2756 = vsel %vm758, %v2754, %v2755
      %v2757 = vrot.slane %v2727, 1
      %v2758 = vrot.slane %v2471, 1
      %v2759 = vsel %vm758, %v2757, %v2758
      %v2760 = vrot.slane %v2728, 1
      %v2761 = vrot.slane %v2472, 1
      %v2762 = vsel %vm758, %v2760, %v2761
      %v2763 = vrot.slane %v2729, 1
      %v2764 = vrot.slane %v2473, 1
      %v2765 = vsel %vm758, %v2763, %v2764
      %v2766 = vrot.slane %v2730, 1
      %v2767 = vrot.slane %v2474, 1
      %v2768 = vsel %vm758, %v2766, %v2767
      %v2769 = vrot.slane %v2731, 1
      %v2770 = vrot.slane %v2475, 1
      %v2771 = vsel %vm758, %v2769, %v2770
      %v2772 = vrot.slane %v2732, 1
      %v2773 = vrot.slane %v2476, 1
      %v2774 = vsel %vm758, %v2772, %v2773
      %v2775 = vrot.slane %v2733, 1
      %v2776 = vrot.slane %v2477, 1
      %v2777 = vsel %vm758, %v2775, %v2776
      %v2778 = vrot.slane %v2734, 1
      %v2779 = vrot.slane %v2478, 1
      %v2780 = vsel %vm758, %v2778, %v2779
      %v2781 = vrot.slane %v2735, 1
      %v2782 = vrot.slane %v2479, 1
      %v2783 = vsel %vm758, %v2781, %v2782
      %s2800 = scalar_lea.vmem %s2, 384
      %v2801 = vld [vmem:[%s2800] sm:$0xf]
      %v2802 = vld [vmem:[%s2800 + $0x4] sm:$0xf]
      %v2803 = vld [vmem:[%s2800 + $0x8] sm:$0xf]
      %v2804 = vld [vmem:[%s2800 + $0xc] sm:$0xf]
      %v2805 = vld [vmem:[%s2800 + $0x10] sm:$0xf]
      %v2806 = vld [vmem:[%s2800 + $0x14] sm:$0xf]
      %v2807 = vld [vmem:[%s2800 + $0x18] sm:$0xf]
      %v2808 = vld [vmem:[%s2800 + $0x1c] sm:$0xf]
      %v2809 = vld [vmem:[%s2800 + $0x20] sm:$0xf]
      %v2810 = vld [vmem:[%s2800 + $0x24] sm:$0xf]
      %v2811 = vld [vmem:[%s2800 + $0x28] sm:$0xf]
      %v2812 = vld [vmem:[%s2800 + $0x2c] sm:$0xf]
      %v2813 = vld [vmem:[%s2800 + $0x30] sm:$0xf]
      %v2814 = vld [vmem:[%s2800 + $0x34] sm:$0xf]
      %v2815 = vld [vmem:[%s2800 + $0x38] sm:$0xf]
      %v2816 = vld [vmem:[%s2800 + $0x3c] sm:$0xf]
      %v2817 = vld [vmem:[%s2800 + $0x40] sm:$0xf]
      %v2818 = vld [vmem:[%s2800 + $0x44] sm:$0xf]
      %v2819 = vld [vmem:[%s2800 + $0x48] sm:$0xf]
      %v2820 = vld [vmem:[%s2800 + $0x4c] sm:$0xf]
      %v2821 = vld [vmem:[%s2800 + $0x50] sm:$0xf]
      %v2822 = vld [vmem:[%s2800 + $0x54] sm:$0xf]
      %v2823 = vld [vmem:[%s2800 + $0x58] sm:$0xf]
      %v2824 = vld [vmem:[%s2800 + $0x5c] sm:$0xf]
      %v2825 = vld [vmem:[%s2800 + $0x60] sm:$0xf]
      %v2826 = vld [vmem:[%s2800 + $0x64] sm:$0xf]
      %v2827 = vld [vmem:[%s2800 + $0x68] sm:$0xf]
      %v2828 = vld [vmem:[%s2800 + $0x6c] sm:$0xf]
      %v2829 = vld [vmem:[%s2800 + $0x70] sm:$0xf]
      %v2830 = vld [vmem:[%s2800 + $0x74] sm:$0xf]
      %v2831 = vld [vmem:[%s2800 + $0x78] sm:$0xf]
      %v2832 = vld [vmem:[%s2800 + $0x7c] sm:$0xf]
      %v2833 = vld [vmem:[%s2800 + $0x80] sm:$0xf]
      %v2834 = vld [vmem:[%s2800 + $0x84] sm:$0xf]
      %v2835 = vld [vmem:[%s2800 + $0x88] sm:$0xf]
      %v2836 = vld [vmem:[%s2800 + $0x8c] sm:$0xf]
      %v2837 = vld [vmem:[%s2800 + $0x90] sm:$0xf]
      %v2838 = vld [vmem:[%s2800 + $0x94] sm:$0xf]
      %v2839 = vld [vmem:[%s2800 + $0x98] sm:$0xf]
      %v2840 = vld [vmem:[%s2800 + $0x9c] sm:$0xf]
      %v2841 = vld [vmem:[%s2800 + $0xa0] sm:$0xf]
      %v2842 = vld [vmem:[%s2800 + $0xa4] sm:$0xf]
      %v2843 = vld [vmem:[%s2800 + $0xa8] sm:$0xf]
      %v2844 = vld [vmem:[%s2800 + $0xac] sm:$0xf]
      %v2845 = vld [vmem:[%s2800 + $0xb0] sm:$0xf]
      %v2846 = vld [vmem:[%s2800 + $0xb4] sm:$0xf]
      %v2847 = vld [vmem:[%s2800 + $0xb8] sm:$0xf]
      %v2848 = vld [vmem:[%s2800 + $0xbc] sm:$0xf]
      %v2897 = vunpack.c.l.b16 %v2801
      %v2898 = vunpack.c.l.b16 %v2802
      %v2899 = vunpack.c.l.b16 %v2803
      %v2900 = vunpack.c.l.b16 %v2804
      %v2901 = vunpack.c.l.b16 %v2805
      %v2902 = vunpack.c.l.b16 %v2806
      %v2903 = vunpack.c.l.b16 %v2807
      %v2904 = vunpack.c.l.b16 %v2808
      %v2905 = vunpack.c.l.b16 %v2809
      %v2906 = vunpack.c.l.b16 %v2810
      %v2907 = vunpack.c.l.b16 %v2811
      %v2908 = vunpack.c.l.b16 %v2812
      %v2909 = vunpack.c.l.b16 %v2813
      %v2910 = vunpack.c.l.b16 %v2814
      %v2911 = vunpack.c.l.b16 %v2815
      %v2912 = vunpack.c.l.b16 %v2816
      %v2913 = vunpack.c.l.b16 %v2817
      %v2914 = vunpack.c.l.b16 %v2818
      %v2915 = vunpack.c.l.b16 %v2819
      %v2916 = vunpack.c.l.b16 %v2820
      %v2917 = vunpack.c.l.b16 %v2821
      %v2918 = vunpack.c.l.b16 %v2822
      %v2919 = vunpack.c.l.b16 %v2823
      %v2920 = vunpack.c.l.b16 %v2824
      %v2921 = vunpack.c.l.b16 %v2825
      %v2922 = vunpack.c.l.b16 %v2826
      %v2923 = vunpack.c.l.b16 %v2827
      %v2924 = vunpack.c.l.b16 %v2828
      %v2925 = vunpack.c.l.b16 %v2829
      %v2926 = vunpack.c.l.b16 %v2830
      %v2927 = vunpack.c.l.b16 %v2831
      %v2928 = vunpack.c.l.b16 %v2832
      %v2929 = vunpack.c.l.b16 %v2833
      %v2930 = vunpack.c.l.b16 %v2834
      %v2931 = vunpack.c.l.b16 %v2835
      %v2932 = vunpack.c.l.b16 %v2836
      %v2933 = vunpack.c.l.b16 %v2837
      %v2934 = vunpack.c.l.b16 %v2838
      %v2935 = vunpack.c.l.b16 %v2839
      %v2936 = vunpack.c.l.b16 %v2840
      %v2937 = vunpack.c.l.b16 %v2841
      %v2938 = vunpack.c.l.b16 %v2842
      %v2939 = vunpack.c.l.b16 %v2843
      %v2940 = vunpack.c.l.b16 %v2844
      %v2941 = vunpack.c.l.b16 %v2845
      %v2942 = vunpack.c.l.b16 %v2846
      %v2943 = vunpack.c.l.b16 %v2847
      %v2944 = vunpack.c.l.b16 %v2848
      %v2945 = vpack.c.b16 %v2898, %v2897
      %v2946 = vpack.c.b16 %v2900, %v2899
      %v2947 = vpack.c.b16 %v2902, %v2901
      %v2948 = vpack.c.b16 %v2904, %v2903
      %v2949 = vpack.c.b16 %v2906, %v2905
      %v2950 = vpack.c.b16 %v2908, %v2907
      %v2951 = vpack.c.b16 %v2910, %v2909
      %v2952 = vpack.c.b16 %v2912, %v2911
      %v2953 = vpack.c.b16 %v2914, %v2913
      %v2954 = vpack.c.b16 %v2916, %v2915
      %v2955 = vpack.c.b16 %v2918, %v2917
      %v2956 = vpack.c.b16 %v2920, %v2919
      %v2957 = vpack.c.b16 %v2922, %v2921
      %v2958 = vpack.c.b16 %v2924, %v2923
      %v2959 = vpack.c.b16 %v2926, %v2925
      %v2960 = vpack.c.b16 %v2928, %v2927
      %v2961 = vpack.c.b16 %v2930, %v2929
      %v2962 = vpack.c.b16 %v2932, %v2931
      %v2963 = vpack.c.b16 %v2934, %v2933
      %v2964 = vpack.c.b16 %v2936, %v2935
      %v2965 = vpack.c.b16 %v2938, %v2937
      %v2966 = vpack.c.b16 %v2940, %v2939
      %v2967 = vpack.c.b16 %v2942, %v2941
      %v2968 = vpack.c.b16 %v2944, %v2943
      %2993 = vmatpush.bf16.msra.mxu0 %v2952
      %2994 = vmatpush.bf16.msra.mxu0 %v2951
      %2995 = vmatpush.bf16.msra.mxu0 %v2950
      %2996 = vmatpush.bf16.msra.mxu0 %v2949
      %2997 = vmatpush.bf16.msra.mxu0 %v2948
      %2998 = vmatpush.bf16.msra.mxu0 %v2947
      %2999 = vmatpush.bf16.msra.mxu0 %v2946
      %3000 = vmatpush.bf16.msra.mxu0 %v2945
      %3001 = vmatmul.bf16.gmra.mxu0 %v2400
      %v3002 = vpop.f32.mrf.mxu0
      %v3003 = vadd.f32 0.0, %v3002
      %v3004 = vpop.f32.mrf.mxu0
      %v3005 = vadd.f32 0.0, %v3004
      %3006 = vmatmul.bf16.gmra.mxu0 %v2401
      %v3007 = vpop.f32.mrf.mxu0
      %v3008 = vadd.f32 0.0, %v3007
      %v3009 = vpop.f32.mrf.mxu0
      %v3010 = vadd.f32 0.0, %v3009
      %3011 = vmatmul.bf16.gmra.mxu0 %v2402
      %v3012 = vpop.f32.mrf.mxu0
      %v3013 = vadd.f32 0.0, %v3012
      %v3014 = vpop.f32.mrf.mxu0
      %v3015 = vadd.f32 0.0, %v3014
      %3016 = vmatmul.bf16.gmra.mxu0 %v2403
      %v3017 = vpop.f32.mrf.mxu0
      %v3018 = vadd.f32 0.0, %v3017
      %v3019 = vpop.f32.mrf.mxu0
      %v3020 = vadd.f32 0.0, %v3019
      %3021 = vmatmul.bf16.gmra.mxu0 %v2404
      %v3022 = vpop.f32.mrf.mxu0
      %v3023 = vadd.f32 0.0, %v3022
      %v3024 = vpop.f32.mrf.mxu0
      %v3025 = vadd.f32 0.0, %v3024
      %3026 = vmatmul.bf16.gmra.mxu0 %v2405
      %v3027 = vpop.f32.mrf.mxu0
      %v3028 = vadd.f32 0.0, %v3027
      %v3029 = vpop.f32.mrf.mxu0
      %v3030 = vadd.f32 0.0, %v3029
      %3031 = vmatmul.bf16.gmra.mxu0 %v2406
      %v3032 = vpop.f32.mrf.mxu0
      %v3033 = vadd.f32 0.0, %v3032
      %v3034 = vpop.f32.mrf.mxu0
      %v3035 = vadd.f32 0.0, %v3034
      %3036 = vmatmul.bf16.gmra.mxu0 %v2407
      %v3037 = vpop.f32.mrf.mxu0
      %v3038 = vadd.f32 0.0, %v3037
      %v3039 = vpop.f32.mrf.mxu0
      %v3040 = vadd.f32 0.0, %v3039
      %3041 = vmatmul.bf16.gmra.mxu0 %v2408
      %v3042 = vpop.f32.mrf.mxu0
      %v3043 = vadd.f32 0.0, %v3042
      %v3044 = vpop.f32.mrf.mxu0
      %v3045 = vadd.f32 0.0, %v3044
      %3046 = vmatmul.bf16.gmra.mxu0 %v2409
      %v3047 = vpop.f32.mrf.mxu0
      %v3048 = vadd.f32 0.0, %v3047
      %v3049 = vpop.f32.mrf.mxu0
      %v3050 = vadd.f32 0.0, %v3049
      %3051 = vmatmul.bf16.gmra.mxu0 %v2410
      %v3052 = vpop.f32.mrf.mxu0
      %v3053 = vadd.f32 0.0, %v3052
      %v3054 = vpop.f32.mrf.mxu0
      %v3055 = vadd.f32 0.0, %v3054
      %3056 = vmatmul.bf16.gmra.mxu0 %v2411
      %v3057 = vpop.f32.mrf.mxu0
      %v3058 = vadd.f32 0.0, %v3057
      %v3059 = vpop.f32.mrf.mxu0
      %v3060 = vadd.f32 0.0, %v3059
      %3061 = vmatmul.bf16.gmra.mxu0 %v2412
      %v3062 = vpop.f32.mrf.mxu0
      %v3063 = vadd.f32 0.0, %v3062
      %v3064 = vpop.f32.mrf.mxu0
      %v3065 = vadd.f32 0.0, %v3064
      %3066 = vmatmul.bf16.gmra.mxu0 %v2413
      %v3067 = vpop.f32.mrf.mxu0
      %v3068 = vadd.f32 0.0, %v3067
      %v3069 = vpop.f32.mrf.mxu0
      %v3070 = vadd.f32 0.0, %v3069
      %3071 = vmatmul.bf16.gmra.mxu0 %v2414
      %v3072 = vpop.f32.mrf.mxu0
      %v3073 = vadd.f32 0.0, %v3072
      %v3074 = vpop.f32.mrf.mxu0
      %v3075 = vadd.f32 0.0, %v3074
      %3076 = vmatmul.bf16.gmra.mxu0 %v2415
      %v3077 = vpop.f32.mrf.mxu0
      %v3078 = vadd.f32 0.0, %v3077
      %v3079 = vpop.f32.mrf.mxu0
      %v3080 = vadd.f32 0.0, %v3079
      %3081 = vdwg.mxu0
      %3082 = vmatpush.bf16.msra.mxu0 %v2960
      %3083 = vmatpush.bf16.msra.mxu0 %v2959
      %3084 = vmatpush.bf16.msra.mxu0 %v2958
      %3085 = vmatpush.bf16.msra.mxu0 %v2957
      %3086 = vmatpush.bf16.msra.mxu0 %v2956
      %3087 = vmatpush.bf16.msra.mxu0 %v2955
      %3088 = vmatpush.bf16.msra.mxu0 %v2954
      %3089 = vmatpush.bf16.msra.mxu0 %v2953
      %3090 = vmatmul.bf16.gmra.mxu0 %v2491
      %v3091 = vpop.f32.mrf.mxu0
      %v3092 = vadd.f32 %v3003, %v3091
      %v3093 = vpop.f32.mrf.mxu0
      %v3094 = vadd.f32 %v3005, %v3093
      %3095 = vmatmul.bf16.gmra.mxu0 %v2503
      %v3096 = vpop.f32.mrf.mxu0
      %v3097 = vadd.f32 %v3008, %v3096
      %v3098 = vpop.f32.mrf.mxu0
      %v3099 = vadd.f32 %v3010, %v3098
      %3100 = vmatmul.bf16.gmra.mxu0 %v2515
      %v3101 = vpop.f32.mrf.mxu0
      %v3102 = vadd.f32 %v3013, %v3101
      %v3103 = vpop.f32.mrf.mxu0
      %v3104 = vadd.f32 %v3015, %v3103
      %3105 = vmatmul.bf16.gmra.mxu0 %v2527
      %v3106 = vpop.f32.mrf.mxu0
      %v3107 = vadd.f32 %v3018, %v3106
      %v3108 = vpop.f32.mrf.mxu0
      %v3109 = vadd.f32 %v3020, %v3108
      %3110 = vmatmul.bf16.gmra.mxu0 %v2539
      %v3111 = vpop.f32.mrf.mxu0
      %v3112 = vadd.f32 %v3023, %v3111
      %v3113 = vpop.f32.mrf.mxu0
      %v3114 = vadd.f32 %v3025, %v3113
      %3115 = vmatmul.bf16.gmra.mxu0 %v2551
      %v3116 = vpop.f32.mrf.mxu0
      %v3117 = vadd.f32 %v3028, %v3116
      %v3118 = vpop.f32.mrf.mxu0
      %v3119 = vadd.f32 %v3030, %v3118
      %3120 = vmatmul.bf16.gmra.mxu0 %v2563
      %v3121 = vpop.f32.mrf.mxu0
      %v3122 = vadd.f32 %v3033, %v3121
      %v3123 = vpop.f32.mrf.mxu0
      %v3124 = vadd.f32 %v3035, %v3123
      %3125 = vmatmul.bf16.gmra.mxu0 %v2575
      %v3126 = vpop.f32.mrf.mxu0
      %v3127 = vadd.f32 %v3038, %v3126
      %v3128 = vpop.f32.mrf.mxu0
      %v3129 = vadd.f32 %v3040, %v3128
      %3130 = vmatmul.bf16.gmra.mxu0 %v2587
      %v3131 = vpop.f32.mrf.mxu0
      %v3132 = vadd.f32 %v3043, %v3131
      %v3133 = vpop.f32.mrf.mxu0
      %v3134 = vadd.f32 %v3045, %v3133
      %3135 = vmatmul.bf16.gmra.mxu0 %v2599
      %v3136 = vpop.f32.mrf.mxu0
      %v3137 = vadd.f32 %v3048, %v3136
      %v3138 = vpop.f32.mrf.mxu0
      %v3139 = vadd.f32 %v3050, %v3138
      %3140 = vmatmul.bf16.gmra.mxu0 %v2611
      %v3141 = vpop.f32.mrf.mxu0
      %v3142 = vadd.f32 %v3053, %v3141
      %v3143 = vpop.f32.mrf.mxu0
      %v3144 = vadd.f32 %v3055, %v3143
      %3145 = vmatmul.bf16.gmra.mxu0 %v2623
      %v3146 = vpop.f32.mrf.mxu0
      %v3147 = vadd.f32 %v3058, %v3146
      %v3148 = vpop.f32.mrf.mxu0
      %v3149 = vadd.f32 %v3060, %v3148
      %3150 = vmatmul.bf16.gmra.mxu0 %v2635
      %v3151 = vpop.f32.mrf.mxu0
      %v3152 = vadd.f32 %v3063, %v3151
      %v3153 = vpop.f32.mrf.mxu0
      %v3154 = vadd.f32 %v3065, %v3153
      %3155 = vmatmul.bf16.gmra.mxu0 %v2647
      %v3156 = vpop.f32.mrf.mxu0
      %v3157 = vadd.f32 %v3068, %v3156
      %v3158 = vpop.f32.mrf.mxu0
      %v3159 = vadd.f32 %v3070, %v3158
      %3160 = vmatmul.bf16.gmra.mxu0 %v2659
      %v3161 = vpop.f32.mrf.mxu0
      %v3162 = vadd.f32 %v3073, %v3161
      %v3163 = vpop.f32.mrf.mxu0
      %v3164 = vadd.f32 %v3075, %v3163
      %3165 = vmatmul.bf16.gmra.mxu0 %v2671
      %v3166 = vpop.f32.mrf.mxu0
      %v3167 = vadd.f32 %v3078, %v3166
      %v3168 = vpop.f32.mrf.mxu0
      %v3169 = vadd.f32 %v3080, %v3168
      %3170 = vdwg.mxu0
      %3171 = vmatpush.bf16.msra.mxu0 %v2968
      %3172 = vmatpush.bf16.msra.mxu0 %v2967
      %3173 = vmatpush.bf16.msra.mxu0 %v2966
      %3174 = vmatpush.bf16.msra.mxu0 %v2965
      %3175 = vmatpush.bf16.msra.mxu0 %v2964
      %3176 = vmatpush.bf16.msra.mxu0 %v2963
      %3177 = vmatpush.bf16.msra.mxu0 %v2962
      %3178 = vmatpush.bf16.msra.mxu0 %v2961
      %3179 = vmatmul.bf16.gmra.mxu0 %v2738
      %v3180 = vpop.f32.mrf.mxu0
      %v3181 = vadd.f32 %v3092, %v3180
      %v3182 = vpop.f32.mrf.mxu0
      %v3183 = vadd.f32 %v3094, %v3182
      %3184 = vmatmul.bf16.gmra.mxu0 %v2741
      %v3185 = vpop.f32.mrf.mxu0
      %v3186 = vadd.f32 %v3097, %v3185
      %v3187 = vpop.f32.mrf.mxu0
      %v3188 = vadd.f32 %v3099, %v3187
      %3189 = vmatmul.bf16.gmra.mxu0 %v2744
      %v3190 = vpop.f32.mrf.mxu0
      %v3191 = vadd.f32 %v3102, %v3190
      %v3192 = vpop.f32.mrf.mxu0
      %v3193 = vadd.f32 %v3104, %v3192
      %3194 = vmatmul.bf16.gmra.mxu0 %v2747
      %v3195 = vpop.f32.mrf.mxu0
      %v3196 = vadd.f32 %v3107, %v3195
      %v3197 = vpop.f32.mrf.mxu0
      %v3198 = vadd.f32 %v3109, %v3197
      %3199 = vmatmul.bf16.gmra.mxu0 %v2750
      %v3200 = vpop.f32.mrf.mxu0
      %v3201 = vadd.f32 %v3112, %v3200
      %v3202 = vpop.f32.mrf.mxu0
      %v3203 = vadd.f32 %v3114, %v3202
      %3204 = vmatmul.bf16.gmra.mxu0 %v2753
      %v3205 = vpop.f32.mrf.mxu0
      %v3206 = vadd.f32 %v3117, %v3205
      %v3207 = vpop.f32.mrf.mxu0
      %v3208 = vadd.f32 %v3119, %v3207
      %3209 = vmatmul.bf16.gmra.mxu0 %v2756
      %v3210 = vpop.f32.mrf.mxu0
      %v3211 = vadd.f32 %v3122, %v3210
      %v3212 = vpop.f32.mrf.mxu0
      %v3213 = vadd.f32 %v3124, %v3212
      %3214 = vmatmul.bf16.gmra.mxu0 %v2759
      %v3215 = vpop.f32.mrf.mxu0
      %v3216 = vadd.f32 %v3127, %v3215
      %v3217 = vpop.f32.mrf.mxu0
      %v3218 = vadd.f32 %v3129, %v3217
      %3219 = vmatmul.bf16.gmra.mxu0 %v2762
      %v3220 = vpop.f32.mrf.mxu0
      %v3221 = vadd.f32 %v3132, %v3220
      %v3222 = vpop.f32.mrf.mxu0
      %v3223 = vadd.f32 %v3134, %v3222
      %3224 = vmatmul.bf16.gmra.mxu0 %v2765
      %v3225 = vpop.f32.mrf.mxu0
      %v3226 = vadd.f32 %v3137, %v3225
      %v3227 = vpop.f32.mrf.mxu0
      %v3228 = vadd.f32 %v3139, %v3227
      %3229 = vmatmul.bf16.gmra.mxu0 %v2768
      %v3230 = vpop.f32.mrf.mxu0
      %v3231 = vadd.f32 %v3142, %v3230
      %v3232 = vpop.f32.mrf.mxu0
      %v3233 = vadd.f32 %v3144, %v3232
      %3234 = vmatmul.bf16.gmra.mxu0 %v2771
      %v3235 = vpop.f32.mrf.mxu0
      %v3236 = vadd.f32 %v3147, %v3235
      %v3237 = vpop.f32.mrf.mxu0
      %v3238 = vadd.f32 %v3149, %v3237
      %3239 = vmatmul.bf16.gmra.mxu0 %v2774
      %v3240 = vpop.f32.mrf.mxu0
      %v3241 = vadd.f32 %v3152, %v3240
      %v3242 = vpop.f32.mrf.mxu0
      %v3243 = vadd.f32 %v3154, %v3242
      %3244 = vmatmul.bf16.gmra.mxu0 %v2777
      %v3245 = vpop.f32.mrf.mxu0
      %v3246 = vadd.f32 %v3157, %v3245
      %v3247 = vpop.f32.mrf.mxu0
      %v3248 = vadd.f32 %v3159, %v3247
      %3249 = vmatmul.bf16.gmra.mxu0 %v2780
      %v3250 = vpop.f32.mrf.mxu0
      %v3251 = vadd.f32 %v3162, %v3250
      %v3252 = vpop.f32.mrf.mxu0
      %v3253 = vadd.f32 %v3164, %v3252
      %3254 = vmatmul.bf16.gmra.mxu0 %v2783
      %v3255 = vpop.f32.mrf.mxu0
      %v3256 = vadd.f32 %v3167, %v3255
      %v3257 = vpop.f32.mrf.mxu0
      %v3258 = vadd.f32 %v3169, %v3257
      %3259 = vdwg.mxu0
      %v3260 = vadd.f32 %v2192, %v3181
      %v3261 = vadd.f32 %v2194, %v3183
      %v3262 = vadd.f32 %v2197, %v3186
      %v3263 = vadd.f32 %v2199, %v3188
      %v3264 = vadd.f32 %v2202, %v3191
      %v3265 = vadd.f32 %v2204, %v3193
      %v3266 = vadd.f32 %v2207, %v3196
      %v3267 = vadd.f32 %v2209, %v3198
      %v3268 = vadd.f32 %v2212, %v3201
      %v3269 = vadd.f32 %v2214, %v3203
      %v3270 = vadd.f32 %v2217, %v3206
      %v3271 = vadd.f32 %v2219, %v3208
      %v3272 = vadd.f32 %v2222, %v3211
      %v3273 = vadd.f32 %v2224, %v3213
      %v3274 = vadd.f32 %v2227, %v3216
      %v3275 = vadd.f32 %v2229, %v3218
      %v3276 = vadd.f32 %v2232, %v3221
      %v3277 = vadd.f32 %v2234, %v3223
      %v3278 = vadd.f32 %v2237, %v3226
      %v3279 = vadd.f32 %v2239, %v3228
      %v3280 = vadd.f32 %v2242, %v3231
      %v3281 = vadd.f32 %v2244, %v3233
      %v3282 = vadd.f32 %v2247, %v3236
      %v3283 = vadd.f32 %v2249, %v3238
      %v3284 = vadd.f32 %v2252, %v3241
      %v3285 = vadd.f32 %v2254, %v3243
      %v3286 = vadd.f32 %v2257, %v3246
      %v3287 = vadd.f32 %v2259, %v3248
      %v3288 = vadd.f32 %v2262, %v3251
      %v3289 = vadd.f32 %v2264, %v3253
      %v3290 = vadd.f32 %v2267, %v3256
      %v3291 = vadd.f32 %v2269, %v3258
      %v3292 = vpack.c.bf16 %v3260, %v3260
      %v3293 = vpack.c.bf16 %v3261, %v3261
      %v3294 = vpack.c.bf16 %v3262, %v3262
      %v3295 = vpack.c.bf16 %v3263, %v3263
      %v3296 = vpack.c.bf16 %v3264, %v3264
      %v3297 = vpack.c.bf16 %v3265, %v3265
      %v3298 = vpack.c.bf16 %v3266, %v3266
      %v3299 = vpack.c.bf16 %v3267, %v3267
      %v3300 = vpack.c.bf16 %v3268, %v3268
      %v3301 = vpack.c.bf16 %v3269, %v3269
      %v3302 = vpack.c.bf16 %v3270, %v3270
      %v3303 = vpack.c.bf16 %v3271, %v3271
      %v3304 = vpack.c.bf16 %v3272, %v3272
      %v3305 = vpack.c.bf16 %v3273, %v3273
      %v3306 = vpack.c.bf16 %v3274, %v3274
      %v3307 = vpack.c.bf16 %v3275, %v3275
      %v3308 = vpack.c.bf16 %v3276, %v3276
      %v3309 = vpack.c.bf16 %v3277, %v3277
      %v3310 = vpack.c.bf16 %v3278, %v3278
      %v3311 = vpack.c.bf16 %v3279, %v3279
      %v3312 = vpack.c.bf16 %v3280, %v3280
      %v3313 = vpack.c.bf16 %v3281, %v3281
      %v3314 = vpack.c.bf16 %v3282, %v3282
      %v3315 = vpack.c.bf16 %v3283, %v3283
      %v3316 = vpack.c.bf16 %v3284, %v3284
      %v3317 = vpack.c.bf16 %v3285, %v3285
      %v3318 = vpack.c.bf16 %v3286, %v3286
      %v3319 = vpack.c.bf16 %v3287, %v3287
      %v3320 = vpack.c.bf16 %v3288, %v3288
      %v3321 = vpack.c.bf16 %v3289, %v3289
      %v3322 = vpack.c.bf16 %v3290, %v3290
      %v3323 = vpack.c.bf16 %v3291, %v3291
      %3324 = vst [vmem:[%s284] sm:$0xf] %v3292
      %3325 = vst [vmem:[%s284 + $0x4] sm:$0xf] %v3293
      %3326 = vst [vmem:[%s284 + $0x8] sm:$0xf] %v3294
      %3327 = vst [vmem:[%s284 + $0xc] sm:$0xf] %v3295
      %3328 = vst [vmem:[%s284 + $0x10] sm:$0xf] %v3296
      %3329 = vst [vmem:[%s284 + $0x14] sm:$0xf] %v3297
      %3330 = vst [vmem:[%s284 + $0x18] sm:$0xf] %v3298
      %3331 = vst [vmem:[%s284 + $0x1c] sm:$0xf] %v3299
      %3332 = vst [vmem:[%s284 + $0x20] sm:$0xf] %v3300
      %3333 = vst [vmem:[%s284 + $0x24] sm:$0xf] %v3301
      %3334 = vst [vmem:[%s284 + $0x28] sm:$0xf] %v3302
      %3335 = vst [vmem:[%s284 + $0x2c] sm:$0xf] %v3303
      %3336 = vst [vmem:[%s284 + $0x30] sm:$0xf] %v3304
      %3337 = vst [vmem:[%s284 + $0x34] sm:$0xf] %v3305
      %3338 = vst [vmem:[%s284 + $0x38] sm:$0xf] %v3306
      %3339 = vst [vmem:[%s284 + $0x3c] sm:$0xf] %v3307
      %3340 = vst [vmem:[%s284 + $0x40] sm:$0xf] %v3308
      %3341 = vst [vmem:[%s284 + $0x44] sm:$0xf] %v3309
      %3342 = vst [vmem:[%s284 + $0x48] sm:$0xf] %v3310
      %3343 = vst [vmem:[%s284 + $0x4c] sm:$0xf] %v3311
      %3344 = vst [vmem:[%s284 + $0x50] sm:$0xf] %v3312
      %3345 = vst [vmem:[%s284 + $0x54] sm:$0xf] %v3313
      %3346 = vst [vmem:[%s284 + $0x58] sm:$0xf] %v3314
      %3347 = vst [vmem:[%s284 + $0x5c] sm:$0xf] %v3315
      %3348 = vst [vmem:[%s284 + $0x60] sm:$0xf] %v3316
      %3349 = vst [vmem:[%s284 + $0x64] sm:$0xf] %v3317
      %3350 = vst [vmem:[%s284 + $0x68] sm:$0xf] %v3318
      %3351 = vst [vmem:[%s284 + $0x6c] sm:$0xf] %v3319
      %3352 = vst [vmem:[%s284 + $0x70] sm:$0xf] %v3320
      %3353 = vst [vmem:[%s284 + $0x74] sm:$0xf] %v3321
      %3354 = vst [vmem:[%s284 + $0x78] sm:$0xf] %v3322
      %3355 = vst [vmem:[%s284 + $0x7c] sm:$0xf] %v3323
      %v3356 = vadd.f32 %v3260, %v3261
      %v3357 = vadd.f32 %v3356, %v3262
      %v3358 = vadd.f32 %v3357, %v3263
      %v3359 = vadd.f32 %v3358, %v3264
      %v3360 = vadd.f32 %v3359, %v3265
      %v3361 = vadd.f32 %v3360, %v3266
      %v3362 = vadd.f32 %v3361, %v3267
      %v3363 = vadd.f32 %v3362, %v3268
      %v3364 = vadd.f32 %v3363, %v3269
      %v3365 = vadd.f32 %v3364, %v3270
      %v3366 = vadd.f32 %v3365, %v3271
      %v3367 = vadd.f32 %v3366, %v3272
      %v3368 = vadd.f32 %v3367, %v3273
      %v3369 = vadd.f32 %v3368, %v3274
      %v3370 = vadd.f32 %v3369, %v3275
      %v3371 = vadd.f32 %v3370, %v3276
      %v3372 = vadd.f32 %v3371, %v3277
      %v3373 = vadd.f32 %v3372, %v3278
      %v3374 = vadd.f32 %v3373, %v3279
      %v3375 = vadd.f32 %v3374, %v3280
      %v3376 = vadd.f32 %v3375, %v3281
      %v3377 = vadd.f32 %v3376, %v3282
      %v3378 = vadd.f32 %v3377, %v3283
      %v3379 = vadd.f32 %v3378, %v3284
      %v3380 = vadd.f32 %v3379, %v3285
      %v3381 = vadd.f32 %v3380, %v3286
      %v3382 = vadd.f32 %v3381, %v3287
      %v3383 = vadd.f32 %v3382, %v3288
      %v3384 = vadd.f32 %v3383, %v3289
      %v3385 = vadd.f32 %v3384, %v3290
      %v3386 = vadd.f32 %v3385, %v3291
      %v3387 = vrot.slane %v3386, 4
      %v3388 = vadd.f32 %v3386, %v3387
      %v3389 = vrot.slane %v3388, 2
      %v3390 = vadd.f32 %v3388, %v3389
      %v3391 = vrot.slane %v3390, 1
      %v3392 = vadd.f32 %v3390, %v3391
      %3393 = vst [vmem:[%s288] sm:$0x1] %v3392
      %v3394 = vmul.f32 %v3260, %v3260
      %v3395 = vmul.f32 %v3261, %v3261
      %v3396 = vmul.f32 %v3262, %v3262
      %v3397 = vmul.f32 %v3263, %v3263
      %v3398 = vmul.f32 %v3264, %v3264
      %v3399 = vmul.f32 %v3265, %v3265
      %v3400 = vmul.f32 %v3266, %v3266
      %v3401 = vmul.f32 %v3267, %v3267
      %v3402 = vmul.f32 %v3268, %v3268
      %v3403 = vmul.f32 %v3269, %v3269
      %v3404 = vmul.f32 %v3270, %v3270
      %v3405 = vmul.f32 %v3271, %v3271
      %v3406 = vmul.f32 %v3272, %v3272
      %v3407 = vmul.f32 %v3273, %v3273
      %v3408 = vmul.f32 %v3274, %v3274
      %v3409 = vmul.f32 %v3275, %v3275
      %v3410 = vmul.f32 %v3276, %v3276
      %v3411 = vmul.f32 %v3277, %v3277
      %v3412 = vmul.f32 %v3278, %v3278
      %v3413 = vmul.f32 %v3279, %v3279
      %v3414 = vmul.f32 %v3280, %v3280
      %v3415 = vmul.f32 %v3281, %v3281
      %v3416 = vmul.f32 %v3282, %v3282
      %v3417 = vmul.f32 %v3283, %v3283
      %v3418 = vmul.f32 %v3284, %v3284
      %v3419 = vmul.f32 %v3285, %v3285
      %v3420 = vmul.f32 %v3286, %v3286
      %v3421 = vmul.f32 %v3287, %v3287
      %v3422 = vmul.f32 %v3288, %v3288
      %v3423 = vmul.f32 %v3289, %v3289
      %v3424 = vmul.f32 %v3290, %v3290
      %v3425 = vmul.f32 %v3291, %v3291
      %v3426 = vadd.f32 %v3394, %v3395
      %v3427 = vadd.f32 %v3426, %v3396
      %v3428 = vadd.f32 %v3427, %v3397
      %v3429 = vadd.f32 %v3428, %v3398
      %v3430 = vadd.f32 %v3429, %v3399
      %v3431 = vadd.f32 %v3430, %v3400
      %v3432 = vadd.f32 %v3431, %v3401
      %v3433 = vadd.f32 %v3432, %v3402
      %v3434 = vadd.f32 %v3433, %v3403
      %v3435 = vadd.f32 %v3434, %v3404
      %v3436 = vadd.f32 %v3435, %v3405
      %v3437 = vadd.f32 %v3436, %v3406
      %v3438 = vadd.f32 %v3437, %v3407
      %v3439 = vadd.f32 %v3438, %v3408
      %v3440 = vadd.f32 %v3439, %v3409
      %v3441 = vadd.f32 %v3440, %v3410
      %v3442 = vadd.f32 %v3441, %v3411
      %v3443 = vadd.f32 %v3442, %v3412
      %v3444 = vadd.f32 %v3443, %v3413
      %v3445 = vadd.f32 %v3444, %v3414
      %v3446 = vadd.f32 %v3445, %v3415
      %v3447 = vadd.f32 %v3446, %v3416
      %v3448 = vadd.f32 %v3447, %v3417
      %v3449 = vadd.f32 %v3448, %v3418
      %v3450 = vadd.f32 %v3449, %v3419
      %v3451 = vadd.f32 %v3450, %v3420
      %v3452 = vadd.f32 %v3451, %v3421
      %v3453 = vadd.f32 %v3452, %v3422
      %v3454 = vadd.f32 %v3453, %v3423
      %v3455 = vadd.f32 %v3454, %v3424
      %v3456 = vadd.f32 %v3455, %v3425
      %v3457 = vrot.slane %v3456, 4
      %v3458 = vadd.f32 %v3456, %v3457
      %v3459 = vrot.slane %v3458, 2
      %v3460 = vadd.f32 %v3458, %v3459
      %v3461 = vrot.slane %v3460, 1
      %v3462 = vadd.f32 %v3460, %v3461
      %3463 = vst [vmem:[%s288 + $0x1] sm:$0x1] %v3462
      %v3464 = vld [vmem:[%s279] sm:$0xf]
      %v3465 = vld [vmem:[%s279 + $0x4] sm:$0xf]
      %v3466 = vld [vmem:[%s279 + $0x8] sm:$0xf]
      %v3467 = vld [vmem:[%s279 + $0xc] sm:$0xf]
      %v3468 = vld [vmem:[%s279 + $0x10] sm:$0xf]
      %v3469 = vld [vmem:[%s279 + $0x14] sm:$0xf]
      %v3470 = vld [vmem:[%s279 + $0x18] sm:$0xf]
      %v3471 = vld [vmem:[%s279 + $0x1c] sm:$0xf]
      %v3472 = vld [vmem:[%s279 + $0x20] sm:$0xf]
      %v3473 = vld [vmem:[%s279 + $0x24] sm:$0xf]
      %v3474 = vld [vmem:[%s279 + $0x28] sm:$0xf]
      %v3475 = vld [vmem:[%s279 + $0x2c] sm:$0xf]
      %v3476 = vld [vmem:[%s279 + $0x30] sm:$0xf]
      %v3477 = vld [vmem:[%s279 + $0x34] sm:$0xf]
      %v3478 = vld [vmem:[%s279 + $0x38] sm:$0xf]
      %v3479 = vld [vmem:[%s279 + $0x3c] sm:$0xf]
      %v3480 = vld [vmem:[%s279 + $0x40] sm:$0xf]
      %v3481 = vld [vmem:[%s279 + $0x44] sm:$0xf]
      %v3482 = vld [vmem:[%s279 + $0x48] sm:$0xf]
      %v3483 = vld [vmem:[%s279 + $0x4c] sm:$0xf]
      %v3484 = vld [vmem:[%s279 + $0x50] sm:$0xf]
      %v3485 = vld [vmem:[%s279 + $0x54] sm:$0xf]
      %v3486 = vld [vmem:[%s279 + $0x58] sm:$0xf]
      %v3487 = vld [vmem:[%s279 + $0x5c] sm:$0xf]
      %v3488 = vld [vmem:[%s279 + $0x60] sm:$0xf]
      %v3489 = vld [vmem:[%s279 + $0x64] sm:$0xf]
      %v3490 = vld [vmem:[%s279 + $0x68] sm:$0xf]
      %v3491 = vld [vmem:[%s279 + $0x6c] sm:$0xf]
      %v3492 = vld [vmem:[%s279 + $0x70] sm:$0xf]
      %v3493 = vld [vmem:[%s279 + $0x74] sm:$0xf]
      %v3494 = vld [vmem:[%s279 + $0x78] sm:$0xf]
      %v3495 = vld [vmem:[%s279 + $0x7c] sm:$0xf]
      %v3496 = vld [vmem:[%s3] sm:$0xf]
      %v3497 = vld [vmem:[%s3 + $0x4] sm:$0xf]
      %v3498 = vld [vmem:[%s3 + $0x8] sm:$0xf]
      %v3499 = vld [vmem:[%s3 + $0xc] sm:$0xf]
      %v3500 = vld [vmem:[%s3 + $0x10] sm:$0xf]
      %v3501 = vld [vmem:[%s3 + $0x14] sm:$0xf]
      %v3502 = vld [vmem:[%s3 + $0x18] sm:$0xf]
      %v3503 = vld [vmem:[%s3 + $0x1c] sm:$0xf]
      %v3504 = vld [vmem:[%s3 + $0x20] sm:$0xf]
      %v3505 = vld [vmem:[%s3 + $0x24] sm:$0xf]
      %v3506 = vld [vmem:[%s3 + $0x28] sm:$0xf]
      %v3507 = vld [vmem:[%s3 + $0x2c] sm:$0xf]
      %v3508 = vld [vmem:[%s3 + $0x30] sm:$0xf]
      %v3509 = vld [vmem:[%s3 + $0x34] sm:$0xf]
      %v3510 = vld [vmem:[%s3 + $0x38] sm:$0xf]
      %v3511 = vld [vmem:[%s3 + $0x3c] sm:$0xf]
      %v3544 = vunpack.c.l.b16 %v3464
      %v3545 = vunpack.c.l.b16 %v3465
      %v3546 = vunpack.c.l.b16 %v3466
      %v3547 = vunpack.c.l.b16 %v3467
      %v3548 = vunpack.c.l.b16 %v3468
      %v3549 = vunpack.c.l.b16 %v3469
      %v3550 = vunpack.c.l.b16 %v3470
      %v3551 = vunpack.c.l.b16 %v3471
      %v3552 = vunpack.c.l.b16 %v3472
      %v3553 = vunpack.c.l.b16 %v3473
      %v3554 = vunpack.c.l.b16 %v3474
      %v3555 = vunpack.c.l.b16 %v3475
      %v3556 = vunpack.c.l.b16 %v3476
      %v3557 = vunpack.c.l.b16 %v3477
      %v3558 = vunpack.c.l.b16 %v3478
      %v3559 = vunpack.c.l.b16 %v3479
      %v3560 = vunpack.c.l.b16 %v3480
      %v3561 = vunpack.c.l.b16 %v3481
      %v3562 = vunpack.c.l.b16 %v3482
      %v3563 = vunpack.c.l.b16 %v3483
      %v3564 = vunpack.c.l.b16 %v3484
      %v3565 = vunpack.c.l.b16 %v3485
      %v3566 = vunpack.c.l.b16 %v3486
      %v3567 = vunpack.c.l.b16 %v3487
      %v3568 = vunpack.c.l.b16 %v3488
      %v3569 = vunpack.c.l.b16 %v3489
      %v3570 = vunpack.c.l.b16 %v3490
      %v3571 = vunpack.c.l.b16 %v3491
      %v3572 = vunpack.c.l.b16 %v3492
      %v3573 = vunpack.c.l.b16 %v3493
      %v3574 = vunpack.c.l.b16 %v3494
      %v3575 = vunpack.c.l.b16 %v3495
      %v3576 = vpack.c.b16 %v3545, %v3544
      %v3577 = vpack.c.b16 %v3547, %v3546
      %v3578 = vpack.c.b16 %v3549, %v3548
      %v3579 = vpack.c.b16 %v3551, %v3550
      %v3580 = vpack.c.b16 %v3553, %v3552
      %v3581 = vpack.c.b16 %v3555, %v3554
      %v3582 = vpack.c.b16 %v3557, %v3556
      %v3583 = vpack.c.b16 %v3559, %v3558
      %v3584 = vpack.c.b16 %v3561, %v3560
      %v3585 = vpack.c.b16 %v3563, %v3562
      %v3586 = vpack.c.b16 %v3565, %v3564
      %v3587 = vpack.c.b16 %v3567, %v3566
      %v3588 = vpack.c.b16 %v3569, %v3568
      %v3589 = vpack.c.b16 %v3571, %v3570
      %v3590 = vpack.c.b16 %v3573, %v3572
      %v3591 = vpack.c.b16 %v3575, %v3574
      %v3624 = vunpack.c.l.b16 %v3496
      %v3625 = vunpack.c.l.b16 %v3497
      %v3626 = vunpack.c.l.b16 %v3498
      %v3627 = vunpack.c.l.b16 %v3499
      %v3628 = vunpack.c.l.b16 %v3500
      %v3629 = vunpack.c.l.b16 %v3501
      %v3630 = vunpack.c.l.b16 %v3502
      %v3631 = vunpack.c.l.b16 %v3503
      %v3632 = vunpack.c.l.b16 %v3504
      %v3633 = vunpack.c.l.b16 %v3505
      %v3634 = vunpack.c.l.b16 %v3506
      %v3635 = vunpack.c.l.b16 %v3507
      %v3636 = vunpack.c.l.b16 %v3508
      %v3637 = vunpack.c.l.b16 %v3509
      %v3638 = vunpack.c.l.b16 %v3510
      %v3639 = vunpack.c.l.b16 %v3511
      %v3640 = vpack.c.b16 %v3625, %v3624
      %v3641 = vpack.c.b16 %v3627, %v3626
      %v3642 = vpack.c.b16 %v3629, %v3628
      %v3643 = vpack.c.b16 %v3631, %v3630
      %v3644 = vpack.c.b16 %v3633, %v3632
      %v3645 = vpack.c.b16 %v3635, %v3634
      %v3646 = vpack.c.b16 %v3637, %v3636
      %v3647 = vpack.c.b16 %v3639, %v3638
      %3656 = vmatpush.bf16.msra.mxu0 %v3647
      %3657 = vmatpush.bf16.msra.mxu0 %v3646
      %3658 = vmatpush.bf16.msra.mxu0 %v3645
      %3659 = vmatpush.bf16.msra.mxu0 %v3644
      %3660 = vmatpush.bf16.msra.mxu0 %v3643
      %3661 = vmatpush.bf16.msra.mxu0 %v3642
      %3662 = vmatpush.bf16.msra.mxu0 %v3641
      %3663 = vmatpush.bf16.msra.mxu0 %v3640
      %3664 = vmatmul.bf16.gmra.mxu0 %v3576
      %v3665 = vpop.f32.mrf.mxu0
      %v3666 = vadd.f32 0.0, %v3665
      %v3667 = vpop.f32.mrf.mxu0
      %v3668 = vadd.f32 0.0, %v3667
      %3669 = vmatmul.bf16.gmra.mxu0 %v3577
      %v3670 = vpop.f32.mrf.mxu0
      %v3671 = vadd.f32 0.0, %v3670
      %v3672 = vpop.f32.mrf.mxu0
      %v3673 = vadd.f32 0.0, %v3672
      %3674 = vmatmul.bf16.gmra.mxu0 %v3578
      %v3675 = vpop.f32.mrf.mxu0
      %v3676 = vadd.f32 0.0, %v3675
      %v3677 = vpop.f32.mrf.mxu0
      %v3678 = vadd.f32 0.0, %v3677
      %3679 = vmatmul.bf16.gmra.mxu0 %v3579
      %v3680 = vpop.f32.mrf.mxu0
      %v3681 = vadd.f32 0.0, %v3680
      %v3682 = vpop.f32.mrf.mxu0
      %v3683 = vadd.f32 0.0, %v3682
      %3684 = vmatmul.bf16.gmra.mxu0 %v3580
      %v3685 = vpop.f32.mrf.mxu0
      %v3686 = vadd.f32 0.0, %v3685
      %v3687 = vpop.f32.mrf.mxu0
      %v3688 = vadd.f32 0.0, %v3687
      %3689 = vmatmul.bf16.gmra.mxu0 %v3581
      %v3690 = vpop.f32.mrf.mxu0
      %v3691 = vadd.f32 0.0, %v3690
      %v3692 = vpop.f32.mrf.mxu0
      %v3693 = vadd.f32 0.0, %v3692
      %3694 = vmatmul.bf16.gmra.mxu0 %v3582
      %v3695 = vpop.f32.mrf.mxu0
      %v3696 = vadd.f32 0.0, %v3695
      %v3697 = vpop.f32.mrf.mxu0
      %v3698 = vadd.f32 0.0, %v3697
      %3699 = vmatmul.bf16.gmra.mxu0 %v3583
      %v3700 = vpop.f32.mrf.mxu0
      %v3701 = vadd.f32 0.0, %v3700
      %v3702 = vpop.f32.mrf.mxu0
      %v3703 = vadd.f32 0.0, %v3702
      %3704 = vmatmul.bf16.gmra.mxu0 %v3584
      %v3705 = vpop.f32.mrf.mxu0
      %v3706 = vadd.f32 0.0, %v3705
      %v3707 = vpop.f32.mrf.mxu0
      %v3708 = vadd.f32 0.0, %v3707
      %3709 = vmatmul.bf16.gmra.mxu0 %v3585
      %v3710 = vpop.f32.mrf.mxu0
      %v3711 = vadd.f32 0.0, %v3710
      %v3712 = vpop.f32.mrf.mxu0
      %v3713 = vadd.f32 0.0, %v3712
      %3714 = vmatmul.bf16.gmra.mxu0 %v3586
      %v3715 = vpop.f32.mrf.mxu0
      %v3716 = vadd.f32 0.0, %v3715
      %v3717 = vpop.f32.mrf.mxu0
      %v3718 = vadd.f32 0.0, %v3717
      %3719 = vmatmul.bf16.gmra.mxu0 %v3587
      %v3720 = vpop.f32.mrf.mxu0
      %v3721 = vadd.f32 0.0, %v3720
      %v3722 = vpop.f32.mrf.mxu0
      %v3723 = vadd.f32 0.0, %v3722
      %3724 = vmatmul.bf16.gmra.mxu0 %v3588
      %v3725 = vpop.f32.mrf.mxu0
      %v3726 = vadd.f32 0.0, %v3725
      %v3727 = vpop.f32.mrf.mxu0
      %v3728 = vadd.f32 0.0, %v3727
      %3729 = vmatmul.bf16.gmra.mxu0 %v3589
      %v3730 = vpop.f32.mrf.mxu0
      %v3731 = vadd.f32 0.0, %v3730
      %v3732 = vpop.f32.mrf.mxu0
      %v3733 = vadd.f32 0.0, %v3732
      %3734 = vmatmul.bf16.gmra.mxu0 %v3590
      %v3735 = vpop.f32.mrf.mxu0
      %v3736 = vadd.f32 0.0, %v3735
      %v3737 = vpop.f32.mrf.mxu0
      %v3738 = vadd.f32 0.0, %v3737
      %3739 = vmatmul.bf16.gmra.mxu0 %v3591
      %v3740 = vpop.f32.mrf.mxu0
      %v3741 = vadd.f32 0.0, %v3740
      %v3742 = vpop.f32.mrf.mxu0
      %v3743 = vadd.f32 0.0, %v3742
      %3744 = vdwg.mxu0
      %v3745 = vadd.f32 %v3666, %v3668
      %v3746 = vadd.f32 %v3745, %v3671
      %v3747 = vadd.f32 %v3746, %v3673
      %v3748 = vadd.f32 %v3747, %v3676
      %v3749 = vadd.f32 %v3748, %v3678
      %v3750 = vadd.f32 %v3749, %v3681
      %v3751 = vadd.f32 %v3750, %v3683
      %v3752 = vadd.f32 %v3751, %v3686
      %v3753 = vadd.f32 %v3752, %v3688
      %v3754 = vadd.f32 %v3753, %v3691
      %v3755 = vadd.f32 %v3754, %v3693
      %v3756 = vadd.f32 %v3755, %v3696
      %v3757 = vadd.f32 %v3756, %v3698
      %v3758 = vadd.f32 %v3757, %v3701
      %v3759 = vadd.f32 %v3758, %v3703
      %v3760 = vadd.f32 %v3759, %v3706
      %v3761 = vadd.f32 %v3760, %v3708
      %v3762 = vadd.f32 %v3761, %v3711
      %v3763 = vadd.f32 %v3762, %v3713
      %v3764 = vadd.f32 %v3763, %v3716
      %v3765 = vadd.f32 %v3764, %v3718
      %v3766 = vadd.f32 %v3765, %v3721
      %v3767 = vadd.f32 %v3766, %v3723
      %v3768 = vadd.f32 %v3767, %v3726
      %v3769 = vadd.f32 %v3768, %v3728
      %v3770 = vadd.f32 %v3769, %v3731
      %v3771 = vadd.f32 %v3770, %v3733
      %v3772 = vadd.f32 %v3771, %v3736
      %v3773 = vadd.f32 %v3772, %v3738
      %v3774 = vadd.f32 %v3773, %v3741
      %v3775 = vadd.f32 %v3774, %v3743
      %v3776 = vrot.slane %v3775, 4
      %v3777 = vadd.f32 %v3775, %v3776
      %v3778 = vrot.slane %v3777, 2
      %v3779 = vadd.f32 %v3777, %v3778
      %v3780 = vrot.slane %v3779, 1
      %v3781 = vadd.f32 %v3779, %v3780
      %3782 = vst [vmem:[%s292] sm:$0x1] %v3781
      %v3783 = vmul.f32 %v3666, %v3666
      %v3784 = vmul.f32 %v3668, %v3668
      %v3785 = vmul.f32 %v3671, %v3671
      %v3786 = vmul.f32 %v3673, %v3673
      %v3787 = vmul.f32 %v3676, %v3676
      %v3788 = vmul.f32 %v3678, %v3678
      %v3789 = vmul.f32 %v3681, %v3681
      %v3790 = vmul.f32 %v3683, %v3683
      %v3791 = vmul.f32 %v3686, %v3686
      %v3792 = vmul.f32 %v3688, %v3688
      %v3793 = vmul.f32 %v3691, %v3691
      %v3794 = vmul.f32 %v3693, %v3693
      %v3795 = vmul.f32 %v3696, %v3696
      %v3796 = vmul.f32 %v3698, %v3698
      %v3797 = vmul.f32 %v3701, %v3701
      %v3798 = vmul.f32 %v3703, %v3703
      %v3799 = vmul.f32 %v3706, %v3706
      %v3800 = vmul.f32 %v3708, %v3708
      %v3801 = vmul.f32 %v3711, %v3711
      %v3802 = vmul.f32 %v3713, %v3713
      %v3803 = vmul.f32 %v3716, %v3716
      %v3804 = vmul.f32 %v3718, %v3718
      %v3805 = vmul.f32 %v3721, %v3721
      %v3806 = vmul.f32 %v3723, %v3723
      %v3807 = vmul.f32 %v3726, %v3726
      %v3808 = vmul.f32 %v3728, %v3728
      %v3809 = vmul.f32 %v3731, %v3731
      %v3810 = vmul.f32 %v3733, %v3733
      %v3811 = vmul.f32 %v3736, %v3736
      %v3812 = vmul.f32 %v3738, %v3738
      %v3813 = vmul.f32 %v3741, %v3741
      %v3814 = vmul.f32 %v3743, %v3743
      %v3815 = vadd.f32 %v3783, %v3784
      %v3816 = vadd.f32 %v3815, %v3785
      %v3817 = vadd.f32 %v3816, %v3786
      %v3818 = vadd.f32 %v3817, %v3787
      %v3819 = vadd.f32 %v3818, %v3788
      %v3820 = vadd.f32 %v3819, %v3789
      %v3821 = vadd.f32 %v3820, %v3790
      %v3822 = vadd.f32 %v3821, %v3791
      %v3823 = vadd.f32 %v3822, %v3792
      %v3824 = vadd.f32 %v3823, %v3793
      %v3825 = vadd.f32 %v3824, %v3794
      %v3826 = vadd.f32 %v3825, %v3795
      %v3827 = vadd.f32 %v3826, %v3796
      %v3828 = vadd.f32 %v3827, %v3797
      %v3829 = vadd.f32 %v3828, %v3798
      %v3830 = vadd.f32 %v3829, %v3799
      %v3831 = vadd.f32 %v3830, %v3800
      %v3832 = vadd.f32 %v3831, %v3801
      %v3833 = vadd.f32 %v3832, %v3802
      %v3834 = vadd.f32 %v3833, %v3803
      %v3835 = vadd.f32 %v3834, %v3804
      %v3836 = vadd.f32 %v3835, %v3805
      %v3837 = vadd.f32 %v3836, %v3806
      %v3838 = vadd.f32 %v3837, %v3807
      %v3839 = vadd.f32 %v3838, %v3808
      %v3840 = vadd.f32 %v3839, %v3809
      %v3841 = vadd.f32 %v3840, %v3810
      %v3842 = vadd.f32 %v3841, %v3811
      %v3843 = vadd.f32 %v3842, %v3812
      %v3844 = vadd.f32 %v3843, %v3813
      %v3845 = vadd.f32 %v3844, %v3814
      %v3846 = vrot.slane %v3845, 4
      %v3847 = vadd.f32 %v3845, %v3846
      %v3848 = vrot.slane %v3847, 2
      %v3849 = vadd.f32 %v3847, %v3848
      %v3850 = vrot.slane %v3849, 1
      %v3851 = vadd.f32 %v3849, %v3850
      %3852 = vst [vmem:[%s292 + $0x1] sm:$0x1] %v3851
      %p3853 = scmp.lt.s32.totalorder %s18, 1
      %s3854 = scalar_select %p3853, %s18, 1
      %s3855 = smul.addr %s3854, 32
      %s3856 = smul.addr %s3855, 4
      %s3857 = scalar_lea.vmem %s4, %s3856
      %p3858 = scmp.lt.s32.totalorder %s18, 1
      %s3859 = scalar_select %p3858, %s18, 1
      %s3860 = smul.addr %s3859, 2
      %s3861 = scalar_lea.vmem %s5, %s3860
      %p3862 = scmp.lt.s32.totalorder %s18, 1
      %s3863 = scalar_select %p3862, %s18, 1
      %s3864 = smul.addr %s3863, 2
      %s3865 = scalar_lea.vmem %s6, %s3864
      // Predicated region
      $region37: #{residual_block_forward.3} parent=35 // pred_check
        %p3866 = pneg %p130
      $region38: #{residual_block_forward.3} parent=35 // pred_check_branch
        %3868 = sbr.rel (%p3866) target = $region40
      $region39: #{residual_block_forward.3} parent=35 // pred_region
        _
      $region40: #{residual_block_forward.3} parent=35 // pred_fallthru
        _
      // Predicated region
      $region41: #{residual_block_forward.3} parent=35 // pred_check
        %p3869 = pneg %p156
      $region42: #{residual_block_forward.3} parent=35 // pred_check_branch
        %3871 = sbr.rel (%p3869) target = $region44
      $region43: #{residual_block_forward.3} parent=35 // pred_region
        _
      $region44: #{residual_block_forward.3} parent=35 // pred_fallthru
        _
      // Predicated region
      $region45: #{residual_block_forward.3} parent=35 // pred_check
        %p3872 = pneg %p182
      $region46: #{residual_block_forward.3} parent=35 // pred_check_branch
        %3874 = sbr.rel (%p3872) target = $region48
      $region47: #{residual_block_forward.3} parent=35 // pred_region
        _
      $region48: #{residual_block_forward.3} parent=35 // pred_fallthru
        _
    $region36: #{residual_block_forward.3} parent=5 // pred_fallthru
      _
    %p3875 = scmp.le.s32.totalorder 2, %s13
    // Predicated region
    $region49: #{residual_block_forward.3} parent=5 // pred_check
      %p3876 = pneg %p3875
    $region50: #{residual_block_forward.3} parent=5 // pred_check_branch
      %3878 = sbr.rel (%p3876) target = $region52
    $region51: #{residual_block_forward.3} parent=5 // pred_region
      %s3879 = ssub.s32 %s13, 2
      // Predicated region
      $region53: #{residual_block_forward.3} parent=51 // pred_check
        %p3880 = pneg %p136
      $region54: #{residual_block_forward.3} parent=51 // pred_check_branch
        %3882 = sbr.rel (%p3880) target = $region56
      $region55: #{residual_block_forward.3} parent=51 // pred_region
        %p3883 = scmp.lt.s32.totalorder %s19, 1
        %s3884 = scalar_select %p3883, %s19, 1
        %s3885 = smul.addr %s3884, 32
        %s3886 = smul.addr %s3885, 4
        %s3887 = scalar_lea.vmem %s4, %s3886
      $region56: #{residual_block_forward.3} parent=51 // pred_fallthru
        _
      // Predicated region
      $region57: #{residual_block_forward.3} parent=51 // pred_check
        %p3888 = pneg %p162
      $region58: #{residual_block_forward.3} parent=51 // pred_check_branch
        %3890 = sbr.rel (%p3888) target = $region60
      $region59: #{residual_block_forward.3} parent=51 // pred_region
        %p3891 = scmp.lt.s32.totalorder %s19, 1
        %s3892 = scalar_select %p3891, %s19, 1
        %s3893 = smul.addr %s3892, 2
        %s3894 = scalar_lea.vmem %s5, %s3893
      $region60: #{residual_block_forward.3} parent=51 // pred_fallthru
        _
      // Predicated region
      $region61: #{residual_block_forward.3} parent=51 // pred_check
        %p3895 = pneg %p188
      $region62: #{residual_block_forward.3} parent=51 // pred_check_branch
        %3897 = sbr.rel (%p3895) target = $region64
      $region63: #{residual_block_forward.3} parent=51 // pred_region
        %p3898 = scmp.lt.s32.totalorder %s19, 1
        %s3899 = scalar_select %p3898, %s19, 1
        %s3900 = smul.addr %s3899, 2
        %s3901 = scalar_lea.vmem %s6, %s3900
      $region64: #{residual_block_forward.3} parent=51 // pred_fallthru
        _
    $region52: #{residual_block_forward.3} parent=5 // pred_fallthru
      _
  $region6: #{residual_block_forward.3} parent=0 // loop_footer
    %s17 = sadd.s32 1, %s13
  $region7: #{residual_block_forward.3} parent=0 // loop_footer_branch
    %12 = sbr.rel target = $region3
  $region8: #{residual_block_forward.3} parent=0 // loop_exit
    _

// kernel: residual_block_forward.4
$region0: #{residual_block_forward.4}
  #allocation0 [shape = 'u32[]', space=smem, size = 0x4, offset = 0x4, fixed_abs, tag = 'smem constant byte address 0x4 - core index']
  #allocation1 [shape = 'u32[72,128]{1,0:T(1,128)}', space=vmem, size = 0x9000, scoped, tag = 'internal scratch']
  #allocation2 [shape = 'bf16[18,20,128]{2,1,0:T(8,128)(2,1)}', space=vmem, size = 0x1b000, scoped, tag = 'scratch operand']
  %s0 = inlined_call_operand.vmem [shape: bf16[2,16,16,128], index: 0, kind: input, shape index: {}]
  %s1 = inlined_call_operand.vmem [shape: f32[1,128], index: 1, kind: input, shape index: {}]
  %s2 = inlined_call_operand.vmem [shape: f32[1,128], index: 2, kind: input, shape index: {}]
  %s3 = inlined_call_operand.vmem [shape: bf16[3,384,128], index: 3, kind: input, shape index: {}]
  %s4 = inlined_call_operand.vmem [shape: bf16[2,16,16,128], index: 4, kind: output, shape index: {0}]
  %s5 = inlined_call_operand.vmem [shape: f32[2,2,128], index: 5, kind: output, shape index: {1}]
  %6 = xla_tuple %s4, %s5
  %s7 = sld [smem:[#allocation0]]
  $region57: #{residual_block_forward.4} parent=0
    _
  %s9 = ssub.s32 1, %s7
  %s10 = scalar_select 0, %s9, %s7
  loop: start=0, step=1, limit=4
  $region2: #{residual_block_forward.4} parent=0 // loop_pre_header
    _
  $region3: #{residual_block_forward.4} parent=0 // loop_header
    %s12 = sphi 0, %s16
    %p13 = scmp.ge.s32.totalorder %s12, 4
    %s22 = sphi 0, %s24
    %s25 = sphi 0, %s22
    %s26 = sphi 0, %s25
    %s42 = sphi 0, %s26
    %s46 = sphi 0, %s46
    %s48 = sphi 0, %s46
    %s49 = sphi 0, %s48
    %s63 = sphi 0, %s49
    %s67 = sphi 0, %s67
    %s69 = sphi 0, %s67
    %s70 = sphi 0, %s69
    %s84 = sphi 0, %s70
    %s88 = sphi 0, %s88
    %s90 = sphi 0, %s88
    %s91 = sphi 0, %s90
    %s105 = sphi 0, %s91
    %s111 = sphi 0, %s113
    %s114 = sphi 0, %s111
    %s115 = sphi 0, %s114
    %s131 = sphi 0, %s115
    %s137 = sphi 0, %s139
    %s140 = sphi 0, %s137
    %s141 = sphi 0, %s140
    %s157 = sphi 0, %s141
  $region4: #{residual_block_forward.4} parent=0 // loop_header_branch
    %15 = sbr.rel (%p13) target = $region8
  $region5: #{residual_block_forward.4} parent=0 // loop_body
    %s17 = ssub.s32 %s12, 1
    %s18 = ssub.s32 %s12, 2
    %s19 = sadd.s32 %s12, 1
    %s20 = ssub.s32 %s12, %s19
    %p21 = scmp.eq.s32.totalorder %s20, 0
    %s23 = sadd.s32 %s22, 1
    %s24 = scalar_select %p21, %s22, %s23
    %p27 = pneg %p21
    %p28 = scmp.eq.s32.totalorder %s12, 1
    %p29 = por %p27, %p28
    %p30 = scmp.ne.s32.totalorder %s22, %s25
    %p31 = scmp.eq.s32.totalorder %s12, 0
    %p32 = por %p30, %p31
    %p33 = scmp.ne.s32.totalorder %s22, %s25
    %p34 = scmp.eq.s32.totalorder %s17, 1
    %p35 = por %p33, %p34
    %p36 = scmp.ne.s32.totalorder %s25, %s26
    %p37 = scmp.eq.s32.totalorder %s17, 0
    %p38 = por %p36, %p37
    %p39 = scmp.ne.s32.totalorder %s25, %s26
    %p40 = scmp.eq.s32.totalorder %s18, 1
    %p41 = por %p39, %p40
    %p43 = scmp.ne.s32.totalorder %s26, %s42
    %p44 = scmp.eq.s32.totalorder %s18, 0
    %p45 = por %p43, %p44
    %s47 = sadd.s32 %s46, 1
    %p50 = scmp.eq.s32.totalorder %s12, 1
    %p51 = scmp.ne.s32.totalorder %s46, %s48
    %p52 = scmp.eq.s32.totalorder %s12, 0
    %p53 = por %p51, %p52
    %p54 = scmp.ne.s32.totalorder %s46, %s48
    %p55 = scmp.eq.s32.totalorder %s17, 1
    %p56 = por %p54, %p55
    %p57 = scmp.ne.s32.totalorder %s48, %s49
    %p58 = scmp.eq.s32.totalorder %s17, 0
    %p59 = por %p57, %p58
    %p60 = scmp.ne.s32.totalorder %s48, %s49
    %p61 = scmp.eq.s32.totalorder %s18, 1
    %p62 = por %p60, %p61
    %p64 = scmp.ne.s32.totalorder %s49, %s63
    %p65 = scmp.eq.s32.totalorder %s18, 0
    %p66 = por %p64, %p65
    %s68 = sadd.s32 %s67, 1
    %p71 = scmp.eq.s32.totalorder %s12, 1
    %p72 = scmp.ne.s32.totalorder %s67, %s69
    %p73 = scmp.eq.s32.totalorder %s12, 0
    %p74 = por %p72, %p73
    %p75 = scmp.ne.s32.totalorder %s67, %s69
    %p76 = scmp.eq.s32.totalorder %s17, 1
    %p77 = por %p75, %p76
    %p78 = scmp.ne.s32.totalorder %s69, %s70
    %p79 = scmp.eq.s32.totalorder %s17, 0
    %p80 = por %p78, %p79
    %p81 = scmp.ne.s32.totalorder %s69, %s70
    %p82 = scmp.eq.s32.totalorder %s18, 1
    %p83 = por %p81, %p82
    %p85 = scmp.ne.s32.totalorder %s70, %s84
    %p86 = scmp.eq.s32.totalorder %s18, 0
    %p87 = por %p85, %p86
    %s89 = sadd.s32 %s88, 1
    %p92 = scmp.eq.s32.totalorder %s12, 1
    %p93 = scmp.ne.s32.totalorder %s88, %s90
    %p94 = scmp.eq.s32.totalorder %s12, 0
    %p95 = por %p93, %p94
    %p96 = scmp.ne.s32.totalorder %s88, %s90
    %p97 = scmp.eq.s32.totalorder %s17, 1
    %p98 = por %p96, %p97
    %p99 = scmp.ne.s32.totalorder %s90, %s91
    %p100 = scmp.eq.s32.totalorder %s17, 0
    %p101 = por %p99, %p100
    %p102 = scmp.ne.s32.totalorder %s90, %s91
    %p103 = scmp.eq.s32.totalorder %s18, 1
    %p104 = por %p102, %p103
    %p106 = scmp.ne.s32.totalorder %s91, %s105
    %p107 = scmp.eq.s32.totalorder %s18, 0
    %p108 = por %p106, %p107
    %s109 = ssub.s32 %s12, %s19
    %p110 = scmp.eq.s32.totalorder %s109, 0
    %s112 = sadd.s32 %s111, 1
    %s113 = scalar_select %p110, %s111, %s112
    %p116 = pneg %p110
    %p117 = scmp.eq.s32.totalorder %s12, 1
    %p118 = por %p116, %p117
    %p119 = scmp.ne.s32.totalorder %s111, %s114
    %p120 = scmp.eq.s32.totalorder %s12, 0
    %p121 = por %p119, %p120
    %p122 = scmp.ne.s32.totalorder %s111, %s114
    %p123 = scmp.eq.s32.totalorder %s17, 1
    %p124 = por %p122, %p123
    %p125 = scmp.ne.s32.totalorder %s114, %s115
    %p126 = scmp.eq.s32.totalorder %s17, 0
    %p127 = por %p125, %p126
    %p128 = scmp.ne.s32.totalorder %s114, %s115
    %p129 = scmp.eq.s32.totalorder %s18, 1
    %p130 = por %p128, %p129
    %p132 = scmp.ne.s32.totalorder %s115, %s131
    %p133 = scmp.eq.s32.totalorder %s18, 0
    %p134 = por %p132, %p133
    %s135 = ssub.s32 %s12, %s19
    %p136 = scmp.eq.s32.totalorder %s135, 0
    %s138 = sadd.s32 %s137, 1
    %s139 = scalar_select %p136, %s137, %s138
    %p142 = pneg %p136
    %p143 = scmp.eq.s32.totalorder %s12, 1
    %p144 = por %p142, %p143
    %p145 = scmp.ne.s32.totalorder %s137, %s140
    %p146 = scmp.eq.s32.totalorder %s12, 0
    %p147 = por %p145, %p146
    %p148 = scmp.ne.s32.totalorder %s137, %s140
    %p149 = scmp.eq.s32.totalorder %s17, 1
    %p150 = por %p148, %p149
    %p151 = scmp.ne.s32.totalorder %s140, %s141
    %p152 = scmp.eq.s32.totalorder %s17, 0
    %p153 = por %p151, %p152
    %p154 = scmp.ne.s32.totalorder %s140, %s141
    %p155 = scmp.eq.s32.totalorder %s18, 1
    %p156 = por %p154, %p155
    %p158 = scmp.ne.s32.totalorder %s141, %s157
    %p159 = scmp.eq.s32.totalorder %s18, 0
    %p160 = por %p158, %p159
    %p161 = scmp.le.s32.totalorder 1, %s12
    %p162 = scmp.lt.s32.totalorder %s12, 3
    %p163 = pnand %p161, %p162
    %p164 = pneg %p163
    // Predicated region
    $region9: #{residual_block_forward.4} parent=5 // pred_check
      _
    $region10: #{residual_block_forward.4} parent=5 // pred_check_branch
      %166 = sbr.rel (%p163) target = $region12
    $region11: #{residual_block_forward.4} parent=5 // pred_region
      %s167 = ssub.s32 %s12, 1
      // Predicated region
      $region13: #{residual_block_forward.4} parent=11 // pred_check
        %p168 = pneg %p59
      $region14: #{residual_block_forward.4} parent=11 // pred_check_branch
        %170 = sbr.rel (%p168) target = $region16
      $region15: #{residual_block_forward.4} parent=11 // pred_region
        _
      $region16: #{residual_block_forward.4} parent=11 // pred_fallthru
        _
      // Predicated region
      $region17: #{residual_block_forward.4} parent=11 // pred_check
        %p171 = pneg %p80
      $region18: #{residual_block_forward.4} parent=11 // pred_check_branch
        %173 = sbr.rel (%p171) target = $region20
      $region19: #{residual_block_forward.4} parent=11 // pred_region
        _
      $region20: #{residual_block_forward.4} parent=11 // pred_fallthru
        _
      // Predicated region
      $region21: #{residual_block_forward.4} parent=11 // pred_check
        %p174 = pneg %p101
      $region22: #{residual_block_forward.4} parent=11 // pred_check_branch
        %176 = sbr.rel (%p174) target = $region24
      $region23: #{residual_block_forward.4} parent=11 // pred_region
        _
      $region24: #{residual_block_forward.4} parent=11 // pred_fallthru
        _
    $region12: #{residual_block_forward.4} parent=5 // pred_fallthru
      _
    %p177 = scmp.lt.s32.totalorder %s12, 2
    // Predicated region
    $region25: #{residual_block_forward.4} parent=5 // pred_check
      %p178 = pneg %p177
    $region26: #{residual_block_forward.4} parent=5 // pred_check_branch
      %180 = sbr.rel (%p178) target = $region28
    $region27: #{residual_block_forward.4} parent=5 // pred_region
      // Predicated region
      $region29: #{residual_block_forward.4} parent=27 // pred_check
        %p181 = pneg %p32
      $region30: #{residual_block_forward.4} parent=27 // pred_check_branch
        %183 = sbr.rel (%p181) target = $region32
      $region31: #{residual_block_forward.4} parent=27 // pred_region
        %p184 = scmp.lt.s32.totalorder %s12, 1
        %s185 = scalar_select %p184, %s12, 1
        %s186 = smul.addr %s185, 32
        %s187 = smul.addr %s186, 4
        %s188 = scalar_lea.vmem %s0, %s187
      $region32: #{residual_block_forward.4} parent=27 // pred_fallthru
        _
    $region28: #{residual_block_forward.4} parent=5 // pred_fallthru
      _
    %p189 = scmp.le.s32.totalorder 1, %s12
    %p190 = scmp.lt.s32.totalorder %s12, 3
    %p191 = pnand %p189, %p190
    %p192 = pneg %p191
    // Predicated region
    $region33: #{residual_block_forward.4} parent=5 // pred_check
      _
    $region34: #{residual_block_forward.4} parent=5 // pred_check_branch
      %194 = sbr.rel (%p191) target = $region36
    $region35: #{residual_block_forward.4} parent=5 // pred_region
      %s195 = ssub.s32 %s12, 1
      %p196 = scmp.lt.s32.totalorder %s17, 1
      %s197 = scalar_select %p196, %s17, 1
      %s198 = smul.addr %s197, 32
      %s199 = smul.addr %s198, 4
      %s200 = scalar_lea.vmem %s0, %s199
      %p201 = pneg %p38
      %p202 = pneg %p35
      %p203 = pneg %p59
      %p204 = pneg %p56
      %p205 = pneg %p80
      %p206 = pneg %p77
      %p207 = pneg %p101
      %p208 = pneg %p98
      %p209 = pneg %p127
      %p210 = pneg %p124
      %p211 = scmp.lt.s32.totalorder %s17, 1
      %s212 = scalar_select %p211, %s17, 1
      %s213 = smul.addr %s212, 32
      %s214 = smul.addr %s213, 4
      %s215 = scalar_lea.vmem %s4, %s214
      %p216 = pneg %p153
      %p217 = pneg %p150
      %p218 = scmp.lt.s32.totalorder %s17, 1
      %s219 = scalar_select %p218, %s17, 1
      %s220 = smul.addr %s219, 2
      %s221 = scalar_lea.vmem %s5, %s220
      %p222 = scmp.lt.s32.totalorder %s17, 1
      %s223 = scalar_select %p222, %s17, 1
      %s224 = smul.addr %s223, 32
      %s225 = smul.addr %s224, 4
      %s226 = scalar_lea.vmem %s0, %s225
      %p227 = scmp.lt.s32.totalorder %s17, 1
      %s228 = scalar_select %p227, %s17, 1
      %s229 = smul.addr %s228, 32
      %s230 = smul.addr %s229, 4
      %s231 = scalar_lea.vmem %s4, %s230
      %p232 = scmp.lt.s32.totalorder %s17, 1
      %s233 = scalar_select %p232, %s17, 1
      %s234 = smul.addr %s233, 2
      %s235 = scalar_lea.vmem %s5, %s234
      %v237 = vld [vmem:[%s226] sm:$0xf]
      %v238 = vld [vmem:[%s226 + $0x4] sm:$0xf]
      %v239 = vld [vmem:[%s226 + $0x8] sm:$0xf]
      %v240 = vld [vmem:[%s226 + $0xc] sm:$0xf]
      %v241 = vld [vmem:[%s226 + $0x10] sm:$0xf]
      %v242 = vld [vmem:[%s226 + $0x14] sm:$0xf]
      %v243 = vld [vmem:[%s226 + $0x18] sm:$0xf]
      %v244 = vld [vmem:[%s226 + $0x1c] sm:$0xf]
      %v245 = vld [vmem:[%s226 + $0x20] sm:$0xf]
      %v246 = vld [vmem:[%s226 + $0x24] sm:$0xf]
      %v247 = vld [vmem:[%s226 + $0x28] sm:$0xf]
      %v248 = vld [vmem:[%s226 + $0x2c] sm:$0xf]
      %v249 = vld [vmem:[%s226 + $0x30] sm:$0xf]
      %v250 = vld [vmem:[%s226 + $0x34] sm:$0xf]
      %v251 = vld [vmem:[%s226 + $0x38] sm:$0xf]
      %v252 = vld [vmem:[%s226 + $0x3c] sm:$0xf]
      %v253 = vld [vmem:[%s226 + $0x40] sm:$0xf]
      %v254 = vld [vmem:[%s226 + $0x44] sm:$0xf]
      %v255 = vld [vmem:[%s226 + $0x48] sm:$0xf]
      %v256 = vld [vmem:[%s226 + $0x4c] sm:$0xf]
      %v257 = vld [vmem:[%s226 + $0x50] sm:$0xf]
      %v258 = vld [vmem:[%s226 + $0x54] sm:$0xf]
      %v259 = vld [vmem:[%s226 + $0x58] sm:$0xf]
      %v260 = vld [vmem:[%s226 + $0x5c] sm:$0xf]
      %v261 = vld [vmem:[%s226 + $0x60] sm:$0xf]
      %v262 = vld [vmem:[%s226 + $0x64] sm:$0xf]
      %v263 = vld [vmem:[%s226 + $0x68] sm:$0xf]
      %v264 = vld [vmem:[%s226 + $0x6c] sm:$0xf]
      %v265 = vld [vmem:[%s226 + $0x70] sm:$0xf]
      %v266 = vld [vmem:[%s226 + $0x74] sm:$0xf]
      %v267 = vld [vmem:[%s226 + $0x78] sm:$0xf]
      %v268 = vld [vmem:[%s226 + $0x7c] sm:$0xf]
      %v269 = vunpack.c.l.bf16 %v237
      %v270 = vunpack.c.l.bf16 %v238
      %v271 = vunpack.c.l.bf16 %v239
      %v272 = vunpack.c.l.bf16 %v240
      %v273 = vunpack.c.l.bf16 %v241
      %v274 = vunpack.c.l.bf16 %v242
      %v275 = vunpack.c.l.bf16 %v243
      %v276 = vunpack.c.l.bf16 %v244
      %v277 = vunpack.c.l.bf16 %v245
      %v278 = vunpack.c.l.bf16 %v246
      %v279 = vunpack.c.l.bf16 %v247
      %v280 = vunpack.c.l.bf16 %v248
      %v281 = vunpack.c.l.bf16 %v249
      %v282 = vunpack.c.l.bf16 %v250
      %v283 = vunpack.c.l.bf16 %v251
      %v284 = vunpack.c.l.bf16 %v252
      %v285 = vunpack.c.l.bf16 %v253
      %v286 = vunpack.c.l.bf16 %v254
      %v287 = vunpack.c.l.bf16 %v255
      %v288 = vunpack.c.l.bf16 %v256
      %v289 = vunpack.c.l.bf16 %v257
      %v290 = vunpack.c.l.bf16 %v258
      %v291 = vunpack.c.l.bf16 %v259
      %v292 = vunpack.c.l.bf16 %v260
      %v293 = vunpack.c.l.bf16 %v261
      %v294 = vunpack.c.l.bf16 %v262
      %v295 = vunpack.c.l.bf16 %v263
      %v296 = vunpack.c.l.bf16 %v264
      %v297 = vunpack.c.l.bf16 %v265
      %v298 = vunpack.c.l.bf16 %v266
      %v299 = vunpack.c.l.bf16 %v267
      %v300 = vunpack.c.l.bf16 %v268
      %v301 = vld [vmem:[%s1] sm:$0x1]
      %v303 = vperm.slane %v301, 0
      %v305 = vmul.f32 %v269, %v303
      %v306 = vmul.f32 %v270, %v303
      %v307 = vmul.f32 %v271, %v303
      %v308 = vmul.f32 %v272, %v303
      %v309 = vmul.f32 %v273, %v303
      %v310 = vmul.f32 %v274, %v303
      %v311 = vmul.f32 %v275, %v303
      %v312 = vmul.f32 %v276, %v303
      %v313 = vmul.f32 %v277, %v303
      %v314 = vmul.f32 %v278, %v303
      %v315 = vmul.f32 %v279, %v303
      %v316 = vmul.f32 %v280, %v303
      %v317 = vmul.f32 %v281, %v303
      %v318 = vmul.f32 %v282, %v303
      %v319 = vmul.f32 %v283, %v303
      %v320 = vmul.f32 %v284, %v303
      %v321 = vmul.f32 %v285, %v303
      %v322 = vmul.f32 %v286, %v303
      %v323 = vmul.f32 %v287, %v303
      %v324 = vmul.f32 %v288, %v303
      %v325 = vmul.f32 %v289, %v303
      %v326 = vmul.f32 %v290, %v303
      %v327 = vmul.f32 %v291, %v303
      %v328 = vmul.f32 %v292, %v303
      %v329 = vmul.f32 %v293, %v303
      %v330 = vmul.f32 %v294, %v303
      %v331 = vmul.f32 %v295, %v303
      %v332 = vmul.f32 %v296, %v303
      %v333 = vmul.f32 %v297, %v303
      %v334 = vmul.f32 %v298, %v303
      %v335 = vmul.f32 %v299, %v303
      %v336 = vmul.f32 %v300, %v303
      %v337 = vld [vmem:[%s2] sm:$0x1]
      %v339 = vperm.slane %v337, 0
      %v341 = vadd.f32 %v305, %v339
      %v342 = vadd.f32 %v306, %v339
      %v343 = vadd.f32 %v307, %v339
      %v344 = vadd.f32 %v308, %v339
      %v345 = vadd.f32 %v309, %v339
      %v346 = vadd.f32 %v310, %v339
      %v347 = vadd.f32 %v311, %v339
      %v348 = vadd.f32 %v312, %v339
      %v349 = vadd.f32 %v313, %v339
      %v350 = vadd.f32 %v314, %v339
      %v351 = vadd.f32 %v315, %v339
      %v352 = vadd.f32 %v316, %v339
      %v353 = vadd.f32 %v317, %v339
      %v354 = vadd.f32 %v318, %v339
      %v355 = vadd.f32 %v319, %v339
      %v356 = vadd.f32 %v320, %v339
      %v357 = vadd.f32 %v321, %v339
      %v358 = vadd.f32 %v322, %v339
      %v359 = vadd.f32 %v323, %v339
      %v360 = vadd.f32 %v324, %v339
      %v361 = vadd.f32 %v325, %v339
      %v362 = vadd.f32 %v326, %v339
      %v363 = vadd.f32 %v327, %v339
      %v364 = vadd.f32 %v328, %v339
      %v365 = vadd.f32 %v329, %v339
      %v366 = vadd.f32 %v330, %v339
      %v367 = vadd.f32 %v331, %v339
      %v368 = vadd.f32 %v332, %v339
      %v369 = vadd.f32 %v333, %v339
      %v370 = vadd.f32 %v334, %v339
      %v371 = vadd.f32 %v335, %v339
      %v372 = vadd.f32 %v336, %v339
      %v373 = vmax.f32 %v341, 0.0
      %v374 = vmax.f32 %v342, 0.0
      %v375 = vmax.f32 %v343, 0.0
      %v376 = vmax.f32 %v344, 0.0
      %v377 = vmax.f32 %v345, 0.0
      %v378 = vmax.f32 %v346, 0.0
      %v379 = vmax.f32 %v347, 0.0
      %v380 = vmax.f32 %v348, 0.0
      %v381 = vmax.f32 %v349, 0.0
      %v382 = vmax.f32 %v350, 0.0
      %v383 = vmax.f32 %v351, 0.0
      %v384 = vmax.f32 %v352, 0.0
      %v385 = vmax.f32 %v353, 0.0
      %v386 = vmax.f32 %v354, 0.0
      %v387 = vmax.f32 %v355, 0.0
      %v388 = vmax.f32 %v356, 0.0
      %v389 = vmax.f32 %v357, 0.0
      %v390 = vmax.f32 %v358, 0.0
      %v391 = vmax.f32 %v359, 0.0
      %v392 = vmax.f32 %v360, 0.0
      %v393 = vmax.f32 %v361, 0.0
      %v394 = vmax.f32 %v362, 0.0
      %v395 = vmax.f32 %v363, 0.0
      %v396 = vmax.f32 %v364, 0.0
      %v397 = vmax.f32 %v365, 0.0
      %v398 = vmax.f32 %v366, 0.0
      %v399 = vmax.f32 %v367, 0.0
      %v400 = vmax.f32 %v368, 0.0
      %v401 = vmax.f32 %v369, 0.0
      %v402 = vmax.f32 %v370, 0.0
      %v403 = vmax.f32 %v371, 0.0
      %v404 = vmax.f32 %v372, 0.0
      %405 = vst [vmem:[#allocation2] sm:$0xf] 0
      %406 = vst [vmem:[#allocation2 + $0x4] sm:$0xf] 0
      %407 = vst [vmem:[#allocation2 + $0x8] sm:$0x3] 0
      %s408 = scalar_lea.vmem [#allocation2], 204
      %409 = vst [vmem:[%s408] sm:$0xf] 0
      %410 = vst [vmem:[%s408 + $0x4] sm:$0xf] 0
      %411 = vst [vmem:[%s408 + $0x8] sm:$0x3] 0
      %s412 = scalar_lea.vmem [#allocation2], 12
      %413 = vst [vmem:[%s412] sm:$0x1] 0
      %414 = vst [vmem:[%s412 + $0xc] sm:$0x1] 0
      %415 = vst [vmem:[%s412 + $0x18] sm:$0x1] 0
      %416 = vst [vmem:[%s412 + $0x24] sm:$0x1] 0
      %417 = vst [vmem:[%s412 + $0x30] sm:$0x1] 0
      %418 = vst [vmem:[%s412 + $0x3c] sm:$0x1] 0
      %419 = vst [vmem:[%s412 + $0x48] sm:$0x1] 0
      %420 = vst [vmem:[%s412 + $0x54] sm:$0x1] 0
      %421 = vst [vmem:[%s412 + $0x60] sm:$0x1] 0
      %422 = vst [vmem:[%s412 + $0x6c] sm:$0x1] 0
      %423 = vst [vmem:[%s412 + $0x78] sm:$0x1] 0
      %424 = vst [vmem:[%s412 + $0x84] sm:$0x1] 0
      %425 = vst [vmem:[%s412 + $0x90] sm:$0x1] 0
      %426 = vst [vmem:[%s412 + $0x9c] sm:$0x1] 0
      %427 = vst [vmem:[%s412 + $0xa8] sm:$0x1] 0
      %428 = vst [vmem:[%s412 + $0xb4] sm:$0x1] 0
      %429 = vst [vmem:[%s412 + $0x8] sm:$0x2] 0
      %430 = vst [vmem:[%s412 + $0x14] sm:$0x2] 0
      %431 = vst [vmem:[%s412 + $0x20] sm:$0x2] 0
      %432 = vst [vmem:[%s412 + $0x2c] sm:$0x2] 0
      %433 = vst [vmem:[%s412 + $0x38] sm:$0x2] 0
      %434 = vst [vmem:[%s412 + $0x44] sm:$0x2] 0
      %435 = vst [vmem:[%s412 + $0x50] sm:$0x2] 0
      %436 = vst [vmem:[%s412 + $0x5c] sm:$0x2] 0
      %437 = vst [vmem:[%s412 + $0x68] sm:$0x2] 0
      %438 = vst [vmem:[%s412 + $0x74] sm:$0x2] 0
      %439 = vst [vmem:[%s412 + $0x80] sm:$0x2] 0
      %440 = vst [vmem:[%s412 + $0x8c] sm:$0x2] 0
      %441 = vst [vmem:[%s412 + $0x98] sm:$0x2] 0
      %442 = vst [vmem:[%s412 + $0xa4] sm:$0x2] 0
      %443 = vst [vmem:[%s412 + $0xb0] sm:$0x2] 0
      %444 = vst [vmem:[%s412 + $0xbc] sm:$0x2] 0
      %v445 = vpack.c.bf16 %v373, %v373
      %v446 = vpack.c.bf16 %v374, %v374
      %v447 = vpack.c.bf16 %v375, %v375
      %v448 = vpack.c.bf16 %v376, %v376
      %v449 = vpack.c.bf16 %v377, %v377
      %v450 = vpack.c.bf16 %v378, %v378
      %v451 = vpack.c.bf16 %v379, %v379
      %v452 = vpack.c.bf16 %v380, %v380
      %v453 = vpack.c.bf16 %v381, %v381
      %v454 = vpack.c.bf16 %v382, %v382
      %v455 = vpack.c.bf16 %v383, %v383
      %v456 = vpack.c.bf16 %v384, %v384
      %v457 = vpack.c.bf16 %v385, %v385
      %v458 = vpack.c.bf16 %v386, %v386
      %v459 = vpack.c.bf16 %v387, %v387
      %v460 = vpack.c.bf16 %v388, %v388
      %v461 = vpack.c.bf16 %v389, %v389
      %v462 = vpack.c.bf16 %v390, %v390
      %v463 = vpack.c.bf16 %v391, %v391
      %v464 = vpack.c.bf16 %v392, %v392
      %v465 = vpack.c.bf16 %v393, %v393
      %v466 = vpack.c.bf16 %v394, %v394
      %v467 = vpack.c.bf16 %v395, %v395
      %v468 = vpack.c.bf16 %v396, %v396
      %v469 = vpack.c.bf16 %v397, %v397
      %v470 = vpack.c.bf16 %v398, %v398
      %v471 = vpack.c.bf16 %v399, %v399
      %v472 = vpack.c.bf16 %v400, %v400
      %v473 = vpack.c.bf16 %v401, %v401
      %v474 = vpack.c.bf16 %v402, %v402
      %v475 = vpack.c.bf16 %v403, %v403
      %v476 = vpack.c.bf16 %v404, %v404
      %vm509 = vcmask 1040384
      %vm510 = vcmask 1044484
      %vm511 = vmor %vm509, %vm510
      %v512 = vrot.slane %v445, 7
      %v513 = vrot.slane %v512, 4
      %v514 = vrot.slane %v446, 7
      %v515 = vsel %vm511, %v513, %v514
      %v516 = vrot.slane %v514, 4
      %v517 = vrot.slane %v447, 7
      %v518 = vrot.slane %v517, 4
      %v519 = vrot.slane %v448, 7
      %v520 = vsel %vm511, %v518, %v519
      %v521 = vrot.slane %v519, 4
      %v522 = vrot.slane %v449, 7
      %v523 = vrot.slane %v522, 4
      %v524 = vrot.slane %v450, 7
      %v525 = vsel %vm511, %v523, %v524
      %v526 = vrot.slane %v524, 4
      %v527 = vrot.slane %v451, 7
      %v528 = vrot.slane %v527, 4
      %v529 = vrot.slane %v452, 7
      %v530 = vsel %vm511, %v528, %v529
      %v531 = vrot.slane %v529, 4
      %v532 = vrot.slane %v453, 7
      %v533 = vrot.slane %v532, 4
      %v534 = vrot.slane %v454, 7
      %v535 = vsel %vm511, %v533, %v534
      %v536 = vrot.slane %v534, 4
      %v537 = vrot.slane %v455, 7
      %v538 = vrot.slane %v537, 4
      %v539 = vrot.slane %v456, 7
      %v540 = vsel %vm511, %v538, %v539
      %v541 = vrot.slane %v539, 4
      %v542 = vrot.slane %v457, 7
      %v543 = vrot.slane %v542, 4
      %v544 = vrot.slane %v458, 7
      %v545 = vsel %vm511, %v543, %v544
      %v546 = vrot.slane %v544, 4
      %v547 = vrot.slane %v459, 7
      %v548 = vrot.slane %v547, 4
      %v549 = vrot.slane %v460, 7
      %v550 = vsel %vm511, %v548, %v549
      %v551 = vrot.slane %v549, 4
      %v552 = vrot.slane %v461, 7
      %v553 = vrot.slane %v552, 4
      %v554 = vrot.slane %v462, 7
      %v555 = vsel %vm511, %v553, %v554
      %v556 = vrot.slane %v554, 4
      %v557 = vrot.slane %v463, 7
      %v558 = vrot.slane %v557, 4
      %v559 = vrot.slane %v464, 7
      %v560 = vsel %vm511, %v558, %v559
      %v561 = vrot.slane %v559, 4
      %v562 = vrot.slane %v465, 7
      %v563 = vrot.slane %v562, 4
      %v564 = vrot.slane %v466, 7
      %v565 = vsel %vm511, %v563, %v564
      %v566 = vrot.slane %v564, 4
      %v567 = vrot.slane %v467, 7
      %v568 = vrot.slane %v567, 4
      %v569 = vrot.slane %v468, 7
      %v570 = vsel %vm511, %v568, %v569
      %v571 = vrot.slane %v569, 4
      %v572 = vrot.slane %v469, 7
      %v573 = vrot.slane %v572, 4
      %v574 = vrot.slane %v470, 7
      %v575 = vsel %vm511, %v573, %v574
      %v576 = vrot.slane %v574, 4
      %v577 = vrot.slane %v471, 7
      %v578 = vrot.slane %v577, 4
      %v579 = vrot.slane %v472, 7
      %v580 = vsel %vm511, %v578, %v579
      %v581 = vrot.slane %v579, 4
      %v582 = vrot.slane %v473, 7
      %v583 = vrot.slane %v582, 4
      %v584 = vrot.slane %v474, 7
      %v585 = vsel %vm511, %v583, %v584
      %v586 = vrot.slane %v584, 4
      %v587 = vrot.slane %v475, 7
      %v588 = vrot.slane %v587, 4
      %v589 = vrot.slane %v476, 7
      %v590 = vsel %vm511, %v588, %v589
      %v591 = vrot.slane %v589, 4
      %640 = vst [vmem:[%s412] sm:$0xe] %v512
      %641 = vst [vmem:[%s412 + $0x4] sm:$0xf] %v515
      %642 = vst [vmem:[%s412 + $0x8] sm:$0x1] %v516
      %643 = vst [vmem:[%s412 + $0xc] sm:$0xe] %v517
      %644 = vst [vmem:[%s412 + $0x10] sm:$0xf] %v520
      %645 = vst [vmem:[%s412 + $0x14] sm:$0x1] %v521
      %646 = vst [vmem:[%s412 + $0x18] sm:$0xe] %v522
      %647 = vst [vmem:[%s412 + $0x1c] sm:$0xf] %v525
      %648 = vst [vmem:[%s412 + $0x20] sm:$0x1] %v526
      %649 = vst [vmem:[%s412 + $0x24] sm:$0xe] %v527
      %650 = vst [vmem:[%s412 + $0x28] sm:$0xf] %v530
      %651 = vst [vmem:[%s412 + $0x2c] sm:$0x1] %v531
      %652 = vst [vmem:[%s412 + $0x30] sm:$0xe] %v532
      %653 = vst [vmem:[%s412 + $0x34] sm:$0xf] %v535
      %654 = vst [vmem:[%s412 + $0x38] sm:$0x1] %v536
      %655 = vst [vmem:[%s412 + $0x3c] sm:$0xe] %v537
      %656 = vst [vmem:[%s412 + $0x40] sm:$0xf] %v540
      %657 = vst [vmem:[%s412 + $0x44] sm:$0x1] %v541
      %658 = vst [vmem:[%s412 + $0x48] sm:$0xe] %v542
      %659 = vst [vmem:[%s412 + $0x4c] sm:$0xf] %v545
      %660 = vst [vmem:[%s412 + $0x50] sm:$0x1] %v546
      %661 = vst [vmem:[%s412 + $0x54] sm:$0xe] %v547
      %662 = vst [vmem:[%s412 + $0x58] sm:$0xf] %v550
      %663 = vst [vmem:[%s412 + $0x5c] sm:$0x1] %v551
      %664 = vst [vmem:[%s412 + $0x60] sm:$0xe] %v552
      %665 = vst [vmem:[%s412 + $0x64] sm:$0xf] %v555
      %666 = vst [vmem:[%s412 + $0x68] sm:$0x1] %v556
      %667 = vst [vmem:[%s412 + $0x6c] sm:$0xe] %v557
      %668 = vst [vmem:[%s412 + $0x70] sm:$0xf] %v560
      %669 = vst [vmem:[%s412 + $0x74] sm:$0x1] %v561
      %670 = vst [vmem:[%s412 + $0x78] sm:$0xe] %v562
      %671 = vst [vmem:[%s412 + $0x7c] sm:$0xf] %v565
      %672 = vst [vmem:[%s412 + $0x80] sm:$0x1] %v566
      %673 = vst [vmem:[%s412 + $0x84] sm:$0xe] %v567
      %674 = vst [vmem:[%s412 + $0x88] sm:$0xf] %v570
      %675 = vst [vmem:[%s412 + $0x8c] sm:$0x1] %v571
      %676 = vst [vmem:[%s412 + $0x90] sm:$0xe] %v572
      %677 = vst [vmem:[%s412 + $0x94] sm:$0xf] %v575
      %678 = vst [vmem:[%s412 + $0x98] sm:$0x1] %v576
      %679 = vst [vmem:[%s412 + $0x9c] sm:$0xe] %v577
      %680 = vst [vmem:[%s412 + $0xa0] sm:$0xf] %v580
      %681 = vst [vmem:[%s412 + $0xa4] sm:$0x1] %v581
      %682 = vst [vmem:[%s412 + $0xa8] sm:$0xe] %v582
      %683 = vst [vmem:[%s412 + $0xac] sm:$0xf] %v585
      %684 = vst [vmem:[%s412 + $0xb0] sm:$0x1] %v586
      %685 = vst [vmem:[%s412 + $0xb4] sm:$0xe] %v587
      %686 = vst [vmem:[%s412 + $0xb8] sm:$0xf] %v590
      %687 = vst [vmem:[%s412 + $0xbc] sm:$0x1] %v591
      %v688 = vld [vmem:[#allocation2] sm:$0xf]
      %v689 = vld [vmem:[#allocation2 + $0x4] sm:$0xf]
      %v690 = vld [vmem:[#allocation2 + $0x8] sm:$0x1]
      %v691 = vld [vmem:[#allocation2 + $0xc] sm:$0xf]
      %v692 = vld [vmem:[#allocation2 + $0x10] sm:$0xf]
      %v693 = vld [vmem:[#allocation2 + $0x14] sm:$0x1]
      %v694 = vld [vmem:[#allocation2 + $0x18] sm:$0xf]
      %v695 = vld [vmem:[#allocation2 + $0x1c] sm:$0xf]
      %v696 = vld [vmem:[#allocation2 + $0x20] sm:$0x1]
      %v697 = vld [vmem:[#allocation2 + $0x24] sm:$0xf]
      %v698 = vld [vmem:[#allocation2 + $0x28] sm:$0xf]
      %v699 = vld [vmem:[#allocation2 + $0x2c] sm:$0x1]
      %v700 = vld [vmem:[#allocation2 + $0x30] sm:$0xf]
      %v701 = vld [vmem:[#allocation2 + $0x34] sm:$0xf]
      %v702 = vld [vmem:[#allocation2 + $0x38] sm:$0x1]
      %v703 = vld [vmem:[#allocation2 + $0x3c] sm:$0xf]
      %v704 = vld [vmem:[#allocation2 + $0x40] sm:$0xf]
      %v705 = vld [vmem:[#allocation2 + $0x44] sm:$0x1]
      %v706 = vld [vmem:[#allocation2 + $0x48] sm:$0xf]
      %v707 = vld [vmem:[#allocation2 + $0x4c] sm:$0xf]
      %v708 = vld [vmem:[#allocation2 + $0x50] sm:$0x1]
      %v709 = vld [vmem:[#allocation2 + $0x54] sm:$0xf]
      %v710 = vld [vmem:[#allocation2 + $0x58] sm:$0xf]
      %v711 = vld [vmem:[#allocation2 + $0x5c] sm:$0x1]
      %v712 = vld [vmem:[#allocation2 + $0x60] sm:$0xf]
      %v713 = vld [vmem:[#allocation2 + $0x64] sm:$0xf]
      %v714 = vld [vmem:[#allocation2 + $0x68] sm:$0x1]
      %v715 = vld [vmem:[#allocation2 + $0x6c] sm:$0xf]
      %v716 = vld [vmem:[#allocation2 + $0x70] sm:$0xf]
      %v717 = vld [vmem:[#allocation2 + $0x74] sm:$0x1]
      %v718 = vld [vmem:[#allocation2 + $0x78] sm:$0xf]
      %v719 = vld [vmem:[#allocation2 + $0x7c] sm:$0xf]
      %v720 = vld [vmem:[#allocation2 + $0x80] sm:$0x1]
      %v721 = vld [vmem:[#allocation2 + $0x84] sm:$0xf]
      %v722 = vld [vmem:[#allocation2 + $0x88] sm:$0xf]
      %v723 = vld [vmem:[#allocation2 + $0x8c] sm:$0x1]
      %v724 = vld [vmem:[#allocation2 + $0x90] sm:$0xf]
      %v725 = vld [vmem:[#allocation2 + $0x94] sm:$0xf]
      %v726 = vld [vmem:[#allocation2 + $0x98] sm:$0x1]
      %v727 = vld [vmem:[#allocation2 + $0x9c] sm:$0xf]
      %v728 = vld [vmem:[#allocation2 + $0xa0] sm:$0xf]
      %v729 = vld [vmem:[#allocation2 + $0xa4] sm:$0x1]
      %v730 = vld [vmem:[#allocation2 + $0xa8] sm:$0xf]
      %v731 = vld [vmem:[#allocation2 + $0xac] sm:$0xf]
      %v732 = vld [vmem:[#allocation2 + $0xb0] sm:$0x1]
      %v733 = vld [vmem:[#allocation2 + $0xb4] sm:$0xf]
      %v734 = vld [vmem:[#allocation2 + $0xb8] sm:$0xf]
      %v735 = vld [vmem:[#allocation2 + $0xbc] sm:$0x1]
      %v736 = vld [vmem:[#allocation2] sm:$0xe]
      %v737 = vld [vmem:[#allocation2 + $0xc] sm:$0xe]
      %v738 = vld [vmem:[#allocation2 + $0x18] sm:$0xe]
      %v739 = vld [vmem:[#allocation2 + $0x24] sm:$0xe]
      %v740 = vld [vmem:[#allocation2 + $0x30] sm:$0xe]
      %v741 = vld [vmem:[#allocation2 + $0x3c] sm:$0xe]
      %v742 = vld [vmem:[#allocation2 + $0x48] sm:$0xe]
      %v743 = vld [vmem:[#allocation2 + $0x54] sm:$0xe]
      %v744 = vld [vmem:[#allocation2 + $0x60] sm:$0xe]
      %v745 = vld [vmem:[#allocation2 + $0x6c] sm:$0xe]
      %v746 = vld [vmem:[#allocation2 + $0x78] sm:$0xe]
      %v747 = vld [vmem:[#allocation2 + $0x84] sm:$0xe]
      %v748 = vld [vmem:[#allocation2 + $0x90] sm:$0xe]
      %v749 = vld [vmem:[#allocation2 + $0x9c] sm:$0xe]
      %v750 = vld [vmem:[#allocation2 + $0xa8] sm:$0xe]
      %v751 = vld [vmem:[#allocation2 + $0xb4] sm:$0xe]
      %v752 = vld [vmem:[#allocation2 + $0x8] sm:$0x3]
      %v753 = vld [vmem:[#allocation2 + $0x14] sm:$0x3]
      %v754 = vld [vmem:[#allocation2 + $0x20] sm:$0x3]
      %v755 = vld [vmem:[#allocation2 + $0x2c] sm:$0x3]
      %v756 = vld [vmem:[#allocation2 + $0x38] sm:$0x3]
      %v757 = vld [vmem:[#allocation2 + $0x44] sm:$0x3]
      %v758 = vld [vmem:[#allocation2 + $0x50] sm:$0x3]
      %v759 = vld [vmem:[#allocation2 + $0x5c] sm:$0x3]
      %v760 = vld [vmem:[#allocation2 + $0x68] sm:$0x3]
      %v761 = vld [vmem:[#allocation2 + $0x74] sm:$0x3]
      %v762 = vld [vmem:[#allocation2 + $0x80] sm:$0x3]
      %v763 = vld [vmem:[#allocation2 + $0x8c] sm:$0x3]
      %v764 = vld [vmem:[#allocation2 + $0x98] sm:$0x3]
      %v765 = vld [vmem:[#allocation2 + $0xa4] sm:$0x3]
      %v766 = vld [vmem:[#allocation2 + $0xb0] sm:$0x3]
      %v767 = vld [vmem:[#allocation2 + $0xbc] sm:$0x3]
      %v816 = vunpack.c.l.b16 %v688
      %v817 = vunpack.c.l.b16 %v689
      %v818 = vunpack.c.l.b16 %v690
      %v819 = vunpack.c.l.b16 %v691
      %v820 = vunpack.c.l.b16 %v692
      %v821 = vunpack.c.l.b16 %v693
      %v822 = vunpack.c.l.b16 %v694
      %v823 = vunpack.c.l.b16 %v695
      %v824 = vunpack.c.l.b16 %v696
      %v825 = vunpack.c.l.b16 %v697
      %v826 = vunpack.c.l.b16 %v698
      %v827 = vunpack.c.l.b16 %v699
      %v828 = vunpack.c.l.b16 %v700
      %v829 = vunpack.c.l.b16 %v701
      %v830 = vunpack.c.l.b16 %v702
      %v831 = vunpack.c.l.b16 %v703
      %v832 = vunpack.c.l.b16 %v704
      %v833 = vunpack.c.l.b16 %v705
      %v834 = vunpack.c.l.b16 %v706
      %v835 = vunpack.c.l.b16 %v707
      %v836 = vunpack.c.l.b16 %v708
      %v837 = vunpack.c.l.b16 %v709
      %v838 = vunpack.c.l.b16 %v710
      %v839 = vunpack.c.l.b16 %v711
      %v840 = vunpack.c.l.b16 %v712
      %v841 = vunpack.c.l.b16 %v713
      %v842 = vunpack.c.l.b16 %v714
      %v843 = vunpack.c.l.b16 %v715
      %v844 = vunpack.c.l.b16 %v716
      %v845 = vunpack.c.l.b16 %v717
      %v846 = vunpack.c.l.b16 %v718
      %v847 = vunpack.c.l.b16 %v719
      %v848 = vunpack.c.l.b16 %v720
      %v849 = vunpack.c.l.b16 %v721
      %v850 = vunpack.c.l.b16 %v722
      %v851 = vunpack.c.l.b16 %v723
      %v852 = vunpack.c.l.b16 %v724
      %v853 = vunpack.c.l.b16 %v725
      %v854 = vunpack.c.l.b16 %v726
      %v855 = vunpack.c.l.b16 %v727
      %v856 = vunpack.c.l.b16 %v728
      %v857 = vunpack.c.l.b16 %v729
      %v858 = vunpack.c.l.b16 %v730
      %v859 = vunpack.c.l.b16 %v731
      %v860 = vunpack.c.l.b16 %v732
      %v861 = vunpack.c.l.b16 %v733
      %v862 = vunpack.c.l.b16 %v734
      %v863 = vunpack.c.l.b16 %v735
      %v864 = vpack.c.b16 %v817, %v816
      %v865 = vpack.c.b16 %v818, %v818
      %v866 = vpack.c.b16 %v820, %v819
      %v867 = vpack.c.b16 %v821, %v821
      %v868 = vpack.c.b16 %v823, %v822
      %v869 = vpack.c.b16 %v824, %v824
      %v870 = vpack.c.b16 %v826, %v825
      %v871 = vpack.c.b16 %v827, %v827
      %v872 = vpack.c.b16 %v829, %v828
      %v873 = vpack.c.b16 %v830, %v830
      %v874 = vpack.c.b16 %v832, %v831
      %v875 = vpack.c.b16 %v833, %v833
      %v876 = vpack.c.b16 %v835, %v834
      %v877 = vpack.c.b16 %v836, %v836
      %v878 = vpack.c.b16 %v838, %v837
      %v879 = vpack.c.b16 %v839, %v839
      %v880 = vpack.c.b16 %v841, %v840
      %v881 = vpack.c.b16 %v842, %v842
      %v882 = vpack.c.b16 %v844, %v843
      %v883 = vpack.c.b16 %v845, %v845
      %v884 = vpack.c.b16 %v847, %v846
      %v885 = vpack.c.b16 %v848, %v848
      %v886 = vpack.c.b16 %v850, %v849
      %v887 = vpack.c.b16 %v851, %v851
      %v888 = vpack.c.b16 %v853, %v852
      %v889 = vpack.c.b16 %v854, %v854
      %v890 = vpack.c.b16 %v856, %v855
      %v891 = vpack.c.b16 %v857, %v857
      %v892 = vpack.c.b16 %v859, %v858
      %v893 = vpack.c.b16 %v860, %v860
      %v894 = vpack.c.b16 %v862, %v861
      %v895 = vpack.c.b16 %v863, %v863
      %v912 = vunpack.c.l.b16 %v736
      %v913 = vunpack.c.l.b16 %v737
      %v914 = vunpack.c.l.b16 %v738
      %v915 = vunpack.c.l.b16 %v739
      %v916 = vunpack.c.l.b16 %v740
      %v917 = vunpack.c.l.b16 %v741
      %v918 = vunpack.c.l.b16 %v742
      %v919 = vunpack.c.l.b16 %v743
      %v920 = vunpack.c.l.b16 %v744
      %v921 = vunpack.c.l.b16 %v745
      %v922 = vunpack.c.l.b16 %v746
      %v923 = vunpack.c.l.b16 %v747
      %v924 = vunpack.c.l.b16 %v748
      %v925 = vunpack.c.l.b16 %v749
      %v926 = vunpack.c.l.b16 %v750
      %v927 = vunpack.c.l.b16 %v751
      %v928 = vpack.c.b16 %v817, %v912
      %v929 = vpack.c.b16 %v820, %v913
      %v930 = vpack.c.b16 %v823, %v914
      %v931 = vpack.c.b16 %v826, %v915
      %v932 = vpack.c.b16 %v829, %v916
      %v933 = vpack.c.b16 %v832, %v917
      %v934 = vpack.c.b16 %v835, %v918
      %v935 = vpack.c.b16 %v838, %v919
      %v936 = vpack.c.b16 %v841, %v920
      %v937 = vpack.c.b16 %v844, %v921
      %v938 = vpack.c.b16 %v847, %v922
      %v939 = vpack.c.b16 %v850, %v923
      %v940 = vpack.c.b16 %v853, %v924
      %v941 = vpack.c.b16 %v856, %v925
      %v942 = vpack.c.b16 %v859, %v926
      %v943 = vpack.c.b16 %v862, %v927
      %vm944 = vsmask.f32 7424
      %v946 = vshrl.u32 %v928, 16
      %v948 = vshll.u32 %v928, 16
      %v950 = vrot.slane %v948, 1
      %v951 = vor.u32 %v946, %v950
      %v953 = vshll.u32 %v865, 16
      %v955 = vrot.slane %v953, 1
      %v956 = vsel %vm944, %v951, %v955
      %v957 = vshrl.u32 %v865, 16
      %v960 = vshrl.u32 %v929, 16
      %v962 = vshll.u32 %v929, 16
      %v964 = vrot.slane %v962, 1
      %v965 = vor.u32 %v960, %v964
      %v967 = vshll.u32 %v867, 16
      %v969 = vrot.slane %v967, 1
      %v970 = vsel %vm944, %v965, %v969
      %v971 = vshrl.u32 %v867, 16
      %v974 = vshrl.u32 %v930, 16
      %v976 = vshll.u32 %v930, 16
      %v978 = vrot.slane %v976, 1
      %v979 = vor.u32 %v974, %v978
      %v981 = vshll.u32 %v869, 16
      %v983 = vrot.slane %v981, 1
      %v984 = vsel %vm944, %v979, %v983
      %v985 = vshrl.u32 %v869, 16
      %v988 = vshrl.u32 %v931, 16
      %v990 = vshll.u32 %v931, 16
      %v992 = vrot.slane %v990, 1
      %v993 = vor.u32 %v988, %v992
      %v995 = vshll.u32 %v871, 16
      %v997 = vrot.slane %v995, 1
      %v998 = vsel %vm944, %v993, %v997
      %v999 = vshrl.u32 %v871, 16
      %v1002 = vshrl.u32 %v932, 16
      %v1004 = vshll.u32 %v932, 16
      %v1006 = vrot.slane %v1004, 1
      %v1007 = vor.u32 %v1002, %v1006
      %v1009 = vshll.u32 %v873, 16
      %v1011 = vrot.slane %v1009, 1
      %v1012 = vsel %vm944, %v1007, %v1011
      %v1013 = vshrl.u32 %v873, 16
      %v1016 = vshrl.u32 %v933, 16
      %v1018 = vshll.u32 %v933, 16
      %v1020 = vrot.slane %v1018, 1
      %v1021 = vor.u32 %v1016, %v1020
      %v1023 = vshll.u32 %v875, 16
      %v1025 = vrot.slane %v1023, 1
      %v1026 = vsel %vm944, %v1021, %v1025
      %v1027 = vshrl.u32 %v875, 16
      %v1030 = vshrl.u32 %v934, 16
      %v1032 = vshll.u32 %v934, 16
      %v1034 = vrot.slane %v1032, 1
      %v1035 = vor.u32 %v1030, %v1034
      %v1037 = vshll.u32 %v877, 16
      %v1039 = vrot.slane %v1037, 1
      %v1040 = vsel %vm944, %v1035, %v1039
      %v1041 = vshrl.u32 %v877, 16
      %v1044 = vshrl.u32 %v935, 16
      %v1046 = vshll.u32 %v935, 16
      %v1048 = vrot.slane %v1046, 1
      %v1049 = vor.u32 %v1044, %v1048
      %v1051 = vshll.u32 %v879, 16
      %v1053 = vrot.slane %v1051, 1
      %v1054 = vsel %vm944, %v1049, %v1053
      %v1055 = vshrl.u32 %v879, 16
      %v1058 = vshrl.u32 %v936, 16
      %v1060 = vshll.u32 %v936, 16
      %v1062 = vrot.slane %v1060, 1
      %v1063 = vor.u32 %v1058, %v1062
      %v1065 = vshll.u32 %v881, 16
      %v1067 = vrot.slane %v1065, 1
      %v1068 = vsel %vm944, %v1063, %v1067
      %v1069 = vshrl.u32 %v881, 16
      %v1072 = vshrl.u32 %v937, 16
      %v1074 = vshll.u32 %v937, 16
      %v1076 = vrot.slane %v1074, 1
      %v1077 = vor.u32 %v1072, %v1076
      %v1079 = vshll.u32 %v883, 16
      %v1081 = vrot.slane %v1079, 1
      %v1082 = vsel %vm944, %v1077, %v1081
      %v1083 = vshrl.u32 %v883, 16
      %v1086 = vshrl.u32 %v938, 16
      %v1088 = vshll.u32 %v938, 16
      %v1090 = vrot.slane %v1088, 1
      %v1091 = vor.u32 %v1086, %v1090
      %v1093 = vshll.u32 %v885, 16
      %v1095 = vrot.slane %v1093, 1
      %v1096 = vsel %vm944, %v1091, %v1095
      %v1097 = vshrl.u32 %v885, 16
      %v1100 = vshrl.u32 %v939, 16
      %v1102 = vshll.u32 %v939, 16
      %v1104 = vrot.slane %v1102, 1
      %v1105 = vor.u32 %v1100, %v1104
      %v1107 = vshll.u32 %v887, 16
      %v1109 = vrot.slane %v1107, 1
      %v1110 = vsel %vm944, %v1105, %v1109
      %v1111 = vshrl.u32 %v887, 16
      %v1114 = vshrl.u32 %v940, 16
      %v1116 = vshll.u32 %v940, 16
      %v1118 = vrot.slane %v1116, 1
      %v1119 = vor.u32 %v1114, %v1118
      %v1121 = vshll.u32 %v889, 16
      %v1123 = vrot.slane %v1121, 1
      %v1124 = vsel %vm944, %v1119, %v1123
      %v1125 = vshrl.u32 %v889, 16
      %v1128 = vshrl.u32 %v941, 16
      %v1130 = vshll.u32 %v941, 16
      %v1132 = vrot.slane %v1130, 1
      %v1133 = vor.u32 %v1128, %v1132
      %v1135 = vshll.u32 %v891, 16
      %v1137 = vrot.slane %v1135, 1
      %v1138 = vsel %vm944, %v1133, %v1137
      %v1139 = vshrl.u32 %v891, 16
      %v1142 = vshrl.u32 %v942, 16
      %v1144 = vshll.u32 %v942, 16
      %v1146 = vrot.slane %v1144, 1
      %v1147 = vor.u32 %v1142, %v1146
      %v1149 = vshll.u32 %v893, 16
      %v1151 = vrot.slane %v1149, 1
      %v1152 = vsel %vm944, %v1147, %v1151
      %v1153 = vshrl.u32 %v893, 16
      %v1156 = vshrl.u32 %v943, 16
      %v1158 = vshll.u32 %v943, 16
      %v1160 = vrot.slane %v1158, 1
      %v1161 = vor.u32 %v1156, %v1160
      %v1163 = vshll.u32 %v895, 16
      %v1165 = vrot.slane %v1163, 1
      %v1166 = vsel %vm944, %v1161, %v1165
      %v1167 = vshrl.u32 %v895, 16
      %v1185 = vunpack.c.l.b16 %v752
      %v1186 = vunpack.c.l.b16 %v753
      %v1187 = vunpack.c.l.b16 %v754
      %v1188 = vunpack.c.l.b16 %v755
      %v1189 = vunpack.c.l.b16 %v756
      %v1190 = vunpack.c.l.b16 %v757
      %v1191 = vunpack.c.l.b16 %v758
      %v1192 = vunpack.c.l.b16 %v759
      %v1193 = vunpack.c.l.b16 %v760
      %v1194 = vunpack.c.l.b16 %v761
      %v1195 = vunpack.c.l.b16 %v762
      %v1196 = vunpack.c.l.b16 %v763
      %v1197 = vunpack.c.l.b16 %v764
      %v1198 = vunpack.c.l.b16 %v765
      %v1199 = vunpack.c.l.b16 %v766
      %v1200 = vunpack.c.l.b16 %v767
      %v1201 = vpack.c.b16 %v1185, %v1185
      %v1202 = vpack.c.b16 %v1186, %v1186
      %v1203 = vpack.c.b16 %v1187, %v1187
      %v1204 = vpack.c.b16 %v1188, %v1188
      %v1205 = vpack.c.b16 %v1189, %v1189
      %v1206 = vpack.c.b16 %v1190, %v1190
      %v1207 = vpack.c.b16 %v1191, %v1191
      %v1208 = vpack.c.b16 %v1192, %v1192
      %v1209 = vpack.c.b16 %v1193, %v1193
      %v1210 = vpack.c.b16 %v1194, %v1194
      %v1211 = vpack.c.b16 %v1195, %v1195
      %v1212 = vpack.c.b16 %v1196, %v1196
      %v1213 = vpack.c.b16 %v1197, %v1197
      %v1214 = vpack.c.b16 %v1198, %v1198
      %v1215 = vpack.c.b16 %v1199, %v1199
      %v1216 = vpack.c.b16 %v1200, %v1200
      %vm1217 = vcmask 1046528
      %v1218 = vrot.slane %v928, 1
      %v1219 = vrot.slane %v1201, 1
      %v1220 = vsel %vm1217, %v1218, %v1219
      %v1221 = vrot.slane %v929, 1
      %v1222 = vrot.slane %v1202, 1
      %v1223 = vsel %vm1217, %v1221, %v1222
      %v1224 = vrot.slane %v930, 1
      %v1225 = vrot.slane %v1203, 1
      %v1226 = vsel %vm1217, %v1224, %v1225
      %v1227 = vrot.slane %v931, 1
      %v1228 = vrot.slane %v1204, 1
      %v1229 = vsel %vm1217, %v1227, %v1228
      %v1230 = vrot.slane %v932, 1
      %v1231 = vrot.slane %v1205, 1
      %v1232 = vsel %vm1217, %v1230, %v1231
      %v1233 = vrot.slane %v933, 1
      %v1234 = vrot.slane %v1206, 1
      %v1235 = vsel %vm1217, %v1233, %v1234
      %v1236 = vrot.slane %v934, 1
      %v1237 = vrot.slane %v1207, 1
      %v1238 = vsel %vm1217, %v1236, %v1237
      %v1239 = vrot.slane %v935, 1
      %v1240 = vrot.slane %v1208, 1
      %v1241 = vsel %vm1217, %v1239, %v1240
      %v1242 = vrot.slane %v936, 1
      %v1243 = vrot.slane %v1209, 1
      %v1244 = vsel %vm1217, %v1242, %v1243
      %v1245 = vrot.slane %v937, 1
      %v1246 = vrot.slane %v1210, 1
      %v1247 = vsel %vm1217, %v1245, %v1246
      %v1248 = vrot.slane %v938, 1
      %v1249 = vrot.slane %v1211, 1
      %v1250 = vsel %vm1217, %v1248, %v1249
      %v1251 = vrot.slane %v939, 1
      %v1252 = vrot.slane %v1212, 1
      %v1253 = vsel %vm1217, %v1251, %v1252
      %v1254 = vrot.slane %v940, 1
      %v1255 = vrot.slane %v1213, 1
      %v1256 = vsel %vm1217, %v1254, %v1255
      %v1257 = vrot.slane %v941, 1
      %v1258 = vrot.slane %v1214, 1
      %v1259 = vsel %vm1217, %v1257, %v1258
      %v1260 = vrot.slane %v942, 1
      %v1261 = vrot.slane %v1215, 1
      %v1262 = vsel %vm1217, %v1260, %v1261
      %v1263 = vrot.slane %v943, 1
      %v1264 = vrot.slane %v1216, 1
      %v1265 = vsel %vm1217, %v1263, %v1264
      %v1267 = vshrl.u32 %v864, 16
      %v1269 = vshll.u32 %v864, 16
      %v1271 = vrot.slane %v1269, 1
      %v1272 = vor.u32 %v1267, %v1271
      %v1273 = vsel %vm944, %v1272, %v955
      %v1275 = vshrl.u32 %v956, 16
      %v1277 = vshll.u32 %v956, 16
      %v1279 = vrot.slane %v1277, 1
      %v1280 = vor.u32 %v1275, %v1279
      %v1282 = vshll.u32 %v957, 16
      %v1284 = vrot.slane %v1282, 1
      %v1285 = vsel %vm944, %v1280, %v1284
      %v1287 = vshrl.u32 %v1220, 16
      %v1289 = vshll.u32 %v1220, 16
      %v1291 = vrot.slane %v1289, 1
      %v1292 = vor.u32 %v1287, %v1291
      %v1294 = vshll.u32 %v1219, 16
      %v1296 = vrot.slane %v1294, 1
      %v1297 = vsel %vm944, %v1292, %v1296
      %v1299 = vshrl.u32 %v866, 16
      %v1301 = vshll.u32 %v866, 16
      %v1303 = vrot.slane %v1301, 1
      %v1304 = vor.u32 %v1299, %v1303
      %v1305 = vsel %vm944, %v1304, %v969
      %v1307 = vshrl.u32 %v970, 16
      %v1309 = vshll.u32 %v970, 16
      %v1311 = vrot.slane %v1309, 1
      %v1312 = vor.u32 %v1307, %v1311
      %v1314 = vshll.u32 %v971, 16
      %v1316 = vrot.slane %v1314, 1
      %v1317 = vsel %vm944, %v1312, %v1316
      %v1319 = vshrl.u32 %v1223, 16
      %v1321 = vshll.u32 %v1223, 16
      %v1323 = vrot.slane %v1321, 1
      %v1324 = vor.u32 %v1319, %v1323
      %v1326 = vshll.u32 %v1222, 16
      %v1328 = vrot.slane %v1326, 1
      %v1329 = vsel %vm944, %v1324, %v1328
      %v1331 = vshrl.u32 %v868, 16
      %v1333 = vshll.u32 %v868, 16
      %v1335 = vrot.slane %v1333, 1
      %v1336 = vor.u32 %v1331, %v1335
      %v1337 = vsel %vm944, %v1336, %v983
      %v1339 = vshrl.u32 %v984, 16
      %v1341 = vshll.u32 %v984, 16
      %v1343 = vrot.slane %v1341, 1
      %v1344 = vor.u32 %v1339, %v1343
      %v1346 = vshll.u32 %v985, 16
      %v1348 = vrot.slane %v1346, 1
      %v1349 = vsel %vm944, %v1344, %v1348
      %v1351 = vshrl.u32 %v1226, 16
      %v1353 = vshll.u32 %v1226, 16
      %v1355 = vrot.slane %v1353, 1
      %v1356 = vor.u32 %v1351, %v1355
      %v1358 = vshll.u32 %v1225, 16
      %v1360 = vrot.slane %v1358, 1
      %v1361 = vsel %vm944, %v1356, %v1360
      %v1363 = vshrl.u32 %v870, 16
      %v1365 = vshll.u32 %v870, 16
      %v1367 = vrot.slane %v1365, 1
      %v1368 = vor.u32 %v1363, %v1367
      %v1369 = vsel %vm944, %v1368, %v997
      %v1371 = vshrl.u32 %v998, 16
      %v1373 = vshll.u32 %v998, 16
      %v1375 = vrot.slane %v1373, 1
      %v1376 = vor.u32 %v1371, %v1375
      %v1378 = vshll.u32 %v999, 16
      %v1380 = vrot.slane %v1378, 1
      %v1381 = vsel %vm944, %v1376, %v1380
      %v1383 = vshrl.u32 %v1229, 16
      %v1385 = vshll.u32 %v1229, 16
      %v1387 = vrot.slane %v1385, 1
      %v1388 = vor.u32 %v1383, %v1387
      %v1390 = vshll.u32 %v1228, 16
      %v1392 = vrot.slane %v1390, 1
      %v1393 = vsel %vm944, %v1388, %v1392
      %v1395 = vshrl.u32 %v872, 16
      %v1397 = vshll.u32 %v872, 16
      %v1399 = vrot.slane %v1397, 1
      %v1400 = vor.u32 %v1395, %v1399
      %v1401 = vsel %vm944, %v1400, %v1011
      %v1403 = vshrl.u32 %v1012, 16
      %v1405 = vshll.u32 %v1012, 16
      %v1407 = vrot.slane %v1405, 1
      %v1408 = vor.u32 %v1403, %v1407
      %v1410 = vshll.u32 %v1013, 16
      %v1412 = vrot.slane %v1410, 1
      %v1413 = vsel %vm944, %v1408, %v1412
      %v1415 = vshrl.u32 %v1232, 16
      %v1417 = vshll.u32 %v1232, 16
      %v1419 = vrot.slane %v1417, 1
      %v1420 = vor.u32 %v1415, %v1419
      %v1422 = vshll.u32 %v1231, 16
      %v1424 = vrot.slane %v1422, 1
      %v1425 = vsel %vm944, %v1420, %v1424
      %v1427 = vshrl.u32 %v874, 16
      %v1429 = vshll.u32 %v874, 16
      %v1431 = vrot.slane %v1429, 1
      %v1432 = vor.u32 %v1427, %v1431
      %v1433 = vsel %vm944, %v1432, %v1025
      %v1435 = vshrl.u32 %v1026, 16
      %v1437 = vshll.u32 %v1026, 16
      %v1439 = vrot.slane %v1437, 1
      %v1440 = vor.u32 %v1435, %v1439
      %v1442 = vshll.u32 %v1027, 16
      %v1444 = vrot.slane %v1442, 1
      %v1445 = vsel %vm944, %v1440, %v1444
      %v1447 = vshrl.u32 %v1235, 16
      %v1449 = vshll.u32 %v1235, 16
      %v1451 = vrot.slane %v1449, 1
      %v1452 = vor.u32 %v1447, %v1451
      %v1454 = vshll.u32 %v1234, 16
      %v1456 = vrot.slane %v1454, 1
      %v1457 = vsel %vm944, %v1452, %v1456
      %v1459 = vshrl.u32 %v876, 16
      %v1461 = vshll.u32 %v876, 16
      %v1463 = vrot.slane %v1461, 1
      %v1464 = vor.u32 %v1459, %v1463
      %v1465 = vsel %vm944, %v1464, %v1039
      %v1467 = vshrl.u32 %v1040, 16
      %v1469 = vshll.u32 %v1040, 16
      %v1471 = vrot.slane %v1469, 1
      %v1472 = vor.u32 %v1467, %v1471
      %v1474 = vshll.u32 %v1041, 16
      %v1476 = vrot.slane %v1474, 1
      %v1477 = vsel %vm944, %v1472, %v1476
      %v1479 = vshrl.u32 %v1238, 16
      %v1481 = vshll.u32 %v1238, 16
      %v1483 = vrot.slane %v1481, 1
      %v1484 = vor.u32 %v1479, %v1483
      %v1486 = vshll.u32 %v1237, 16
      %v1488 = vrot.slane %v1486, 1
      %v1489 = vsel %vm944, %v1484, %v1488
      %v1491 = vshrl.u32 %v878, 16
      %v1493 = vshll.u32 %v878, 16
      %v1495 = vrot.slane %v1493, 1
      %v1496 = vor.u32 %v1491, %v1495
      %v1497 = vsel %vm944, %v1496, %v1053
      %v1499 = vshrl.u32 %v1054, 16
      %v1501 = vshll.u32 %v1054, 16
      %v1503 = vrot.slane %v1501, 1
      %v1504 = vor.u32 %v1499, %v1503
      %v1506 = vshll.u32 %v1055, 16
      %v1508 = vrot.slane %v1506, 1
      %v1509 = vsel %vm944, %v1504, %v1508
      %v1511 = vshrl.u32 %v1241, 16
      %v1513 = vshll.u32 %v1241, 16
      %v1515 = vrot.slane %v1513, 1
      %v1516 = vor.u32 %v1511, %v1515
      %v1518 = vshll.u32 %v1240, 16
      %v1520 = vrot.slane %v1518, 1
      %v1521 = vsel %vm944, %v1516, %v1520
      %v1523 = vshrl.u32 %v880, 16
      %v1525 = vshll.u32 %v880, 16
      %v1527 = vrot.slane %v1525, 1
      %v1528 = vor.u32 %v1523, %v1527
      %v1529 = vsel %vm944, %v1528, %v1067
      %v1531 = vshrl.u32 %v1068, 16
      %v1533 = vshll.u32 %v1068, 16
      %v1535 = vrot.slane %v1533, 1
      %v1536 = vor.u32 %v1531, %v1535
      %v1538 = vshll.u32 %v1069, 16
      %v1540 = vrot.slane %v1538, 1
      %v1541 = vsel %vm944, %v1536, %v1540
      %v1543 = vshrl.u32 %v1244, 16
      %v1545 = vshll.u32 %v1244, 16
      %v1547 = vrot.slane %v1545, 1
      %v1548 = vor.u32 %v1543, %v1547
      %v1550 = vshll.u32 %v1243, 16
      %v1552 = vrot.slane %v1550, 1
      %v1553 = vsel %vm944, %v1548, %v1552
      %v1555 = vshrl.u32 %v882, 16
      %v1557 = vshll.u32 %v882, 16
      %v1559 = vrot.slane %v1557, 1
      %v1560 = vor.u32 %v1555, %v1559
      %v1561 = vsel %vm944, %v1560, %v1081
      %v1563 = vshrl.u32 %v1082, 16
      %v1565 = vshll.u32 %v1082, 16
      %v1567 = vrot.slane %v1565, 1
      %v1568 = vor.u32 %v1563, %v1567
      %v1570 = vshll.u32 %v1083, 16
      %v1572 = vrot.slane %v1570, 1
      %v1573 = vsel %vm944, %v1568, %v1572
      %v1575 = vshrl.u32 %v1247, 16
      %v1577 = vshll.u32 %v1247, 16
      %v1579 = vrot.slane %v1577, 1
      %v1580 = vor.u32 %v1575, %v1579
      %v1582 = vshll.u32 %v1246, 16
      %v1584 = vrot.slane %v1582, 1
      %v1585 = vsel %vm944, %v1580, %v1584
      %v1587 = vshrl.u32 %v884, 16
      %v1589 = vshll.u32 %v884, 16
      %v1591 = vrot.slane %v1589, 1
      %v1592 = vor.u32 %v1587, %v1591
      %v1593 = vsel %vm944, %v1592, %v1095
      %v1595 = vshrl.u32 %v1096, 16
      %v1597 = vshll.u32 %v1096, 16
      %v1599 = vrot.slane %v1597, 1
      %v1600 = vor.u32 %v1595, %v1599
      %v1602 = vshll.u32 %v1097, 16
      %v1604 = vrot.slane %v1602, 1
      %v1605 = vsel %vm944, %v1600, %v1604
      %v1607 = vshrl.u32 %v1250, 16
      %v1609 = vshll.u32 %v1250, 16
      %v1611 = vrot.slane %v1609, 1
      %v1612 = vor.u32 %v1607, %v1611
      %v1614 = vshll.u32 %v1249, 16
      %v1616 = vrot.slane %v1614, 1
      %v1617 = vsel %vm944, %v1612, %v1616
      %v1619 = vshrl.u32 %v886, 16
      %v1621 = vshll.u32 %v886, 16
      %v1623 = vrot.slane %v1621, 1
      %v1624 = vor.u32 %v1619, %v1623
      %v1625 = vsel %vm944, %v1624, %v1109
      %v1627 = vshrl.u32 %v1110, 16
      %v1629 = vshll.u32 %v1110, 16
      %v1631 = vrot.slane %v1629, 1
      %v1632 = vor.u32 %v1627, %v1631
      %v1634 = vshll.u32 %v1111, 16
      %v1636 = vrot.slane %v1634, 1
      %v1637 = vsel %vm944, %v1632, %v1636
      %v1639 = vshrl.u32 %v1253, 16
      %v1641 = vshll.u32 %v1253, 16
      %v1643 = vrot.slane %v1641, 1
      %v1644 = vor.u32 %v1639, %v1643
      %v1646 = vshll.u32 %v1252, 16
      %v1648 = vrot.slane %v1646, 1
      %v1649 = vsel %vm944, %v1644, %v1648
      %v1651 = vshrl.u32 %v888, 16
      %v1653 = vshll.u32 %v888, 16
      %v1655 = vrot.slane %v1653, 1
      %v1656 = vor.u32 %v1651, %v1655
      %v1657 = vsel %vm944, %v1656, %v1123
      %v1659 = vshrl.u32 %v1124, 16
      %v1661 = vshll.u32 %v1124, 16
      %v1663 = vrot.slane %v1661, 1
      %v1664 = vor.u32 %v1659, %v1663
      %v1666 = vshll.u32 %v1125, 16
      %v1668 = vrot.slane %v1666, 1
      %v1669 = vsel %vm944, %v1664, %v1668
      %v1671 = vshrl.u32 %v1256, 16
      %v1673 = vshll.u32 %v1256, 16
      %v1675 = vrot.slane %v1673, 1
      %v1676 = vor.u32 %v1671, %v1675
      %v1678 = vshll.u32 %v1255, 16
      %v1680 = vrot.slane %v1678, 1
      %v1681 = vsel %vm944, %v1676, %v1680
      %v1683 = vshrl.u32 %v890, 16
      %v1685 = vshll.u32 %v890, 16
      %v1687 = vrot.slane %v1685, 1
      %v1688 = vor.u32 %v1683, %v1687
      %v1689 = vsel %vm944, %v1688, %v1137
      %v1691 = vshrl.u32 %v1138, 16
      %v1693 = vshll.u32 %v1138, 16
      %v1695 = vrot.slane %v1693, 1
      %v1696 = vor.u32 %v1691, %v1695
      %v1698 = vshll.u32 %v1139, 16
      %v1700 = vrot.slane %v1698, 1
      %v1701 = vsel %vm944, %v1696, %v1700
      %v1703 = vshrl.u32 %v1259, 16
      %v1705 = vshll.u32 %v1259, 16
      %v1707 = vrot.slane %v1705, 1
      %v1708 = vor.u32 %v1703, %v1707
      %v1710 = vshll.u32 %v1258, 16
      %v1712 = vrot.slane %v1710, 1
      %v1713 = vsel %vm944, %v1708, %v1712
      %v1715 = vshrl.u32 %v892, 16
      %v1717 = vshll.u32 %v892, 16
      %v1719 = vrot.slane %v1717, 1
      %v1720 = vor.u32 %v1715, %v1719
      %v1721 = vsel %vm944, %v1720, %v1151
      %v1723 = vshrl.u32 %v1152, 16
      %v1725 = vshll.u32 %v1152, 16
      %v1727 = vrot.slane %v1725, 1
      %v1728 = vor.u32 %v1723, %v1727
      %v1730 = vshll.u32 %v1153, 16
      %v1732 = vrot.slane %v1730, 1
      %v1733 = vsel %vm944, %v1728, %v1732
      %v1735 = vshrl.u32 %v1262, 16
      %v1737 = vshll.u32 %v1262, 16
      %v1739 = vrot.slane %v1737, 1
      %v1740 = vor.u32 %v1735, %v1739
      %v1742 = vshll.u32 %v1261, 16
      %v1744 = vrot.slane %v1742, 1
      %v1745 = vsel %vm944, %v1740, %v1744
      %v1747 = vshrl.u32 %v894, 16
      %v1749 = vshll.u32 %v894, 16
      %v1751 = vrot.slane %v1749, 1
      %v1752 = vor.u32 %v1747, %v1751
      %v1753 = vsel %vm944, %v1752, %v1165
      %v1755 = vshrl.u32 %v1166, 16
      %v1757 = vshll.u32 %v1166, 16
      %v1759 = vrot.slane %v1757, 1
      %v1760 = vor.u32 %v1755, %v1759
      %v1762 = vshll.u32 %v1167, 16
      %v1764 = vrot.slane %v1762, 1
      %v1765 = vsel %vm944, %v1760, %v1764
      %v1767 = vshrl.u32 %v1265, 16
      %v1769 = vshll.u32 %v1265, 16
      %v1771 = vrot.slane %v1769, 1
      %v1772 = vor.u32 %v1767, %v1771
      %v1774 = vshll.u32 %v1264, 16
      %v1776 = vrot.slane %v1774, 1
      %v1777 = vsel %vm944, %v1772, %v1776
      %v1826 = vld [vmem:[%s3] sm:$0xf]
      %v1827 = vld [vmem:[%s3 + $0x4] sm:$0xf]
      %v1828 = vld [vmem:[%s3 + $0x8] sm:$0xf]
      %v1829 = vld [vmem:[%s3 + $0xc] sm:$0xf]
      %v1830 = vld [vmem:[%s3 + $0x10] sm:$0xf]
      %v1831 = vld [vmem:[%s3 + $0x14] sm:$0xf]
      %v1832 = vld [vmem:[%s3 + $0x18] sm:$0xf]
      %v1833 = vld [vmem:[%s3 + $0x1c] sm:$0xf]
      %v1834 = vld [vmem:[%s3 + $0x20] sm:$0xf]
      %v1835 = vld [vmem:[%s3 + $0x24] sm:$0xf]
      %v1836 = vld [vmem:[%s3 + $0x28] sm:$0xf]
      %v1837 = vld [vmem:[%s3 + $0x2c] sm:$0xf]
      %v1838 = vld [vmem:[%s3 + $0x30] sm:$0xf]
      %v1839 = vld [vmem:[%s3 + $0x34] sm:$0xf]
      %v1840 = vld [vmem:[%s3 + $0x38] sm:$0xf]
      %v1841 = vld [vmem:[%s3 + $0x3c] sm:$0xf]
      %v1842 = vld [vmem:[%s3 + $0x40] sm:$0xf]
      %v1843 = vld [vmem:[%s3 + $0x44] sm:$0xf]
      %v1844 = vld [vmem:[%s3 + $0x48] sm:$0xf]
      %v1845 = vld [vmem:[%s3 + $0x4c] sm:$0xf]
      %v1846 = vld [vmem:[%s3 + $0x50] sm:$0xf]
      %v1847 = vld [vmem:[%s3 + $0x54] sm:$0xf]
      %v1848 = vld [vmem:[%s3 + $0x58] sm:$0xf]
      %v1849 = vld [vmem:[%s3 + $0x5c] sm:$0xf]
      %v1850 = vld [vmem:[%s3 + $0x60] sm:$0xf]
      %v1851 = vld [vmem:[%s3 + $0x64] sm:$0xf]
      %v1852 = vld [vmem:[%s3 + $0x68] sm:$0xf]
      %v1853 = vld [vmem:[%s3 + $0x6c] sm:$0xf]
      %v1854 = vld [vmem:[%s3 + $0x70] sm:$0xf]
      %v1855 = vld [vmem:[%s3 + $0x74] sm:$0xf]
      %v1856 = vld [vmem:[%s3 + $0x78] sm:$0xf]
      %v1857 = vld [vmem:[%s3 + $0x7c] sm:$0xf]
      %v1858 = vld [vmem:[%s3 + $0x80] sm:$0xf]
      %v1859 = vld [vmem:[%s3 + $0x84] sm:$0xf]
      %v1860 = vld [vmem:[%s3 + $0x88] sm:$0xf]
      %v1861 = vld [vmem:[%s3 + $0x8c] sm:$0xf]
      %v1862 = vld [vmem:[%s3 + $0x90] sm:$0xf]
      %v1863 = vld [vmem:[%s3 + $0x94] sm:$0xf]
      %v1864 = vld [vmem:[%s3 + $0x98] sm:$0xf]
      %v1865 = vld [vmem:[%s3 + $0x9c] sm:$0xf]
      %v1866 = vld [vmem:[%s3 + $0xa0] sm:$0xf]
      %v1867 = vld [vmem:[%s3 + $0xa4] sm:$0xf]
      %v1868 = vld [vmem:[%s3 + $0xa8] sm:$0xf]
      %v1869 = vld [vmem:[%s3 + $0xac] sm:$0xf]
      %v1870 = vld [vmem:[%s3 + $0xb0] sm:$0xf]
      %v1871 = vld [vmem:[%s3 + $0xb4] sm:$0xf]
      %v1872 = vld [vmem:[%s3 + $0xb8] sm:$0xf]
      %v1873 = vld [vmem:[%s3 + $0xbc] sm:$0xf]
      %v1874 = vld [vmem:[%s412] sm:$0xf]
      %v1875 = vld [vmem:[%s412 + $0x4] sm:$0xf]
      %v1876 = vld [vmem:[%s412 + $0x8] sm:$0x1]
      %v1877 = vld [vmem:[%s412 + $0xc] sm:$0xf]
      %v1878 = vld [vmem:[%s412 + $0x10] sm:$0xf]
      %v1879 = vld [vmem:[%s412 + $0x14] sm:$0x1]
      %v1880 = vld [vmem:[%s412 + $0x18] sm:$0xf]
      %v1881 = vld [vmem:[%s412 + $0x1c] sm:$0xf]
      %v1882 = vld [vmem:[%s412 + $0x20] sm:$0x1]
      %v1883 = vld [vmem:[%s412 + $0x24] sm:$0xf]
      %v1884 = vld [vmem:[%s412 + $0x28] sm:$0xf]
      %v1885 = vld [vmem:[%s412 + $0x2c] sm:$0x1]
      %v1886 = vld [vmem:[%s412 + $0x30] sm:$0xf]
      %v1887 = vld [vmem:[%s412 + $0x34] sm:$0xf]
      %v1888 = vld [vmem:[%s412 + $0x38] sm:$0x1]
      %v1889 = vld [vmem:[%s412 + $0x3c] sm:$0xf]
      %v1890 = vld [vmem:[%s412 + $0x40] sm:$0xf]
      %v1891 = vld [vmem:[%s412 + $0x44] sm:$0x1]
      %v1892 = vld [vmem:[%s412 + $0x48] sm:$0xf]
      %v1893 = vld [vmem:[%s412 + $0x4c] sm:$0xf]
      %v1894 = vld [vmem:[%s412 + $0x50] sm:$0x1]
      %v1895 = vld [vmem:[%s412 + $0x54] sm:$0xf]
      %v1896 = vld [vmem:[%s412 + $0x58] sm:$0xf]
      %v1897 = vld [vmem:[%s412 + $0x5c] sm:$0x1]
      %v1898 = vld [vmem:[%s412 + $0x60] sm:$0xf]
      %v1899 = vld [vmem:[%s412 + $0x64] sm:$0xf]
      %v1900 = vld [vmem:[%s412 + $0x68] sm:$0x1]
      %v1901 = vld [vmem:[%s412 + $0x6c] sm:$0xf]
      %v1902 = vld [vmem:[%s412 + $0x70] sm:$0xf]
      %v1903 = vld [vmem:[%s412 + $0x74] sm:$0x1]
      %v1904 = vld [vmem:[%s412 + $0x78] sm:$0xf]
      %v1905 = vld [vmem:[%s412 + $0x7c] sm:$0xf]
      %v1906 = vld [vmem:[%s412 + $0x80] sm:$0x1]
      %v1907 = vld [vmem:[%s412 + $0x84] sm:$0xf]
      %v1908 = vld [vmem:[%s412 + $0x88] sm:$0xf]
      %v1909 = vld [vmem:[%s412 + $0x8c] sm:$0x1]
      %v1910 = vld [vmem:[%s412 + $0x90] sm:$0xf]
      %v1911 = vld [vmem:[%s412 + $0x94] sm:$0xf]
      %v1912 = vld [vmem:[%s412 + $0x98] sm:$0x1]
      %v1913 = vld [vmem:[%s412 + $0x9c] sm:$0xf]
      %v1914 = vld [vmem:[%s412 + $0xa0] sm:$0xf]
      %v1915 = vld [vmem:[%s412 + $0xa4] sm:$0x1]
      %v1916 = vld [vmem:[%s412 + $0xa8] sm:$0xf]
      %v1917 = vld [vmem:[%s412 + $0xac] sm:$0xf]
      %v1918 = vld [vmem:[%s412 + $0xb0] sm:$0x1]
      %v1919 = vld [vmem:[%s412 + $0xb4] sm:$0xf]
      %v1920 = vld [vmem:[%s412 + $0xb8] sm:$0xf]
      %v1921 = vld [vmem:[%s412 + $0xbc] sm:$0x1]
      %v1922 = vld [vmem:[%s412] sm:$0xe]
      %v1923 = vld [vmem:[%s412 + $0xc] sm:$0xe]
      %v1924 = vld [vmem:[%s412 + $0x18] sm:$0xe]
      %v1925 = vld [vmem:[%s412 + $0x24] sm:$0xe]
      %v1926 = vld [vmem:[%s412 + $0x30] sm:$0xe]
      %v1927 = vld [vmem:[%s412 + $0x3c] sm:$0xe]
      %v1928 = vld [vmem:[%s412 + $0x48] sm:$0xe]
      %v1929 = vld [vmem:[%s412 + $0x54] sm:$0xe]
      %v1930 = vld [vmem:[%s412 + $0x60] sm:$0xe]
      %v1931 = vld [vmem:[%s412 + $0x6c] sm:$0xe]
      %v1932 = vld [vmem:[%s412 + $0x78] sm:$0xe]
      %v1933 = vld [vmem:[%s412 + $0x84] sm:$0xe]
      %v1934 = vld [vmem:[%s412 + $0x90] sm:$0xe]
      %v1935 = vld [vmem:[%s412 + $0x9c] sm:$0xe]
      %v1936 = vld [vmem:[%s412 + $0xa8] sm:$0xe]
      %v1937 = vld [vmem:[%s412 + $0xb4] sm:$0xe]
      %v1938 = vld [vmem:[%s412 + $0x8] sm:$0x3]
      %v1939 = vld [vmem:[%s412 + $0x14] sm:$0x3]
      %v1940 = vld [vmem:[%s412 + $0x20] sm:$0x3]
      %v1941 = vld [vmem:[%s412 + $0x2c] sm:$0x3]
      %v1942 = vld [vmem:[%s412 + $0x38] sm:$0x3]
      %v1943 = vld [vmem:[%s412 + $0x44] sm:$0x3]
      %v1944 = vld [vmem:[%s412 + $0x50] sm:$0x3]
      %v1945 = vld [vmem:[%s412 + $0x5c] sm:$0x3]
      %v1946 = vld [vmem:[%s412 + $0x68] sm:$0x3]
      %v1947 = vld [vmem:[%s412 + $0x74] sm:$0x3]
      %v1948 = vld [vmem:[%s412 + $0x80] sm:$0x3]
      %v1949 = vld [vmem:[%s412 + $0x8c] sm:$0x3]
      %v1950 = vld [vmem:[%s412 + $0x98] sm:$0x3]
      %v1951 = vld [vmem:[%s412 + $0xa4] sm:$0x3]
      %v1952 = vld [vmem:[%s412 + $0xb0] sm:$0x3]
      %v1953 = vld [vmem:[%s412 + $0xbc] sm:$0x3]
      %v2002 = vunpack.c.l.b16 %v1874
      %v2003 = vunpack.c.l.b16 %v1875
      %v2004 = vunpack.c.l.b16 %v1876
      %v2005 = vunpack.c.l.b16 %v1877
      %v2006 = vunpack.c.l.b16 %v1878
      %v2007 = vunpack.c.l.b16 %v1879
      %v2008 = vunpack.c.l.b16 %v1880
      %v2009 = vunpack.c.l.b16 %v1881
      %v2010 = vunpack.c.l.b16 %v1882
      %v2011 = vunpack.c.l.b16 %v1883
      %v2012 = vunpack.c.l.b16 %v1884
      %v2013 = vunpack.c.l.b16 %v1885
      %v2014 = vunpack.c.l.b16 %v1886
      %v2015 = vunpack.c.l.b16 %v1887
      %v2016 = vunpack.c.l.b16 %v1888
      %v2017 = vunpack.c.l.b16 %v1889
      %v2018 = vunpack.c.l.b16 %v1890
      %v2019 = vunpack.c.l.b16 %v1891
      %v2020 = vunpack.c.l.b16 %v1892
      %v2021 = vunpack.c.l.b16 %v1893
      %v2022 = vunpack.c.l.b16 %v1894
      %v2023 = vunpack.c.l.b16 %v1895
      %v2024 = vunpack.c.l.b16 %v1896
      %v2025 = vunpack.c.l.b16 %v1897
      %v2026 = vunpack.c.l.b16 %v1898
      %v2027 = vunpack.c.l.b16 %v1899
      %v2028 = vunpack.c.l.b16 %v1900
      %v2029 = vunpack.c.l.b16 %v1901
      %v2030 = vunpack.c.l.b16 %v1902
      %v2031 = vunpack.c.l.b16 %v1903
      %v2032 = vunpack.c.l.b16 %v1904
      %v2033 = vunpack.c.l.b16 %v1905
      %v2034 = vunpack.c.l.b16 %v1906
      %v2035 = vunpack.c.l.b16 %v1907
      %v2036 = vunpack.c.l.b16 %v1908
      %v2037 = vunpack.c.l.b16 %v1909
      %v2038 = vunpack.c.l.b16 %v1910
      %v2039 = vunpack.c.l.b16 %v1911
      %v2040 = vunpack.c.l.b16 %v1912
      %v2041 = vunpack.c.l.b16 %v1913
      %v2042 = vunpack.c.l.b16 %v1914
      %v2043 = vunpack.c.l.b16 %v1915
      %v2044 = vunpack.c.l.b16 %v1916
      %v2045 = vunpack.c.l.b16 %v1917
      %v2046 = vunpack.c.l.b16 %v1918
      %v2047 = vunpack.c.l.b16 %v1919
      %v2048 = vunpack.c.l.b16 %v1920
      %v2049 = vunpack.c.l.b16 %v1921
      %v2050 = vpack.c.b16 %v2003, %v2002
      %v2051 = vpack.c.b16 %v2004, %v2004
      %v2052 = vpack.c.b16 %v2006, %v2005
      %v2053 = vpack.c.b16 %v2007, %v2007
      %v2054 = vpack.c.b16 %v2009, %v2008
      %v2055 = vpack.c.b16 %v2010, %v2010
      %v2056 = vpack.c.b16 %v2012, %v2011
      %v2057 = vpack.c.b16 %v2013, %v2013
      %v2058 = vpack.c.b16 %v2015, %v2014
      %v2059 = vpack.c.b16 %v2016, %v2016
      %v2060 = vpack.c.b16 %v2018, %v2017
      %v2061 = vpack.c.b16 %v2019, %v2019
      %v2062 = vpack.c.b16 %v2021, %v2020
      %v2063 = vpack.c.b16 %v2022, %v2022
      %v2064 = vpack.c.b16 %v2024, %v2023
      %v2065 = vpack.c.b16 %v2025, %v2025
      %v2066 = vpack.c.b16 %v2027, %v2026
      %v2067 = vpack.c.b16 %v2028, %v2028
      %v2068 = vpack.c.b16 %v2030, %v2029
      %v2069 = vpack.c.b16 %v2031, %v2031
      %v2070 = vpack.c.b16 %v2033, %v2032
      %v2071 = vpack.c.b16 %v2034, %v2034
      %v2072 = vpack.c.b16 %v2036, %v2035
      %v2073 = vpack.c.b16 %v2037, %v2037
      %v2074 = vpack.c.b16 %v2039, %v2038
      %v2075 = vpack.c.b16 %v2040, %v2040
      %v2076 = vpack.c.b16 %v2042, %v2041
      %v2077 = vpack.c.b16 %v2043, %v2043
      %v2078 = vpack.c.b16 %v2045, %v2044
      %v2079 = vpack.c.b16 %v2046, %v2046
      %v2080 = vpack.c.b16 %v2048, %v2047
      %v2081 = vpack.c.b16 %v2049, %v2049
      %v2098 = vunpack.c.l.b16 %v1922
      %v2099 = vunpack.c.l.b16 %v1923
      %v2100 = vunpack.c.l.b16 %v1924
      %v2101 = vunpack.c.l.b16 %v1925
      %v2102 = vunpack.c.l.b16 %v1926
      %v2103 = vunpack.c.l.b16 %v1927
      %v2104 = vunpack.c.l.b16 %v1928
      %v2105 = vunpack.c.l.b16 %v1929
      %v2106 = vunpack.c.l.b16 %v1930
      %v2107 = vunpack.c.l.b16 %v1931
      %v2108 = vunpack.c.l.b16 %v1932
      %v2109 = vunpack.c.l.b16 %v1933
      %v2110 = vunpack.c.l.b16 %v1934
      %v2111 = vunpack.c.l.b16 %v1935
      %v2112 = vunpack.c.l.b16 %v1936
      %v2113 = vunpack.c.l.b16 %v1937
      %v2114 = vpack.c.b16 %v2003, %v2098
      %v2115 = vpack.c.b16 %v2006, %v2099
      %v2116 = vpack.c.b16 %v2009, %v2100
      %v2117 = vpack.c.b16 %v2012, %v2101
      %v2118 = vpack.c.b16 %v2015, %v2102
      %v2119 = vpack.c.b16 %v2018, %v2103
      %v2120 = vpack.c.b16 %v2021, %v2104
      %v2121 = vpack.c.b16 %v2024, %v2105
      %v2122 = vpack.c.b16 %v2027, %v2106
      %v2123 = vpack.c.b16 %v2030, %v2107
      %v2124 = vpack.c.b16 %v2033, %v2108
      %v2125 = vpack.c.b16 %v2036, %v2109
      %v2126 = vpack.c.b16 %v2039, %v2110
      %v2127 = vpack.c.b16 %v2042, %v2111
      %v2128 = vpack.c.b16 %v2045, %v2112
      %v2129 = vpack.c.b16 %v2048, %v2113
      %v2131 = vshrl.u32 %v2114, 16
      %v2133 = vshll.u32 %v2114, 16
      %v2135 = vrot.slane %v2133, 1
      %v2136 = vor.u32 %v2131, %v2135
      %v2138 = vshll.u32 %v2051, 16
      %v2140 = vrot.slane %v2138, 1
      %v2141 = vsel %vm944, %v2136, %v2140
      %v2142 = vshrl.u32 %v2051, 16
      %v2145 = vshrl.u32 %v2115, 16
      %v2147 = vshll.u32 %v2115, 16
      %v2149 = vrot.slane %v2147, 1
      %v2150 = vor.u32 %v2145, %v2149
      %v2152 = vshll.u32 %v2053, 16
      %v2154 = vrot.slane %v2152, 1
      %v2155 = vsel %vm944, %v2150, %v2154
      %v2156 = vshrl.u32 %v2053, 16
      %v2159 = vshrl.u32 %v2116, 16
      %v2161 = vshll.u32 %v2116, 16
      %v2163 = vrot.slane %v2161, 1
      %v2164 = vor.u32 %v2159, %v2163
      %v2166 = vshll.u32 %v2055, 16
      %v2168 = vrot.slane %v2166, 1
      %v2169 = vsel %vm944, %v2164, %v2168
      %v2170 = vshrl.u32 %v2055, 16
      %v2173 = vshrl.u32 %v2117, 16
      %v2175 = vshll.u32 %v2117, 16
      %v2177 = vrot.slane %v2175, 1
      %v2178 = vor.u32 %v2173, %v2177
      %v2180 = vshll.u32 %v2057, 16
      %v2182 = vrot.slane %v2180, 1
      %v2183 = vsel %vm944, %v2178, %v2182
      %v2184 = vshrl.u32 %v2057, 16
      %v2187 = vshrl.u32 %v2118, 16
      %v2189 = vshll.u32 %v2118, 16
      %v2191 = vrot.slane %v2189, 1
      %v2192 = vor.u32 %v2187, %v2191
      %v2194 = vshll.u32 %v2059, 16
      %v2196 = vrot.slane %v2194, 1
      %v2197 = vsel %vm944, %v2192, %v2196
      %v2198 = vshrl.u32 %v2059, 16
      %v2201 = vshrl.u32 %v2119, 16
      %v2203 = vshll.u32 %v2119, 16
      %v2205 = vrot.slane %v2203, 1
      %v2206 = vor.u32 %v2201, %v2205
      %v2208 = vshll.u32 %v2061, 16
      %v2210 = vrot.slane %v2208, 1
      %v2211 = vsel %vm944, %v2206, %v2210
      %v2212 = vshrl.u32 %v2061, 16
      %v2215 = vshrl.u32 %v2120, 16
      %v2217 = vshll.u32 %v2120, 16
      %v2219 = vrot.slane %v2217, 1
      %v2220 = vor.u32 %v2215, %v2219
      %v2222 = vshll.u32 %v2063, 16
      %v2224 = vrot.slane %v2222, 1
      %v2225 = vsel %vm944, %v2220, %v2224
      %v2226 = vshrl.u32 %v2063, 16
      %v2229 = vshrl.u32 %v2121, 16
      %v2231 = vshll.u32 %v2121, 16
      %v2233 = vrot.slane %v2231, 1
      %v2234 = vor.u32 %v2229, %v2233
      %v2236 = vshll.u32 %v2065, 16
      %v2238 = vrot.slane %v2236, 1
      %v2239 = vsel %vm944, %v2234, %v2238
      %v2240 = vshrl.u32 %v2065, 16
      %v2243 = vshrl.u32 %v2122, 16
      %v2245 = vshll.u32 %v2122, 16
      %v2247 = vrot.slane %v2245, 1
      %v2248 = vor.u32 %v2243, %v2247
      %v2250 = vshll.u32 %v2067, 16
      %v2252 = vrot.slane %v2250, 1
      %v2253 = vsel %vm944, %v2248, %v2252
      %v2254 = vshrl.u32 %v2067, 16
      %v2257 = vshrl.u32 %v2123, 16
      %v2259 = vshll.u32 %v2123, 16
      %v2261 = vrot.slane %v2259, 1
      %v2262 = vor.u32 %v2257, %v2261
      %v2264 = vshll.u32 %v2069, 16
      %v2266 = vrot.slane %v2264, 1
      %v2267 = vsel %vm944, %v2262, %v2266
      %v2268 = vshrl.u32 %v2069, 16
      %v2271 = vshrl.u32 %v2124, 16
      %v2273 = vshll.u32 %v2124, 16
      %v2275 = vrot.slane %v2273, 1
      %v2276 = vor.u32 %v2271, %v2275
      %v2278 = vshll.u32 %v2071, 16
      %v2280 = vrot.slane %v2278, 1
      %v2281 = vsel %vm944, %v2276, %v2280
      %v2282 = vshrl.u32 %v2071, 16
      %v2285 = vshrl.u32 %v2125, 16
      %v2287 = vshll.u32 %v2125, 16
      %v2289 = vrot.slane %v2287, 1
      %v2290 = vor.u32 %v2285, %v2289
      %v2292 = vshll.u32 %v2073, 16
      %v2294 = vrot.slane %v2292, 1
      %v2295 = vsel %vm944, %v2290, %v2294
      %v2296 = vshrl.u32 %v2073, 16
      %v2299 = vshrl.u32 %v2126, 16
      %v2301 = vshll.u32 %v2126, 16
      %v2303 = vrot.slane %v2301, 1
      %v2304 = vor.u32 %v2299, %v2303
      %v2306 = vshll.u32 %v2075, 16
      %v2308 = vrot.slane %v2306, 1
      %v2309 = vsel %vm944, %v2304, %v2308
      %v2310 = vshrl.u32 %v2075, 16
      %v2313 = vshrl.u32 %v2127, 16
      %v2315 = vshll.u32 %v2127, 16
      %v2317 = vrot.slane %v2315, 1
      %v2318 = vor.u32 %v2313, %v2317
      %v2320 = vshll.u32 %v2077, 16
      %v2322 = vrot.slane %v2320, 1
      %v2323 = vsel %vm944, %v2318, %v2322
      %v2324 = vshrl.u32 %v2077, 16
      %v2327 = vshrl.u32 %v2128, 16
      %v2329 = vshll.u32 %v2128, 16
      %v2331 = vrot.slane %v2329, 1
      %v2332 = vor.u32 %v2327, %v2331
      %v2334 = vshll.u32 %v2079, 16
      %v2336 = vrot.slane %v2334, 1
      %v2337 = vsel %vm944, %v2332, %v2336
      %v2338 = vshrl.u32 %v2079, 16
      %v2341 = vshrl.u32 %v2129, 16
      %v2343 = vshll.u32 %v2129, 16
      %v2345 = vrot.slane %v2343, 1
      %v2346 = vor.u32 %v2341, %v2345
      %v2348 = vshll.u32 %v2081, 16
      %v2350 = vrot.slane %v2348, 1
      %v2351 = vsel %vm944, %v2346, %v2350
      %v2352 = vshrl.u32 %v2081, 16
      %v2370 = vunpack.c.l.b16 %v1938
      %v2371 = vunpack.c.l.b16 %v1939
      %v2372 = vunpack.c.l.b16 %v1940
      %v2373 = vunpack.c.l.b16 %v1941
      %v2374 = vunpack.c.l.b16 %v1942
      %v2375 = vunpack.c.l.b16 %v1943
      %v2376 = vunpack.c.l.b16 %v1944
      %v2377 = vunpack.c.l.b16 %v1945
      %v2378 = vunpack.c.l.b16 %v1946
      %v2379 = vunpack.c.l.b16 %v1947
      %v2380 = vunpack.c.l.b16 %v1948
      %v2381 = vunpack.c.l.b16 %v1949
      %v2382 = vunpack.c.l.b16 %v1950
      %v2383 = vunpack.c.l.b16 %v1951
      %v2384 = vunpack.c.l.b16 %v1952
      %v2385 = vunpack.c.l.b16 %v1953
      %v2386 = vpack.c.b16 %v2370, %v2370
      %v2387 = vpack.c.b16 %v2371, %v2371
      %v2388 = vpack.c.b16 %v2372, %v2372
      %v2389 = vpack.c.b16 %v2373, %v2373
      %v2390 = vpack.c.b16 %v2374, %v2374
      %v2391 = vpack.c.b16 %v2375, %v2375
      %v2392 = vpack.c.b16 %v2376, %v2376
      %v2393 = vpack.c.b16 %v2377, %v2377
      %v2394 = vpack.c.b16 %v2378, %v2378
      %v2395 = vpack.c.b16 %v2379, %v2379
      %v2396 = vpack.c.b16 %v2380, %v2380
      %v2397 = vpack.c.b16 %v2381, %v2381
      %v2398 = vpack.c.b16 %v2382, %v2382
      %v2399 = vpack.c.b16 %v2383, %v2383
      %v2400 = vpack.c.b16 %v2384, %v2384
      %v2401 = vpack.c.b16 %v2385, %v2385
      %v2402 = vrot.slane %v2114, 1
      %v2403 = vrot.slane %v2386, 1
      %v2404 = vsel %vm1217, %v2402, %v2403
      %v2405 = vrot.slane %v2115, 1
      %v2406 = vrot.slane %v2387, 1
      %v2407 = vsel %vm1217, %v2405, %v2406
      %v2408 = vrot.slane %v2116, 1
      %v2409 = vrot.slane %v2388, 1
      %v2410 = vsel %vm1217, %v2408, %v2409
      %v2411 = vrot.slane %v2117, 1
      %v2412 = vrot.slane %v2389, 1
      %v2413 = vsel %vm1217, %v2411, %v2412
      %v2414 = vrot.slane %v2118, 1
      %v2415 = vrot.slane %v2390, 1
      %v2416 = vsel %vm1217, %v2414, %v2415
      %v2417 = vrot.slane %v2119, 1
      %v2418 = vrot.slane %v2391, 1
      %v2419 = vsel %vm1217, %v2417, %v2418
      %v2420 = vrot.slane %v2120, 1
      %v2421 = vrot.slane %v2392, 1
      %v2422 = vsel %vm1217, %v2420, %v2421
      %v2423 = vrot.slane %v2121, 1
      %v2424 = vrot.slane %v2393, 1
      %v2425 = vsel %vm1217, %v2423, %v2424
      %v2426 = vrot.slane %v2122, 1
      %v2427 = vrot.slane %v2394, 1
      %v2428 = vsel %vm1217, %v2426, %v2427
      %v2429 = vrot.slane %v2123, 1
      %v2430 = vrot.slane %v2395, 1
      %v2431 = vsel %vm1217, %v2429, %v2430
      %v2432 = vrot.slane %v2124, 1
      %v2433 = vrot.slane %v2396, 1
      %v2434 = vsel %vm1217, %v2432, %v2433
      %v2435 = vrot.slane %v2125, 1
      %v2436 = vrot.slane %v2397, 1
      %v2437 = vsel %vm1217, %v2435, %v2436
      %v2438 = vrot.slane %v2126, 1
      %v2439 = vrot.slane %v2398, 1
      %v2440 = vsel %vm1217, %v2438, %v2439
      %v2441 = vrot.slane %v2127, 1
      %v2442 = vrot.slane %v2399, 1
      %v2443 = vsel %vm1217, %v2441, %v2442
      %v2444 = vrot.slane %v2128, 1
      %v2445 = vrot.slane %v2400, 1
      %v2446 = vsel %vm1217, %v2444, %v2445
      %v2447 = vrot.slane %v2129, 1
      %v2448 = vrot.slane %v2401, 1
      %v2449 = vsel %vm1217, %v2447, %v2448
      %v2451 = vshrl.u32 %v2050, 16
      %v2453 = vshll.u32 %v2050, 16
      %v2455 = vrot.slane %v2453, 1
      %v2456 = vor.u32 %v2451, %v2455
      %v2457 = vsel %vm944, %v2456, %v2140
      %v2459 = vshrl.u32 %v2141, 16
      %v2461 = vshll.u32 %v2141, 16
      %v2463 = vrot.slane %v2461, 1
      %v2464 = vor.u32 %v2459, %v2463
      %v2466 = vshll.u32 %v2142, 16
      %v2468 = vrot.slane %v2466, 1
      %v2469 = vsel %vm944, %v2464, %v2468
      %v2471 = vshrl.u32 %v2404, 16
      %v2473 = vshll.u32 %v2404, 16
      %v2475 = vrot.slane %v2473, 1
      %v2476 = vor.u32 %v2471, %v2475
      %v2478 = vshll.u32 %v2403, 16
      %v2480 = vrot.slane %v2478, 1
      %v2481 = vsel %vm944, %v2476, %v2480
      %v2483 = vshrl.u32 %v2052, 16
      %v2485 = vshll.u32 %v2052, 16
      %v2487 = vrot.slane %v2485, 1
      %v2488 = vor.u32 %v2483, %v2487
      %v2489 = vsel %vm944, %v2488, %v2154
      %v2491 = vshrl.u32 %v2155, 16
      %v2493 = vshll.u32 %v2155, 16
      %v2495 = vrot.slane %v2493, 1
      %v2496 = vor.u32 %v2491, %v2495
      %v2498 = vshll.u32 %v2156, 16
      %v2500 = vrot.slane %v2498, 1
      %v2501 = vsel %vm944, %v2496, %v2500
      %v2503 = vshrl.u32 %v2407, 16
      %v2505 = vshll.u32 %v2407, 16
      %v2507 = vrot.slane %v2505, 1
      %v2508 = vor.u32 %v2503, %v2507
      %v2510 = vshll.u32 %v2406, 16
      %v2512 = vrot.slane %v2510, 1
      %v2513 = vsel %vm944, %v2508, %v2512
      %v2515 = vshrl.u32 %v2054, 16
      %v2517 = vshll.u32 %v2054, 16
      %v2519 = vrot.slane %v2517, 1
      %v2520 = vor.u32 %v2515, %v2519
      %v2521 = vsel %vm944, %v2520, %v2168
      %v2523 = vshrl.u32 %v2169, 16
      %v2525 = vshll.u32 %v2169, 16
      %v2527 = vrot.slane %v2525, 1
      %v2528 = vor.u32 %v2523, %v2527
      %v2530 = vshll.u32 %v2170, 16
      %v2532 = vrot.slane %v2530, 1
      %v2533 = vsel %vm944, %v2528, %v2532
      %v2535 = vshrl.u32 %v2410, 16
      %v2537 = vshll.u32 %v2410, 16
      %v2539 = vrot.slane %v2537, 1
      %v2540 = vor.u32 %v2535, %v2539
      %v2542 = vshll.u32 %v2409, 16
      %v2544 = vrot.slane %v2542, 1
      %v2545 = vsel %vm944, %v2540, %v2544
      %v2547 = vshrl.u32 %v2056, 16
      %v2549 = vshll.u32 %v2056, 16
      %v2551 = vrot.slane %v2549, 1
      %v2552 = vor.u32 %v2547, %v2551
      %v2553 = vsel %vm944, %v2552, %v2182
      %v2555 = vshrl.u32 %v2183, 16
      %v2557 = vshll.u32 %v2183, 16
      %v2559 = vrot.slane %v2557, 1
      %v2560 = vor.u32 %v2555, %v2559
      %v2562 = vshll.u32 %v2184, 16
      %v2564 = vrot.slane %v2562, 1
      %v2565 = vsel %vm944, %v2560, %v2564
      %v2567 = vshrl.u32 %v2413, 16
      %v2569 = vshll.u32 %v2413, 16
      %v2571 = vrot.slane %v2569, 1
      %v2572 = vor.u32 %v2567, %v2571
      %v2574 = vshll.u32 %v2412, 16
      %v2576 = vrot.slane %v2574, 1
      %v2577 = vsel %vm944, %v2572, %v2576
      %v2579 = vshrl.u32 %v2058, 16
      %v2581 = vshll.u32 %v2058, 16
      %v2583 = vrot.slane %v2581, 1
      %v2584 = vor.u32 %v2579, %v2583
      %v2585 = vsel %vm944, %v2584, %v2196
      %v2587 = vshrl.u32 %v2197, 16
      %v2589 = vshll.u32 %v2197, 16
      %v2591 = vrot.slane %v2589, 1
      %v2592 = vor.u32 %v2587, %v2591
      %v2594 = vshll.u32 %v2198, 16
      %v2596 = vrot.slane %v2594, 1
      %v2597 = vsel %vm944, %v2592, %v2596
      %v2599 = vshrl.u32 %v2416, 16
      %v2601 = vshll.u32 %v2416, 16
      %v2603 = vrot.slane %v2601, 1
      %v2604 = vor.u32 %v2599, %v2603
      %v2606 = vshll.u32 %v2415, 16
      %v2608 = vrot.slane %v2606, 1
      %v2609 = vsel %vm944, %v2604, %v2608
      %v2611 = vshrl.u32 %v2060, 16
      %v2613 = vshll.u32 %v2060, 16
      %v2615 = vrot.slane %v2613, 1
      %v2616 = vor.u32 %v2611, %v2615
      %v2617 = vsel %vm944, %v2616, %v2210
      %v2619 = vshrl.u32 %v2211, 16
      %v2621 = vshll.u32 %v2211, 16
      %v2623 = vrot.slane %v2621, 1
      %v2624 = vor.u32 %v2619, %v2623
      %v2626 = vshll.u32 %v2212, 16
      %v2628 = vrot.slane %v2626, 1
      %v2629 = vsel %vm944, %v2624, %v2628
      %v2631 = vshrl.u32 %v2419, 16
      %v2633 = vshll.u32 %v2419, 16
      %v2635 = vrot.slane %v2633, 1
      %v2636 = vor.u32 %v2631, %v2635
      %v2638 = vshll.u32 %v2418, 16
      %v2640 = vrot.slane %v2638, 1
      %v2641 = vsel %vm944, %v2636, %v2640
      %v2643 = vshrl.u32 %v2062, 16
      %v2645 = vshll.u32 %v2062, 16
      %v2647 = vrot.slane %v2645, 1
      %v2648 = vor.u32 %v2643, %v2647
      %v2649 = vsel %vm944, %v2648, %v2224
      %v2651 = vshrl.u32 %v2225, 16
      %v2653 = vshll.u32 %v2225, 16
      %v2655 = vrot.slane %v2653, 1
      %v2656 = vor.u32 %v2651, %v2655
      %v2658 = vshll.u32 %v2226, 16
      %v2660 = vrot.slane %v2658, 1
      %v2661 = vsel %vm944, %v2656, %v2660
      %v2663 = vshrl.u32 %v2422, 16
      %v2665 = vshll.u32 %v2422, 16
      %v2667 = vrot.slane %v2665, 1
      %v2668 = vor.u32 %v2663, %v2667
      %v2670 = vshll.u32 %v2421, 16
      %v2672 = vrot.slane %v2670, 1
      %v2673 = vsel %vm944, %v2668, %v2672
      %v2675 = vshrl.u32 %v2064, 16
      %v2677 = vshll.u32 %v2064, 16
      %v2679 = vrot.slane %v2677, 1
      %v2680 = vor.u32 %v2675, %v2679
      %v2681 = vsel %vm944, %v2680, %v2238
      %v2683 = vshrl.u32 %v2239, 16
      %v2685 = vshll.u32 %v2239, 16
      %v2687 = vrot.slane %v2685, 1
      %v2688 = vor.u32 %v2683, %v2687
      %v2690 = vshll.u32 %v2240, 16
      %v2692 = vrot.slane %v2690, 1
      %v2693 = vsel %vm944, %v2688, %v2692
      %v2695 = vshrl.u32 %v2425, 16
      %v2697 = vshll.u32 %v2425, 16
      %v2699 = vrot.slane %v2697, 1
      %v2700 = vor.u32 %v2695, %v2699
      %v2702 = vshll.u32 %v2424, 16
      %v2704 = vrot.slane %v2702, 1
      %v2705 = vsel %vm944, %v2700, %v2704
      %v2707 = vshrl.u32 %v2066, 16
      %v2709 = vshll.u32 %v2066, 16
      %v2711 = vrot.slane %v2709, 1
      %v2712 = vor.u32 %v2707, %v2711
      %v2713 = vsel %vm944, %v2712, %v2252
      %v2715 = vshrl.u32 %v2253, 16
      %v2717 = vshll.u32 %v2253, 16
      %v2719 = vrot.slane %v2717, 1
      %v2720 = vor.u32 %v2715, %v2719
      %v2722 = vshll.u32 %v2254, 16
      %v2724 = vrot.slane %v2722, 1
      %v2725 = vsel %vm944, %v2720, %v2724
      %v2727 = vshrl.u32 %v2428, 16
      %v2729 = vshll.u32 %v2428, 16
      %v2731 = vrot.slane %v2729, 1
      %v2732 = vor.u32 %v2727, %v2731
      %v2734 = vshll.u32 %v2427, 16
      %v2736 = vrot.slane %v2734, 1
      %v2737 = vsel %vm944, %v2732, %v2736
      %v2739 = vshrl.u32 %v2068, 16
      %v2741 = vshll.u32 %v2068, 16
      %v2743 = vrot.slane %v2741, 1
      %v2744 = vor.u32 %v2739, %v2743
      %v2745 = vsel %vm944, %v2744, %v2266
      %v2747 = vshrl.u32 %v2267, 16
      %v2749 = vshll.u32 %v2267, 16
      %v2751 = vrot.slane %v2749, 1
      %v2752 = vor.u32 %v2747, %v2751
      %v2754 = vshll.u32 %v2268, 16
      %v2756 = vrot.slane %v2754, 1
      %v2757 = vsel %vm944, %v2752, %v2756
      %v2759 = vshrl.u32 %v2431, 16
      %v2761 = vshll.u32 %v2431, 16
      %v2763 = vrot.slane %v2761, 1
      %v2764 = vor.u32 %v2759, %v2763
      %v2766 = vshll.u32 %v2430, 16
      %v2768 = vrot.slane %v2766, 1
      %v2769 = vsel %vm944, %v2764, %v2768
      %v2771 = vshrl.u32 %v2070, 16
      %v2773 = vshll.u32 %v2070, 16
      %v2775 = vrot.slane %v2773, 1
      %v2776 = vor.u32 %v2771, %v2775
      %v2777 = vsel %vm944, %v2776, %v2280
      %v2779 = vshrl.u32 %v2281, 16
      %v2781 = vshll.u32 %v2281, 16
      %v2783 = vrot.slane %v2781, 1
      %v2784 = vor.u32 %v2779, %v2783
      %v2786 = vshll.u32 %v2282, 16
      %v2788 = vrot.slane %v2786, 1
      %v2789 = vsel %vm944, %v2784, %v2788
      %v2791 = vshrl.u32 %v2434, 16
      %v2793 = vshll.u32 %v2434, 16
      %v2795 = vrot.slane %v2793, 1
      %v2796 = vor.u32 %v2791, %v2795
      %v2798 = vshll.u32 %v2433, 16
      %v2800 = vrot.slane %v2798, 1
      %v2801 = vsel %vm944, %v2796, %v2800
      %v2803 = vshrl.u32 %v2072, 16
      %v2805 = vshll.u32 %v2072, 16
      %v2807 = vrot.slane %v2805, 1
      %v2808 = vor.u32 %v2803, %v2807
      %v2809 = vsel %vm944, %v2808, %v2294
      %v2811 = vshrl.u32 %v2295, 16
      %v2813 = vshll.u32 %v2295, 16
      %v2815 = vrot.slane %v2813, 1
      %v2816 = vor.u32 %v2811, %v2815
      %v2818 = vshll.u32 %v2296, 16
      %v2820 = vrot.slane %v2818, 1
      %v2821 = vsel %vm944, %v2816, %v2820
      %v2823 = vshrl.u32 %v2437, 16
      %v2825 = vshll.u32 %v2437, 16
      %v2827 = vrot.slane %v2825, 1
      %v2828 = vor.u32 %v2823, %v2827
      %v2830 = vshll.u32 %v2436, 16
      %v2832 = vrot.slane %v2830, 1
      %v2833 = vsel %vm944, %v2828, %v2832
      %v2835 = vshrl.u32 %v2074, 16
      %v2837 = vshll.u32 %v2074, 16
      %v2839 = vrot.slane %v2837, 1
      %v2840 = vor.u32 %v2835, %v2839
      %v2841 = vsel %vm944, %v2840, %v2308
      %v2843 = vshrl.u32 %v2309, 16
      %v2845 = vshll.u32 %v2309, 16
      %v2847 = vrot.slane %v2845, 1
      %v2848 = vor.u32 %v2843, %v2847
      %v2850 = vshll.u32 %v2310, 16
      %v2852 = vrot.slane %v2850, 1
      %v2853 = vsel %vm944, %v2848, %v2852
      %v2855 = vshrl.u32 %v2440, 16
      %v2857 = vshll.u32 %v2440, 16
      %v2859 = vrot.slane %v2857, 1
      %v2860 = vor.u32 %v2855, %v2859
      %v2862 = vshll.u32 %v2439, 16
      %v2864 = vrot.slane %v2862, 1
      %v2865 = vsel %vm944, %v2860, %v2864
      %v2867 = vshrl.u32 %v2076, 16
      %v2869 = vshll.u32 %v2076, 16
      %v2871 = vrot.slane %v2869, 1
      %v2872 = vor.u32 %v2867, %v2871
      %v2873 = vsel %vm944, %v2872, %v2322
      %v2875 = vshrl.u32 %v2323, 16
      %v2877 = vshll.u32 %v2323, 16
      %v2879 = vrot.slane %v2877, 1
      %v2880 = vor.u32 %v2875, %v2879
      %v2882 = vshll.u32 %v2324, 16
      %v2884 = vrot.slane %v2882, 1
      %v2885 = vsel %vm944, %v2880, %v2884
      %v2887 = vshrl.u32 %v2443, 16
      %v2889 = vshll.u32 %v2443, 16
      %v2891 = vrot.slane %v2889, 1
      %v2892 = vor.u32 %v2887, %v2891
      %v2894 = vshll.u32 %v2442, 16
      %v2896 = vrot.slane %v2894, 1
      %v2897 = vsel %vm944, %v2892, %v2896
      %v2899 = vshrl.u32 %v2078, 16
      %v2901 = vshll.u32 %v2078, 16
      %v2903 = vrot.slane %v2901, 1
      %v2904 = vor.u32 %v2899, %v2903
      %v2905 = vsel %vm944, %v2904, %v2336
      %v2907 = vshrl.u32 %v2337, 16
      %v2909 = vshll.u32 %v2337, 16
      %v2911 = vrot.slane %v2909, 1
      %v2912 = vor.u32 %v2907, %v2911
      %v2914 = vshll.u32 %v2338, 16
      %v2916 = vrot.slane %v2914, 1
      %v2917 = vsel %vm944, %v2912, %v2916
      %v2919 = vshrl.u32 %v2446, 16
      %v2921 = vshll.u32 %v2446, 16
      %v2923 = vrot.slane %v2921, 1
      %v2924 = vor.u32 %v2919, %v2923
      %v2926 = vshll.u32 %v2445, 16
      %v2928 = vrot.slane %v2926, 1
      %v2929 = vsel %vm944, %v2924, %v2928
      %v2931 = vshrl.u32 %v2080, 16
      %v2933 = vshll.u32 %v2080, 16
      %v2935 = vrot.slane %v2933, 1
      %v2936 = vor.u32 %v2931, %v2935
      %v2937 = vsel %vm944, %v2936, %v2350
      %v2939 = vshrl.u32 %v2351, 16
      %v2941 = vshll.u32 %v2351, 16
      %v2943 = vrot.slane %v2941, 1
      %v2944 = vor.u32 %v2939, %v2943
      %v2946 = vshll.u32 %v2352, 16
      %v2948 = vrot.slane %v2946, 1
      %v2949 = vsel %vm944, %v2944, %v2948
      %v2951 = vshrl.u32 %v2449, 16
      %v2953 = vshll.u32 %v2449, 16
      %v2955 = vrot.slane %v2953, 1
      %v2956 = vor.u32 %v2951, %v2955
      %v2958 = vshll.u32 %v2448, 16
      %v2960 = vrot.slane %v2958, 1
      %v2961 = vsel %vm944, %v2956, %v2960
      %s3010 = scalar_lea.vmem %s3, 192
      %v3011 = vld [vmem:[%s3010] sm:$0xf]
      %v3012 = vld [vmem:[%s3010 + $0x4] sm:$0xf]
      %v3013 = vld [vmem:[%s3010 + $0x8] sm:$0xf]
      %v3014 = vld [vmem:[%s3010 + $0xc] sm:$0xf]
      %v3015 = vld [vmem:[%s3010 + $0x10] sm:$0xf]
      %v3016 = vld [vmem:[%s3010 + $0x14] sm:$0xf]
      %v3017 = vld [vmem:[%s3010 + $0x18] sm:$0xf]
      %v3018 = vld [vmem:[%s3010 + $0x1c] sm:$0xf]
      %v3019 = vld [vmem:[%s3010 + $0x20] sm:$0xf]
      %v3020 = vld [vmem:[%s3010 + $0x24] sm:$0xf]
      %v3021 = vld [vmem:[%s3010 + $0x28] sm:$0xf]
      %v3022 = vld [vmem:[%s3010 + $0x2c] sm:$0xf]
      %v3023 = vld [vmem:[%s3010 + $0x30] sm:$0xf]
      %v3024 = vld [vmem:[%s3010 + $0x34] sm:$0xf]
      %v3025 = vld [vmem:[%s3010 + $0x38] sm:$0xf]
      %v3026 = vld [vmem:[%s3010 + $0x3c] sm:$0xf]
      %v3027 = vld [vmem:[%s3010 + $0x40] sm:$0xf]
      %v3028 = vld [vmem:[%s3010 + $0x44] sm:$0xf]
      %v3029 = vld [vmem:[%s3010 + $0x48] sm:$0xf]
      %v3030 = vld [vmem:[%s3010 + $0x4c] sm:$0xf]
      %v3031 = vld [vmem:[%s3010 + $0x50] sm:$0xf]
      %v3032 = vld [vmem:[%s3010 + $0x54] sm:$0xf]
      %v3033 = vld [vmem:[%s3010 + $0x58] sm:$0xf]
      %v3034 = vld [vmem:[%s3010 + $0x5c] sm:$0xf]
      %v3035 = vld [vmem:[%s3010 + $0x60] sm:$0xf]
      %v3036 = vld [vmem:[%s3010 + $0x64] sm:$0xf]
      %v3037 = vld [vmem:[%s3010 + $0x68] sm:$0xf]
      %v3038 = vld [vmem:[%s3010 + $0x6c] sm:$0xf]
      %v3039 = vld [vmem:[%s3010 + $0x70] sm:$0xf]
      %v3040 = vld [vmem:[%s3010 + $0x74] sm:$0xf]
      %v3041 = vld [vmem:[%s3010 + $0x78] sm:$0xf]
      %v3042 = vld [vmem:[%s3010 + $0x7c] sm:$0xf]
      %v3043 = vld [vmem:[%s3010 + $0x80] sm:$0xf]
      %v3044 = vld [vmem:[%s3010 + $0x84] sm:$0xf]
      %v3045 = vld [vmem:[%s3010 + $0x88] sm:$0xf]
      %v3046 = vld [vmem:[%s3010 + $0x8c] sm:$0xf]
      %v3047 = vld [vmem:[%s3010 + $0x90] sm:$0xf]
      %v3048 = vld [vmem:[%s3010 + $0x94] sm:$0xf]
      %v3049 = vld [vmem:[%s3010 + $0x98] sm:$0xf]
      %v3050 = vld [vmem:[%s3010 + $0x9c] sm:$0xf]
      %v3051 = vld [vmem:[%s3010 + $0xa0] sm:$0xf]
      %v3052 = vld [vmem:[%s3010 + $0xa4] sm:$0xf]
      %v3053 = vld [vmem:[%s3010 + $0xa8] sm:$0xf]
      %v3054 = vld [vmem:[%s3010 + $0xac] sm:$0xf]
      %v3055 = vld [vmem:[%s3010 + $0xb0] sm:$0xf]
      %v3056 = vld [vmem:[%s3010 + $0xb4] sm:$0xf]
      %v3057 = vld [vmem:[%s3010 + $0xb8] sm:$0xf]
      %v3058 = vld [vmem:[%s3010 + $0xbc] sm:$0xf]
      %v3107 = vunpack.c.l.b16 %v3011
      %v3108 = vunpack.c.l.b16 %v3012
      %v3109 = vunpack.c.l.b16 %v3013
      %v3110 = vunpack.c.l.b16 %v3014
      %v3111 = vunpack.c.l.b16 %v3015
      %v3112 = vunpack.c.l.b16 %v3016
      %v3113 = vunpack.c.l.b16 %v3017
      %v3114 = vunpack.c.l.b16 %v3018
      %v3115 = vunpack.c.l.b16 %v3019
      %v3116 = vunpack.c.l.b16 %v3020
      %v3117 = vunpack.c.l.b16 %v3021
      %v3118 = vunpack.c.l.b16 %v3022
      %v3119 = vunpack.c.l.b16 %v3023
      %v3120 = vunpack.c.l.b16 %v3024
      %v3121 = vunpack.c.l.b16 %v3025
      %v3122 = vunpack.c.l.b16 %v3026
      %v3123 = vunpack.c.l.b16 %v3027
      %v3124 = vunpack.c.l.b16 %v3028
      %v3125 = vunpack.c.l.b16 %v3029
      %v3126 = vunpack.c.l.b16 %v3030
      %v3127 = vunpack.c.l.b16 %v3031
      %v3128 = vunpack.c.l.b16 %v3032
      %v3129 = vunpack.c.l.b16 %v3033
      %v3130 = vunpack.c.l.b16 %v3034
      %v3131 = vunpack.c.l.b16 %v3035
      %v3132 = vunpack.c.l.b16 %v3036
      %v3133 = vunpack.c.l.b16 %v3037
      %v3134 = vunpack.c.l.b16 %v3038
      %v3135 = vunpack.c.l.b16 %v3039
      %v3136 = vunpack.c.l.b16 %v3040
      %v3137 = vunpack.c.l.b16 %v3041
      %v3138 = vunpack.c.l.b16 %v3042
      %v3139 = vunpack.c.l.b16 %v3043
      %v3140 = vunpack.c.l.b16 %v3044
      %v3141 = vunpack.c.l.b16 %v3045
      %v3142 = vunpack.c.l.b16 %v3046
      %v3143 = vunpack.c.l.b16 %v3047
      %v3144 = vunpack.c.l.b16 %v3048
      %v3145 = vunpack.c.l.b16 %v3049
      %v3146 = vunpack.c.l.b16 %v3050
      %v3147 = vunpack.c.l.b16 %v3051
      %v3148 = vunpack.c.l.b16 %v3052
      %v3149 = vunpack.c.l.b16 %v3053
      %v3150 = vunpack.c.l.b16 %v3054
      %v3151 = vunpack.c.l.b16 %v3055
      %v3152 = vunpack.c.l.b16 %v3056
      %v3153 = vunpack.c.l.b16 %v3057
      %v3154 = vunpack.c.l.b16 %v3058
      %v3155 = vpack.c.b16 %v3108, %v3107
      %v3156 = vpack.c.b16 %v3110, %v3109
      %v3157 = vpack.c.b16 %v3112, %v3111
      %v3158 = vpack.c.b16 %v3114, %v3113
      %v3159 = vpack.c.b16 %v3116, %v3115
      %v3160 = vpack.c.b16 %v3118, %v3117
      %v3161 = vpack.c.b16 %v3120, %v3119
      %v3162 = vpack.c.b16 %v3122, %v3121
      %v3163 = vpack.c.b16 %v3124, %v3123
      %v3164 = vpack.c.b16 %v3126, %v3125
      %v3165 = vpack.c.b16 %v3128, %v3127
      %v3166 = vpack.c.b16 %v3130, %v3129
      %v3167 = vpack.c.b16 %v3132, %v3131
      %v3168 = vpack.c.b16 %v3134, %v3133
      %v3169 = vpack.c.b16 %v3136, %v3135
      %v3170 = vpack.c.b16 %v3138, %v3137
      %v3171 = vpack.c.b16 %v3140, %v3139
      %v3172 = vpack.c.b16 %v3142, %v3141
      %v3173 = vpack.c.b16 %v3144, %v3143
      %v3174 = vpack.c.b16 %v3146, %v3145
      %v3175 = vpack.c.b16 %v3148, %v3147
      %v3176 = vpack.c.b16 %v3150, %v3149
      %v3177 = vpack.c.b16 %v3152, %v3151
      %v3178 = vpack.c.b16 %v3154, %v3153
      %3203 = vmatpush.bf16.msra.mxu0 %v3162
      %3204 = vmatpush.bf16.msra.mxu0 %v3161
      %3205 = vmatpush.bf16.msra.mxu0 %v3160
      %3206 = vmatpush.bf16.msra.mxu0 %v3159
      %3207 = vmatpush.bf16.msra.mxu0 %v3158
      %3208 = vmatpush.bf16.msra.mxu0 %v3157
      %3209 = vmatpush.bf16.msra.mxu0 %v3156
      %3210 = vmatpush.bf16.msra.mxu0 %v3155
      %3211 = vmatmul.bf16.gmra.mxu0 %v2457
      %v3212 = vpop.f32.mrf.mxu0
      %v3213 = vadd.f32 0.0, %v3212
      %v3214 = vpop.f32.mrf.mxu0
      %v3215 = vadd.f32 0.0, %v3214
      %3216 = vmatmul.bf16.gmra.mxu0 %v2489
      %v3217 = vpop.f32.mrf.mxu0
      %v3218 = vadd.f32 0.0, %v3217
      %v3219 = vpop.f32.mrf.mxu0
      %v3220 = vadd.f32 0.0, %v3219
      %3221 = vmatmul.bf16.gmra.mxu0 %v2521
      %v3222 = vpop.f32.mrf.mxu0
      %v3223 = vadd.f32 0.0, %v3222
      %v3224 = vpop.f32.mrf.mxu0
      %v3225 = vadd.f32 0.0, %v3224
      %3226 = vmatmul.bf16.gmra.mxu0 %v2553
      %v3227 = vpop.f32.mrf.mxu0
      %v3228 = vadd.f32 0.0, %v3227
      %v3229 = vpop.f32.mrf.mxu0
      %v3230 = vadd.f32 0.0, %v3229
      %3231 = vmatmul.bf16.gmra.mxu0 %v2585
      %v3232 = vpop.f32.mrf.mxu0
      %v3233 = vadd.f32 0.0, %v3232
      %v3234 = vpop.f32.mrf.mxu0
      %v3235 = vadd.f32 0.0, %v3234
      %3236 = vmatmul.bf16.gmra.mxu0 %v2617
      %v3237 = vpop.f32.mrf.mxu0
      %v3238 = vadd.f32 0.0, %v3237
      %v3239 = vpop.f32.mrf.mxu0
      %v3240 = vadd.f32 0.0, %v3239
      %3241 = vmatmul.bf16.gmra.mxu0 %v2649
      %v3242 = vpop.f32.mrf.mxu0
      %v3243 = vadd.f32 0.0, %v3242
      %v3244 = vpop.f32.mrf.mxu0
      %v3245 = vadd.f32 0.0, %v3244
      %3246 = vmatmul.bf16.gmra.mxu0 %v2681
      %v3247 = vpop.f32.mrf.mxu0
      %v3248 = vadd.f32 0.0, %v3247
      %v3249 = vpop.f32.mrf.mxu0
      %v3250 = vadd.f32 0.0, %v3249
      %3251 = vmatmul.bf16.gmra.mxu0 %v2713
      %v3252 = vpop.f32.mrf.mxu0
      %v3253 = vadd.f32 0.0, %v3252
      %v3254 = vpop.f32.mrf.mxu0
      %v3255 = vadd.f32 0.0, %v3254
      %3256 = vmatmul.bf16.gmra.mxu0 %v2745
      %v3257 = vpop.f32.mrf.mxu0
      %v3258 = vadd.f32 0.0, %v3257
      %v3259 = vpop.f32.mrf.mxu0
      %v3260 = vadd.f32 0.0, %v3259
      %3261 = vmatmul.bf16.gmra.mxu0 %v2777
      %v3262 = vpop.f32.mrf.mxu0
      %v3263 = vadd.f32 0.0, %v3262
      %v3264 = vpop.f32.mrf.mxu0
      %v3265 = vadd.f32 0.0, %v3264
      %3266 = vmatmul.bf16.gmra.mxu0 %v2809
      %v3267 = vpop.f32.mrf.mxu0
      %v3268 = vadd.f32 0.0, %v3267
      %v3269 = vpop.f32.mrf.mxu0
      %v3270 = vadd.f32 0.0, %v3269
      %3271 = vmatmul.bf16.gmra.mxu0 %v2841
      %v3272 = vpop.f32.mrf.mxu0
      %v3273 = vadd.f32 0.0, %v3272
      %v3274 = vpop.f32.mrf.mxu0
      %v3275 = vadd.f32 0.0, %v3274
      %3276 = vmatmul.bf16.gmra.mxu0 %v2873
      %v3277 = vpop.f32.mrf.mxu0
      %v3278 = vadd.f32 0.0, %v3277
      %v3279 = vpop.f32.mrf.mxu0
      %v3280 = vadd.f32 0.0, %v3279
      %3281 = vmatmul.bf16.gmra.mxu0 %v2905
      %v3282 = vpop.f32.mrf.mxu0
      %v3283 = vadd.f32 0.0, %v3282
      %v3284 = vpop.f32.mrf.mxu0
      %v3285 = vadd.f32 0.0, %v3284
      %3286 = vmatmul.bf16.gmra.mxu0 %v2937
      %v3287 = vpop.f32.mrf.mxu0
      %v3288 = vadd.f32 0.0, %v3287
      %v3289 = vpop.f32.mrf.mxu0
      %v3290 = vadd.f32 0.0, %v3289
      %3291 = vdwg.mxu0
      %3292 = vmatpush.bf16.msra.mxu0 %v3170
      %3293 = vmatpush.bf16.msra.mxu0 %v3169
      %3294 = vmatpush.bf16.msra.mxu0 %v3168
      %3295 = vmatpush.bf16.msra.mxu0 %v3167
      %3296 = vmatpush.bf16.msra.mxu0 %v3166
      %3297 = vmatpush.bf16.msra.mxu0 %v3165
      %3298 = vmatpush.bf16.msra.mxu0 %v3164
      %3299 = vmatpush.bf16.msra.mxu0 %v3163
      %3300 = vmatmul.bf16.gmra.mxu0 %v2469
      %v3301 = vpop.f32.mrf.mxu0
      %v3302 = vadd.f32 %v3213, %v3301
      %v3303 = vpop.f32.mrf.mxu0
      %v3304 = vadd.f32 %v3215, %v3303
      %3305 = vmatmul.bf16.gmra.mxu0 %v2501
      %v3306 = vpop.f32.mrf.mxu0
      %v3307 = vadd.f32 %v3218, %v3306
      %v3308 = vpop.f32.mrf.mxu0
      %v3309 = vadd.f32 %v3220, %v3308
      %3310 = vmatmul.bf16.gmra.mxu0 %v2533
      %v3311 = vpop.f32.mrf.mxu0
      %v3312 = vadd.f32 %v3223, %v3311
      %v3313 = vpop.f32.mrf.mxu0
      %v3314 = vadd.f32 %v3225, %v3313
      %3315 = vmatmul.bf16.gmra.mxu0 %v2565
      %v3316 = vpop.f32.mrf.mxu0
      %v3317 = vadd.f32 %v3228, %v3316
      %v3318 = vpop.f32.mrf.mxu0
      %v3319 = vadd.f32 %v3230, %v3318
      %3320 = vmatmul.bf16.gmra.mxu0 %v2597
      %v3321 = vpop.f32.mrf.mxu0
      %v3322 = vadd.f32 %v3233, %v3321
      %v3323 = vpop.f32.mrf.mxu0
      %v3324 = vadd.f32 %v3235, %v3323
      %3325 = vmatmul.bf16.gmra.mxu0 %v2629
      %v3326 = vpop.f32.mrf.mxu0
      %v3327 = vadd.f32 %v3238, %v3326
      %v3328 = vpop.f32.mrf.mxu0
      %v3329 = vadd.f32 %v3240, %v3328
      %3330 = vmatmul.bf16.gmra.mxu0 %v2661
      %v3331 = vpop.f32.mrf.mxu0
      %v3332 = vadd.f32 %v3243, %v3331
      %v3333 = vpop.f32.mrf.mxu0
      %v3334 = vadd.f32 %v3245, %v3333
      %3335 = vmatmul.bf16.gmra.mxu0 %v2693
      %v3336 = vpop.f32.mrf.mxu0
      %v3337 = vadd.f32 %v3248, %v3336
      %v3338 = vpop.f32.mrf.mxu0
      %v3339 = vadd.f32 %v3250, %v3338
      %3340 = vmatmul.bf16.gmra.mxu0 %v2725
      %v3341 = vpop.f32.mrf.mxu0
      %v3342 = vadd.f32 %v3253, %v3341
      %v3343 = vpop.f32.mrf.mxu0
      %v3344 = vadd.f32 %v3255, %v3343
      %3345 = vmatmul.bf16.gmra.mxu0 %v2757
      %v3346 = vpop.f32.mrf.mxu0
      %v3347 = vadd.f32 %v3258, %v3346
      %v3348 = vpop.f32.mrf.mxu0
      %v3349 = vadd.f32 %v3260, %v3348
      %3350 = vmatmul.bf16.gmra.mxu0 %v2789
      %v3351 = vpop.f32.mrf.mxu0
      %v3352 = vadd.f32 %v3263, %v3351
      %v3353 = vpop.f32.mrf.mxu0
      %v3354 = vadd.f32 %v3265, %v3353
      %3355 = vmatmul.bf16.gmra.mxu0 %v2821
      %v3356 = vpop.f32.mrf.mxu0
      %v3357 = vadd.f32 %v3268, %v3356
      %v3358 = vpop.f32.mrf.mxu0
      %v3359 = vadd.f32 %v3270, %v3358
      %3360 = vmatmul.bf16.gmra.mxu0 %v2853
      %v3361 = vpop.f32.mrf.mxu0
      %v3362 = vadd.f32 %v3273, %v3361
      %v3363 = vpop.f32.mrf.mxu0
      %v3364 = vadd.f32 %v3275, %v3363
      %3365 = vmatmul.bf16.gmra.mxu0 %v2885
      %v3366 = vpop.f32.mrf.mxu0
      %v3367 = vadd.f32 %v3278, %v3366
      %v3368 = vpop.f32.mrf.mxu0
      %v3369 = vadd.f32 %v3280, %v3368
      %3370 = vmatmul.bf16.gmra.mxu0 %v2917
      %v3371 = vpop.f32.mrf.mxu0
      %v3372 = vadd.f32 %v3283, %v3371
      %v3373 = vpop.f32.mrf.mxu0
      %v3374 = vadd.f32 %v3285, %v3373
      %3375 = vmatmul.bf16.gmra.mxu0 %v2949
      %v3376 = vpop.f32.mrf.mxu0
      %v3377 = vadd.f32 %v3288, %v3376
      %v3378 = vpop.f32.mrf.mxu0
      %v3379 = vadd.f32 %v3290, %v3378
      %3380 = vdwg.mxu0
      %3381 = vmatpush.bf16.msra.mxu0 %v3178
      %3382 = vmatpush.bf16.msra.mxu0 %v3177
      %3383 = vmatpush.bf16.msra.mxu0 %v3176
      %3384 = vmatpush.bf16.msra.mxu0 %v3175
      %3385 = vmatpush.bf16.msra.mxu0 %v3174
      %3386 = vmatpush.bf16.msra.mxu0 %v3173
      %3387 = vmatpush.bf16.msra.mxu0 %v3172
      %3388 = vmatpush.bf16.msra.mxu0 %v3171
      %3389 = vmatmul.bf16.gmra.mxu0 %v2481
      %v3390 = vpop.f32.mrf.mxu0
      %v3391 = vadd.f32 %v3302, %v3390
      %v3392 = vpop.f32.mrf.mxu0
      %v3393 = vadd.f32 %v3304, %v3392
      %3394 = vmatmul.bf16.gmra.mxu0 %v2513
      %v3395 = vpop.f32.mrf.mxu0
      %v3396 = vadd.f32 %v3307, %v3395
      %v3397 = vpop.f32.mrf.mxu0
      %v3398 = vadd.f32 %v3309, %v3397
      %3399 = vmatmul.bf16.gmra.mxu0 %v2545
      %v3400 = vpop.f32.mrf.mxu0
      %v3401 = vadd.f32 %v3312, %v3400
      %v3402 = vpop.f32.mrf.mxu0
      %v3403 = vadd.f32 %v3314, %v3402
      %3404 = vmatmul.bf16.gmra.mxu0 %v2577
      %v3405 = vpop.f32.mrf.mxu0
      %v3406 = vadd.f32 %v3317, %v3405
      %v3407 = vpop.f32.mrf.mxu0
      %v3408 = vadd.f32 %v3319, %v3407
      %3409 = vmatmul.bf16.gmra.mxu0 %v2609
      %v3410 = vpop.f32.mrf.mxu0
      %v3411 = vadd.f32 %v3322, %v3410
      %v3412 = vpop.f32.mrf.mxu0
      %v3413 = vadd.f32 %v3324, %v3412
      %3414 = vmatmul.bf16.gmra.mxu0 %v2641
      %v3415 = vpop.f32.mrf.mxu0
      %v3416 = vadd.f32 %v3327, %v3415
      %v3417 = vpop.f32.mrf.mxu0
      %v3418 = vadd.f32 %v3329, %v3417
      %3419 = vmatmul.bf16.gmra.mxu0 %v2673
      %v3420 = vpop.f32.mrf.mxu0
      %v3421 = vadd.f32 %v3332, %v3420
      %v3422 = vpop.f32.mrf.mxu0
      %v3423 = vadd.f32 %v3334, %v3422
      %3424 = vmatmul.bf16.gmra.mxu0 %v2705
      %v3425 = vpop.f32.mrf.mxu0
      %v3426 = vadd.f32 %v3337, %v3425
      %v3427 = vpop.f32.mrf.mxu0
      %v3428 = vadd.f32 %v3339, %v3427
      %3429 = vmatmul.bf16.gmra.mxu0 %v2737
      %v3430 = vpop.f32.mrf.mxu0
      %v3431 = vadd.f32 %v3342, %v3430
      %v3432 = vpop.f32.mrf.mxu0
      %v3433 = vadd.f32 %v3344, %v3432
      %3434 = vmatmul.bf16.gmra.mxu0 %v2769
      %v3435 = vpop.f32.mrf.mxu0
      %v3436 = vadd.f32 %v3347, %v3435
      %v3437 = vpop.f32.mrf.mxu0
      %v3438 = vadd.f32 %v3349, %v3437
      %3439 = vmatmul.bf16.gmra.mxu0 %v2801
      %v3440 = vpop.f32.mrf.mxu0
      %v3441 = vadd.f32 %v3352, %v3440
      %v3442 = vpop.f32.mrf.mxu0
      %v3443 = vadd.f32 %v3354, %v3442
      %3444 = vmatmul.bf16.gmra.mxu0 %v2833
      %v3445 = vpop.f32.mrf.mxu0
      %v3446 = vadd.f32 %v3357, %v3445
      %v3447 = vpop.f32.mrf.mxu0
      %v3448 = vadd.f32 %v3359, %v3447
      %3449 = vmatmul.bf16.gmra.mxu0 %v2865
      %v3450 = vpop.f32.mrf.mxu0
      %v3451 = vadd.f32 %v3362, %v3450
      %v3452 = vpop.f32.mrf.mxu0
      %v3453 = vadd.f32 %v3364, %v3452
      %3454 = vmatmul.bf16.gmra.mxu0 %v2897
      %v3455 = vpop.f32.mrf.mxu0
      %v3456 = vadd.f32 %v3367, %v3455
      %v3457 = vpop.f32.mrf.mxu0
      %v3458 = vadd.f32 %v3369, %v3457
      %3459 = vmatmul.bf16.gmra.mxu0 %v2929
      %v3460 = vpop.f32.mrf.mxu0
      %v3461 = vadd.f32 %v3372, %v3460
      %v3462 = vpop.f32.mrf.mxu0
      %v3463 = vadd.f32 %v3374, %v3462
      %3464 = vmatmul.bf16.gmra.mxu0 %v2961
      %v3465 = vpop.f32.mrf.mxu0
      %v3466 = vadd.f32 %v3377, %v3465
      %v3467 = vpop.f32.mrf.mxu0
      %v3468 = vadd.f32 %v3379, %v3467
      %3469 = vdwg.mxu0
      %v3518 = vunpack.c.l.b16 %v1826
      %v3519 = vunpack.c.l.b16 %v1827
      %v3520 = vunpack.c.l.b16 %v1828
      %v3521 = vunpack.c.l.b16 %v1829
      %v3522 = vunpack.c.l.b16 %v1830
      %v3523 = vunpack.c.l.b16 %v1831
      %v3524 = vunpack.c.l.b16 %v1832
      %v3525 = vunpack.c.l.b16 %v1833
      %v3526 = vunpack.c.l.b16 %v1834
      %v3527 = vunpack.c.l.b16 %v1835
      %v3528 = vunpack.c.l.b16 %v1836
      %v3529 = vunpack.c.l.b16 %v1837
      %v3530 = vunpack.c.l.b16 %v1838
      %v3531 = vunpack.c.l.b16 %v1839
      %v3532 = vunpack.c.l.b16 %v1840
      %v3533 = vunpack.c.l.b16 %v1841
      %v3534 = vunpack.c.l.b16 %v1842
      %v3535 = vunpack.c.l.b16 %v1843
      %v3536 = vunpack.c.l.b16 %v1844
      %v3537 = vunpack.c.l.b16 %v1845
      %v3538 = vunpack.c.l.b16 %v1846
      %v3539 = vunpack.c.l.b16 %v1847
      %v3540 = vunpack.c.l.b16 %v1848
      %v3541 = vunpack.c.l.b16 %v1849
      %v3542 = vunpack.c.l.b16 %v1850
      %v3543 = vunpack.c.l.b16 %v1851
      %v3544 = vunpack.c.l.b16 %v1852
      %v3545 = vunpack.c.l.b16 %v1853
      %v3546 = vunpack.c.l.b16 %v1854
      %v3547 = vunpack.c.l.b16 %v1855
      %v3548 = vunpack.c.l.b16 %v1856
      %v3549 = vunpack.c.l.b16 %v1857
      %v3550 = vunpack.c.l.b16 %v1858
      %v3551 = vunpack.c.l.b16 %v1859
      %v3552 = vunpack.c.l.b16 %v1860
      %v3553 = vunpack.c.l.b16 %v1861
      %v3554 = vunpack.c.l.b16 %v1862
      %v3555 = vunpack.c.l.b16 %v1863
      %v3556 = vunpack.c.l.b16 %v1864
      %v3557 = vunpack.c.l.b16 %v1865
      %v3558 = vunpack.c.l.b16 %v1866
      %v3559 = vunpack.c.l.b16 %v1867
      %v3560 = vunpack.c.l.b16 %v1868
      %v3561 = vunpack.c.l.b16 %v1869
      %v3562 = vunpack.c.l.b16 %v1870
      %v3563 = vunpack.c.l.b16 %v1871
      %v3564 = vunpack.c.l.b16 %v1872
      %v3565 = vunpack.c.l.b16 %v1873
      %v3566 = vpack.c.b16 %v3519, %v3518
      %v3567 = vpack.c.b16 %v3521, %v3520
      %v3568 = vpack.c.b16 %v3523, %v3522
      %v3569 = vpack.c.b16 %v3525, %v3524
      %v3570 = vpack.c.b16 %v3527, %v3526
      %v3571 = vpack.c.b16 %v3529, %v3528
      %v3572 = vpack.c.b16 %v3531, %v3530
      %v3573 = vpack.c.b16 %v3533, %v3532
      %v3574 = vpack.c.b16 %v3535, %v3534
      %v3575 = vpack.c.b16 %v3537, %v3536
      %v3576 = vpack.c.b16 %v3539, %v3538
      %v3577 = vpack.c.b16 %v3541, %v3540
      %v3578 = vpack.c.b16 %v3543, %v3542
      %v3579 = vpack.c.b16 %v3545, %v3544
      %v3580 = vpack.c.b16 %v3547, %v3546
      %v3581 = vpack.c.b16 %v3549, %v3548
      %v3582 = vpack.c.b16 %v3551, %v3550
      %v3583 = vpack.c.b16 %v3553, %v3552
      %v3584 = vpack.c.b16 %v3555, %v3554
      %v3585 = vpack.c.b16 %v3557, %v3556
      %v3586 = vpack.c.b16 %v3559, %v3558
      %v3587 = vpack.c.b16 %v3561, %v3560
      %v3588 = vpack.c.b16 %v3563, %v3562
      %v3589 = vpack.c.b16 %v3565, %v3564
      %3614 = vmatpush.bf16.msra.mxu0 %v3573
      %3615 = vmatpush.bf16.msra.mxu0 %v3572
      %3616 = vmatpush.bf16.msra.mxu0 %v3571
      %3617 = vmatpush.bf16.msra.mxu0 %v3570
      %3618 = vmatpush.bf16.msra.mxu0 %v3569
      %3619 = vmatpush.bf16.msra.mxu0 %v3568
      %3620 = vmatpush.bf16.msra.mxu0 %v3567
      %3621 = vmatpush.bf16.msra.mxu0 %v3566
      %3622 = vmatmul.bf16.gmra.mxu0 %v1273
      %v3623 = vpop.f32.mrf.mxu0
      %v3624 = vadd.f32 %v3391, %v3623
      %v3625 = vpop.f32.mrf.mxu0
      %v3626 = vadd.f32 %v3393, %v3625
      %3627 = vmatmul.bf16.gmra.mxu0 %v1305
      %v3628 = vpop.f32.mrf.mxu0
      %v3629 = vadd.f32 %v3396, %v3628
      %v3630 = vpop.f32.mrf.mxu0
      %v3631 = vadd.f32 %v3398, %v3630
      %3632 = vmatmul.bf16.gmra.mxu0 %v1337
      %v3633 = vpop.f32.mrf.mxu0
      %v3634 = vadd.f32 %v3401, %v3633
      %v3635 = vpop.f32.mrf.mxu0
      %v3636 = vadd.f32 %v3403, %v3635
      %3637 = vmatmul.bf16.gmra.mxu0 %v1369
      %v3638 = vpop.f32.mrf.mxu0
      %v3639 = vadd.f32 %v3406, %v3638
      %v3640 = vpop.f32.mrf.mxu0
      %v3641 = vadd.f32 %v3408, %v3640
      %3642 = vmatmul.bf16.gmra.mxu0 %v1401
      %v3643 = vpop.f32.mrf.mxu0
      %v3644 = vadd.f32 %v3411, %v3643
      %v3645 = vpop.f32.mrf.mxu0
      %v3646 = vadd.f32 %v3413, %v3645
      %3647 = vmatmul.bf16.gmra.mxu0 %v1433
      %v3648 = vpop.f32.mrf.mxu0
      %v3649 = vadd.f32 %v3416, %v3648
      %v3650 = vpop.f32.mrf.mxu0
      %v3651 = vadd.f32 %v3418, %v3650
      %3652 = vmatmul.bf16.gmra.mxu0 %v1465
      %v3653 = vpop.f32.mrf.mxu0
      %v3654 = vadd.f32 %v3421, %v3653
      %v3655 = vpop.f32.mrf.mxu0
      %v3656 = vadd.f32 %v3423, %v3655
      %3657 = vmatmul.bf16.gmra.mxu0 %v1497
      %v3658 = vpop.f32.mrf.mxu0
      %v3659 = vadd.f32 %v3426, %v3658
      %v3660 = vpop.f32.mrf.mxu0
      %v3661 = vadd.f32 %v3428, %v3660
      %3662 = vmatmul.bf16.gmra.mxu0 %v1529
      %v3663 = vpop.f32.mrf.mxu0
      %v3664 = vadd.f32 %v3431, %v3663
      %v3665 = vpop.f32.mrf.mxu0
      %v3666 = vadd.f32 %v3433, %v3665
      %3667 = vmatmul.bf16.gmra.mxu0 %v1561
      %v3668 = vpop.f32.mrf.mxu0
      %v3669 = vadd.f32 %v3436, %v3668
      %v3670 = vpop.f32.mrf.mxu0
      %v3671 = vadd.f32 %v3438, %v3670
      %3672 = vmatmul.bf16.gmra.mxu0 %v1593
      %v3673 = vpop.f32.mrf.mxu0
      %v3674 = vadd.f32 %v3441, %v3673
      %v3675 = vpop.f32.mrf.mxu0
      %v3676 = vadd.f32 %v3443, %v3675
      %3677 = vmatmul.bf16.gmra.mxu0 %v1625
      %v3678 = vpop.f32.mrf.mxu0
      %v3679 = vadd.f32 %v3446, %v3678
      %v3680 = vpop.f32.mrf.mxu0
      %v3681 = vadd.f32 %v3448, %v3680
      %3682 = vmatmul.bf16.gmra.mxu0 %v1657
      %v3683 = vpop.f32.mrf.mxu0
      %v3684 = vadd.f32 %v3451, %v3683
      %v3685 = vpop.f32.mrf.mxu0
      %v3686 = vadd.f32 %v3453, %v3685
      %3687 = vmatmul.bf16.gmra.mxu0 %v1689
      %v3688 = vpop.f32.mrf.mxu0
      %v3689 = vadd.f32 %v3456, %v3688
      %v3690 = vpop.f32.mrf.mxu0
      %v3691 = vadd.f32 %v3458, %v3690
      %3692 = vmatmul.bf16.gmra.mxu0 %v1721
      %v3693 = vpop.f32.mrf.mxu0
      %v3694 = vadd.f32 %v3461, %v3693
      %v3695 = vpop.f32.mrf.mxu0
      %v3696 = vadd.f32 %v3463, %v3695
      %3697 = vmatmul.bf16.gmra.mxu0 %v1753
      %v3698 = vpop.f32.mrf.mxu0
      %v3699 = vadd.f32 %v3466, %v3698
      %v3700 = vpop.f32.mrf.mxu0
      %v3701 = vadd.f32 %v3468, %v3700
      %3702 = vdwg.mxu0
      %3703 = vmatpush.bf16.msra.mxu0 %v3581
      %3704 = vmatpush.bf16.msra.mxu0 %v3580
      %3705 = vmatpush.bf16.msra.mxu0 %v3579
      %3706 = vmatpush.bf16.msra.mxu0 %v3578
      %3707 = vmatpush.bf16.msra.mxu0 %v3577
      %3708 = vmatpush.bf16.msra.mxu0 %v3576
      %3709 = vmatpush.bf16.msra.mxu0 %v3575
      %3710 = vmatpush.bf16.msra.mxu0 %v3574
      %3711 = vmatmul.bf16.gmra.mxu0 %v1285
      %v3712 = vpop.f32.mrf.mxu0
      %v3713 = vadd.f32 %v3624, %v3712
      %v3714 = vpop.f32.mrf.mxu0
      %v3715 = vadd.f32 %v3626, %v3714
      %3716 = vmatmul.bf16.gmra.mxu0 %v1317
      %v3717 = vpop.f32.mrf.mxu0
      %v3718 = vadd.f32 %v3629, %v3717
      %v3719 = vpop.f32.mrf.mxu0
      %v3720 = vadd.f32 %v3631, %v3719
      %3721 = vmatmul.bf16.gmra.mxu0 %v1349
      %v3722 = vpop.f32.mrf.mxu0
      %v3723 = vadd.f32 %v3634, %v3722
      %v3724 = vpop.f32.mrf.mxu0
      %v3725 = vadd.f32 %v3636, %v3724
      %3726 = vmatmul.bf16.gmra.mxu0 %v1381
      %v3727 = vpop.f32.mrf.mxu0
      %v3728 = vadd.f32 %v3639, %v3727
      %v3729 = vpop.f32.mrf.mxu0
      %v3730 = vadd.f32 %v3641, %v3729
      %3731 = vmatmul.bf16.gmra.mxu0 %v1413
      %v3732 = vpop.f32.mrf.mxu0
      %v3733 = vadd.f32 %v3644, %v3732
      %v3734 = vpop.f32.mrf.mxu0
      %v3735 = vadd.f32 %v3646, %v3734
      %3736 = vmatmul.bf16.gmra.mxu0 %v1445
      %v3737 = vpop.f32.mrf.mxu0
      %v3738 = vadd.f32 %v3649, %v3737
      %v3739 = vpop.f32.mrf.mxu0
      %v3740 = vadd.f32 %v3651, %v3739
      %3741 = vmatmul.bf16.gmra.mxu0 %v1477
      %v3742 = vpop.f32.mrf.mxu0
      %v3743 = vadd.f32 %v3654, %v3742
      %v3744 = vpop.f32.mrf.mxu0
      %v3745 = vadd.f32 %v3656, %v3744
      %3746 = vmatmul.bf16.gmra.mxu0 %v1509
      %v3747 = vpop.f32.mrf.mxu0
      %v3748 = vadd.f32 %v3659, %v3747
      %v3749 = vpop.f32.mrf.mxu0
      %v3750 = vadd.f32 %v3661, %v3749
      %3751 = vmatmul.bf16.gmra.mxu0 %v1541
      %v3752 = vpop.f32.mrf.mxu0
      %v3753 = vadd.f32 %v3664, %v3752
      %v3754 = vpop.f32.mrf.mxu0
      %v3755 = vadd.f32 %v3666, %v3754
      %3756 = vmatmul.bf16.gmra.mxu0 %v1573
      %v3757 = vpop.f32.mrf.mxu0
      %v3758 = vadd.f32 %v3669, %v3757
      %v3759 = vpop.f32.mrf.mxu0
      %v3760 = vadd.f32 %v3671, %v3759
      %3761 = vmatmul.bf16.gmra.mxu0 %v1605
      %v3762 = vpop.f32.mrf.mxu0
      %v3763 = vadd.f32 %v3674, %v3762
      %v3764 = vpop.f32.mrf.mxu0
      %v3765 = vadd.f32 %v3676, %v3764
      %3766 = vmatmul.bf16.gmra.mxu0 %v1637
      %v3767 = vpop.f32.mrf.mxu0
      %v3768 = vadd.f32 %v3679, %v3767
      %v3769 = vpop.f32.mrf.mxu0
      %v3770 = vadd.f32 %v3681, %v3769
      %3771 = vmatmul.bf16.gmra.mxu0 %v1669
      %v3772 = vpop.f32.mrf.mxu0
      %v3773 = vadd.f32 %v3684, %v3772
      %v3774 = vpop.f32.mrf.mxu0
      %v3775 = vadd.f32 %v3686, %v3774
      %3776 = vmatmul.bf16.gmra.mxu0 %v1701
      %v3777 = vpop.f32.mrf.mxu0
      %v3778 = vadd.f32 %v3689, %v3777
      %v3779 = vpop.f32.mrf.mxu0
      %v3780 = vadd.f32 %v3691, %v3779
      %3781 = vmatmul.bf16.gmra.mxu0 %v1733
      %v3782 = vpop.f32.mrf.mxu0
      %v3783 = vadd.f32 %v3694, %v3782
      %v3784 = vpop.f32.mrf.mxu0
      %v3785 = vadd.f32 %v3696, %v3784
      %3786 = vmatmul.bf16.gmra.mxu0 %v1765
      %v3787 = vpop.f32.mrf.mxu0
      %v3788 = vadd.f32 %v3699, %v3787
      %v3789 = vpop.f32.mrf.mxu0
      %v3790 = vadd.f32 %v3701, %v3789
      %3791 = vdwg.mxu0
      %3792 = vmatpush.bf16.msra.mxu0 %v3589
      %3793 = vmatpush.bf16.msra.mxu0 %v3588
      %3794 = vmatpush.bf16.msra.mxu0 %v3587
      %3795 = vmatpush.bf16.msra.mxu0 %v3586
      %3796 = vmatpush.bf16.msra.mxu0 %v3585
      %3797 = vmatpush.bf16.msra.mxu0 %v3584
      %3798 = vmatpush.bf16.msra.mxu0 %v3583
      %3799 = vmatpush.bf16.msra.mxu0 %v3582
      %3800 = vmatmul.bf16.gmra.mxu0 %v1297
      %v3801 = vpop.f32.mrf.mxu0
      %v3802 = vadd.f32 %v3713, %v3801
      %v3803 = vpop.f32.mrf.mxu0
      %v3804 = vadd.f32 %v3715, %v3803
      %3805 = vmatmul.bf16.gmra.mxu0 %v1329
      %v3806 = vpop.f32.mrf.mxu0
      %v3807 = vadd.f32 %v3718, %v3806
      %v3808 = vpop.f32.mrf.mxu0
      %v3809 = vadd.f32 %v3720, %v3808
      %3810 = vmatmul.bf16.gmra.mxu0 %v1361
      %v3811 = vpop.f32.mrf.mxu0
      %v3812 = vadd.f32 %v3723, %v3811
      %v3813 = vpop.f32.mrf.mxu0
      %v3814 = vadd.f32 %v3725, %v3813
      %3815 = vmatmul.bf16.gmra.mxu0 %v1393
      %v3816 = vpop.f32.mrf.mxu0
      %v3817 = vadd.f32 %v3728, %v3816
      %v3818 = vpop.f32.mrf.mxu0
      %v3819 = vadd.f32 %v3730, %v3818
      %3820 = vmatmul.bf16.gmra.mxu0 %v1425
      %v3821 = vpop.f32.mrf.mxu0
      %v3822 = vadd.f32 %v3733, %v3821
      %v3823 = vpop.f32.mrf.mxu0
      %v3824 = vadd.f32 %v3735, %v3823
      %3825 = vmatmul.bf16.gmra.mxu0 %v1457
      %v3826 = vpop.f32.mrf.mxu0
      %v3827 = vadd.f32 %v3738, %v3826
      %v3828 = vpop.f32.mrf.mxu0
      %v3829 = vadd.f32 %v3740, %v3828
      %3830 = vmatmul.bf16.gmra.mxu0 %v1489
      %v3831 = vpop.f32.mrf.mxu0
      %v3832 = vadd.f32 %v3743, %v3831
      %v3833 = vpop.f32.mrf.mxu0
      %v3834 = vadd.f32 %v3745, %v3833
      %3835 = vmatmul.bf16.gmra.mxu0 %v1521
      %v3836 = vpop.f32.mrf.mxu0
      %v3837 = vadd.f32 %v3748, %v3836
      %v3838 = vpop.f32.mrf.mxu0
      %v3839 = vadd.f32 %v3750, %v3838
      %3840 = vmatmul.bf16.gmra.mxu0 %v1553
      %v3841 = vpop.f32.mrf.mxu0
      %v3842 = vadd.f32 %v3753, %v3841
      %v3843 = vpop.f32.mrf.mxu0
      %v3844 = vadd.f32 %v3755, %v3843
      %3845 = vmatmul.bf16.gmra.mxu0 %v1585
      %v3846 = vpop.f32.mrf.mxu0
      %v3847 = vadd.f32 %v3758, %v3846
      %v3848 = vpop.f32.mrf.mxu0
      %v3849 = vadd.f32 %v3760, %v3848
      %3850 = vmatmul.bf16.gmra.mxu0 %v1617
      %v3851 = vpop.f32.mrf.mxu0
      %v3852 = vadd.f32 %v3763, %v3851
      %v3853 = vpop.f32.mrf.mxu0
      %v3854 = vadd.f32 %v3765, %v3853
      %3855 = vmatmul.bf16.gmra.mxu0 %v1649
      %v3856 = vpop.f32.mrf.mxu0
      %v3857 = vadd.f32 %v3768, %v3856
      %v3858 = vpop.f32.mrf.mxu0
      %v3859 = vadd.f32 %v3770, %v3858
      %3860 = vmatmul.bf16.gmra.mxu0 %v1681
      %v3861 = vpop.f32.mrf.mxu0
      %v3862 = vadd.f32 %v3773, %v3861
      %v3863 = vpop.f32.mrf.mxu0
      %v3864 = vadd.f32 %v3775, %v3863
      %3865 = vmatmul.bf16.gmra.mxu0 %v1713
      %v3866 = vpop.f32.mrf.mxu0
      %v3867 = vadd.f32 %v3778, %v3866
      %v3868 = vpop.f32.mrf.mxu0
      %v3869 = vadd.f32 %v3780, %v3868
      %3870 = vmatmul.bf16.gmra.mxu0 %v1745
      %v3871 = vpop.f32.mrf.mxu0
      %v3872 = vadd.f32 %v3783, %v3871
      %v3873 = vpop.f32.mrf.mxu0
      %v3874 = vadd.f32 %v3785, %v3873
      %3875 = vmatmul.bf16.gmra.mxu0 %v1777
      %v3876 = vpop.f32.mrf.mxu0
      %v3877 = vadd.f32 %v3788, %v3876
      %v3878 = vpop.f32.mrf.mxu0
      %v3879 = vadd.f32 %v3790, %v3878
      %3880 = vdwg.mxu0
      %s3881 = scalar_lea.vmem [#allocation2], 24
      %v3882 = vld [vmem:[%s3881] sm:$0xf]
      %v3883 = vld [vmem:[%s3881 + $0x4] sm:$0xf]
      %v3884 = vld [vmem:[%s3881 + $0x8] sm:$0x1]
      %v3885 = vld [vmem:[%s3881 + $0xc] sm:$0xf]
      %v3886 = vld [vmem:[%s3881 + $0x10] sm:$0xf]
      %v3887 = vld [vmem:[%s3881 + $0x14] sm:$0x1]
      %v3888 = vld [vmem:[%s3881 + $0x18] sm:$0xf]
      %v3889 = vld [vmem:[%s3881 + $0x1c] sm:$0xf]
      %v3890 = vld [vmem:[%s3881 + $0x20] sm:$0x1]
      %v3891 = vld [vmem:[%s3881 + $0x24] sm:$0xf]
      %v3892 = vld [vmem:[%s3881 + $0x28] sm:$0xf]
      %v3893 = vld [vmem:[%s3881 + $0x2c] sm:$0x1]
      %v3894 = vld [vmem:[%s3881 + $0x30] sm:$0xf]
      %v3895 = vld [vmem:[%s3881 + $0x34] sm:$0xf]
      %v3896 = vld [vmem:[%s3881 + $0x38] sm:$0x1]
      %v3897 = vld [vmem:[%s3881 + $0x3c] sm:$0xf]
      %v3898 = vld [vmem:[%s3881 + $0x40] sm:$0xf]
      %v3899 = vld [vmem:[%s3881 + $0x44] sm:$0x1]
      %v3900 = vld [vmem:[%s3881 + $0x48] sm:$0xf]
      %v3901 = vld [vmem:[%s3881 + $0x4c] sm:$0xf]
      %v3902 = vld [vmem:[%s3881 + $0x50] sm:$0x1]
      %v3903 = vld [vmem:[%s3881 + $0x54] sm:$0xf]
      %v3904 = vld [vmem:[%s3881 + $0x58] sm:$0xf]
      %v3905 = vld [vmem:[%s3881 + $0x5c] sm:$0x1]
      %v3906 = vld [vmem:[%s3881 + $0x60] sm:$0xf]
      %v3907 = vld [vmem:[%s3881 + $0x64] sm:$0xf]
      %v3908 = vld [vmem:[%s3881 + $0x68] sm:$0x1]
      %v3909 = vld [vmem:[%s3881 + $0x6c] sm:$0xf]
      %v3910 = vld [vmem:[%s3881 + $0x70] sm:$0xf]
      %v3911 = vld [vmem:[%s3881 + $0x74] sm:$0x1]
      %v3912 = vld [vmem:[%s3881 + $0x78] sm:$0xf]
      %v3913 = vld [vmem:[%s3881 + $0x7c] sm:$0xf]
      %v3914 = vld [vmem:[%s3881 + $0x80] sm:$0x1]
      %v3915 = vld [vmem:[%s3881 + $0x84] sm:$0xf]
      %v3916 = vld [vmem:[%s3881 + $0x88] sm:$0xf]
      %v3917 = vld [vmem:[%s3881 + $0x8c] sm:$0x1]
      %v3918 = vld [vmem:[%s3881 + $0x90] sm:$0xf]
      %v3919 = vld [vmem:[%s3881 + $0x94] sm:$0xf]
      %v3920 = vld [vmem:[%s3881 + $0x98] sm:$0x1]
      %v3921 = vld [vmem:[%s3881 + $0x9c] sm:$0xf]
      %v3922 = vld [vmem:[%s3881 + $0xa0] sm:$0xf]
      %v3923 = vld [vmem:[%s3881 + $0xa4] sm:$0x1]
      %v3924 = vld [vmem:[%s3881 + $0xa8] sm:$0xf]
      %v3925 = vld [vmem:[%s3881 + $0xac] sm:$0xf]
      %v3926 = vld [vmem:[%s3881 + $0xb0] sm:$0x1]
      %v3927 = vld [vmem:[%s3881 + $0xb4] sm:$0xf]
      %v3928 = vld [vmem:[%s3881 + $0xb8] sm:$0xf]
      %v3929 = vld [vmem:[%s3881 + $0xbc] sm:$0x1]
      %v3930 = vld [vmem:[%s3881] sm:$0xe]
      %v3931 = vld [vmem:[%s3881 + $0xc] sm:$0xe]
      %v3932 = vld [vmem:[%s3881 + $0x18] sm:$0xe]
      %v3933 = vld [vmem:[%s3881 + $0x24] sm:$0xe]
      %v3934 = vld [vmem:[%s3881 + $0x30] sm:$0xe]
      %v3935 = vld [vmem:[%s3881 + $0x3c] sm:$0xe]
      %v3936 = vld [vmem:[%s3881 + $0x48] sm:$0xe]
      %v3937 = vld [vmem:[%s3881 + $0x54] sm:$0xe]
      %v3938 = vld [vmem:[%s3881 + $0x60] sm:$0xe]
      %v3939 = vld [vmem:[%s3881 + $0x6c] sm:$0xe]
      %v3940 = vld [vmem:[%s3881 + $0x78] sm:$0xe]
      %v3941 = vld [vmem:[%s3881 + $0x84] sm:$0xe]
      %v3942 = vld [vmem:[%s3881 + $0x90] sm:$0xe]
      %v3943 = vld [vmem:[%s3881 + $0x9c] sm:$0xe]
      %v3944 = vld [vmem:[%s3881 + $0xa8] sm:$0xe]
      %v3945 = vld [vmem:[%s3881 + $0xb4] sm:$0xe]
      %v3946 = vld [vmem:[%s3881 + $0x8] sm:$0x3]
      %v3947 = vld [vmem:[%s3881 + $0x14] sm:$0x3]
      %v3948 = vld [vmem:[%s3881 + $0x20] sm:$0x3]
      %v3949 = vld [vmem:[%s3881 + $0x2c] sm:$0x3]
      %v3950 = vld [vmem:[%s3881 + $0x38] sm:$0x3]
      %v3951 = vld [vmem:[%s3881 + $0x44] sm:$0x3]
      %v3952 = vld [vmem:[%s3881 + $0x50] sm:$0x3]
      %v3953 = vld [vmem:[%s3881 + $0x5c] sm:$0x3]
      %v3954 = vld [vmem:[%s3881 + $0x68] sm:$0x3]
      %v3955 = vld [vmem:[%s3881 + $0x74] sm:$0x3]
      %v3956 = vld [vmem:[%s3881 + $0x80] sm:$0x3]
      %v3957 = vld [vmem:[%s3881 + $0x8c] sm:$0x3]
      %v3958 = vld [vmem:[%s3881 + $0x98] sm:$0x3]
      %v3959 = vld [vmem:[%s3881 + $0xa4] sm:$0x3]
      %v3960 = vld [vmem:[%s3881 + $0xb0] sm:$0x3]
      %v3961 = vld [vmem:[%s3881 + $0xbc] sm:$0x3]
      %v4010 = vunpack.c.l.b16 %v3882
      %v4011 = vunpack.c.l.b16 %v3883
      %v4012 = vunpack.c.l.b16 %v3884
      %v4013 = vunpack.c.l.b16 %v3885
      %v4014 = vunpack.c.l.b16 %v3886
      %v4015 = vunpack.c.l.b16 %v3887
      %v4016 = vunpack.c.l.b16 %v3888
      %v4017 = vunpack.c.l.b16 %v3889
      %v4018 = vunpack.c.l.b16 %v3890
      %v4019 = vunpack.c.l.b16 %v3891
      %v4020 = vunpack.c.l.b16 %v3892
      %v4021 = vunpack.c.l.b16 %v3893
      %v4022 = vunpack.c.l.b16 %v3894
      %v4023 = vunpack.c.l.b16 %v3895
      %v4024 = vunpack.c.l.b16 %v3896
      %v4025 = vunpack.c.l.b16 %v3897
      %v4026 = vunpack.c.l.b16 %v3898
      %v4027 = vunpack.c.l.b16 %v3899
      %v4028 = vunpack.c.l.b16 %v3900
      %v4029 = vunpack.c.l.b16 %v3901
      %v4030 = vunpack.c.l.b16 %v3902
      %v4031 = vunpack.c.l.b16 %v3903
      %v4032 = vunpack.c.l.b16 %v3904
      %v4033 = vunpack.c.l.b16 %v3905
      %v4034 = vunpack.c.l.b16 %v3906
      %v4035 = vunpack.c.l.b16 %v3907
      %v4036 = vunpack.c.l.b16 %v3908
      %v4037 = vunpack.c.l.b16 %v3909
      %v4038 = vunpack.c.l.b16 %v3910
      %v4039 = vunpack.c.l.b16 %v3911
      %v4040 = vunpack.c.l.b16 %v3912
      %v4041 = vunpack.c.l.b16 %v3913
      %v4042 = vunpack.c.l.b16 %v3914
      %v4043 = vunpack.c.l.b16 %v3915
      %v4044 = vunpack.c.l.b16 %v3916
      %v4045 = vunpack.c.l.b16 %v3917
      %v4046 = vunpack.c.l.b16 %v3918
      %v4047 = vunpack.c.l.b16 %v3919
      %v4048 = vunpack.c.l.b16 %v3920
      %v4049 = vunpack.c.l.b16 %v3921
      %v4050 = vunpack.c.l.b16 %v3922
      %v4051 = vunpack.c.l.b16 %v3923
      %v4052 = vunpack.c.l.b16 %v3924
      %v4053 = vunpack.c.l.b16 %v3925
      %v4054 = vunpack.c.l.b16 %v3926
      %v4055 = vunpack.c.l.b16 %v3927
      %v4056 = vunpack.c.l.b16 %v3928
      %v4057 = vunpack.c.l.b16 %v3929
      %v4058 = vpack.c.b16 %v4011, %v4010
      %v4059 = vpack.c.b16 %v4012, %v4012
      %v4060 = vpack.c.b16 %v4014, %v4013
      %v4061 = vpack.c.b16 %v4015, %v4015
      %v4062 = vpack.c.b16 %v4017, %v4016
      %v4063 = vpack.c.b16 %v4018, %v4018
      %v4064 = vpack.c.b16 %v4020, %v4019
      %v4065 = vpack.c.b16 %v4021, %v4021
      %v4066 = vpack.c.b16 %v4023, %v4022
      %v4067 = vpack.c.b16 %v4024, %v4024
      %v4068 = vpack.c.b16 %v4026, %v4025
      %v4069 = vpack.c.b16 %v4027, %v4027
      %v4070 = vpack.c.b16 %v4029, %v4028
      %v4071 = vpack.c.b16 %v4030, %v4030
      %v4072 = vpack.c.b16 %v4032, %v4031
      %v4073 = vpack.c.b16 %v4033, %v4033
      %v4074 = vpack.c.b16 %v4035, %v4034
      %v4075 = vpack.c.b16 %v4036, %v4036
      %v4076 = vpack.c.b16 %v4038, %v4037
      %v4077 = vpack.c.b16 %v4039, %v4039
      %v4078 = vpack.c.b16 %v4041, %v4040
      %v4079 = vpack.c.b16 %v4042, %v4042
      %v4080 = vpack.c.b16 %v4044, %v4043
      %v4081 = vpack.c.b16 %v4045, %v4045
      %v4082 = vpack.c.b16 %v4047, %v4046
      %v4083 = vpack.c.b16 %v4048, %v4048
      %v4084 = vpack.c.b16 %v4050, %v4049
      %v4085 = vpack.c.b16 %v4051, %v4051
      %v4086 = vpack.c.b16 %v4053, %v4052
      %v4087 = vpack.c.b16 %v4054, %v4054
      %v4088 = vpack.c.b16 %v4056, %v4055
      %v4089 = vpack.c.b16 %v4057, %v4057
      %v4106 = vunpack.c.l.b16 %v3930
      %v4107 = vunpack.c.l.b16 %v3931
      %v4108 = vunpack.c.l.b16 %v3932
      %v4109 = vunpack.c.l.b16 %v3933
      %v4110 = vunpack.c.l.b16 %v3934
      %v4111 = vunpack.c.l.b16 %v3935
      %v4112 = vunpack.c.l.b16 %v3936
      %v4113 = vunpack.c.l.b16 %v3937
      %v4114 = vunpack.c.l.b16 %v3938
      %v4115 = vunpack.c.l.b16 %v3939
      %v4116 = vunpack.c.l.b16 %v3940
      %v4117 = vunpack.c.l.b16 %v3941
      %v4118 = vunpack.c.l.b16 %v3942
      %v4119 = vunpack.c.l.b16 %v3943
      %v4120 = vunpack.c.l.b16 %v3944
      %v4121 = vunpack.c.l.b16 %v3945
      %v4122 = vpack.c.b16 %v4011, %v4106
      %v4123 = vpack.c.b16 %v4014, %v4107
      %v4124 = vpack.c.b16 %v4017, %v4108
      %v4125 = vpack.c.b16 %v4020, %v4109
      %v4126 = vpack.c.b16 %v4023, %v4110
      %v4127 = vpack.c.b16 %v4026, %v4111
      %v4128 = vpack.c.b16 %v4029, %v4112
      %v4129 = vpack.c.b16 %v4032, %v4113
      %v4130 = vpack.c.b16 %v4035, %v4114
      %v4131 = vpack.c.b16 %v4038, %v4115
      %v4132 = vpack.c.b16 %v4041, %v4116
      %v4133 = vpack.c.b16 %v4044, %v4117
      %v4134 = vpack.c.b16 %v4047, %v4118
      %v4135 = vpack.c.b16 %v4050, %v4119
      %v4136 = vpack.c.b16 %v4053, %v4120
      %v4137 = vpack.c.b16 %v4056, %v4121
      %v4139 = vshrl.u32 %v4122, 16
      %v4141 = vshll.u32 %v4122, 16
      %v4143 = vrot.slane %v4141, 1
      %v4144 = vor.u32 %v4139, %v4143
      %v4146 = vshll.u32 %v4059, 16
      %v4148 = vrot.slane %v4146, 1
      %v4149 = vsel %vm944, %v4144, %v4148
      %v4150 = vshrl.u32 %v4059, 16
      %v4153 = vshrl.u32 %v4123, 16
      %v4155 = vshll.u32 %v4123, 16
      %v4157 = vrot.slane %v4155, 1
      %v4158 = vor.u32 %v4153, %v4157
      %v4160 = vshll.u32 %v4061, 16
      %v4162 = vrot.slane %v4160, 1
      %v4163 = vsel %vm944, %v4158, %v4162
      %v4164 = vshrl.u32 %v4061, 16
      %v4167 = vshrl.u32 %v4124, 16
      %v4169 = vshll.u32 %v4124, 16
      %v4171 = vrot.slane %v4169, 1
      %v4172 = vor.u32 %v4167, %v4171
      %v4174 = vshll.u32 %v4063, 16
      %v4176 = vrot.slane %v4174, 1
      %v4177 = vsel %vm944, %v4172, %v4176
      %v4178 = vshrl.u32 %v4063, 16
      %v4181 = vshrl.u32 %v4125, 16
      %v4183 = vshll.u32 %v4125, 16
      %v4185 = vrot.slane %v4183, 1
      %v4186 = vor.u32 %v4181, %v4185
      %v4188 = vshll.u32 %v4065, 16
      %v4190 = vrot.slane %v4188, 1
      %v4191 = vsel %vm944, %v4186, %v4190
      %v4192 = vshrl.u32 %v4065, 16
      %v4195 = vshrl.u32 %v4126, 16
      %v4197 = vshll.u32 %v4126, 16
      %v4199 = vrot.slane %v4197, 1
      %v4200 = vor.u32 %v4195, %v4199
      %v4202 = vshll.u32 %v4067, 16
      %v4204 = vrot.slane %v4202, 1
      %v4205 = vsel %vm944, %v4200, %v4204
      %v4206 = vshrl.u32 %v4067, 16
      %v4209 = vshrl.u32 %v4127, 16
      %v4211 = vshll.u32 %v4127, 16
      %v4213 = vrot.slane %v4211, 1
      %v4214 = vor.u32 %v4209, %v4213
      %v4216 = vshll.u32 %v4069, 16
      %v4218 = vrot.slane %v4216, 1
      %v4219 = vsel %vm944, %v4214, %v4218
      %v4220 = vshrl.u32 %v4069, 16
      %v4223 = vshrl.u32 %v4128, 16
      %v4225 = vshll.u32 %v4128, 16
      %v4227 = vrot.slane %v4225, 1
      %v4228 = vor.u32 %v4223, %v4227
      %v4230 = vshll.u32 %v4071, 16
      %v4232 = vrot.slane %v4230, 1
      %v4233 = vsel %vm944, %v4228, %v4232
      %v4234 = vshrl.u32 %v4071, 16
      %v4237 = vshrl.u32 %v4129, 16
      %v4239 = vshll.u32 %v4129, 16
      %v4241 = vrot.slane %v4239, 1
      %v4242 = vor.u32 %v4237, %v4241
      %v4244 = vshll.u32 %v4073, 16
      %v4246 = vrot.slane %v4244, 1
      %v4247 = vsel %vm944, %v4242, %v4246
      %v4248 = vshrl.u32 %v4073, 16
      %v4251 = vshrl.u32 %v4130, 16
      %v4253 = vshll.u32 %v4130, 16
      %v4255 = vrot.slane %v4253, 1
      %v4256 = vor.u32 %v4251, %v4255
      %v4258 = vshll.u32 %v4075, 16
      %v4260 = vrot.slane %v4258, 1
      %v4261 = vsel %vm944, %v4256, %v4260
      %v4262 = vshrl.u32 %v4075, 16
      %v4265 = vshrl.u32 %v4131, 16
      %v4267 = vshll.u32 %v4131, 16
      %v4269 = vrot.slane %v4267, 1
      %v4270 = vor.u32 %v4265, %v4269
      %v4272 = vshll.u32 %v4077, 16
      %v4274 = vrot.slane %v4272, 1
      %v4275 = vsel %vm944, %v4270, %v4274
      %v4276 = vshrl.u32 %v4077, 16
      %v4279 = vshrl.u32 %v4132, 16
      %v4281 = vshll.u32 %v4132, 16
      %v4283 = vrot.slane %v4281, 1
      %v4284 = vor.u32 %v4279, %v4283
      %v4286 = vshll.u32 %v4079, 16
      %v4288 = vrot.slane %v4286, 1
      %v4289 = vsel %vm944, %v4284, %v4288
      %v4290 = vshrl.u32 %v4079, 16
      %v4293 = vshrl.u32 %v4133, 16
      %v4295 = vshll.u32 %v4133, 16
      %v4297 = vrot.slane %v4295, 1
      %v4298 = vor.u32 %v4293, %v4297
      %v4300 = vshll.u32 %v4081, 16
      %v4302 = vrot.slane %v4300, 1
      %v4303 = vsel %vm944, %v4298, %v4302
      %v4304 = vshrl.u32 %v4081, 16
      %v4307 = vshrl.u32 %v4134, 16
      %v4309 = vshll.u32 %v4134, 16
      %v4311 = vrot.slane %v4309, 1
      %v4312 = vor.u32 %v4307, %v4311
      %v4314 = vshll.u32 %v4083, 16
      %v4316 = vrot.slane %v4314, 1
      %v4317 = vsel %vm944, %v4312, %v4316
      %v4318 = vshrl.u32 %v4083, 16
      %v4321 = vshrl.u32 %v4135, 16
      %v4323 = vshll.u32 %v4135, 16
      %v4325 = vrot.slane %v4323, 1
      %v4326 = vor.u32 %v4321, %v4325
      %v4328 = vshll.u32 %v4085, 16
      %v4330 = vrot.slane %v4328, 1
      %v4331 = vsel %vm944, %v4326, %v4330
      %v4332 = vshrl.u32 %v4085, 16
      %v4335 = vshrl.u32 %v4136, 16
      %v4337 = vshll.u32 %v4136, 16
      %v4339 = vrot.slane %v4337, 1
      %v4340 = vor.u32 %v4335, %v4339
      %v4342 = vshll.u32 %v4087, 16
      %v4344 = vrot.slane %v4342, 1
      %v4345 = vsel %vm944, %v4340, %v4344
      %v4346 = vshrl.u32 %v4087, 16
      %v4349 = vshrl.u32 %v4137, 16
      %v4351 = vshll.u32 %v4137, 16
      %v4353 = vrot.slane %v4351, 1
      %v4354 = vor.u32 %v4349, %v4353
      %v4356 = vshll.u32 %v4089, 16
      %v4358 = vrot.slane %v4356, 1
      %v4359 = vsel %vm944, %v4354, %v4358
      %v4360 = vshrl.u32 %v4089, 16
      %v4378 = vunpack.c.l.b16 %v3946
      %v4379 = vunpack.c.l.b16 %v3947
      %v4380 = vunpack.c.l.b16 %v3948
      %v4381 = vunpack.c.l.b16 %v3949
      %v4382 = vunpack.c.l.b16 %v3950
      %v4383 = vunpack.c.l.b16 %v3951
      %v4384 = vunpack.c.l.b16 %v3952
      %v4385 = vunpack.c.l.b16 %v3953
      %v4386 = vunpack.c.l.b16 %v3954
      %v4387 = vunpack.c.l.b16 %v3955
      %v4388 = vunpack.c.l.b16 %v3956
      %v4389 = vunpack.c.l.b16 %v3957
      %v4390 = vunpack.c.l.b16 %v3958
      %v4391 = vunpack.c.l.b16 %v3959
      %v4392 = vunpack.c.l.b16 %v3960
      %v4393 = vunpack.c.l.b16 %v3961
      %v4394 = vpack.c.b16 %v4378, %v4378
      %v4395 = vpack.c.b16 %v4379, %v4379
      %v4396 = vpack.c.b16 %v4380, %v4380
      %v4397 = vpack.c.b16 %v4381, %v4381
      %v4398 = vpack.c.b16 %v4382, %v4382
      %v4399 = vpack.c.b16 %v4383, %v4383
      %v4400 = vpack.c.b16 %v4384, %v4384
      %v4401 = vpack.c.b16 %v4385, %v4385
      %v4402 = vpack.c.b16 %v4386, %v4386
      %v4403 = vpack.c.b16 %v4387, %v4387
      %v4404 = vpack.c.b16 %v4388, %v4388
      %v4405 = vpack.c.b16 %v4389, %v4389
      %v4406 = vpack.c.b16 %v4390, %v4390
      %v4407 = vpack.c.b16 %v4391, %v4391
      %v4408 = vpack.c.b16 %v4392, %v4392
      %v4409 = vpack.c.b16 %v4393, %v4393
      %v4410 = vrot.slane %v4122, 1
      %v4411 = vrot.slane %v4394, 1
      %v4412 = vsel %vm1217, %v4410, %v4411
      %v4413 = vrot.slane %v4123, 1
      %v4414 = vrot.slane %v4395, 1
      %v4415 = vsel %vm1217, %v4413, %v4414
      %v4416 = vrot.slane %v4124, 1
      %v4417 = vrot.slane %v4396, 1
      %v4418 = vsel %vm1217, %v4416, %v4417
      %v4419 = vrot.slane %v4125, 1
      %v4420 = vrot.slane %v4397, 1
      %v4421 = vsel %vm1217, %v4419, %v4420
      %v4422 = vrot.slane %v4126, 1
      %v4423 = vrot.slane %v4398, 1
      %v4424 = vsel %vm1217, %v4422, %v4423
      %v4425 = vrot.slane %v4127, 1
      %v4426 = vrot.slane %v4399, 1
      %v4427 = vsel %vm1217, %v4425, %v4426
      %v4428 = vrot.slane %v4128, 1
      %v4429 = vrot.slane %v4400, 1
      %v4430 = vsel %vm1217, %v4428, %v4429
      %v4431 = vrot.slane %v4129, 1
      %v4432 = vrot.slane %v4401, 1
      %v4433 = vsel %vm1217, %v4431, %v4432
      %v4434 = vrot.slane %v4130, 1
      %v4435 = vrot.slane %v4402, 1
      %v4436 = vsel %vm1217, %v4434, %v4435
      %v4437 = vrot.slane %v4131, 1
      %v4438 = vrot.slane %v4403, 1
      %v4439 = vsel %vm1217, %v4437, %v4438
      %v4440 = vrot.slane %v4132, 1
      %v4441 = vrot.slane %v4404, 1
      %v4442 = vsel %vm1217, %v4440, %v4441
      %v4443 = vrot.slane %v4133, 1
      %v4444 = vrot.slane %v4405, 1
      %v4445 = vsel %vm1217, %v4443, %v4444
      %v4446 = vrot.slane %v4134, 1
      %v4447 = vrot.slane %v4406, 1
      %v4448 = vsel %vm1217, %v4446, %v4447
      %v4449 = vrot.slane %v4135, 1
      %v4450 = vrot.slane %v4407, 1
      %v4451 = vsel %vm1217, %v4449, %v4450
      %v4452 = vrot.slane %v4136, 1
      %v4453 = vrot.slane %v4408, 1
      %v4454 = vsel %vm1217, %v4452, %v4453
      %v4455 = vrot.slane %v4137, 1
      %v4456 = vrot.slane %v4409, 1
      %v4457 = vsel %vm1217, %v4455, %v4456
      %v4459 = vshrl.u32 %v4058, 16
      %v4461 = vshll.u32 %v4058, 16
      %v4463 = vrot.slane %v4461, 1
      %v4464 = vor.u32 %v4459, %v4463
      %v4465 = vsel %vm944, %v4464, %v4148
      %v4467 = vshrl.u32 %v4149, 16
      %v4469 = vshll.u32 %v4149, 16
      %v4471 = vrot.slane %v4469, 1
      %v4472 = vor.u32 %v4467, %v4471
      %v4474 = vshll.u32 %v4150, 16
      %v4476 = vrot.slane %v4474, 1
      %v4477 = vsel %vm944, %v4472, %v4476
      %v4479 = vshrl.u32 %v4412, 16
      %v4481 = vshll.u32 %v4412, 16
      %v4483 = vrot.slane %v4481, 1
      %v4484 = vor.u32 %v4479, %v4483
      %v4486 = vshll.u32 %v4411, 16
      %v4488 = vrot.slane %v4486, 1
      %v4489 = vsel %vm944, %v4484, %v4488
      %v4491 = vshrl.u32 %v4060, 16
      %v4493 = vshll.u32 %v4060, 16
      %v4495 = vrot.slane %v4493, 1
      %v4496 = vor.u32 %v4491, %v4495
      %v4497 = vsel %vm944, %v4496, %v4162
      %v4499 = vshrl.u32 %v4163, 16
      %v4501 = vshll.u32 %v4163, 16
      %v4503 = vrot.slane %v4501, 1
      %v4504 = vor.u32 %v4499, %v4503
      %v4506 = vshll.u32 %v4164, 16
      %v4508 = vrot.slane %v4506, 1
      %v4509 = vsel %vm944, %v4504, %v4508
      %v4511 = vshrl.u32 %v4415, 16
      %v4513 = vshll.u32 %v4415, 16
      %v4515 = vrot.slane %v4513, 1
      %v4516 = vor.u32 %v4511, %v4515
      %v4518 = vshll.u32 %v4414, 16
      %v4520 = vrot.slane %v4518, 1
      %v4521 = vsel %vm944, %v4516, %v4520
      %v4523 = vshrl.u32 %v4062, 16
      %v4525 = vshll.u32 %v4062, 16
      %v4527 = vrot.slane %v4525, 1
      %v4528 = vor.u32 %v4523, %v4527
      %v4529 = vsel %vm944, %v4528, %v4176
      %v4531 = vshrl.u32 %v4177, 16
      %v4533 = vshll.u32 %v4177, 16
      %v4535 = vrot.slane %v4533, 1
      %v4536 = vor.u32 %v4531, %v4535
      %v4538 = vshll.u32 %v4178, 16
      %v4540 = vrot.slane %v4538, 1
      %v4541 = vsel %vm944, %v4536, %v4540
      %v4543 = vshrl.u32 %v4418, 16
      %v4545 = vshll.u32 %v4418, 16
      %v4547 = vrot.slane %v4545, 1
      %v4548 = vor.u32 %v4543, %v4547
      %v4550 = vshll.u32 %v4417, 16
      %v4552 = vrot.slane %v4550, 1
      %v4553 = vsel %vm944, %v4548, %v4552
      %v4555 = vshrl.u32 %v4064, 16
      %v4557 = vshll.u32 %v4064, 16
      %v4559 = vrot.slane %v4557, 1
      %v4560 = vor.u32 %v4555, %v4559
      %v4561 = vsel %vm944, %v4560, %v4190
      %v4563 = vshrl.u32 %v4191, 16
      %v4565 = vshll.u32 %v4191, 16
      %v4567 = vrot.slane %v4565, 1
      %v4568 = vor.u32 %v4563, %v4567
      %v4570 = vshll.u32 %v4192, 16
      %v4572 = vrot.slane %v4570, 1
      %v4573 = vsel %vm944, %v4568, %v4572
      %v4575 = vshrl.u32 %v4421, 16
      %v4577 = vshll.u32 %v4421, 16
      %v4579 = vrot.slane %v4577, 1
      %v4580 = vor.u32 %v4575, %v4579
      %v4582 = vshll.u32 %v4420, 16
      %v4584 = vrot.slane %v4582, 1
      %v4585 = vsel %vm944, %v4580, %v4584
      %v4587 = vshrl.u32 %v4066, 16
      %v4589 = vshll.u32 %v4066, 16
      %v4591 = vrot.slane %v4589, 1
      %v4592 = vor.u32 %v4587, %v4591
      %v4593 = vsel %vm944, %v4592, %v4204
      %v4595 = vshrl.u32 %v4205, 16
      %v4597 = vshll.u32 %v4205, 16
      %v4599 = vrot.slane %v4597, 1
      %v4600 = vor.u32 %v4595, %v4599
      %v4602 = vshll.u32 %v4206, 16
      %v4604 = vrot.slane %v4602, 1
      %v4605 = vsel %vm944, %v4600, %v4604
      %v4607 = vshrl.u32 %v4424, 16
      %v4609 = vshll.u32 %v4424, 16
      %v4611 = vrot.slane %v4609, 1
      %v4612 = vor.u32 %v4607, %v4611
      %v4614 = vshll.u32 %v4423, 16
      %v4616 = vrot.slane %v4614, 1
      %v4617 = vsel %vm944, %v4612, %v4616
      %v4619 = vshrl.u32 %v4068, 16
      %v4621 = vshll.u32 %v4068, 16
      %v4623 = vrot.slane %v4621, 1
      %v4624 = vor.u32 %v4619, %v4623
      %v4625 = vsel %vm944, %v4624, %v4218
      %v4627 = vshrl.u32 %v4219, 16
      %v4629 = vshll.u32 %v4219, 16
      %v4631 = vrot.slane %v4629, 1
      %v4632 = vor.u32 %v4627, %v4631
      %v4634 = vshll.u32 %v4220, 16
      %v4636 = vrot.slane %v4634, 1
      %v4637 = vsel %vm944, %v4632, %v4636
      %v4639 = vshrl.u32 %v4427, 16
      %v4641 = vshll.u32 %v4427, 16
      %v4643 = vrot.slane %v4641, 1
      %v4644 = vor.u32 %v4639, %v4643
      %v4646 = vshll.u32 %v4426, 16
      %v4648 = vrot.slane %v4646, 1
      %v4649 = vsel %vm944, %v4644, %v4648
      %v4651 = vshrl.u32 %v4070, 16
      %v4653 = vshll.u32 %v4070, 16
      %v4655 = vrot.slane %v4653, 1
      %v4656 = vor.u32 %v4651, %v4655
      %v4657 = vsel %vm944, %v4656, %v4232
      %v4659 = vshrl.u32 %v4233, 16
      %v4661 = vshll.u32 %v4233, 16
      %v4663 = vrot.slane %v4661, 1
      %v4664 = vor.u32 %v4659, %v4663
      %v4666 = vshll.u32 %v4234, 16
      %v4668 = vrot.slane %v4666, 1
      %v4669 = vsel %vm944, %v4664, %v4668
      %v4671 = vshrl.u32 %v4430, 16
      %v4673 = vshll.u32 %v4430, 16
      %v4675 = vrot.slane %v4673, 1
      %v4676 = vor.u32 %v4671, %v4675
      %v4678 = vshll.u32 %v4429, 16
      %v4680 = vrot.slane %v4678, 1
      %v4681 = vsel %vm944, %v4676, %v4680
      %v4683 = vshrl.u32 %v4072, 16
      %v4685 = vshll.u32 %v4072, 16
      %v4687 = vrot.slane %v4685, 1
      %v4688 = vor.u32 %v4683, %v4687
      %v4689 = vsel %vm944, %v4688, %v4246
      %v4691 = vshrl.u32 %v4247, 16
      %v4693 = vshll.u32 %v4247, 16
      %v4695 = vrot.slane %v4693, 1
      %v4696 = vor.u32 %v4691, %v4695
      %v4698 = vshll.u32 %v4248, 16
      %v4700 = vrot.slane %v4698, 1
      %v4701 = vsel %vm944, %v4696, %v4700
      %v4703 = vshrl.u32 %v4433, 16
      %v4705 = vshll.u32 %v4433, 16
      %v4707 = vrot.slane %v4705, 1
      %v4708 = vor.u32 %v4703, %v4707
      %v4710 = vshll.u32 %v4432, 16
      %v4712 = vrot.slane %v4710, 1
      %v4713 = vsel %vm944, %v4708, %v4712
      %v4715 = vshrl.u32 %v4074, 16
      %v4717 = vshll.u32 %v4074, 16
      %v4719 = vrot.slane %v4717, 1
      %v4720 = vor.u32 %v4715, %v4719
      %v4721 = vsel %vm944, %v4720, %v4260
      %v4723 = vshrl.u32 %v4261, 16
      %v4725 = vshll.u32 %v4261, 16
      %v4727 = vrot.slane %v4725, 1
      %v4728 = vor.u32 %v4723, %v4727
      %v4730 = vshll.u32 %v4262, 16
      %v4732 = vrot.slane %v4730, 1
      %v4733 = vsel %vm944, %v4728, %v4732
      %v4735 = vshrl.u32 %v4436, 16
      %v4737 = vshll.u32 %v4436, 16
      %v4739 = vrot.slane %v4737, 1
      %v4740 = vor.u32 %v4735, %v4739
      %v4742 = vshll.u32 %v4435, 16
      %v4744 = vrot.slane %v4742, 1
      %v4745 = vsel %vm944, %v4740, %v4744
      %v4747 = vshrl.u32 %v4076, 16
      %v4749 = vshll.u32 %v4076, 16
      %v4751 = vrot.slane %v4749, 1
      %v4752 = vor.u32 %v4747, %v4751
      %v4753 = vsel %vm944, %v4752, %v4274
      %v4755 = vshrl.u32 %v4275, 16
      %v4757 = vshll.u32 %v4275, 16
      %v4759 = vrot.slane %v4757, 1
      %v4760 = vor.u32 %v4755, %v4759
      %v4762 = vshll.u32 %v4276, 16
      %v4764 = vrot.slane %v4762, 1
      %v4765 = vsel %vm944, %v4760, %v4764
      %v4767 = vshrl.u32 %v4439, 16
      %v4769 = vshll.u32 %v4439, 16
      %v4771 = vrot.slane %v4769, 1
      %v4772 = vor.u32 %v4767, %v4771
      %v4774 = vshll.u32 %v4438, 16
      %v4776 = vrot.slane %v4774, 1
      %v4777 = vsel %vm944, %v4772, %v4776
      %v4779 = vshrl.u32 %v4078, 16
      %v4781 = vshll.u32 %v4078, 16
      %v4783 = vrot.slane %v4781, 1
      %v4784 = vor.u32 %v4779, %v4783
      %v4785 = vsel %vm944, %v4784, %v4288
      %v4787 = vshrl.u32 %v4289, 16
      %v4789 = vshll.u32 %v4289, 16
      %v4791 = vrot.slane %v4789, 1
      %v4792 = vor.u32 %v4787, %v4791
      %v4794 = vshll.u32 %v4290, 16
      %v4796 = vrot.slane %v4794, 1
      %v4797 = vsel %vm944, %v4792, %v4796
      %v4799 = vshrl.u32 %v4442, 16
      %v4801 = vshll.u32 %v4442, 16
      %v4803 = vrot.slane %v4801, 1
      %v4804 = vor.u32 %v4799, %v4803
      %v4806 = vshll.u32 %v4441, 16
      %v4808 = vrot.slane %v4806, 1
      %v4809 = vsel %vm944, %v4804, %v4808
      %v4811 = vshrl.u32 %v4080, 16
      %v4813 = vshll.u32 %v4080, 16
      %v4815 = vrot.slane %v4813, 1
      %v4816 = vor.u32 %v4811, %v4815
      %v4817 = vsel %vm944, %v4816, %v4302
      %v4819 = vshrl.u32 %v4303, 16
      %v4821 = vshll.u32 %v4303, 16
      %v4823 = vrot.slane %v4821, 1
      %v4824 = vor.u32 %v4819, %v4823
      %v4826 = vshll.u32 %v4304, 16
      %v4828 = vrot.slane %v4826, 1
      %v4829 = vsel %vm944, %v4824, %v4828
      %v4831 = vshrl.u32 %v4445, 16
      %v4833 = vshll.u32 %v4445, 16
      %v4835 = vrot.slane %v4833, 1
      %v4836 = vor.u32 %v4831, %v4835
      %v4838 = vshll.u32 %v4444, 16
      %v4840 = vrot.slane %v4838, 1
      %v4841 = vsel %vm944, %v4836, %v4840
      %v4843 = vshrl.u32 %v4082, 16
      %v4845 = vshll.u32 %v4082, 16
      %v4847 = vrot.slane %v4845, 1
      %v4848 = vor.u32 %v4843, %v4847
      %v4849 = vsel %vm944, %v4848, %v4316
      %v4851 = vshrl.u32 %v4317, 16
      %v4853 = vshll.u32 %v4317, 16
      %v4855 = vrot.slane %v4853, 1
      %v4856 = vor.u32 %v4851, %v4855
      %v4858 = vshll.u32 %v4318, 16
      %v4860 = vrot.slane %v4858, 1
      %v4861 = vsel %vm944, %v4856, %v4860
      %v4863 = vshrl.u32 %v4448, 16
      %v4865 = vshll.u32 %v4448, 16
      %v4867 = vrot.slane %v4865, 1
      %v4868 = vor.u32 %v4863, %v4867
      %v4870 = vshll.u32 %v4447, 16
      %v4872 = vrot.slane %v4870, 1
      %v4873 = vsel %vm944, %v4868, %v4872
      %v4875 = vshrl.u32 %v4084, 16
      %v4877 = vshll.u32 %v4084, 16
      %v4879 = vrot.slane %v4877, 1
      %v4880 = vor.u32 %v4875, %v4879
      %v4881 = vsel %vm944, %v4880, %v4330
      %v4883 = vshrl.u32 %v4331, 16
      %v4885 = vshll.u32 %v4331, 16
      %v4887 = vrot.slane %v4885, 1
      %v4888 = vor.u32 %v4883, %v4887
      %v4890 = vshll.u32 %v4332, 16
      %v4892 = vrot.slane %v4890, 1
      %v4893 = vsel %vm944, %v4888, %v4892
      %v4895 = vshrl.u32 %v4451, 16
      %v4897 = vshll.u32 %v4451, 16
      %v4899 = vrot.slane %v4897, 1
      %v4900 = vor.u32 %v4895, %v4899
      %v4902 = vshll.u32 %v4450, 16
      %v4904 = vrot.slane %v4902, 1
      %v4905 = vsel %vm944, %v4900, %v4904
      %v4907 = vshrl.u32 %v4086, 16
      %v4909 = vshll.u32 %v4086, 16
      %v4911 = vrot.slane %v4909, 1
      %v4912 = vor.u32 %v4907, %v4911
      %v4913 = vsel %vm944, %v4912, %v4344
      %v4915 = vshrl.u32 %v4345, 16
      %v4917 = vshll.u32 %v4345, 16
      %v4919 = vrot.slane %v4917, 1
      %v4920 = vor.u32 %v4915, %v4919
      %v4922 = vshll.u32 %v4346, 16
      %v4924 = vrot.slane %v4922, 1
      %v4925 = vsel %vm944, %v4920, %v4924
      %v4927 = vshrl.u32 %v4454, 16
      %v4929 = vshll.u32 %v4454, 16
      %v4931 = vrot.slane %v4929, 1
      %v4932 = vor.u32 %v4927, %v4931
      %v4934 = vshll.u32 %v4453, 16
      %v4936 = vrot.slane %v4934, 1
      %v4937 = vsel %vm944, %v4932, %v4936
      %v4939 = vshrl.u32 %v4088, 16
      %v4941 = vshll.u32 %v4088, 16
      %v4943 = vrot.slane %v4941, 1
      %v4944 = vor.u32 %v4939, %v4943
      %v4945 = vsel %vm944, %v4944, %v4358
      %v4947 = vshrl.u32 %v4359, 16
      %v4949 = vshll.u32 %v4359, 16
      %v4951 = vrot.slane %v4949, 1
      %v4952 = vor.u32 %v4947, %v4951
      %v4954 = vshll.u32 %v4360, 16
      %v4956 = vrot.slane %v4954, 1
      %v4957 = vsel %vm944, %v4952, %v4956
      %v4959 = vshrl.u32 %v4457, 16
      %v4961 = vshll.u32 %v4457, 16
      %v4963 = vrot.slane %v4961, 1
      %v4964 = vor.u32 %v4959, %v4963
      %v4966 = vshll.u32 %v4456, 16
      %v4968 = vrot.slane %v4966, 1
      %v4969 = vsel %vm944, %v4964, %v4968
      %s5018 = scalar_lea.vmem %s3, 384
      %v5019 = vld [vmem:[%s5018] sm:$0xf]
      %v5020 = vld [vmem:[%s5018 + $0x4] sm:$0xf]
      %v5021 = vld [vmem:[%s5018 + $0x8] sm:$0xf]
      %v5022 = vld [vmem:[%s5018 + $0xc] sm:$0xf]
      %v5023 = vld [vmem:[%s5018 + $0x10] sm:$0xf]
      %v5024 = vld [vmem:[%s5018 + $0x14] sm:$0xf]
      %v5025 = vld [vmem:[%s5018 + $0x18] sm:$0xf]
      %v5026 = vld [vmem:[%s5018 + $0x1c] sm:$0xf]
      %v5027 = vld [vmem:[%s5018 + $0x20] sm:$0xf]
      %v5028 = vld [vmem:[%s5018 + $0x24] sm:$0xf]
      %v5029 = vld [vmem:[%s5018 + $0x28] sm:$0xf]
      %v5030 = vld [vmem:[%s5018 + $0x2c] sm:$0xf]
      %v5031 = vld [vmem:[%s5018 + $0x30] sm:$0xf]
      %v5032 = vld [vmem:[%s5018 + $0x34] sm:$0xf]
      %v5033 = vld [vmem:[%s5018 + $0x38] sm:$0xf]
      %v5034 = vld [vmem:[%s5018 + $0x3c] sm:$0xf]
      %v5035 = vld [vmem:[%s5018 + $0x40] sm:$0xf]
      %v5036 = vld [vmem:[%s5018 + $0x44] sm:$0xf]
      %v5037 = vld [vmem:[%s5018 + $0x48] sm:$0xf]
      %v5038 = vld [vmem:[%s5018 + $0x4c] sm:$0xf]
      %v5039 = vld [vmem:[%s5018 + $0x50] sm:$0xf]
      %v5040 = vld [vmem:[%s5018 + $0x54] sm:$0xf]
      %v5041 = vld [vmem:[%s5018 + $0x58] sm:$0xf]
      %v5042 = vld [vmem:[%s5018 + $0x5c] sm:$0xf]
      %v5043 = vld [vmem:[%s5018 + $0x60] sm:$0xf]
      %v5044 = vld [vmem:[%s5018 + $0x64] sm:$0xf]
      %v5045 = vld [vmem:[%s5018 + $0x68] sm:$0xf]
      %v5046 = vld [vmem:[%s5018 + $0x6c] sm:$0xf]
      %v5047 = vld [vmem:[%s5018 + $0x70] sm:$0xf]
      %v5048 = vld [vmem:[%s5018 + $0x74] sm:$0xf]
      %v5049 = vld [vmem:[%s5018 + $0x78] sm:$0xf]
      %v5050 = vld [vmem:[%s5018 + $0x7c] sm:$0xf]
      %v5051 = vld [vmem:[%s5018 + $0x80] sm:$0xf]
      %v5052 = vld [vmem:[%s5018 + $0x84] sm:$0xf]
      %v5053 = vld [vmem:[%s5018 + $0x88] sm:$0xf]
      %v5054 = vld [vmem:[%s5018 + $0x8c] sm:$0xf]
      %v5055 = vld [vmem:[%s5018 + $0x90] sm:$0xf]
      %v5056 = vld [vmem:[%s5018 + $0x94] sm:$0xf]
      %v5057 = vld [vmem:[%s5018 + $0x98] sm:$0xf]
      %v5058 = vld [vmem:[%s5018 + $0x9c] sm:$0xf]
      %v5059 = vld [vmem:[%s5018 + $0xa0] sm:$0xf]
      %v5060 = vld [vmem:[%s5018 + $0xa4] sm:$0xf]
      %v5061 = vld [vmem:[%s5018 + $0xa8] sm:$0xf]
      %v5062 = vld [vmem:[%s5018 + $0xac] sm:$0xf]
      %v5063 = vld [vmem:[%s5018 + $0xb0] sm:$0xf]
      %v5064 = vld [vmem:[%s5018 + $0xb4] sm:$0xf]
      %v5065 = vld [vmem:[%s5018 + $0xb8] sm:$0xf]
      %v5066 = vld [vmem:[%s5018 + $0xbc] sm:$0xf]
      %v5115 = vunpack.c.l.b16 %v5019
      %v5116 = vunpack.c.l.b16 %v5020
      %v5117 = vunpack.c.l.b16 %v5021
      %v5118 = vunpack.c.l.b16 %v5022
      %v5119 = vunpack.c.l.b16 %v5023
      %v5120 = vunpack.c.l.b16 %v5024
      %v5121 = vunpack.c.l.b16 %v5025
      %v5122 = vunpack.c.l.b16 %v5026
      %v5123 = vunpack.c.l.b16 %v5027
      %v5124 = vunpack.c.l.b16 %v5028
      %v5125 = vunpack.c.l.b16 %v5029
      %v5126 = vunpack.c.l.b16 %v5030
      %v5127 = vunpack.c.l.b16 %v5031
      %v5128 = vunpack.c.l.b16 %v5032
      %v5129 = vunpack.c.l.b16 %v5033
      %v5130 = vunpack.c.l.b16 %v5034
      %v5131 = vunpack.c.l.b16 %v5035
      %v5132 = vunpack.c.l.b16 %v5036
      %v5133 = vunpack.c.l.b16 %v5037
      %v5134 = vunpack.c.l.b16 %v5038
      %v5135 = vunpack.c.l.b16 %v5039
      %v5136 = vunpack.c.l.b16 %v5040
      %v5137 = vunpack.c.l.b16 %v5041
      %v5138 = vunpack.c.l.b16 %v5042
      %v5139 = vunpack.c.l.b16 %v5043
      %v5140 = vunpack.c.l.b16 %v5044
      %v5141 = vunpack.c.l.b16 %v5045
      %v5142 = vunpack.c.l.b16 %v5046
      %v5143 = vunpack.c.l.b16 %v5047
      %v5144 = vunpack.c.l.b16 %v5048
      %v5145 = vunpack.c.l.b16 %v5049
      %v5146 = vunpack.c.l.b16 %v5050
      %v5147 = vunpack.c.l.b16 %v5051
      %v5148 = vunpack.c.l.b16 %v5052
      %v5149 = vunpack.c.l.b16 %v5053
      %v5150 = vunpack.c.l.b16 %v5054
      %v5151 = vunpack.c.l.b16 %v5055
      %v5152 = vunpack.c.l.b16 %v5056
      %v5153 = vunpack.c.l.b16 %v5057
      %v5154 = vunpack.c.l.b16 %v5058
      %v5155 = vunpack.c.l.b16 %v5059
      %v5156 = vunpack.c.l.b16 %v5060
      %v5157 = vunpack.c.l.b16 %v5061
      %v5158 = vunpack.c.l.b16 %v5062
      %v5159 = vunpack.c.l.b16 %v5063
      %v5160 = vunpack.c.l.b16 %v5064
      %v5161 = vunpack.c.l.b16 %v5065
      %v5162 = vunpack.c.l.b16 %v5066
      %v5163 = vpack.c.b16 %v5116, %v5115
      %v5164 = vpack.c.b16 %v5118, %v5117
      %v5165 = vpack.c.b16 %v5120, %v5119
      %v5166 = vpack.c.b16 %v5122, %v5121
      %v5167 = vpack.c.b16 %v5124, %v5123
      %v5168 = vpack.c.b16 %v5126, %v5125
      %v5169 = vpack.c.b16 %v5128, %v5127
      %v5170 = vpack.c.b16 %v5130, %v5129
      %v5171 = vpack.c.b16 %v5132, %v5131
      %v5172 = vpack.c.b16 %v5134, %v5133
      %v5173 = vpack.c.b16 %v5136, %v5135
      %v5174 = vpack.c.b16 %v5138, %v5137
      %v5175 = vpack.c.b16 %v5140, %v5139
      %v5176 = vpack.c.b16 %v5142, %v5141
      %v5177 = vpack.c.b16 %v5144, %v5143
      %v5178 = vpack.c.b16 %v5146, %v5145
      %v5179 = vpack.c.b16 %v5148, %v5147
      %v5180 = vpack.c.b16 %v5150, %v5149
      %v5181 = vpack.c.b16 %v5152, %v5151
      %v5182 = vpack.c.b16 %v5154, %v5153
      %v5183 = vpack.c.b16 %v5156, %v5155
      %v5184 = vpack.c.b16 %v5158, %v5157
      %v5185 = vpack.c.b16 %v5160, %v5159
      %v5186 = vpack.c.b16 %v5162, %v5161
      %5211 = vmatpush.bf16.msra.mxu0 %v5170
      %5212 = vmatpush.bf16.msra.mxu0 %v5169
      %5213 = vmatpush.bf16.msra.mxu0 %v5168
      %5214 = vmatpush.bf16.msra.mxu0 %v5167
      %5215 = vmatpush.bf16.msra.mxu0 %v5166
      %5216 = vmatpush.bf16.msra.mxu0 %v5165
      %5217 = vmatpush.bf16.msra.mxu0 %v5164
      %5218 = vmatpush.bf16.msra.mxu0 %v5163
      %5219 = vmatmul.bf16.gmra.mxu0 %v4465
      %v5220 = vpop.f32.mrf.mxu0
      %v5221 = vadd.f32 0.0, %v5220
      %v5222 = vpop.f32.mrf.mxu0
      %v5223 = vadd.f32 0.0, %v5222
      %5224 = vmatmul.bf16.gmra.mxu0 %v4497
      %v5225 = vpop.f32.mrf.mxu0
      %v5226 = vadd.f32 0.0, %v5225
      %v5227 = vpop.f32.mrf.mxu0
      %v5228 = vadd.f32 0.0, %v5227
      %5229 = vmatmul.bf16.gmra.mxu0 %v4529
      %v5230 = vpop.f32.mrf.mxu0
      %v5231 = vadd.f32 0.0, %v5230
      %v5232 = vpop.f32.mrf.mxu0
      %v5233 = vadd.f32 0.0, %v5232
      %5234 = vmatmul.bf16.gmra.mxu0 %v4561
      %v5235 = vpop.f32.mrf.mxu0
      %v5236 = vadd.f32 0.0, %v5235
      %v5237 = vpop.f32.mrf.mxu0
      %v5238 = vadd.f32 0.0, %v5237
      %5239 = vmatmul.bf16.gmra.mxu0 %v4593
      %v5240 = vpop.f32.mrf.mxu0
      %v5241 = vadd.f32 0.0, %v5240
      %v5242 = vpop.f32.mrf.mxu0
      %v5243 = vadd.f32 0.0, %v5242
      %5244 = vmatmul.bf16.gmra.mxu0 %v4625
      %v5245 = vpop.f32.mrf.mxu0
      %v5246 = vadd.f32 0.0, %v5245
      %v5247 = vpop.f32.mrf.mxu0
      %v5248 = vadd.f32 0.0, %v5247
      %5249 = vmatmul.bf16.gmra.mxu0 %v4657
      %v5250 = vpop.f32.mrf.mxu0
      %v5251 = vadd.f32 0.0, %v5250
      %v5252 = vpop.f32.mrf.mxu0
      %v5253 = vadd.f32 0.0, %v5252
      %5254 = vmatmul.bf16.gmra.mxu0 %v4689
      %v5255 = vpop.f32.mrf.mxu0
      %v5256 = vadd.f32 0.0, %v5255
      %v5257 = vpop.f32.mrf.mxu0
      %v5258 = vadd.f32 0.0, %v5257
      %5259 = vmatmul.bf16.gmra.mxu0 %v4721
      %v5260 = vpop.f32.mrf.mxu0
      %v5261 = vadd.f32 0.0, %v5260
      %v5262 = vpop.f32.mrf.mxu0
      %v5263 = vadd.f32 0.0, %v5262
      %5264 = vmatmul.bf16.gmra.mxu0 %v4753
      %v5265 = vpop.f32.mrf.mxu0
      %v5266 = vadd.f32 0.0, %v5265
      %v5267 = vpop.f32.mrf.mxu0
      %v5268 = vadd.f32 0.0, %v5267
      %5269 = vmatmul.bf16.gmra.mxu0 %v4785
      %v5270 = vpop.f32.mrf.mxu0
      %v5271 = vadd.f32 0.0, %v5270
      %v5272 = vpop.f32.mrf.mxu0
      %v5273 = vadd.f32 0.0, %v5272
      %5274 = vmatmul.bf16.gmra.mxu0 %v4817
      %v5275 = vpop.f32.mrf.mxu0
      %v5276 = vadd.f32 0.0, %v5275
      %v5277 = vpop.f32.mrf.mxu0
      %v5278 = vadd.f32 0.0, %v5277
      %5279 = vmatmul.bf16.gmra.mxu0 %v4849
      %v5280 = vpop.f32.mrf.mxu0
      %v5281 = vadd.f32 0.0, %v5280
      %v5282 = vpop.f32.mrf.mxu0
      %v5283 = vadd.f32 0.0, %v5282
      %5284 = vmatmul.bf16.gmra.mxu0 %v4881
      %v5285 = vpop.f32.mrf.mxu0
      %v5286 = vadd.f32 0.0, %v5285
      %v5287 = vpop.f32.mrf.mxu0
      %v5288 = vadd.f32 0.0, %v5287
      %5289 = vmatmul.bf16.gmra.mxu0 %v4913
      %v5290 = vpop.f32.mrf.mxu0
      %v5291 = vadd.f32 0.0, %v5290
      %v5292 = vpop.f32.mrf.mxu0
      %v5293 = vadd.f32 0.0, %v5292
      %5294 = vmatmul.bf16.gmra.mxu0 %v4945
      %v5295 = vpop.f32.mrf.mxu0
      %v5296 = vadd.f32 0.0, %v5295
      %v5297 = vpop.f32.mrf.mxu0
      %v5298 = vadd.f32 0.0, %v5297
      %5299 = vdwg.mxu0
      %5300 = vmatpush.bf16.msra.mxu0 %v5178
      %5301 = vmatpush.bf16.msra.mxu0 %v5177
      %5302 = vmatpush.bf16.msra.mxu0 %v5176
      %5303 = vmatpush.bf16.msra.mxu0 %v5175
      %5304 = vmatpush.bf16.msra.mxu0 %v5174
      %5305 = vmatpush.bf16.msra.mxu0 %v5173
      %5306 = vmatpush.bf16.msra.mxu0 %v5172
      %5307 = vmatpush.bf16.msra.mxu0 %v5171
      %5308 = vmatmul.bf16.gmra.mxu0 %v4477
      %v5309 = vpop.f32.mrf.mxu0
      %v5310 = vadd.f32 %v5221, %v5309
      %v5311 = vpop.f32.mrf.mxu0
      %v5312 = vadd.f32 %v5223, %v5311
      %5313 = vmatmul.bf16.gmra.mxu0 %v4509
      %v5314 = vpop.f32.mrf.mxu0
      %v5315 = vadd.f32 %v5226, %v5314
      %v5316 = vpop.f32.mrf.mxu0
      %v5317 = vadd.f32 %v5228, %v5316
      %5318 = vmatmul.bf16.gmra.mxu0 %v4541
      %v5319 = vpop.f32.mrf.mxu0
      %v5320 = vadd.f32 %v5231, %v5319
      %v5321 = vpop.f32.mrf.mxu0
      %v5322 = vadd.f32 %v5233, %v5321
      %5323 = vmatmul.bf16.gmra.mxu0 %v4573
      %v5324 = vpop.f32.mrf.mxu0
      %v5325 = vadd.f32 %v5236, %v5324
      %v5326 = vpop.f32.mrf.mxu0
      %v5327 = vadd.f32 %v5238, %v5326
      %5328 = vmatmul.bf16.gmra.mxu0 %v4605
      %v5329 = vpop.f32.mrf.mxu0
      %v5330 = vadd.f32 %v5241, %v5329
      %v5331 = vpop.f32.mrf.mxu0
      %v5332 = vadd.f32 %v5243, %v5331
      %5333 = vmatmul.bf16.gmra.mxu0 %v4637
      %v5334 = vpop.f32.mrf.mxu0
      %v5335 = vadd.f32 %v5246, %v5334
      %v5336 = vpop.f32.mrf.mxu0
      %v5337 = vadd.f32 %v5248, %v5336
      %5338 = vmatmul.bf16.gmra.mxu0 %v4669
      %v5339 = vpop.f32.mrf.mxu0
      %v5340 = vadd.f32 %v5251, %v5339
      %v5341 = vpop.f32.mrf.mxu0
      %v5342 = vadd.f32 %v5253, %v5341
      %5343 = vmatmul.bf16.gmra.mxu0 %v4701
      %v5344 = vpop.f32.mrf.mxu0
      %v5345 = vadd.f32 %v5256, %v5344
      %v5346 = vpop.f32.mrf.mxu0
      %v5347 = vadd.f32 %v5258, %v5346
      %5348 = vmatmul.bf16.gmra.mxu0 %v4733
      %v5349 = vpop.f32.mrf.mxu0
      %v5350 = vadd.f32 %v5261, %v5349
      %v5351 = vpop.f32.mrf.mxu0
      %v5352 = vadd.f32 %v5263, %v5351
      %5353 = vmatmul.bf16.gmra.mxu0 %v4765
      %v5354 = vpop.f32.mrf.mxu0
      %v5355 = vadd.f32 %v5266, %v5354
      %v5356 = vpop.f32.mrf.mxu0
      %v5357 = vadd.f32 %v5268, %v5356
      %5358 = vmatmul.bf16.gmra.mxu0 %v4797
      %v5359 = vpop.f32.mrf.mxu0
      %v5360 = vadd.f32 %v5271, %v5359
      %v5361 = vpop.f32.mrf.mxu0
      %v5362 = vadd.f32 %v5273, %v5361
      %5363 = vmatmul.bf16.gmra.mxu0 %v4829
      %v5364 = vpop.f32.mrf.mxu0
      %v5365 = vadd.f32 %v5276, %v5364
      %v5366 = vpop.f32.mrf.mxu0
      %v5367 = vadd.f32 %v5278, %v5366
      %5368 = vmatmul.bf16.gmra.mxu0 %v4861
      %v5369 = vpop.f32.mrf.mxu0
      %v5370 = vadd.f32 %v5281, %v5369
      %v5371 = vpop.f32.mrf.mxu0
      %v5372 = vadd.f32 %v5283, %v5371
      %5373 = vmatmul.bf16.gmra.mxu0 %v4893
      %v5374 = vpop.f32.mrf.mxu0
      %v5375 = vadd.f32 %v5286, %v5374
      %v5376 = vpop.f32.mrf.mxu0
      %v5377 = vadd.f32 %v5288, %v5376
      %5378 = vmatmul.bf16.gmra.mxu0 %v4925
      %v5379 = vpop.f32.mrf.mxu0
      %v5380 = vadd.f32 %v5291, %v5379
      %v5381 = vpop.f32.mrf.mxu0
      %v5382 = vadd.f32 %v5293, %v5381
      %5383 = vmatmul.bf16.gmra.mxu0 %v4957
      %v5384 = vpop.f32.mrf.mxu0
      %v5385 = vadd.f32 %v5296, %v5384
      %v5386 = vpop.f32.mrf.mxu0
      %v5387 = vadd.f32 %v5298, %v5386
      %5388 = vdwg.mxu0
      %5389 = vmatpush.bf16.msra.mxu0 %v5186
      %5390 = vmatpush.bf16.msra.mxu0 %v5185
      %5391 = vmatpush.bf16.msra.mxu0 %v5184
      %5392 = vmatpush.bf16.msra.mxu0 %v5183
      %5393 = vmatpush.bf16.msra.mxu0 %v5182
      %5394 = vmatpush.bf16.msra.mxu0 %v5181
      %5395 = vmatpush.bf16.msra.mxu0 %v5180
      %5396 = vmatpush.bf16.msra.mxu0 %v5179
      %5397 = vmatmul.bf16.gmra.mxu0 %v4489
      %v5398 = vpop.f32.mrf.mxu0
      %v5399 = vadd.f32 %v5310, %v5398
      %v5400 = vpop.f32.mrf.mxu0
      %v5401 = vadd.f32 %v5312, %v5400
      %5402 = vmatmul.bf16.gmra.mxu0 %v4521
      %v5403 = vpop.f32.mrf.mxu0
      %v5404 = vadd.f32 %v5315, %v5403
      %v5405 = vpop.f32.mrf.mxu0
      %v5406 = vadd.f32 %v5317, %v5405
      %5407 = vmatmul.bf16.gmra.mxu0 %v4553
      %v5408 = vpop.f32.mrf.mxu0
      %v5409 = vadd.f32 %v5320, %v5408
      %v5410 = vpop.f32.mrf.mxu0
      %v5411 = vadd.f32 %v5322, %v5410
      %5412 = vmatmul.bf16.gmra.mxu0 %v4585
      %v5413 = vpop.f32.mrf.mxu0
      %v5414 = vadd.f32 %v5325, %v5413
      %v5415 = vpop.f32.mrf.mxu0
      %v5416 = vadd.f32 %v5327, %v5415
      %5417 = vmatmul.bf16.gmra.mxu0 %v4617
      %v5418 = vpop.f32.mrf.mxu0
      %v5419 = vadd.f32 %v5330, %v5418
      %v5420 = vpop.f32.mrf.mxu0
      %v5421 = vadd.f32 %v5332, %v5420
      %5422 = vmatmul.bf16.gmra.mxu0 %v4649
      %v5423 = vpop.f32.mrf.mxu0
      %v5424 = vadd.f32 %v5335, %v5423
      %v5425 = vpop.f32.mrf.mxu0
      %v5426 = vadd.f32 %v5337, %v5425
      %5427 = vmatmul.bf16.gmra.mxu0 %v4681
      %v5428 = vpop.f32.mrf.mxu0
      %v5429 = vadd.f32 %v5340, %v5428
      %v5430 = vpop.f32.mrf.mxu0
      %v5431 = vadd.f32 %v5342, %v5430
      %5432 = vmatmul.bf16.gmra.mxu0 %v4713
      %v5433 = vpop.f32.mrf.mxu0
      %v5434 = vadd.f32 %v5345, %v5433
      %v5435 = vpop.f32.mrf.mxu0
      %v5436 = vadd.f32 %v5347, %v5435
      %5437 = vmatmul.bf16.gmra.mxu0 %v4745
      %v5438 = vpop.f32.mrf.mxu0
      %v5439 = vadd.f32 %v5350, %v5438
      %v5440 = vpop.f32.mrf.mxu0
      %v5441 = vadd.f32 %v5352, %v5440
      %5442 = vmatmul.bf16.gmra.mxu0 %v4777
      %v5443 = vpop.f32.mrf.mxu0
      %v5444 = vadd.f32 %v5355, %v5443
      %v5445 = vpop.f32.mrf.mxu0
      %v5446 = vadd.f32 %v5357, %v5445
      %5447 = vmatmul.bf16.gmra.mxu0 %v4809
      %v5448 = vpop.f32.mrf.mxu0
      %v5449 = vadd.f32 %v5360, %v5448
      %v5450 = vpop.f32.mrf.mxu0
      %v5451 = vadd.f32 %v5362, %v5450
      %5452 = vmatmul.bf16.gmra.mxu0 %v4841
      %v5453 = vpop.f32.mrf.mxu0
      %v5454 = vadd.f32 %v5365, %v5453
      %v5455 = vpop.f32.mrf.mxu0
      %v5456 = vadd.f32 %v5367, %v5455
      %5457 = vmatmul.bf16.gmra.mxu0 %v4873
      %v5458 = vpop.f32.mrf.mxu0
      %v5459 = vadd.f32 %v5370, %v5458
      %v5460 = vpop.f32.mrf.mxu0
      %v5461 = vadd.f32 %v5372, %v5460
      %5462 = vmatmul.bf16.gmra.mxu0 %v4905
      %v5463 = vpop.f32.mrf.mxu0
      %v5464 = vadd.f32 %v5375, %v5463
      %v5465 = vpop.f32.mrf.mxu0
      %v5466 = vadd.f32 %v5377, %v5465
      %5467 = vmatmul.bf16.gmra.mxu0 %v4937
      %v5468 = vpop.f32.mrf.mxu0
      %v5469 = vadd.f32 %v5380, %v5468
      %v5470 = vpop.f32.mrf.mxu0
      %v5471 = vadd.f32 %v5382, %v5470
      %5472 = vmatmul.bf16.gmra.mxu0 %v4969
      %v5473 = vpop.f32.mrf.mxu0
      %v5474 = vadd.f32 %v5385, %v5473
      %v5475 = vpop.f32.mrf.mxu0
      %v5476 = vadd.f32 %v5387, %v5475
      %5477 = vdwg.mxu0
      %v5478 = vadd.f32 %v3802, %v5399
      %v5479 = vadd.f32 %v3804, %v5401
      %v5480 = vadd.f32 %v3807, %v5404
      %v5481 = vadd.f32 %v3809, %v5406
      %v5482 = vadd.f32 %v3812, %v5409
      %v5483 = vadd.f32 %v3814, %v5411
      %v5484 = vadd.f32 %v3817, %v5414
      %v5485 = vadd.f32 %v3819, %v5416
      %v5486 = vadd.f32 %v3822, %v5419
      %v5487 = vadd.f32 %v3824, %v5421
      %v5488 = vadd.f32 %v3827, %v5424
      %v5489 = vadd.f32 %v3829, %v5426
      %v5490 = vadd.f32 %v3832, %v5429
      %v5491 = vadd.f32 %v3834, %v5431
      %v5492 = vadd.f32 %v3837, %v5434
      %v5493 = vadd.f32 %v3839, %v5436
      %v5494 = vadd.f32 %v3842, %v5439
      %v5495 = vadd.f32 %v3844, %v5441
      %v5496 = vadd.f32 %v3847, %v5444
      %v5497 = vadd.f32 %v3849, %v5446
      %v5498 = vadd.f32 %v3852, %v5449
      %v5499 = vadd.f32 %v3854, %v5451
      %v5500 = vadd.f32 %v3857, %v5454
      %v5501 = vadd.f32 %v3859, %v5456
      %v5502 = vadd.f32 %v3862, %v5459
      %v5503 = vadd.f32 %v3864, %v5461
      %v5504 = vadd.f32 %v3867, %v5464
      %v5505 = vadd.f32 %v3869, %v5466
      %v5506 = vadd.f32 %v3872, %v5469
      %v5507 = vadd.f32 %v3874, %v5471
      %v5508 = vadd.f32 %v3877, %v5474
      %v5509 = vadd.f32 %v3879, %v5476
      %v5510 = vpack.c.bf16 %v5478, %v5478
      %v5511 = vpack.c.bf16 %v5479, %v5479
      %v5512 = vpack.c.bf16 %v5480, %v5480
      %v5513 = vpack.c.bf16 %v5481, %v5481
      %v5514 = vpack.c.bf16 %v5482, %v5482
      %v5515 = vpack.c.bf16 %v5483, %v5483
      %v5516 = vpack.c.bf16 %v5484, %v5484
      %v5517 = vpack.c.bf16 %v5485, %v5485
      %v5518 = vpack.c.bf16 %v5486, %v5486
      %v5519 = vpack.c.bf16 %v5487, %v5487
      %v5520 = vpack.c.bf16 %v5488, %v5488
      %v5521 = vpack.c.bf16 %v5489, %v5489
      %v5522 = vpack.c.bf16 %v5490, %v5490
      %v5523 = vpack.c.bf16 %v5491, %v5491
      %v5524 = vpack.c.bf16 %v5492, %v5492
      %v5525 = vpack.c.bf16 %v5493, %v5493
      %v5526 = vpack.c.bf16 %v5494, %v5494
      %v5527 = vpack.c.bf16 %v5495, %v5495
      %v5528 = vpack.c.bf16 %v5496, %v5496
      %v5529 = vpack.c.bf16 %v5497, %v5497
      %v5530 = vpack.c.bf16 %v5498, %v5498
      %v5531 = vpack.c.bf16 %v5499, %v5499
      %v5532 = vpack.c.bf16 %v5500, %v5500
      %v5533 = vpack.c.bf16 %v5501, %v5501
      %v5534 = vpack.c.bf16 %v5502, %v5502
      %v5535 = vpack.c.bf16 %v5503, %v5503
      %v5536 = vpack.c.bf16 %v5504, %v5504
      %v5537 = vpack.c.bf16 %v5505, %v5505
      %v5538 = vpack.c.bf16 %v5506, %v5506
      %v5539 = vpack.c.bf16 %v5507, %v5507
      %v5540 = vpack.c.bf16 %v5508, %v5508
      %v5541 = vpack.c.bf16 %v5509, %v5509
      %5542 = vst [vmem:[%s231] sm:$0xf] %v5510
      %5543 = vst [vmem:[%s231 + $0x4] sm:$0xf] %v5511
      %5544 = vst [vmem:[%s231 + $0x8] sm:$0xf] %v5512
      %5545 = vst [vmem:[%s231 + $0xc] sm:$0xf] %v5513
      %5546 = vst [vmem:[%s231 + $0x10] sm:$0xf] %v5514
      %5547 = vst [vmem:[%s231 + $0x14] sm:$0xf] %v5515
      %5548 = vst [vmem:[%s231 + $0x18] sm:$0xf] %v5516
      %5549 = vst [vmem:[%s231 + $0x1c] sm:$0xf] %v5517
      %5550 = vst [vmem:[%s231 + $0x20] sm:$0xf] %v5518
      %5551 = vst [vmem:[%s231 + $0x24] sm:$0xf] %v5519
      %5552 = vst [vmem:[%s231 + $0x28] sm:$0xf] %v5520
      %5553 = vst [vmem:[%s231 + $0x2c] sm:$0xf] %v5521
      %5554 = vst [vmem:[%s231 + $0x30] sm:$0xf] %v5522
      %5555 = vst [vmem:[%s231 + $0x34] sm:$0xf] %v5523
      %5556 = vst [vmem:[%s231 + $0x38] sm:$0xf] %v5524
      %5557 = vst [vmem:[%s231 + $0x3c] sm:$0xf] %v5525
      %5558 = vst [vmem:[%s231 + $0x40] sm:$0xf] %v5526
      %5559 = vst [vmem:[%s231 + $0x44] sm:$0xf] %v5527
      %5560 = vst [vmem:[%s231 + $0x48] sm:$0xf] %v5528
      %5561 = vst [vmem:[%s231 + $0x4c] sm:$0xf] %v5529
      %5562 = vst [vmem:[%s231 + $0x50] sm:$0xf] %v5530
      %5563 = vst [vmem:[%s231 + $0x54] sm:$0xf] %v5531
      %5564 = vst [vmem:[%s231 + $0x58] sm:$0xf] %v5532
      %5565 = vst [vmem:[%s231 + $0x5c] sm:$0xf] %v5533
      %5566 = vst [vmem:[%s231 + $0x60] sm:$0xf] %v5534
      %5567 = vst [vmem:[%s231 + $0x64] sm:$0xf] %v5535
      %5568 = vst [vmem:[%s231 + $0x68] sm:$0xf] %v5536
      %5569 = vst [vmem:[%s231 + $0x6c] sm:$0xf] %v5537
      %5570 = vst [vmem:[%s231 + $0x70] sm:$0xf] %v5538
      %5571 = vst [vmem:[%s231 + $0x74] sm:$0xf] %v5539
      %5572 = vst [vmem:[%s231 + $0x78] sm:$0xf] %v5540
      %5573 = vst [vmem:[%s231 + $0x7c] sm:$0xf] %v5541
      %v5574 = vadd.f32 %v5478, %v5479
      %v5575 = vadd.f32 %v5574, %v5480
      %v5576 = vadd.f32 %v5575, %v5481
      %v5577 = vadd.f32 %v5576, %v5482
      %v5578 = vadd.f32 %v5577, %v5483
      %v5579 = vadd.f32 %v5578, %v5484
      %v5580 = vadd.f32 %v5579, %v5485
      %v5581 = vadd.f32 %v5580, %v5486
      %v5582 = vadd.f32 %v5581, %v5487
      %v5583 = vadd.f32 %v5582, %v5488
      %v5584 = vadd.f32 %v5583, %v5489
      %v5585 = vadd.f32 %v5584, %v5490
      %v5586 = vadd.f32 %v5585, %v5491
      %v5587 = vadd.f32 %v5586, %v5492
      %v5588 = vadd.f32 %v5587, %v5493
      %v5589 = vadd.f32 %v5588, %v5494
      %v5590 = vadd.f32 %v5589, %v5495
      %v5591 = vadd.f32 %v5590, %v5496
      %v5592 = vadd.f32 %v5591, %v5497
      %v5593 = vadd.f32 %v5592, %v5498
      %v5594 = vadd.f32 %v5593, %v5499
      %v5595 = vadd.f32 %v5594, %v5500
      %v5596 = vadd.f32 %v5595, %v5501
      %v5597 = vadd.f32 %v5596, %v5502
      %v5598 = vadd.f32 %v5597, %v5503
      %v5599 = vadd.f32 %v5598, %v5504
      %v5600 = vadd.f32 %v5599, %v5505
      %v5601 = vadd.f32 %v5600, %v5506
      %v5602 = vadd.f32 %v5601, %v5507
      %v5603 = vadd.f32 %v5602, %v5508
      %v5604 = vadd.f32 %v5603, %v5509
      %v5605 = vrot.slane %v5604, 4
      %v5606 = vadd.f32 %v5604, %v5605
      %v5607 = vrot.slane %v5606, 2
      %v5608 = vadd.f32 %v5606, %v5607
      %v5609 = vrot.slane %v5608, 1
      %v5610 = vadd.f32 %v5608, %v5609
      %5611 = vst [vmem:[%s235] sm:$0x1] %v5610
      %v5612 = vmul.f32 %v5478, %v5478
      %v5613 = vmul.f32 %v5479, %v5479
      %v5614 = vmul.f32 %v5480, %v5480
      %v5615 = vmul.f32 %v5481, %v5481
      %v5616 = vmul.f32 %v5482, %v5482
      %v5617 = vmul.f32 %v5483, %v5483
      %v5618 = vmul.f32 %v5484, %v5484
      %v5619 = vmul.f32 %v5485, %v5485
      %v5620 = vmul.f32 %v5486, %v5486
      %v5621 = vmul.f32 %v5487, %v5487
      %v5622 = vmul.f32 %v5488, %v5488
      %v5623 = vmul.f32 %v5489, %v5489
      %v5624 = vmul.f32 %v5490, %v5490
      %v5625 = vmul.f32 %v5491, %v5491
      %v5626 = vmul.f32 %v5492, %v5492
      %v5627 = vmul.f32 %v5493, %v5493
      %v5628 = vmul.f32 %v5494, %v5494
      %v5629 = vmul.f32 %v5495, %v5495
      %v5630 = vmul.f32 %v5496, %v5496
      %v5631 = vmul.f32 %v5497, %v5497
      %v5632 = vmul.f32 %v5498, %v5498
      %v5633 = vmul.f32 %v5499, %v5499
      %v5634 = vmul.f32 %v5500, %v5500
      %v5635 = vmul.f32 %v5501, %v5501
      %v5636 = vmul.f32 %v5502, %v5502
      %v5637 = vmul.f32 %v5503, %v5503
      %v5638 = vmul.f32 %v5504, %v5504
      %v5639 = vmul.f32 %v5505, %v5505
      %v5640 = vmul.f32 %v5506, %v5506
      %v5641 = vmul.f32 %v5507, %v5507
      %v5642 = vmul.f32 %v5508, %v5508
      %v5643 = vmul.f32 %v5509, %v5509
      %v5644 = vadd.f32 %v5612, %v5613
      %v5645 = vadd.f32 %v5644, %v5614
      %v5646 = vadd.f32 %v5645, %v5615
      %v5647 = vadd.f32 %v5646, %v5616
      %v5648 = vadd.f32 %v5647, %v5617
      %v5649 = vadd.f32 %v5648, %v5618
      %v5650 = vadd.f32 %v5649, %v5619
      %v5651 = vadd.f32 %v5650, %v5620
      %v5652 = vadd.f32 %v5651, %v5621
      %v5653 = vadd.f32 %v5652, %v5622
      %v5654 = vadd.f32 %v5653, %v5623
      %v5655 = vadd.f32 %v5654, %v5624
      %v5656 = vadd.f32 %v5655, %v5625
      %v5657 = vadd.f32 %v5656, %v5626
      %v5658 = vadd.f32 %v5657, %v5627
      %v5659 = vadd.f32 %v5658, %v5628
      %v5660 = vadd.f32 %v5659, %v5629
      %v5661 = vadd.f32 %v5660, %v5630
      %v5662 = vadd.f32 %v5661, %v5631
      %v5663 = vadd.f32 %v5662, %v5632
      %v5664 = vadd.f32 %v5663, %v5633
      %v5665 = vadd.f32 %v5664, %v5634
      %v5666 = vadd.f32 %v5665, %v5635
      %v5667 = vadd.f32 %v5666, %v5636
      %v5668 = vadd.f32 %v5667, %v5637
      %v5669 = vadd.f32 %v5668, %v5638
      %v5670 = vadd.f32 %v5669, %v5639
      %v5671 = vadd.f32 %v5670, %v5640
      %v5672 = vadd.f32 %v5671, %v5641
      %v5673 = vadd.f32 %v5672, %v5642
      %v5674 = vadd.f32 %v5673, %v5643
      %v5675 = vrot.slane %v5674, 4
      %v5676 = vadd.f32 %v5674, %v5675
      %v5677 = vrot.slane %v5676, 2
      %v5678 = vadd.f32 %v5676, %v5677
      %v5679 = vrot.slane %v5678, 1
      %v5680 = vadd.f32 %v5678, %v5679
      %5681 = vst [vmem:[%s235 + $0x1] sm:$0x1] %v5680
      %p5682 = scmp.lt.s32.totalorder %s17, 1
      %s5683 = scalar_select %p5682, %s17, 1
      %s5684 = smul.addr %s5683, 32
      %s5685 = smul.addr %s5684, 4
      %s5686 = scalar_lea.vmem %s4, %s5685
      %p5687 = scmp.lt.s32.totalorder %s17, 1
      %s5688 = scalar_select %p5687, %s17, 1
      %s5689 = smul.addr %s5688, 2
      %s5690 = scalar_lea.vmem %s5, %s5689
      // Predicated region
      $region37: #{residual_block_forward.4} parent=35 // pred_check
        %p5691 = pneg %p124
      $region38: #{residual_block_forward.4} parent=35 // pred_check_branch
        %5693 = sbr.rel (%p5691) target = $region40
      $region39: #{residual_block_forward.4} parent=35 // pred_region
        _
      $region40: #{residual_block_forward.4} parent=35 // pred_fallthru
        _
      // Predicated region
      $region41: #{residual_block_forward.4} parent=35 // pred_check
        %p5694 = pneg %p150
      $region42: #{residual_block_forward.4} parent=35 // pred_check_branch
        %5696 = sbr.rel (%p5694) target = $region44
      $region43: #{residual_block_forward.4} parent=35 // pred_region
        _
      $region44: #{residual_block_forward.4} parent=35 // pred_fallthru
        _
    $region36: #{residual_block_forward.4} parent=5 // pred_fallthru
      _
    %p5697 = scmp.le.s32.totalorder 2, %s12
    // Predicated region
    $region45: #{residual_block_forward.4} parent=5 // pred_check
      %p5698 = pneg %p5697
    $region46: #{residual_block_forward.4} parent=5 // pred_check_branch
      %5700 = sbr.rel (%p5698) target = $region48
    $region47: #{residual_block_forward.4} parent=5 // pred_region
      %s5701 = ssub.s32 %s12, 2
      // Predicated region
      $region49: #{residual_block_forward.4} parent=47 // pred_check
        %p5702 = pneg %p130
      $region50: #{residual_block_forward.4} parent=47 // pred_check_branch
        %5704 = sbr.rel (%p5702) target = $region52
      $region51: #{residual_block_forward.4} parent=47 // pred_region
        %p5705 = scmp.lt.s32.totalorder %s18, 1
        %s5706 = scalar_select %p5705, %s18, 1
        %s5707 = smul.addr %s5706, 32
        %s5708 = smul.addr %s5707, 4
        %s5709 = scalar_lea.vmem %s4, %s5708
      $region52: #{residual_block_forward.4} parent=47 // pred_fallthru
        _
      // Predicated region
      $region53: #{residual_block_forward.4} parent=47 // pred_check
        %p5710 = pneg %p156
      $region54: #{residual_block_forward.4} parent=47 // pred_check_branch
        %5712 = sbr.rel (%p5710) target = $region56
      $region55: #{residual_block_forward.4} parent=47 // pred_region
        %p5713 = scmp.lt.s32.totalorder %s18, 1
        %s5714 = scalar_select %p5713, %s18, 1
        %s5715 = smul.addr %s5714, 2
        %s5716 = scalar_lea.vmem %s5, %s5715
      $region56: #{residual_block_forward.4} parent=47 // pred_fallthru
        _
    $region48: #{residual_block_forward.4} parent=5 // pred_fallthru
      _
  $region6: #{residual_block_forward.4} parent=0 // loop_footer
    %s16 = sadd.s32 1, %s12
  $region7: #{residual_block_forward.4} parent=0 // loop_footer_branch
    %11 = sbr.rel target = $region3
  $region8: #{residual_block_forward.4} parent=0 // loop_exit
    _

</llo_original>
